<compile_context>
chip_gen: v7x
topology: tpu7x:2x2x1
jax: 0.10.0
libtpu: 0.0.40
codegen_flags: <defaults>
</compile_context>

<pallas_src>
import functools

import jax
import jax.numpy as jnp
from jax import lax
from jax.experimental import pallas as pl
from jax.experimental.pallas import tpu as pltpu

_LANE = 128      # lane width: hidden gates padded to a multiple of this
_SUBLANE_B = 16  # batch padded to a multiple of this (bf16 sublane packing)


def _round_up(x, m):
    return (x + m - 1) // m * m


def _vmem_limit_bytes():
    """Generation-aware VMEM budget (v7x has 64 MiB/core vs 128 MiB on v5e/v6e)."""
    cap = 0
    try:
        info = pltpu.get_tpu_info()
        cap = int(getattr(info, "vmem_capacity_bytes", 0) or 0)
    except Exception:
        cap = 0
    if cap <= 0:
        cap = 64 * 1024 * 1024  # conservative default (v7x per-core VMEM)
    return max(32 * 1024 * 1024, min(int(cap * 0.6), 100 * 1024 * 1024))


def _pick_time_chunk(T, feats, Hp, Bp, lp, last_layer, vmem_limit, max_tc):
    """Largest divisor of T whose per-chunk VMEM footprint fits the budget."""
    # per-timestep bytes resident in VMEM at one grid step
    feat_bytes_per_t = sum(Bp * f.shape[1] * f.dtype.itemsize for f in feats)
    per_t = 4 * feat_bytes_per_t              # fwd + bwd chunk orderings, double-buffered
    per_t += 2 * Bp * 3 * Hp * 4              # gi scratch (f32, both directions)
    if not last_layer:
        per_t += 2 * 2 * Bp * Hp * 2          # two bf16 sequence outputs, double-buffered
    fixed = 2 * sum(lp[k].size * lp[k].dtype.itemsize
                    for k in ("wih", "bias", "whh", "bhn"))
    fixed += 3 * Bp * 2 * Hp * 4              # h scratch + accumulator headroom
    budget = max(int(vmem_limit * 0.8) - fixed, per_t)
    cap = T if max_tc is None else max(1, min(T, max_tc))
    best = 1
    for d in range(1, cap + 1):
        if T % d == 0 and d * per_t <= budget:
            best = d
    # TODO(synk): for prime/ragged T, stream with a masked tail chunk instead of divisors.
    return best


# -----------------------------------------------------------------------------
# Fused per-layer kernel: chunked input projection + bidirectional recurrence
# -----------------------------------------------------------------------------
def _bigru_layer_kernel(*refs, nfeat, feat_rows, Hp, Bp, Tc, last_layer):
    """One grid step = one time chunk for BOTH direction chains.

    refs layout:
      xf_0..xf_{F-1} : (Tc*Bp, Dk)   features at forward chunk c        (row = t_local*Bp + b)
      xb_0..xb_{F-1} : (Tc*Bp, Dk)   features at backward chunk C-1-c
      wih            : (Din, 6*Hp)   [dir0 r|z|n | dir1 r|z|n] input weights (bf16)
      bias           : (1, 6*Hp)     b_ih (+ b_hh folded for r,z), f32
      whh            : (2*Hp, 6*Hp)  block-diagonal recurrent weights (bf16)
      bhn            : (1, 2*Hp)     b_hh of the n gate per direction, f32
      outputs:
        last layer   : hsum (Bp, 2*Hp) f32, accumulated across the whole grid
        otherwise    : out0 (Tc*Bp, Hp) bf16 at chunk c, out1 (Tc*Bp, Hp) bf16 at chunk C-1-c
      scratch        : h_scr (Bp, 2*Hp) f32, gi0/gi1 (Tc*Bp, 3*Hp) f32
    """
    xf_refs = refs[0:nfeat]
    xb_refs = refs[nfeat:2 * nfeat]
    wih_ref, bias_ref, whh_ref, bhn_ref = refs[2 * nfeat:2 * nfeat + 4]
    n_out = 1 if last_layer else 2
    out_refs = refs[2 * nfeat + 4:2 * nfeat + 4 + n_out]
    h_scr, gi0_ref, gi1_ref = refs[2 * nfeat + 4 + n_out:]

    c = pl.program_id(0)
    G = 3 * Hp
    wdt = wih_ref.dtype

    @pl.when(c == 0)
    def _init():
        h_scr[...] = jnp.zeros_like(h_scr)
        if last_layer:
            out_refs[0][...] = jnp.zeros_like(out_refs[0])

    # ---- fused input projection for this chunk (both directions, one MXU pass each) ----
    def proj(x_refs, col0):
        acc = None
        for k in range(nfeat):
            off, dk = feat_rows[k]
            xk = x_refs[k][...].astype(wdt)                       # (Tc*Bp, dk)
            wk = wih_ref[off:off + dk, col0:col0 + G]             # (dk, 3*Hp)
            p = jnp.dot(xk, wk, preferred_element_type=jnp.float32)
            acc = p if acc is None else acc + p
        return acc

    gi0_ref[...] = proj(xf_refs, 0) + bias_ref[0:1, 0:G]
    gi1_ref[...] = proj(xb_refs, G) + bias_ref[0:1, G:2 * G]

    whh = whh_ref[...]                       # loop-invariant: load once
    bhn0 = bhn_ref[0:1, 0:Hp]
    bhn1 = bhn_ref[0:1, Hp:2 * Hp]

    h_init = h_scr[...]                      # (Bp, 2*Hp) f32 carried across chunks

    def step(s, carry):
        if last_layer:
            h_prev, acc = carry
        else:
            h_prev = carry
        row0 = pl.multiple_of(s * Bp, Bp)                 # dir0: local time s
        row1 = pl.multiple_of((Tc - 1 - s) * Bp, Bp)      # dir1: local time Tc-1-s
        g0 = gi0_ref[pl.ds(row0, Bp), :]                  # (Bp, 3*Hp) f32
        g1 = gi1_ref[pl.ds(row1, Bp), :]

        # one block-diagonal recurrent matmul for BOTH directions (K = 2*Hp)
        gh = jnp.dot(h_prev.astype(wdt), whh,
                     preferred_element_type=jnp.float32)  # (Bp, 6*Hp)

        # direction 0: forward in time
        r = jax.nn.sigmoid(g0[:, 0:Hp] + gh[:, 0:Hp])
        z = jax.nn.sigmoid(g0[:, Hp:2 * Hp] + gh[:, Hp:2 * Hp])
        n = jnp.tanh(g0[:, 2 * Hp:3 * Hp] + r * (gh[:, 2 * Hp:3 * Hp] + bhn0))
        h0 = n + z * (h_prev[:, 0:Hp] - n)                # == (1-z)*n + z*h_prev

        # direction 1: backward in time
        r = jax.nn.sigmoid(g1[:, 0:Hp] + gh[:, 3 * Hp:4 * Hp])
        z = jax.nn.sigmoid(g1[:, Hp:2 * Hp] + gh[:, 4 * Hp:5 * Hp])
        n = jnp.tanh(g1[:, 2 * Hp:3 * Hp] + r * (gh[:, 5 * Hp:6 * Hp] + bhn1))
        h1 = n + z * (h_prev[:, Hp:2 * Hp] - n)

        h_new = jnp.concatenate([h0, h1], axis=-1)        # (Bp, 2*Hp)
        if last_layer:
            return (h_new, acc + h_new)
        out_refs[0][pl.ds(row0, Bp), :] = h0.astype(out_refs[0].dtype)
        out_refs[1][pl.ds(row1, Bp), :] = h1.astype(out_refs[1].dtype)
        return h_new

    if last_layer:
        h_last, acc = lax.fori_loop(0, Tc, step, (h_init, jnp.zeros_like(h_init)),
                                    unroll=4)
        out_refs[0][...] += acc          # per-chunk partial sum into the resident output
    else:
        h_last = lax.fori_loop(0, Tc, step, h_init, unroll=4)
    h_scr[...] = h_last                  # carry h to the next chunk


def _bigru_layer(feats, lp, *, T, Bp, last_layer, time_chunk, vmem_limit):
    """One fused bidirectional GRU layer (streamed over T in chunks)."""
    Hp = lp["whh"].shape[0] // 2
    nfeat = len(feats)
    Tc = time_chunk
    C = T // Tc
    if nfeat == 1:
        feat_rows = ((0, feats[0].shape[1]),)
    else:
        feat_rows = ((0, Hp), (Hp, Hp))

    in_specs, args = [], []
    for f in feats:                                      # forward-ordered chunks
        in_specs.append(pl.BlockSpec((Tc * Bp, f.shape[1]), lambda c: (c, 0)))
        args.append(f)
    for f in feats:                                      # backward-ordered chunks
        in_specs.append(pl.BlockSpec((Tc * Bp, f.shape[1]),
                                     lambda c, _C=C: (_C - 1 - c, 0)))
        args.append(f)
    for w in (lp["wih"], lp["bias"], lp["whh"], lp["bhn"]):
        # constant-index weight blocks (<0.5 MiB each at Hp=128); fetched once by the
        # pipeline since the block index never changes.
        in_specs.append(pl.BlockSpec(w.shape, lambda c: (0, 0)))
        args.append(w)

    if last_layer:
        out_shape = jax.ShapeDtypeStruct((Bp, 2 * Hp), jnp.float32)
        out_specs = pl.BlockSpec((Bp, 2 * Hp), lambda c: (0, 0))
    else:
        out_shape = (jax.ShapeDtypeStruct((T * Bp, Hp), jnp.bfloat16),
                     jax.ShapeDtypeStruct((T * Bp, Hp), jnp.bfloat16))
        out_specs = (pl.BlockSpec((Tc * Bp, Hp), lambda c: (c, 0)),
                     pl.BlockSpec((Tc * Bp, Hp), lambda c, _C=C: (_C - 1 - c, 0)))

    kernel = functools.partial(_bigru_layer_kernel, nfeat=nfeat, feat_rows=feat_rows,
                               Hp=Hp, Bp=Bp, Tc=Tc, last_layer=last_layer)
    return pl.pallas_call(
        kernel,
        out_shape=out_shape,
        grid=(C,),
        in_specs=in_specs,
        out_specs=out_specs,
        scratch_shapes=[
            pltpu.VMEM((Bp, 2 * Hp), jnp.float32),        # h carried across chunks
            pltpu.VMEM((Tc * Bp, 3 * Hp), jnp.float32),   # gi, forward direction
            pltpu.VMEM((Tc * Bp, 3 * Hp), jnp.float32),   # gi, backward direction
        ],
        compiler_params=pltpu.CompilerParams(
            dimension_semantics=("arbitrary",),           # h carries across the T-chunk axis
            vmem_limit_bytes=vmem_limit,
        ),
    )(*args)


def bigru_forward(x_btd, params, *, max_time_chunk=None):
    """x_btd: (B, T, input_dim) f32 -> logits (B, num_classes). Eval mode."""
    B0, T, D0 = x_btd.shape
    Bp = _round_up(max(B0, 1), _SUBLANE_B)
    Hp = params["layers"][0]["whh"].shape[0] // 2
    vmem_limit = _vmem_limit_bytes()

    # time-major + batch padding once at the top; rows are (t * Bp + b)
    x_tm = jnp.transpose(x_btd, (1, 0, 2))
    if Bp != B0:
        x_tm = jnp.pad(x_tm, ((0, 0), (0, Bp - B0), (0, 0)))
    feats = [x_tm.reshape(T * Bp, D0)]

    nlayers = len(params["layers"])
    hsum = None
    for l, lp in enumerate(params["layers"]):
        last = l == nlayers - 1
        Tc = _pick_time_chunk(T, feats, Hp, Bp, lp, last, vmem_limit, max_time_chunk)
        out = _bigru_layer(feats, lp, T=T, Bp=Bp, last_layer=last,
                           time_chunk=Tc, vmem_limit=vmem_limit)
        if last:
            hsum = out                                    # (Bp, 2*Hp) sum over time
        else:
            feats = list(out)                             # [fwd seq, bwd seq] in bf16
        # TODO(synk): nn.GRU inter-layer dropout (p=0.5) is identity in eval mode.

    # mean over time + Linear: trivial (B, 2Hp) x (2Hp, C) -> plain XLA per perf review
    pooled = hsum[:B0] * (1.0 / T)
    # TODO(synk): nn.Dropout before fc is identity in eval mode.
    return pooled @ params["fc_w_t"] + params["fc_b"]


# -----------------------------------------------------------------------------
# Parameter init (PyTorch layout: xavier_uniform weights, zero biases) + packing
# -----------------------------------------------------------------------------
def _xavier_uniform(key, shape):
    fan_out, fan_in = shape  # PyTorch 2D convention: (out, in)
    limit = (6.0 / (fan_in + fan_out)) ** 0.5
    return jax.random.uniform(key, shape, jnp.float32, -limit, limit)


def init_raw_params(key, input_dim, hidden_dim, num_layers, num_classes):
    """PyTorch-layout parameters (gate order r, z, n along dim 0)."""
    H = hidden_dim
    raw = {"gru": []}
    for l in range(num_layers):
        d_in = input_dim if l == 0 else 2 * H
        layer = {}
        for dirname in ("fwd", "bwd"):
            key, k1, k2 = jax.random.split(key, 3)
            layer[dirname] = {
                "w_ih": _xavier_uniform(k1, (3 * H, d_in)),
                "w_hh": _xavier_uniform(k2, (3 * H, H)),
                "b_ih": jnp.zeros((3 * H,), jnp.float32),
                "b_hh": jnp.zeros((3 * H,), jnp.float32),
            }
        raw["gru"].append(layer)
    key, kfc = jax.random.split(key)
    raw["fc_w"] = _xavier_uniform(kfc, (num_classes, 2 * H))
    raw["fc_b"] = jnp.zeros((num_classes,), jnp.float32)
    return raw


def pack_params(raw, input_dim, hidden_dim, num_classes, param_dtype=jnp.bfloat16):
    """Repack PyTorch-layout params into the lane-aligned fused-kernel layout.

    Gates are padded H -> Hp (multiple of 128); padded weight rows/cols and biases are
    zero so padded hidden lanes stay exactly zero. Column layout is
    [dir0 r | dir0 z | dir0 n | dir1 r | dir1 z | dir1 n]; whh is block-diagonal over
    the two directions so one (Bp, 2Hp) x (2Hp, 6Hp) matmul drives both chains.
    """
    H = hidden_dim
    Hp = _round_up(H, _LANE)
    f32 = jnp.float32
    packed = {"layers": []}

    for l, layer in enumerate(raw["gru"]):
        din = input_dim if l == 0 else 2 * Hp
        wih = jnp.zeros((din, 6 * Hp), f32)
        bias = jnp.zeros((1, 6 * Hp), f32)
        whh = jnp.zeros((2 * Hp, 6 * Hp), f32)
        bhn = jnp.zeros((1, 2 * Hp), f32)

        for d, dirname in enumerate(("fwd", "bwd")):
            p = layer[dirname]
            for g in range(3):                           # gate order r, z, n
                col = d * 3 * Hp + g * Hp
                w_g = p["w_ih"][g * H:(g + 1) * H, :]    # (H, d_in_real)
                if l == 0:
                    wih = wih.at[:, col:col + H].set(w_g.T)
                else:
                    # layer>0 features: prev fwd half rows [0:H], prev bwd half rows [Hp:Hp+H]
                    wih = wih.at[0:H, col:col + H].set(w_g[:, 0:H].T)
                    wih = wih.at[Hp:Hp + H, col:col + H].set(w_g[:, H:2 * H].T)
                b = p["b_ih"][g * H:(g + 1) * H]
                if g < 2:  # fold b_hh for r/z; n-gate b_hh must stay inside tanh(r * .)
                    b = b + p["b_hh"][g * H:(g + 1) * H]
                bias = bias.at[0, col:col + H].set(b)
                w_hg = p["w_hh"][g * H:(g + 1) * H, :]   # (H, H)
                whh = whh.at[d * Hp:d * Hp + H, col:col + H].set(w_hg.T)
            bhn = bhn.at[0, d * Hp:d * Hp + H].set(p["b_hh"][2 * H:3 * H])

        packed["layers"].append({
            "wih": wih.astype(param_dtype),
            "bias": bias,
            "whh": whh.astype(param_dtype),
            "bhn": bhn,
        })

    fc_w_t = jnp.zeros((2 * Hp, num_classes), f32)
    fc_w_t = fc_w_t.at[0:H, :].set(raw["fc_w"][:, 0:H].T)
    fc_w_t = fc_w_t.at[Hp:Hp + H, :].set(raw["fc_w"][:, H:2 * H].T)
    packed["fc_w_t"] = fc_w_t
    packed["fc_b"] = raw["fc_b"].reshape(1, num_classes)
    return packed


# -----------------------------------------------------------------------------
if __name__ == "__main__":
    # Small shapes consistent with the module: x is (batch, seq, input_dim)
    B, T = 2, 8
    input_dim = 16
    hidden_dim = 32
    num_layers = 2
    num_classes = 2

    key = jax.random.PRNGKey(0)
    key, kx = jax.random.split(key)
    x = jax.random.normal(kx, (B, T, input_dim), jnp.float32)

    raw = init_raw_params(key, input_dim, hidden_dim, num_layers, num_classes)
    params = pack_params(raw, input_dim, hidden_dim, num_classes)

    # cap the time chunk at 4 so the demo exercises the streamed multi-chunk path (C=2)
    fwd = jax.jit(functools.partial(bigru_forward, max_time_chunk=4))
    logits = fwd(x, params)
    jax.block_until_ready(logits)

    assert logits.shape == (B, num_classes), logits.shape
    print("KERNEL_OK")
</pallas_src>

<mosaic_0001>
module attributes {stable_mosaic.version = 11 : i64} {
  func.func @_bigru_layer_kernel(%arg0: i32, %arg1: memref<64x16xf32, #tpu.memory_space<vmem>>, %arg2: memref<64x16xf32, #tpu.memory_space<vmem>>, %arg3: memref<16x768xbf16, #tpu.memory_space<vmem>>, %arg4: memref<1x768xf32, #tpu.memory_space<vmem>>, %arg5: memref<256x768xbf16, #tpu.memory_space<vmem>>, %arg6: memref<1x256xf32, #tpu.memory_space<vmem>>, %arg7: memref<64x128xbf16, #tpu.memory_space<vmem>>, %arg8: memref<64x128xbf16, #tpu.memory_space<vmem>>, %arg9: memref<16x256xf32, #tpu.memory_space<vmem>>, %arg10: memref<64x384xf32, #tpu.memory_space<vmem>>, %arg11: memref<64x384xf32, #tpu.memory_space<vmem>>) attributes {dimension_semantics = [#tpu.dimension_semantics<arbitrary>], iteration_bounds = array<i64: 2>, scalar_prefetch = 0 : i64, scratch_operands = 3 : i64, tpu.core_type = #tpu.core_type<tc>, window_params = [{transform_indices = @transform_0, window_bounds = array<i64: 64, 16>}, {transform_indices = @transform_1, window_bounds = array<i64: 64, 16>}, {pipeline_mode = #tpu.pipeline_mode<synchronous>, transform_indices = @transform_2, window_bounds = array<i64: 16, 768>}, {pipeline_mode = #tpu.pipeline_mode<synchronous>, transform_indices = @transform_3, window_bounds = array<i64: 1, 768>}, {pipeline_mode = #tpu.pipeline_mode<synchronous>, transform_indices = @transform_4, window_bounds = array<i64: 256, 768>}, {pipeline_mode = #tpu.pipeline_mode<synchronous>, transform_indices = @transform_5, window_bounds = array<i64: 1, 256>}, {transform_indices = @transform_6, window_bounds = array<i64: 64, 128>}, {transform_indices = @transform_7, window_bounds = array<i64: 64, 128>}]} {
    %c0_i32 = arith.constant 0 : i32
    %0 = arith.cmpi eq, %arg0, %c0_i32 : i32
    %1 = arith.extui %0 : i1 to i32
    %c0_i32_0 = arith.constant 0 : i32
    %2 = arith.cmpi ne, %1, %c0_i32_0 : i32
    scf.if %2 {
      %cst_73 = arith.constant 0.000000e+00 : f32
      %312 = vector.broadcast %cst_73 : f32 to vector<16x256xf32>
      %c0_74 = arith.constant 0 : index
      %c0_75 = arith.constant 0 : index
      %313 = vector.load %arg9[%c0_74, %c0_75] : memref<16x256xf32, #tpu.memory_space<vmem>>, vector<16x256xf32>
      tpu.vector_store %arg9[%c0_74, %c0_75], %312 {strides = array<i32>} : memref<16x256xf32, #tpu.memory_space<vmem>>, vector<16x256xf32>,
    } else {
    }
    %c0 = arith.constant 0 : index
    %c0_1 = arith.constant 0 : index
    %3 = vector.load %arg1[%c0, %c0_1] : memref<64x16xf32, #tpu.memory_space<vmem>>, vector<64x16xf32>
    %4 = arith.truncf %3 : vector<64x16xf32> to vector<64x16xbf16>
    %c0_2 = arith.constant 0 : index
    %c0_3 = arith.constant 0 : index
    %5 = vector.load %arg3[%c0_2, %c0_3] : memref<16x768xbf16, #tpu.memory_space<vmem>>, vector<16x384xbf16>
    %cst = arith.constant dense<0.000000e+00> : vector<64x384xf32>
    %6 = tpu.matmul %4, %5, %cst {dimension_numbers = #tpu.dot_dimension_numbers<[1], [0], [0], [1], [0, 0, 1, 1], [], []>} : vector<64x16xbf16>, vector<16x384xbf16>, vector<64x384xf32> -> vector<64x384xf32>
    %c0_4 = arith.constant 0 : index
    %c0_5 = arith.constant 0 : index
    %7 = vector.load %arg4[%c0_4, %c0_5] : memref<1x768xf32, #tpu.memory_space<vmem>>, vector<1x384xf32>
    %8 = vector.broadcast %7 : vector<1x384xf32> to vector<64x384xf32>
    %9 = arith.addf %6, %8 : vector<64x384xf32>
    %c0_6 = arith.constant 0 : index
    %c0_7 = arith.constant 0 : index
    %10 = vector.load %arg10[%c0_6, %c0_7] : memref<64x384xf32, #tpu.memory_space<vmem>>, vector<64x384xf32>
    tpu.vector_store %arg10[%c0_6, %c0_7], %9 {strides = array<i32>} : memref<64x384xf32, #tpu.memory_space<vmem>>, vector<64x384xf32>,
    %c0_8 = arith.constant 0 : index
    %c0_9 = arith.constant 0 : index
    %11 = vector.load %arg2[%c0_8, %c0_9] : memref<64x16xf32, #tpu.memory_space<vmem>>, vector<64x16xf32>
    %12 = arith.truncf %11 : vector<64x16xf32> to vector<64x16xbf16>
    %c0_10 = arith.constant 0 : index
    %c384 = arith.constant 384 : index
    %13 = vector.load %arg3[%c0_10, %c384] : memref<16x768xbf16, #tpu.memory_space<vmem>>, vector<16x384xbf16>
    %cst_11 = arith.constant dense<0.000000e+00> : vector<64x384xf32>
    %14 = tpu.matmul %12, %13, %cst_11 {dimension_numbers = #tpu.dot_dimension_numbers<[1], [0], [0], [1], [0, 0, 1, 1], [], []>} : vector<64x16xbf16>, vector<16x384xbf16>, vector<64x384xf32> -> vector<64x384xf32>
    %c0_12 = arith.constant 0 : index
    %c384_13 = arith.constant 384 : index
    %15 = vector.load %arg4[%c0_12, %c384_13] : memref<1x768xf32, #tpu.memory_space<vmem>>, vector<1x384xf32>
    %16 = vector.broadcast %15 : vector<1x384xf32> to vector<64x384xf32>
    %17 = arith.addf %14, %16 : vector<64x384xf32>
    %c0_14 = arith.constant 0 : index
    %c0_15 = arith.constant 0 : index
    %18 = vector.load %arg11[%c0_14, %c0_15] : memref<64x384xf32, #tpu.memory_space<vmem>>, vector<64x384xf32>
    tpu.vector_store %arg11[%c0_14, %c0_15], %17 {strides = array<i32>} : memref<64x384xf32, #tpu.memory_space<vmem>>, vector<64x384xf32>,
    %c0_16 = arith.constant 0 : index
    %c0_17 = arith.constant 0 : index
    %19 = vector.load %arg5[%c0_16, %c0_17] : memref<256x768xbf16, #tpu.memory_space<vmem>>, vector<256x768xbf16>
    %c0_18 = arith.constant 0 : index
    %c0_19 = arith.constant 0 : index
    %20 = vector.load %arg6[%c0_18, %c0_19] : memref<1x256xf32, #tpu.memory_space<vmem>>, vector<1x128xf32>
    %c0_20 = arith.constant 0 : index
    %c128 = arith.constant 128 : index
    %21 = vector.load %arg6[%c0_20, %c128] : memref<1x256xf32, #tpu.memory_space<vmem>>, vector<1x128xf32>
    %c0_21 = arith.constant 0 : index
    %c0_22 = arith.constant 0 : index
    %22 = vector.load %arg9[%c0_21, %c0_22] : memref<16x256xf32, #tpu.memory_space<vmem>>, vector<16x256xf32>
    %c0_i32_23 = arith.constant 0 : i32
    %c16_i32 = arith.constant 16 : i32
    %23 = arith.muli %c0_i32_23, %c16_i32 : i32
    %24 = tpu.assume_multiple %23, 16 : i32
    %c3_i32 = arith.constant 3 : i32
    %25 = arith.subi %c3_i32, %c0_i32_23 : i32
    %c16_i32_24 = arith.constant 16 : i32
    %26 = arith.muli %25, %c16_i32_24 : i32
    %27 = tpu.assume_multiple %26, 16 : i32
    %28 = arith.index_cast %24 : i32 to index
    %c0_25 = arith.constant 0 : index
    %29 = vector.load %arg10[%28, %c0_25] : memref<64x384xf32, #tpu.memory_space<vmem>>, vector<16x384xf32>
    %30 = arith.index_cast %27 : i32 to index
    %c0_26 = arith.constant 0 : index
    %31 = vector.load %arg11[%30, %c0_26] : memref<64x384xf32, #tpu.memory_space<vmem>>, vector<16x384xf32>
    %32 = arith.truncf %22 : vector<16x256xf32> to vector<16x256xbf16>
    %cst_27 = arith.constant dense<0.000000e+00> : vector<16x768xf32>
    %33 = tpu.matmul %32, %19, %cst_27 {dimension_numbers = #tpu.dot_dimension_numbers<[1], [0], [0], [1], [0, 0, 1, 1], [], []>} : vector<16x256xbf16>, vector<256x768xbf16>, vector<16x768xf32> -> vector<16x768xf32>
    %34 = vector.extract_strided_slice %29 {offsets = [0, 0], sizes = [16, 128], strides = [1, 1]} : vector<16x384xf32> to vector<16x128xf32>
    %35 = vector.extract_strided_slice %33 {offsets = [0, 0], sizes = [16, 128], strides = [1, 1]} : vector<16x768xf32> to vector<16x128xf32>
    %36 = arith.addf %34, %35 : vector<16x128xf32>
    %37 = arith.negf %36 : vector<16x128xf32>
    %38 = math.exp %37 : vector<16x128xf32>
    %cst_28 = arith.constant 1.000000e+00 : f32
    %39 = vector.broadcast %cst_28 : f32 to vector<16x128xf32>
    %40 = arith.addf %39, %38 : vector<16x128xf32>
    %41 = arith.divf %39, %40 : vector<16x128xf32>
    %42 = vector.extract_strided_slice %29 {offsets = [0, 128], sizes = [16, 128], strides = [1, 1]} : vector<16x384xf32> to vector<16x128xf32>
    %43 = vector.extract_strided_slice %33 {offsets = [0, 128], sizes = [16, 128], strides = [1, 1]} : vector<16x768xf32> to vector<16x128xf32>
    %44 = arith.addf %42, %43 : vector<16x128xf32>
    %45 = arith.negf %44 : vector<16x128xf32>
    %46 = math.exp %45 : vector<16x128xf32>
    %cst_29 = arith.constant 1.000000e+00 : f32
    %47 = vector.broadcast %cst_29 : f32 to vector<16x128xf32>
    %48 = arith.addf %47, %46 : vector<16x128xf32>
    %49 = arith.divf %47, %48 : vector<16x128xf32>
    %50 = vector.extract_strided_slice %29 {offsets = [0, 256], sizes = [16, 128], strides = [1, 1]} : vector<16x384xf32> to vector<16x128xf32>
    %51 = vector.extract_strided_slice %33 {offsets = [0, 256], sizes = [16, 128], strides = [1, 1]} : vector<16x768xf32> to vector<16x128xf32>
    %52 = vector.broadcast %20 : vector<1x128xf32> to vector<16x128xf32>
    %53 = arith.addf %51, %52 : vector<16x128xf32>
    %54 = arith.mulf %41, %53 : vector<16x128xf32>
    %55 = arith.addf %50, %54 : vector<16x128xf32>
    %56 = math.tanh %55 : vector<16x128xf32>
    %57 = vector.extract_strided_slice %22 {offsets = [0, 0], sizes = [16, 128], strides = [1, 1]} : vector<16x256xf32> to vector<16x128xf32>
    %58 = arith.subf %57, %56 : vector<16x128xf32>
    %59 = arith.mulf %49, %58 : vector<16x128xf32>
    %60 = arith.addf %56, %59 : vector<16x128xf32>
    %61 = vector.extract_strided_slice %31 {offsets = [0, 0], sizes = [16, 128], strides = [1, 1]} : vector<16x384xf32> to vector<16x128xf32>
    %62 = vector.extract_strided_slice %33 {offsets = [0, 384], sizes = [16, 128], strides = [1, 1]} : vector<16x768xf32> to vector<16x128xf32>
    %63 = arith.addf %61, %62 : vector<16x128xf32>
    %64 = arith.negf %63 : vector<16x128xf32>
    %65 = math.exp %64 : vector<16x128xf32>
    %cst_30 = arith.constant 1.000000e+00 : f32
    %66 = vector.broadcast %cst_30 : f32 to vector<16x128xf32>
    %67 = arith.addf %66, %65 : vector<16x128xf32>
    %68 = arith.divf %66, %67 : vector<16x128xf32>
    %69 = vector.extract_strided_slice %31 {offsets = [0, 128], sizes = [16, 128], strides = [1, 1]} : vector<16x384xf32> to vector<16x128xf32>
    %70 = vector.extract_strided_slice %33 {offsets = [0, 512], sizes = [16, 128], strides = [1, 1]} : vector<16x768xf32> to vector<16x128xf32>
    %71 = arith.addf %69, %70 : vector<16x128xf32>
    %72 = arith.negf %71 : vector<16x128xf32>
    %73 = math.exp %72 : vector<16x128xf32>
    %cst_31 = arith.constant 1.000000e+00 : f32
    %74 = vector.broadcast %cst_31 : f32 to vector<16x128xf32>
    %75 = arith.addf %74, %73 : vector<16x128xf32>
    %76 = arith.divf %74, %75 : vector<16x128xf32>
    %77 = vector.extract_strided_slice %31 {offsets = [0, 256], sizes = [16, 128], strides = [1, 1]} : vector<16x384xf32> to vector<16x128xf32>
    %78 = vector.extract_strided_slice %33 {offsets = [0, 640], sizes = [16, 128], strides = [1, 1]} : vector<16x768xf32> to vector<16x128xf32>
    %79 = vector.broadcast %21 : vector<1x128xf32> to vector<16x128xf32>
    %80 = arith.addf %78, %79 : vector<16x128xf32>
    %81 = arith.mulf %68, %80 : vector<16x128xf32>
    %82 = arith.addf %77, %81 : vector<16x128xf32>
    %83 = math.tanh %82 : vector<16x128xf32>
    %84 = vector.extract_strided_slice %22 {offsets = [0, 128], sizes = [16, 128], strides = [1, 1]} : vector<16x256xf32> to vector<16x128xf32>
    %85 = arith.subf %84, %83 : vector<16x128xf32>
    %86 = arith.mulf %76, %85 : vector<16x128xf32>
    %87 = arith.addf %83, %86 : vector<16x128xf32>
    %88 = tpu.concatenate %60, %87 in 1 : vector<16x128xf32>, vector<16x128xf32> -> vector<16x256xf32>
    %89 = arith.truncf %60 : vector<16x128xf32> to vector<16x128xbf16>
    %90 = arith.index_cast %24 : i32 to index
    %c0_32 = arith.constant 0 : index
    %91 = vector.load %arg7[%90, %c0_32] : memref<64x128xbf16, #tpu.memory_space<vmem>>, vector<16x128xbf16>
    tpu.vector_store %arg7[%90, %c0_32], %89 {strides = array<i32>} : memref<64x128xbf16, #tpu.memory_space<vmem>>, vector<16x128xbf16>,
    %92 = arith.truncf %87 : vector<16x128xf32> to vector<16x128xbf16>
    %93 = arith.index_cast %27 : i32 to index
    %c0_33 = arith.constant 0 : index
    %94 = vector.load %arg8[%93, %c0_33] : memref<64x128xbf16, #tpu.memory_space<vmem>>, vector<16x128xbf16>
    tpu.vector_store %arg8[%93, %c0_33], %92 {strides = array<i32>} : memref<64x128xbf16, #tpu.memory_space<vmem>>, vector<16x128xbf16>,
    %c1_i32 = arith.constant 1 : i32
    %c16_i32_34 = arith.constant 16 : i32
    %95 = arith.muli %c1_i32, %c16_i32_34 : i32
    %96 = tpu.assume_multiple %95, 16 : i32
    %c3_i32_35 = arith.constant 3 : i32
    %97 = arith.subi %c3_i32_35, %c1_i32 : i32
    %c16_i32_36 = arith.constant 16 : i32
    %98 = arith.muli %97, %c16_i32_36 : i32
    %99 = tpu.assume_multiple %98, 16 : i32
    %100 = arith.index_cast %96 : i32 to index
    %c0_37 = arith.constant 0 : index
    %101 = vector.load %arg10[%100, %c0_37] : memref<64x384xf32, #tpu.memory_space<vmem>>, vector<16x384xf32>
    %102 = arith.index_cast %99 : i32 to index
    %c0_38 = arith.constant 0 : index
    %103 = vector.load %arg11[%102, %c0_38] : memref<64x384xf32, #tpu.memory_space<vmem>>, vector<16x384xf32>
    %104 = arith.truncf %88 : vector<16x256xf32> to vector<16x256xbf16>
    %cst_39 = arith.constant dense<0.000000e+00> : vector<16x768xf32>
    %105 = tpu.matmul %104, %19, %cst_39 {dimension_numbers = #tpu.dot_dimension_numbers<[1], [0], [0], [1], [0, 0, 1, 1], [], []>} : vector<16x256xbf16>, vector<256x768xbf16>, vector<16x768xf32> -> vector<16x768xf32>
    %106 = vector.extract_strided_slice %101 {offsets = [0, 0], sizes = [16, 128], strides = [1, 1]} : vector<16x384xf32> to vector<16x128xf32>
    %107 = vector.extract_strided_slice %105 {offsets = [0, 0], sizes = [16, 128], strides = [1, 1]} : vector<16x768xf32> to vector<16x128xf32>
    %108 = arith.addf %106, %107 : vector<16x128xf32>
    %109 = arith.negf %108 : vector<16x128xf32>
    %110 = math.exp %109 : vector<16x128xf32>
    %cst_40 = arith.constant 1.000000e+00 : f32
    %111 = vector.broadcast %cst_40 : f32 to vector<16x128xf32>
    %112 = arith.addf %111, %110 : vector<16x128xf32>
    %113 = arith.divf %111, %112 : vector<16x128xf32>
    %114 = vector.extract_strided_slice %101 {offsets = [0, 128], sizes = [16, 128], strides = [1, 1]} : vector<16x384xf32> to vector<16x128xf32>
    %115 = vector.extract_strided_slice %105 {offsets = [0, 128], sizes = [16, 128], strides = [1, 1]} : vector<16x768xf32> to vector<16x128xf32>
    %116 = arith.addf %114, %115 : vector<16x128xf32>
    %117 = arith.negf %116 : vector<16x128xf32>
    %118 = math.exp %117 : vector<16x128xf32>
    %cst_41 = arith.constant 1.000000e+00 : f32
    %119 = vector.broadcast %cst_41 : f32 to vector<16x128xf32>
    %120 = arith.addf %119, %118 : vector<16x128xf32>
    %121 = arith.divf %119, %120 : vector<16x128xf32>
    %122 = vector.extract_strided_slice %101 {offsets = [0, 256], sizes = [16, 128], strides = [1, 1]} : vector<16x384xf32> to vector<16x128xf32>
    %123 = vector.extract_strided_slice %105 {offsets = [0, 256], sizes = [16, 128], strides = [1, 1]} : vector<16x768xf32> to vector<16x128xf32>
    %124 = vector.broadcast %20 : vector<1x128xf32> to vector<16x128xf32>
    %125 = arith.addf %123, %124 : vector<16x128xf32>
    %126 = arith.mulf %113, %125 : vector<16x128xf32>
    %127 = arith.addf %122, %126 : vector<16x128xf32>
    %128 = math.tanh %127 : vector<16x128xf32>
    %129 = vector.extract_strided_slice %88 {offsets = [0, 0], sizes = [16, 128], strides = [1, 1]} : vector<16x256xf32> to vector<16x128xf32>
    %130 = arith.subf %129, %128 : vector<16x128xf32>
    %131 = arith.mulf %121, %130 : vector<16x128xf32>
    %132 = arith.addf %128, %131 : vector<16x128xf32>
    %133 = vector.extract_strided_slice %103 {offsets = [0, 0], sizes = [16, 128], strides = [1, 1]} : vector<16x384xf32> to vector<16x128xf32>
    %134 = vector.extract_strided_slice %105 {offsets = [0, 384], sizes = [16, 128], strides = [1, 1]} : vector<16x768xf32> to vector<16x128xf32>
    %135 = arith.addf %133, %134 : vector<16x128xf32>
    %136 = arith.negf %135 : vector<16x128xf32>
    %137 = math.exp %136 : vector<16x128xf32>
    %cst_42 = arith.constant 1.000000e+00 : f32
    %138 = vector.broadcast %cst_42 : f32 to vector<16x128xf32>
    %139 = arith.addf %138, %137 : vector<16x128xf32>
    %140 = arith.divf %138, %139 : vector<16x128xf32>
    %141 = vector.extract_strided_slice %103 {offsets = [0, 128], sizes = [16, 128], strides = [1, 1]} : vector<16x384xf32> to vector<16x128xf32>
    %142 = vector.extract_strided_slice %105 {offsets = [0, 512], sizes = [16, 128], strides = [1, 1]} : vector<16x768xf32> to vector<16x128xf32>
    %143 = arith.addf %141, %142 : vector<16x128xf32>
    %144 = arith.negf %143 : vector<16x128xf32>
    %145 = math.exp %144 : vector<16x128xf32>
    %cst_43 = arith.constant 1.000000e+00 : f32
    %146 = vector.broadcast %cst_43 : f32 to vector<16x128xf32>
    %147 = arith.addf %146, %145 : vector<16x128xf32>
    %148 = arith.divf %146, %147 : vector<16x128xf32>
    %149 = vector.extract_strided_slice %103 {offsets = [0, 256], sizes = [16, 128], strides = [1, 1]} : vector<16x384xf32> to vector<16x128xf32>
    %150 = vector.extract_strided_slice %105 {offsets = [0, 640], sizes = [16, 128], strides = [1, 1]} : vector<16x768xf32> to vector<16x128xf32>
    %151 = vector.broadcast %21 : vector<1x128xf32> to vector<16x128xf32>
    %152 = arith.addf %150, %151 : vector<16x128xf32>
    %153 = arith.mulf %140, %152 : vector<16x128xf32>
    %154 = arith.addf %149, %153 : vector<16x128xf32>
    %155 = math.tanh %154 : vector<16x128xf32>
    %156 = vector.extract_strided_slice %88 {offsets = [0, 128], sizes = [16, 128], strides = [1, 1]} : vector<16x256xf32> to vector<16x128xf32>
    %157 = arith.subf %156, %155 : vector<16x128xf32>
    %158 = arith.mulf %148, %157 : vector<16x128xf32>
    %159 = arith.addf %155, %158 : vector<16x128xf32>
    %160 = tpu.concatenate %132, %159 in 1 : vector<16x128xf32>, vector<16x128xf32> -> vector<16x256xf32>
    %161 = arith.truncf %132 : vector<16x128xf32> to vector<16x128xbf16>
    %162 = arith.index_cast %96 : i32 to index
    %c0_44 = arith.constant 0 : index
    %163 = vector.load %arg7[%162, %c0_44] : memref<64x128xbf16, #tpu.memory_space<vmem>>, vector<16x128xbf16>
    tpu.vector_store %arg7[%162, %c0_44], %161 {strides = array<i32>} : memref<64x128xbf16, #tpu.memory_space<vmem>>, vector<16x128xbf16>,
    %164 = arith.truncf %159 : vector<16x128xf32> to vector<16x128xbf16>
    %165 = arith.index_cast %99 : i32 to index
    %c0_45 = arith.constant 0 : index
    %166 = vector.load %arg8[%165, %c0_45] : memref<64x128xbf16, #tpu.memory_space<vmem>>, vector<16x128xbf16>
    tpu.vector_store %arg8[%165, %c0_45], %164 {strides = array<i32>} : memref<64x128xbf16, #tpu.memory_space<vmem>>, vector<16x128xbf16>,
    %c2_i32 = arith.constant 2 : i32
    %c16_i32_46 = arith.constant 16 : i32
    %167 = arith.muli %c2_i32, %c16_i32_46 : i32
    %168 = tpu.assume_multiple %167, 16 : i32
    %c3_i32_47 = arith.constant 3 : i32
    %169 = arith.subi %c3_i32_47, %c2_i32 : i32
    %c16_i32_48 = arith.constant 16 : i32
    %170 = arith.muli %169, %c16_i32_48 : i32
    %171 = tpu.assume_multiple %170, 16 : i32
    %172 = arith.index_cast %168 : i32 to index
    %c0_49 = arith.constant 0 : index
    %173 = vector.load %arg10[%172, %c0_49] : memref<64x384xf32, #tpu.memory_space<vmem>>, vector<16x384xf32>
    %174 = arith.index_cast %171 : i32 to index
    %c0_50 = arith.constant 0 : index
    %175 = vector.load %arg11[%174, %c0_50] : memref<64x384xf32, #tpu.memory_space<vmem>>, vector<16x384xf32>
    %176 = arith.truncf %160 : vector<16x256xf32> to vector<16x256xbf16>
    %cst_51 = arith.constant dense<0.000000e+00> : vector<16x768xf32>
    %177 = tpu.matmul %176, %19, %cst_51 {dimension_numbers = #tpu.dot_dimension_numbers<[1], [0], [0], [1], [0, 0, 1, 1], [], []>} : vector<16x256xbf16>, vector<256x768xbf16>, vector<16x768xf32> -> vector<16x768xf32>
    %178 = vector.extract_strided_slice %173 {offsets = [0, 0], sizes = [16, 128], strides = [1, 1]} : vector<16x384xf32> to vector<16x128xf32>
    %179 = vector.extract_strided_slice %177 {offsets = [0, 0], sizes = [16, 128], strides = [1, 1]} : vector<16x768xf32> to vector<16x128xf32>
    %180 = arith.addf %178, %179 : vector<16x128xf32>
    %181 = arith.negf %180 : vector<16x128xf32>
    %182 = math.exp %181 : vector<16x128xf32>
    %cst_52 = arith.constant 1.000000e+00 : f32
    %183 = vector.broadcast %cst_52 : f32 to vector<16x128xf32>
    %184 = arith.addf %183, %182 : vector<16x128xf32>
    %185 = arith.divf %183, %184 : vector<16x128xf32>
    %186 = vector.extract_strided_slice %173 {offsets = [0, 128], sizes = [16, 128], strides = [1, 1]} : vector<16x384xf32> to vector<16x128xf32>
    %187 = vector.extract_strided_slice %177 {offsets = [0, 128], sizes = [16, 128], strides = [1, 1]} : vector<16x768xf32> to vector<16x128xf32>
    %188 = arith.addf %186, %187 : vector<16x128xf32>
    %189 = arith.negf %188 : vector<16x128xf32>
    %190 = math.exp %189 : vector<16x128xf32>
    %cst_53 = arith.constant 1.000000e+00 : f32
    %191 = vector.broadcast %cst_53 : f32 to vector<16x128xf32>
    %192 = arith.addf %191, %190 : vector<16x128xf32>
    %193 = arith.divf %191, %192 : vector<16x128xf32>
    %194 = vector.extract_strided_slice %173 {offsets = [0, 256], sizes = [16, 128], strides = [1, 1]} : vector<16x384xf32> to vector<16x128xf32>
    %195 = vector.extract_strided_slice %177 {offsets = [0, 256], sizes = [16, 128], strides = [1, 1]} : vector<16x768xf32> to vector<16x128xf32>
    %196 = vector.broadcast %20 : vector<1x128xf32> to vector<16x128xf32>
    %197 = arith.addf %195, %196 : vector<16x128xf32>
    %198 = arith.mulf %185, %197 : vector<16x128xf32>
    %199 = arith.addf %194, %198 : vector<16x128xf32>
    %200 = math.tanh %199 : vector<16x128xf32>
    %201 = vector.extract_strided_slice %160 {offsets = [0, 0], sizes = [16, 128], strides = [1, 1]} : vector<16x256xf32> to vector<16x128xf32>
    %202 = arith.subf %201, %200 : vector<16x128xf32>
    %203 = arith.mulf %193, %202 : vector<16x128xf32>
    %204 = arith.addf %200, %203 : vector<16x128xf32>
    %205 = vector.extract_strided_slice %175 {offsets = [0, 0], sizes = [16, 128], strides = [1, 1]} : vector<16x384xf32> to vector<16x128xf32>
    %206 = vector.extract_strided_slice %177 {offsets = [0, 384], sizes = [16, 128], strides = [1, 1]} : vector<16x768xf32> to vector<16x128xf32>
    %207 = arith.addf %205, %206 : vector<16x128xf32>
    %208 = arith.negf %207 : vector<16x128xf32>
    %209 = math.exp %208 : vector<16x128xf32>
    %cst_54 = arith.constant 1.000000e+00 : f32
    %210 = vector.broadcast %cst_54 : f32 to vector<16x128xf32>
    %211 = arith.addf %210, %209 : vector<16x128xf32>
    %212 = arith.divf %210, %211 : vector<16x128xf32>
    %213 = vector.extract_strided_slice %175 {offsets = [0, 128], sizes = [16, 128], strides = [1, 1]} : vector<16x384xf32> to vector<16x128xf32>
    %214 = vector.extract_strided_slice %177 {offsets = [0, 512], sizes = [16, 128], strides = [1, 1]} : vector<16x768xf32> to vector<16x128xf32>
    %215 = arith.addf %213, %214 : vector<16x128xf32>
    %216 = arith.negf %215 : vector<16x128xf32>
    %217 = math.exp %216 : vector<16x128xf32>
    %cst_55 = arith.constant 1.000000e+00 : f32
    %218 = vector.broadcast %cst_55 : f32 to vector<16x128xf32>
    %219 = arith.addf %218, %217 : vector<16x128xf32>
    %220 = arith.divf %218, %219 : vector<16x128xf32>
    %221 = vector.extract_strided_slice %175 {offsets = [0, 256], sizes = [16, 128], strides = [1, 1]} : vector<16x384xf32> to vector<16x128xf32>
    %222 = vector.extract_strided_slice %177 {offsets = [0, 640], sizes = [16, 128], strides = [1, 1]} : vector<16x768xf32> to vector<16x128xf32>
    %223 = vector.broadcast %21 : vector<1x128xf32> to vector<16x128xf32>
    %224 = arith.addf %222, %223 : vector<16x128xf32>
    %225 = arith.mulf %212, %224 : vector<16x128xf32>
    %226 = arith.addf %221, %225 : vector<16x128xf32>
    %227 = math.tanh %226 : vector<16x128xf32>
    %228 = vector.extract_strided_slice %160 {offsets = [0, 128], sizes = [16, 128], strides = [1, 1]} : vector<16x256xf32> to vector<16x128xf32>
    %229 = arith.subf %228, %227 : vector<16x128xf32>
    %230 = arith.mulf %220, %229 : vector<16x128xf32>
    %231 = arith.addf %227, %230 : vector<16x128xf32>
    %232 = tpu.concatenate %204, %231 in 1 : vector<16x128xf32>, vector<16x128xf32> -> vector<16x256xf32>
    %233 = arith.truncf %204 : vector<16x128xf32> to vector<16x128xbf16>
    %234 = arith.index_cast %168 : i32 to index
    %c0_56 = arith.constant 0 : index
    %235 = vector.load %arg7[%234, %c0_56] : memref<64x128xbf16, #tpu.memory_space<vmem>>, vector<16x128xbf16>
    tpu.vector_store %arg7[%234, %c0_56], %233 {strides = array<i32>} : memref<64x128xbf16, #tpu.memory_space<vmem>>, vector<16x128xbf16>,
    %236 = arith.truncf %231 : vector<16x128xf32> to vector<16x128xbf16>
    %237 = arith.index_cast %171 : i32 to index
    %c0_57 = arith.constant 0 : index
    %238 = vector.load %arg8[%237, %c0_57] : memref<64x128xbf16, #tpu.memory_space<vmem>>, vector<16x128xbf16>
    tpu.vector_store %arg8[%237, %c0_57], %236 {strides = array<i32>} : memref<64x128xbf16, #tpu.memory_space<vmem>>, vector<16x128xbf16>,
    %c3_i32_58 = arith.constant 3 : i32
    %c16_i32_59 = arith.constant 16 : i32
    %239 = arith.muli %c3_i32_58, %c16_i32_59 : i32
    %240 = tpu.assume_multiple %239, 16 : i32
    %c3_i32_60 = arith.constant 3 : i32
    %241 = arith.subi %c3_i32_60, %c3_i32_58 : i32
    %c16_i32_61 = arith.constant 16 : i32
    %242 = arith.muli %241, %c16_i32_61 : i32
    %243 = tpu.assume_multiple %242, 16 : i32
    %244 = arith.index_cast %240 : i32 to index
    %c0_62 = arith.constant 0 : index
    %245 = vector.load %arg10[%244, %c0_62] : memref<64x384xf32, #tpu.memory_space<vmem>>, vector<16x384xf32>
    %246 = arith.index_cast %243 : i32 to index
    %c0_63 = arith.constant 0 : index
    %247 = vector.load %arg11[%246, %c0_63] : memref<64x384xf32, #tpu.memory_space<vmem>>, vector<16x384xf32>
    %248 = arith.truncf %232 : vector<16x256xf32> to vector<16x256xbf16>
    %cst_64 = arith.constant dense<0.000000e+00> : vector<16x768xf32>
    %249 = tpu.matmul %248, %19, %cst_64 {dimension_numbers = #tpu.dot_dimension_numbers<[1], [0], [0], [1], [0, 0, 1, 1], [], []>} : vector<16x256xbf16>, vector<256x768xbf16>, vector<16x768xf32> -> vector<16x768xf32>
    %250 = vector.extract_strided_slice %245 {offsets = [0, 0], sizes = [16, 128], strides = [1, 1]} : vector<16x384xf32> to vector<16x128xf32>
    %251 = vector.extract_strided_slice %249 {offsets = [0, 0], sizes = [16, 128], strides = [1, 1]} : vector<16x768xf32> to vector<16x128xf32>
    %252 = arith.addf %250, %251 : vector<16x128xf32>
    %253 = arith.negf %252 : vector<16x128xf32>
    %254 = math.exp %253 : vector<16x128xf32>
    %cst_65 = arith.constant 1.000000e+00 : f32
    %255 = vector.broadcast %cst_65 : f32 to vector<16x128xf32>
    %256 = arith.addf %255, %254 : vector<16x128xf32>
    %257 = arith.divf %255, %256 : vector<16x128xf32>
    %258 = vector.extract_strided_slice %245 {offsets = [0, 128], sizes = [16, 128], strides = [1, 1]} : vector<16x384xf32> to vector<16x128xf32>
    %259 = vector.extract_strided_slice %249 {offsets = [0, 128], sizes = [16, 128], strides = [1, 1]} : vector<16x768xf32> to vector<16x128xf32>
    %260 = arith.addf %258, %259 : vector<16x128xf32>
    %261 = arith.negf %260 : vector<16x128xf32>
    %262 = math.exp %261 : vector<16x128xf32>
    %cst_66 = arith.constant 1.000000e+00 : f32
    %263 = vector.broadcast %cst_66 : f32 to vector<16x128xf32>
    %264 = arith.addf %263, %262 : vector<16x128xf32>
    %265 = arith.divf %263, %264 : vector<16x128xf32>
    %266 = vector.extract_strided_slice %245 {offsets = [0, 256], sizes = [16, 128], strides = [1, 1]} : vector<16x384xf32> to vector<16x128xf32>
    %267 = vector.extract_strided_slice %249 {offsets = [0, 256], sizes = [16, 128], strides = [1, 1]} : vector<16x768xf32> to vector<16x128xf32>
    %268 = vector.broadcast %20 : vector<1x128xf32> to vector<16x128xf32>
    %269 = arith.addf %267, %268 : vector<16x128xf32>
    %270 = arith.mulf %257, %269 : vector<16x128xf32>
    %271 = arith.addf %266, %270 : vector<16x128xf32>
    %272 = math.tanh %271 : vector<16x128xf32>
    %273 = vector.extract_strided_slice %232 {offsets = [0, 0], sizes = [16, 128], strides = [1, 1]} : vector<16x256xf32> to vector<16x128xf32>
    %274 = arith.subf %273, %272 : vector<16x128xf32>
    %275 = arith.mulf %265, %274 : vector<16x128xf32>
    %276 = arith.addf %272, %275 : vector<16x128xf32>
    %277 = vector.extract_strided_slice %247 {offsets = [0, 0], sizes = [16, 128], strides = [1, 1]} : vector<16x384xf32> to vector<16x128xf32>
    %278 = vector.extract_strided_slice %249 {offsets = [0, 384], sizes = [16, 128], strides = [1, 1]} : vector<16x768xf32> to vector<16x128xf32>
    %279 = arith.addf %277, %278 : vector<16x128xf32>
    %280 = arith.negf %279 : vector<16x128xf32>
    %281 = math.exp %280 : vector<16x128xf32>
    %cst_67 = arith.constant 1.000000e+00 : f32
    %282 = vector.broadcast %cst_67 : f32 to vector<16x128xf32>
    %283 = arith.addf %282, %281 : vector<16x128xf32>
    %284 = arith.divf %282, %283 : vector<16x128xf32>
    %285 = vector.extract_strided_slice %247 {offsets = [0, 128], sizes = [16, 128], strides = [1, 1]} : vector<16x384xf32> to vector<16x128xf32>
    %286 = vector.extract_strided_slice %249 {offsets = [0, 512], sizes = [16, 128], strides = [1, 1]} : vector<16x768xf32> to vector<16x128xf32>
    %287 = arith.addf %285, %286 : vector<16x128xf32>
    %288 = arith.negf %287 : vector<16x128xf32>
    %289 = math.exp %288 : vector<16x128xf32>
    %cst_68 = arith.constant 1.000000e+00 : f32
    %290 = vector.broadcast %cst_68 : f32 to vector<16x128xf32>
    %291 = arith.addf %290, %289 : vector<16x128xf32>
    %292 = arith.divf %290, %291 : vector<16x128xf32>
    %293 = vector.extract_strided_slice %247 {offsets = [0, 256], sizes = [16, 128], strides = [1, 1]} : vector<16x384xf32> to vector<16x128xf32>
    %294 = vector.extract_strided_slice %249 {offsets = [0, 640], sizes = [16, 128], strides = [1, 1]} : vector<16x768xf32> to vector<16x128xf32>
    %295 = vector.broadcast %21 : vector<1x128xf32> to vector<16x128xf32>
    %296 = arith.addf %294, %295 : vector<16x128xf32>
    %297 = arith.mulf %284, %296 : vector<16x128xf32>
    %298 = arith.addf %293, %297 : vector<16x128xf32>
    %299 = math.tanh %298 : vector<16x128xf32>
    %300 = vector.extract_strided_slice %232 {offsets = [0, 128], sizes = [16, 128], strides = [1, 1]} : vector<16x256xf32> to vector<16x128xf32>
    %301 = arith.subf %300, %299 : vector<16x128xf32>
    %302 = arith.mulf %292, %301 : vector<16x128xf32>
    %303 = arith.addf %299, %302 : vector<16x128xf32>
    %304 = tpu.concatenate %276, %303 in 1 : vector<16x128xf32>, vector<16x128xf32> -> vector<16x256xf32>
    %305 = arith.truncf %276 : vector<16x128xf32> to vector<16x128xbf16>
    %306 = arith.index_cast %240 : i32 to index
    %c0_69 = arith.constant 0 : index
    %307 = vector.load %arg7[%306, %c0_69] : memref<64x128xbf16, #tpu.memory_space<vmem>>, vector<16x128xbf16>
    tpu.vector_store %arg7[%306, %c0_69], %305 {strides = array<i32>} : memref<64x128xbf16, #tpu.memory_space<vmem>>, vector<16x128xbf16>,
    %308 = arith.truncf %303 : vector<16x128xf32> to vector<16x128xbf16>
    %309 = arith.index_cast %243 : i32 to index
    %c0_70 = arith.constant 0 : index
    %310 = vector.load %arg8[%309, %c0_70] : memref<64x128xbf16, #tpu.memory_space<vmem>>, vector<16x128xbf16>
    tpu.vector_store %arg8[%309, %c0_70], %308 {strides = array<i32>} : memref<64x128xbf16, #tpu.memory_space<vmem>>, vector<16x128xbf16>,
    %c4_i32 = arith.constant 4 : i32
    %c0_71 = arith.constant 0 : index
    %c0_72 = arith.constant 0 : index
    %311 = vector.load %arg9[%c0_71, %c0_72] : memref<16x256xf32, #tpu.memory_space<vmem>>, vector<16x256xf32>
    tpu.vector_store %arg9[%c0_71, %c0_72], %304 {strides = array<i32>} : memref<16x256xf32, #tpu.memory_space<vmem>>, vector<16x256xf32>,
    return
  }
  func.func @transform_0(%arg0: i32) -> (i32, i32) {
    %c0_i32 = arith.constant 0 : i32
    %c0_i32_0 = arith.constant 0 : i32
    return %arg0, %c0_i32 : i32, i32
  }
  func.func @transform_1(%arg0: i32) -> (i32, i32) {
    %c1_i32 = arith.constant 1 : i32
    %0 = arith.subi %c1_i32, %arg0 : i32
    %c0_i32 = arith.constant 0 : i32
    %c0_i32_0 = arith.constant 0 : i32
    return %0, %c0_i32 : i32, i32
  }
  func.func @transform_2(%arg0: i32) -> (i32, i32) {
    %c0_i32 = arith.constant 0 : i32
    %c0_i32_0 = arith.constant 0 : i32
    %c0_i32_1 = arith.constant 0 : i32
    return %c0_i32, %c0_i32_0 : i32, i32
  }
  func.func @transform_3(%arg0: i32) -> (i32, i32) {
    %c0_i32 = arith.constant 0 : i32
    %c0_i32_0 = arith.constant 0 : i32
    %c0_i32_1 = arith.constant 0 : i32
    return %c0_i32, %c0_i32_0 : i32, i32
  }
  func.func @transform_4(%arg0: i32) -> (i32, i32) {
    %c0_i32 = arith.constant 0 : i32
    %c0_i32_0 = arith.constant 0 : i32
    %c0_i32_1 = arith.constant 0 : i32
    return %c0_i32, %c0_i32_0 : i32, i32
  }
  func.func @transform_5(%arg0: i32) -> (i32, i32) {
    %c0_i32 = arith.constant 0 : i32
    %c0_i32_0 = arith.constant 0 : i32
    %c0_i32_1 = arith.constant 0 : i32
    return %c0_i32, %c0_i32_0 : i32, i32
  }
  func.func @transform_6(%arg0: i32) -> (i32, i32) {
    %c0_i32 = arith.constant 0 : i32
    %c0_i32_0 = arith.constant 0 : i32
    return %arg0, %c0_i32 : i32, i32
  }
  func.func @transform_7(%arg0: i32) -> (i32, i32) {
    %c1_i32 = arith.constant 1 : i32
    %0 = arith.subi %c1_i32, %arg0 : i32
    %c0_i32 = arith.constant 0 : i32
    %c0_i32_0 = arith.constant 0 : i32
    return %0, %c0_i32 : i32, i32
  }
}

module attributes {stable_mosaic.version = 11 : i64} {
  func.func @_bigru_layer_kernel(%arg0: i32, %arg1: memref<64x128xbf16, #tpu.memory_space<vmem>>, %arg2: memref<64x128xbf16, #tpu.memory_space<vmem>>, %arg3: memref<64x128xbf16, #tpu.memory_space<vmem>>, %arg4: memref<64x128xbf16, #tpu.memory_space<vmem>>, %arg5: memref<256x768xbf16, #tpu.memory_space<vmem>>, %arg6: memref<1x768xf32, #tpu.memory_space<vmem>>, %arg7: memref<256x768xbf16, #tpu.memory_space<vmem>>, %arg8: memref<1x256xf32, #tpu.memory_space<vmem>>, %arg9: memref<16x256xf32, #tpu.memory_space<vmem>>, %arg10: memref<16x256xf32, #tpu.memory_space<vmem>>, %arg11: memref<64x384xf32, #tpu.memory_space<vmem>>, %arg12: memref<64x384xf32, #tpu.memory_space<vmem>>) attributes {dimension_semantics = [#tpu.dimension_semantics<arbitrary>], iteration_bounds = array<i64: 2>, scalar_prefetch = 0 : i64, scratch_operands = 3 : i64, tpu.core_type = #tpu.core_type<tc>, window_params = [{transform_indices = @transform_0, window_bounds = array<i64: 64, 128>}, {transform_indices = @transform_1, window_bounds = array<i64: 64, 128>}, {transform_indices = @transform_2, window_bounds = array<i64: 64, 128>}, {transform_indices = @transform_3, window_bounds = array<i64: 64, 128>}, {pipeline_mode = #tpu.pipeline_mode<synchronous>, transform_indices = @transform_4, window_bounds = array<i64: 256, 768>}, {pipeline_mode = #tpu.pipeline_mode<synchronous>, transform_indices = @transform_5, window_bounds = array<i64: 1, 768>}, {pipeline_mode = #tpu.pipeline_mode<synchronous>, transform_indices = @transform_6, window_bounds = array<i64: 256, 768>}, {pipeline_mode = #tpu.pipeline_mode<synchronous>, transform_indices = @transform_7, window_bounds = array<i64: 1, 256>}, {pipeline_mode = #tpu.pipeline_mode<synchronous>, transform_indices = @transform_8, window_bounds = array<i64: 16, 256>}]} {
    %c0_i32 = arith.constant 0 : i32
    %0 = arith.cmpi eq, %arg0, %c0_i32 : i32
    %1 = arith.extui %0 : i1 to i32
    %c0_i32_0 = arith.constant 0 : i32
    %2 = arith.cmpi ne, %1, %c0_i32_0 : i32
    scf.if %2 {
      %cst_80 = arith.constant 0.000000e+00 : f32
      %302 = vector.broadcast %cst_80 : f32 to vector<16x256xf32>
      %c0_81 = arith.constant 0 : index
      %c0_82 = arith.constant 0 : index
      %303 = vector.load %arg10[%c0_81, %c0_82] : memref<16x256xf32, #tpu.memory_space<vmem>>, vector<16x256xf32>
      tpu.vector_store %arg10[%c0_81, %c0_82], %302 {strides = array<i32>} : memref<16x256xf32, #tpu.memory_space<vmem>>, vector<16x256xf32>,
      %cst_83 = arith.constant 0.000000e+00 : f32
      %304 = vector.broadcast %cst_83 : f32 to vector<16x256xf32>
      %c0_84 = arith.constant 0 : index
      %c0_85 = arith.constant 0 : index
      %305 = vector.load %arg9[%c0_84, %c0_85] : memref<16x256xf32, #tpu.memory_space<vmem>>, vector<16x256xf32>
      tpu.vector_store %arg9[%c0_84, %c0_85], %304 {strides = array<i32>} : memref<16x256xf32, #tpu.memory_space<vmem>>, vector<16x256xf32>,
    } else {
    }
    %c0 = arith.constant 0 : index
    %c0_1 = arith.constant 0 : index
    %3 = vector.load %arg1[%c0, %c0_1] : memref<64x128xbf16, #tpu.memory_space<vmem>>, vector<64x128xbf16>
    %c0_2 = arith.constant 0 : index
    %c0_3 = arith.constant 0 : index
    %4 = vector.load %arg5[%c0_2, %c0_3] : memref<256x768xbf16, #tpu.memory_space<vmem>>, vector<128x384xbf16>
    %cst = arith.constant dense<0.000000e+00> : vector<64x384xf32>
    %5 = tpu.matmul %3, %4, %cst {dimension_numbers = #tpu.dot_dimension_numbers<[1], [0], [0], [1], [0, 0, 1, 1], [], []>} : vector<64x128xbf16>, vector<128x384xbf16>, vector<64x384xf32> -> vector<64x384xf32>
    %c0_4 = arith.constant 0 : index
    %c0_5 = arith.constant 0 : index
    %6 = vector.load %arg2[%c0_4, %c0_5] : memref<64x128xbf16, #tpu.memory_space<vmem>>, vector<64x128xbf16>
    %c128 = arith.constant 128 : index
    %c0_6 = arith.constant 0 : index
    %7 = vector.load %arg5[%c128, %c0_6] : memref<256x768xbf16, #tpu.memory_space<vmem>>, vector<128x384xbf16>
    %cst_7 = arith.constant dense<0.000000e+00> : vector<64x384xf32>
    %8 = tpu.matmul %6, %7, %cst_7 {dimension_numbers = #tpu.dot_dimension_numbers<[1], [0], [0], [1], [0, 0, 1, 1], [], []>} : vector<64x128xbf16>, vector<128x384xbf16>, vector<64x384xf32> -> vector<64x384xf32>
    %9 = arith.addf %5, %8 : vector<64x384xf32>
    %c0_8 = arith.constant 0 : index
    %c0_9 = arith.constant 0 : index
    %10 = vector.load %arg6[%c0_8, %c0_9] : memref<1x768xf32, #tpu.memory_space<vmem>>, vector<1x384xf32>
    %11 = vector.broadcast %10 : vector<1x384xf32> to vector<64x384xf32>
    %12 = arith.addf %9, %11 : vector<64x384xf32>
    %c0_10 = arith.constant 0 : index
    %c0_11 = arith.constant 0 : index
    %13 = vector.load %arg11[%c0_10, %c0_11] : memref<64x384xf32, #tpu.memory_space<vmem>>, vector<64x384xf32>
    tpu.vector_store %arg11[%c0_10, %c0_11], %12 {strides = array<i32>} : memref<64x384xf32, #tpu.memory_space<vmem>>, vector<64x384xf32>,
    %c0_12 = arith.constant 0 : index
    %c0_13 = arith.constant 0 : index
    %14 = vector.load %arg3[%c0_12, %c0_13] : memref<64x128xbf16, #tpu.memory_space<vmem>>, vector<64x128xbf16>
    %c0_14 = arith.constant 0 : index
    %c384 = arith.constant 384 : index
    %15 = vector.load %arg5[%c0_14, %c384] : memref<256x768xbf16, #tpu.memory_space<vmem>>, vector<128x384xbf16>
    %cst_15 = arith.constant dense<0.000000e+00> : vector<64x384xf32>
    %16 = tpu.matmul %14, %15, %cst_15 {dimension_numbers = #tpu.dot_dimension_numbers<[1], [0], [0], [1], [0, 0, 1, 1], [], []>} : vector<64x128xbf16>, vector<128x384xbf16>, vector<64x384xf32> -> vector<64x384xf32>
    %c0_16 = arith.constant 0 : index
    %c0_17 = arith.constant 0 : index
    %17 = vector.load %arg4[%c0_16, %c0_17] : memref<64x128xbf16, #tpu.memory_space<vmem>>, vector<64x128xbf16>
    %c128_18 = arith.constant 128 : index
    %c384_19 = arith.constant 384 : index
    %18 = vector.load %arg5[%c128_18, %c384_19] : memref<256x768xbf16, #tpu.memory_space<vmem>>, vector<128x384xbf16>
    %cst_20 = arith.constant dense<0.000000e+00> : vector<64x384xf32>
    %19 = tpu.matmul %17, %18, %cst_20 {dimension_numbers = #tpu.dot_dimension_numbers<[1], [0], [0], [1], [0, 0, 1, 1], [], []>} : vector<64x128xbf16>, vector<128x384xbf16>, vector<64x384xf32> -> vector<64x384xf32>
    %20 = arith.addf %16, %19 : vector<64x384xf32>
    %c0_21 = arith.constant 0 : index
    %c384_22 = arith.constant 384 : index
    %21 = vector.load %arg6[%c0_21, %c384_22] : memref<1x768xf32, #tpu.memory_space<vmem>>, vector<1x384xf32>
    %22 = vector.broadcast %21 : vector<1x384xf32> to vector<64x384xf32>
    %23 = arith.addf %20, %22 : vector<64x384xf32>
    %c0_23 = arith.constant 0 : index
    %c0_24 = arith.constant 0 : index
    %24 = vector.load %arg12[%c0_23, %c0_24] : memref<64x384xf32, #tpu.memory_space<vmem>>, vector<64x384xf32>
    tpu.vector_store %arg12[%c0_23, %c0_24], %23 {strides = array<i32>} : memref<64x384xf32, #tpu.memory_space<vmem>>, vector<64x384xf32>,
    %c0_25 = arith.constant 0 : index
    %c0_26 = arith.constant 0 : index
    %25 = vector.load %arg7[%c0_25, %c0_26] : memref<256x768xbf16, #tpu.memory_space<vmem>>, vector<256x768xbf16>
    %c0_27 = arith.constant 0 : index
    %c0_28 = arith.constant 0 : index
    %26 = vector.load %arg8[%c0_27, %c0_28] : memref<1x256xf32, #tpu.memory_space<vmem>>, vector<1x128xf32>
    %c0_29 = arith.constant 0 : index
    %c128_30 = arith.constant 128 : index
    %27 = vector.load %arg8[%c0_29, %c128_30] : memref<1x256xf32, #tpu.memory_space<vmem>>, vector<1x128xf32>
    %c0_31 = arith.constant 0 : index
    %c0_32 = arith.constant 0 : index
    %28 = vector.load %arg10[%c0_31, %c0_32] : memref<16x256xf32, #tpu.memory_space<vmem>>, vector<16x256xf32>
    %cst_33 = arith.constant 0.000000e+00 : f32
    %29 = vector.broadcast %cst_33 : f32 to vector<16x256xf32>
    %c0_i32_34 = arith.constant 0 : i32
    %c16_i32 = arith.constant 16 : i32
    %30 = arith.muli %c0_i32_34, %c16_i32 : i32
    %31 = tpu.assume_multiple %30, 16 : i32
    %c3_i32 = arith.constant 3 : i32
    %32 = arith.subi %c3_i32, %c0_i32_34 : i32
    %c16_i32_35 = arith.constant 16 : i32
    %33 = arith.muli %32, %c16_i32_35 : i32
    %34 = tpu.assume_multiple %33, 16 : i32
    %35 = arith.index_cast %31 : i32 to index
    %c0_36 = arith.constant 0 : index
    %36 = vector.load %arg11[%35, %c0_36] : memref<64x384xf32, #tpu.memory_space<vmem>>, vector<16x384xf32>
    %37 = arith.index_cast %34 : i32 to index
    %c0_37 = arith.constant 0 : index
    %38 = vector.load %arg12[%37, %c0_37] : memref<64x384xf32, #tpu.memory_space<vmem>>, vector<16x384xf32>
    %39 = arith.truncf %28 : vector<16x256xf32> to vector<16x256xbf16>
    %cst_38 = arith.constant dense<0.000000e+00> : vector<16x768xf32>
    %40 = tpu.matmul %39, %25, %cst_38 {dimension_numbers = #tpu.dot_dimension_numbers<[1], [0], [0], [1], [0, 0, 1, 1], [], []>} : vector<16x256xbf16>, vector<256x768xbf16>, vector<16x768xf32> -> vector<16x768xf32>
    %41 = vector.extract_strided_slice %36 {offsets = [0, 0], sizes = [16, 128], strides = [1, 1]} : vector<16x384xf32> to vector<16x128xf32>
    %42 = vector.extract_strided_slice %40 {offsets = [0, 0], sizes = [16, 128], strides = [1, 1]} : vector<16x768xf32> to vector<16x128xf32>
    %43 = arith.addf %41, %42 : vector<16x128xf32>
    %44 = arith.negf %43 : vector<16x128xf32>
    %45 = math.exp %44 : vector<16x128xf32>
    %cst_39 = arith.constant 1.000000e+00 : f32
    %46 = vector.broadcast %cst_39 : f32 to vector<16x128xf32>
    %47 = arith.addf %46, %45 : vector<16x128xf32>
    %48 = arith.divf %46, %47 : vector<16x128xf32>
    %49 = vector.extract_strided_slice %36 {offsets = [0, 128], sizes = [16, 128], strides = [1, 1]} : vector<16x384xf32> to vector<16x128xf32>
    %50 = vector.extract_strided_slice %40 {offsets = [0, 128], sizes = [16, 128], strides = [1, 1]} : vector<16x768xf32> to vector<16x128xf32>
    %51 = arith.addf %49, %50 : vector<16x128xf32>
    %52 = arith.negf %51 : vector<16x128xf32>
    %53 = math.exp %52 : vector<16x128xf32>
    %cst_40 = arith.constant 1.000000e+00 : f32
    %54 = vector.broadcast %cst_40 : f32 to vector<16x128xf32>
    %55 = arith.addf %54, %53 : vector<16x128xf32>
    %56 = arith.divf %54, %55 : vector<16x128xf32>
    %57 = vector.extract_strided_slice %36 {offsets = [0, 256], sizes = [16, 128], strides = [1, 1]} : vector<16x384xf32> to vector<16x128xf32>
    %58 = vector.extract_strided_slice %40 {offsets = [0, 256], sizes = [16, 128], strides = [1, 1]} : vector<16x768xf32> to vector<16x128xf32>
    %59 = vector.broadcast %26 : vector<1x128xf32> to vector<16x128xf32>
    %60 = arith.addf %58, %59 : vector<16x128xf32>
    %61 = arith.mulf %48, %60 : vector<16x128xf32>
    %62 = arith.addf %57, %61 : vector<16x128xf32>
    %63 = math.tanh %62 : vector<16x128xf32>
    %64 = vector.extract_strided_slice %28 {offsets = [0, 0], sizes = [16, 128], strides = [1, 1]} : vector<16x256xf32> to vector<16x128xf32>
    %65 = arith.subf %64, %63 : vector<16x128xf32>
    %66 = arith.mulf %56, %65 : vector<16x128xf32>
    %67 = arith.addf %63, %66 : vector<16x128xf32>
    %68 = vector.extract_strided_slice %38 {offsets = [0, 0], sizes = [16, 128], strides = [1, 1]} : vector<16x384xf32> to vector<16x128xf32>
    %69 = vector.extract_strided_slice %40 {offsets = [0, 384], sizes = [16, 128], strides = [1, 1]} : vector<16x768xf32> to vector<16x128xf32>
    %70 = arith.addf %68, %69 : vector<16x128xf32>
    %71 = arith.negf %70 : vector<16x128xf32>
    %72 = math.exp %71 : vector<16x128xf32>
    %cst_41 = arith.constant 1.000000e+00 : f32
    %73 = vector.broadcast %cst_41 : f32 to vector<16x128xf32>
    %74 = arith.addf %73, %72 : vector<16x128xf32>
    %75 = arith.divf %73, %74 : vector<16x128xf32>
    %76 = vector.extract_strided_slice %38 {offsets = [0, 128], sizes = [16, 128], strides = [1, 1]} : vector<16x384xf32> to vector<16x128xf32>
    %77 = vector.extract_strided_slice %40 {offsets = [0, 512], sizes = [16, 128], strides = [1, 1]} : vector<16x768xf32> to vector<16x128xf32>
    %78 = arith.addf %76, %77 : vector<16x128xf32>
    %79 = arith.negf %78 : vector<16x128xf32>
    %80 = math.exp %79 : vector<16x128xf32>
    %cst_42 = arith.constant 1.000000e+00 : f32
    %81 = vector.broadcast %cst_42 : f32 to vector<16x128xf32>
    %82 = arith.addf %81, %80 : vector<16x128xf32>
    %83 = arith.divf %81, %82 : vector<16x128xf32>
    %84 = vector.extract_strided_slice %38 {offsets = [0, 256], sizes = [16, 128], strides = [1, 1]} : vector<16x384xf32> to vector<16x128xf32>
    %85 = vector.extract_strided_slice %40 {offsets = [0, 640], sizes = [16, 128], strides = [1, 1]} : vector<16x768xf32> to vector<16x128xf32>
    %86 = vector.broadcast %27 : vector<1x128xf32> to vector<16x128xf32>
    %87 = arith.addf %85, %86 : vector<16x128xf32>
    %88 = arith.mulf %75, %87 : vector<16x128xf32>
    %89 = arith.addf %84, %88 : vector<16x128xf32>
    %90 = math.tanh %89 : vector<16x128xf32>
    %91 = vector.extract_strided_slice %28 {offsets = [0, 128], sizes = [16, 128], strides = [1, 1]} : vector<16x256xf32> to vector<16x128xf32>
    %92 = arith.subf %91, %90 : vector<16x128xf32>
    %93 = arith.mulf %83, %92 : vector<16x128xf32>
    %94 = arith.addf %90, %93 : vector<16x128xf32>
    %95 = tpu.concatenate %67, %94 in 1 : vector<16x128xf32>, vector<16x128xf32> -> vector<16x256xf32>
    %96 = arith.addf %29, %95 : vector<16x256xf32>
    %c1_i32 = arith.constant 1 : i32
    %c16_i32_43 = arith.constant 16 : i32
    %97 = arith.muli %c1_i32, %c16_i32_43 : i32
    %98 = tpu.assume_multiple %97, 16 : i32
    %c3_i32_44 = arith.constant 3 : i32
    %99 = arith.subi %c3_i32_44, %c1_i32 : i32
    %c16_i32_45 = arith.constant 16 : i32
    %100 = arith.muli %99, %c16_i32_45 : i32
    %101 = tpu.assume_multiple %100, 16 : i32
    %102 = arith.index_cast %98 : i32 to index
    %c0_46 = arith.constant 0 : index
    %103 = vector.load %arg11[%102, %c0_46] : memref<64x384xf32, #tpu.memory_space<vmem>>, vector<16x384xf32>
    %104 = arith.index_cast %101 : i32 to index
    %c0_47 = arith.constant 0 : index
    %105 = vector.load %arg12[%104, %c0_47] : memref<64x384xf32, #tpu.memory_space<vmem>>, vector<16x384xf32>
    %106 = arith.truncf %95 : vector<16x256xf32> to vector<16x256xbf16>
    %cst_48 = arith.constant dense<0.000000e+00> : vector<16x768xf32>
    %107 = tpu.matmul %106, %25, %cst_48 {dimension_numbers = #tpu.dot_dimension_numbers<[1], [0], [0], [1], [0, 0, 1, 1], [], []>} : vector<16x256xbf16>, vector<256x768xbf16>, vector<16x768xf32> -> vector<16x768xf32>
    %108 = vector.extract_strided_slice %103 {offsets = [0, 0], sizes = [16, 128], strides = [1, 1]} : vector<16x384xf32> to vector<16x128xf32>
    %109 = vector.extract_strided_slice %107 {offsets = [0, 0], sizes = [16, 128], strides = [1, 1]} : vector<16x768xf32> to vector<16x128xf32>
    %110 = arith.addf %108, %109 : vector<16x128xf32>
    %111 = arith.negf %110 : vector<16x128xf32>
    %112 = math.exp %111 : vector<16x128xf32>
    %cst_49 = arith.constant 1.000000e+00 : f32
    %113 = vector.broadcast %cst_49 : f32 to vector<16x128xf32>
    %114 = arith.addf %113, %112 : vector<16x128xf32>
    %115 = arith.divf %113, %114 : vector<16x128xf32>
    %116 = vector.extract_strided_slice %103 {offsets = [0, 128], sizes = [16, 128], strides = [1, 1]} : vector<16x384xf32> to vector<16x128xf32>
    %117 = vector.extract_strided_slice %107 {offsets = [0, 128], sizes = [16, 128], strides = [1, 1]} : vector<16x768xf32> to vector<16x128xf32>
    %118 = arith.addf %116, %117 : vector<16x128xf32>
    %119 = arith.negf %118 : vector<16x128xf32>
    %120 = math.exp %119 : vector<16x128xf32>
    %cst_50 = arith.constant 1.000000e+00 : f32
    %121 = vector.broadcast %cst_50 : f32 to vector<16x128xf32>
    %122 = arith.addf %121, %120 : vector<16x128xf32>
    %123 = arith.divf %121, %122 : vector<16x128xf32>
    %124 = vector.extract_strided_slice %103 {offsets = [0, 256], sizes = [16, 128], strides = [1, 1]} : vector<16x384xf32> to vector<16x128xf32>
    %125 = vector.extract_strided_slice %107 {offsets = [0, 256], sizes = [16, 128], strides = [1, 1]} : vector<16x768xf32> to vector<16x128xf32>
    %126 = vector.broadcast %26 : vector<1x128xf32> to vector<16x128xf32>
    %127 = arith.addf %125, %126 : vector<16x128xf32>
    %128 = arith.mulf %115, %127 : vector<16x128xf32>
    %129 = arith.addf %124, %128 : vector<16x128xf32>
    %130 = math.tanh %129 : vector<16x128xf32>
    %131 = vector.extract_strided_slice %95 {offsets = [0, 0], sizes = [16, 128], strides = [1, 1]} : vector<16x256xf32> to vector<16x128xf32>
    %132 = arith.subf %131, %130 : vector<16x128xf32>
    %133 = arith.mulf %123, %132 : vector<16x128xf32>
    %134 = arith.addf %130, %133 : vector<16x128xf32>
    %135 = vector.extract_strided_slice %105 {offsets = [0, 0], sizes = [16, 128], strides = [1, 1]} : vector<16x384xf32> to vector<16x128xf32>
    %136 = vector.extract_strided_slice %107 {offsets = [0, 384], sizes = [16, 128], strides = [1, 1]} : vector<16x768xf32> to vector<16x128xf32>
    %137 = arith.addf %135, %136 : vector<16x128xf32>
    %138 = arith.negf %137 : vector<16x128xf32>
    %139 = math.exp %138 : vector<16x128xf32>
    %cst_51 = arith.constant 1.000000e+00 : f32
    %140 = vector.broadcast %cst_51 : f32 to vector<16x128xf32>
    %141 = arith.addf %140, %139 : vector<16x128xf32>
    %142 = arith.divf %140, %141 : vector<16x128xf32>
    %143 = vector.extract_strided_slice %105 {offsets = [0, 128], sizes = [16, 128], strides = [1, 1]} : vector<16x384xf32> to vector<16x128xf32>
    %144 = vector.extract_strided_slice %107 {offsets = [0, 512], sizes = [16, 128], strides = [1, 1]} : vector<16x768xf32> to vector<16x128xf32>
    %145 = arith.addf %143, %144 : vector<16x128xf32>
    %146 = arith.negf %145 : vector<16x128xf32>
    %147 = math.exp %146 : vector<16x128xf32>
    %cst_52 = arith.constant 1.000000e+00 : f32
    %148 = vector.broadcast %cst_52 : f32 to vector<16x128xf32>
    %149 = arith.addf %148, %147 : vector<16x128xf32>
    %150 = arith.divf %148, %149 : vector<16x128xf32>
    %151 = vector.extract_strided_slice %105 {offsets = [0, 256], sizes = [16, 128], strides = [1, 1]} : vector<16x384xf32> to vector<16x128xf32>
    %152 = vector.extract_strided_slice %107 {offsets = [0, 640], sizes = [16, 128], strides = [1, 1]} : vector<16x768xf32> to vector<16x128xf32>
    %153 = vector.broadcast %27 : vector<1x128xf32> to vector<16x128xf32>
    %154 = arith.addf %152, %153 : vector<16x128xf32>
    %155 = arith.mulf %142, %154 : vector<16x128xf32>
    %156 = arith.addf %151, %155 : vector<16x128xf32>
    %157 = math.tanh %156 : vector<16x128xf32>
    %158 = vector.extract_strided_slice %95 {offsets = [0, 128], sizes = [16, 128], strides = [1, 1]} : vector<16x256xf32> to vector<16x128xf32>
    %159 = arith.subf %158, %157 : vector<16x128xf32>
    %160 = arith.mulf %150, %159 : vector<16x128xf32>
    %161 = arith.addf %157, %160 : vector<16x128xf32>
    %162 = tpu.concatenate %134, %161 in 1 : vector<16x128xf32>, vector<16x128xf32> -> vector<16x256xf32>
    %163 = arith.addf %96, %162 : vector<16x256xf32>
    %c2_i32 = arith.constant 2 : i32
    %c16_i32_53 = arith.constant 16 : i32
    %164 = arith.muli %c2_i32, %c16_i32_53 : i32
    %165 = tpu.assume_multiple %164, 16 : i32
    %c3_i32_54 = arith.constant 3 : i32
    %166 = arith.subi %c3_i32_54, %c2_i32 : i32
    %c16_i32_55 = arith.constant 16 : i32
    %167 = arith.muli %166, %c16_i32_55 : i32
    %168 = tpu.assume_multiple %167, 16 : i32
    %169 = arith.index_cast %165 : i32 to index
    %c0_56 = arith.constant 0 : index
    %170 = vector.load %arg11[%169, %c0_56] : memref<64x384xf32, #tpu.memory_space<vmem>>, vector<16x384xf32>
    %171 = arith.index_cast %168 : i32 to index
    %c0_57 = arith.constant 0 : index
    %172 = vector.load %arg12[%171, %c0_57] : memref<64x384xf32, #tpu.memory_space<vmem>>, vector<16x384xf32>
    %173 = arith.truncf %162 : vector<16x256xf32> to vector<16x256xbf16>
    %cst_58 = arith.constant dense<0.000000e+00> : vector<16x768xf32>
    %174 = tpu.matmul %173, %25, %cst_58 {dimension_numbers = #tpu.dot_dimension_numbers<[1], [0], [0], [1], [0, 0, 1, 1], [], []>} : vector<16x256xbf16>, vector<256x768xbf16>, vector<16x768xf32> -> vector<16x768xf32>
    %175 = vector.extract_strided_slice %170 {offsets = [0, 0], sizes = [16, 128], strides = [1, 1]} : vector<16x384xf32> to vector<16x128xf32>
    %176 = vector.extract_strided_slice %174 {offsets = [0, 0], sizes = [16, 128], strides = [1, 1]} : vector<16x768xf32> to vector<16x128xf32>
    %177 = arith.addf %175, %176 : vector<16x128xf32>
    %178 = arith.negf %177 : vector<16x128xf32>
    %179 = math.exp %178 : vector<16x128xf32>
    %cst_59 = arith.constant 1.000000e+00 : f32
    %180 = vector.broadcast %cst_59 : f32 to vector<16x128xf32>
    %181 = arith.addf %180, %179 : vector<16x128xf32>
    %182 = arith.divf %180, %181 : vector<16x128xf32>
    %183 = vector.extract_strided_slice %170 {offsets = [0, 128], sizes = [16, 128], strides = [1, 1]} : vector<16x384xf32> to vector<16x128xf32>
    %184 = vector.extract_strided_slice %174 {offsets = [0, 128], sizes = [16, 128], strides = [1, 1]} : vector<16x768xf32> to vector<16x128xf32>
    %185 = arith.addf %183, %184 : vector<16x128xf32>
    %186 = arith.negf %185 : vector<16x128xf32>
    %187 = math.exp %186 : vector<16x128xf32>
    %cst_60 = arith.constant 1.000000e+00 : f32
    %188 = vector.broadcast %cst_60 : f32 to vector<16x128xf32>
    %189 = arith.addf %188, %187 : vector<16x128xf32>
    %190 = arith.divf %188, %189 : vector<16x128xf32>
    %191 = vector.extract_strided_slice %170 {offsets = [0, 256], sizes = [16, 128], strides = [1, 1]} : vector<16x384xf32> to vector<16x128xf32>
    %192 = vector.extract_strided_slice %174 {offsets = [0, 256], sizes = [16, 128], strides = [1, 1]} : vector<16x768xf32> to vector<16x128xf32>
    %193 = vector.broadcast %26 : vector<1x128xf32> to vector<16x128xf32>
    %194 = arith.addf %192, %193 : vector<16x128xf32>
    %195 = arith.mulf %182, %194 : vector<16x128xf32>
    %196 = arith.addf %191, %195 : vector<16x128xf32>
    %197 = math.tanh %196 : vector<16x128xf32>
    %198 = vector.extract_strided_slice %162 {offsets = [0, 0], sizes = [16, 128], strides = [1, 1]} : vector<16x256xf32> to vector<16x128xf32>
    %199 = arith.subf %198, %197 : vector<16x128xf32>
    %200 = arith.mulf %190, %199 : vector<16x128xf32>
    %201 = arith.addf %197, %200 : vector<16x128xf32>
    %202 = vector.extract_strided_slice %172 {offsets = [0, 0], sizes = [16, 128], strides = [1, 1]} : vector<16x384xf32> to vector<16x128xf32>
    %203 = vector.extract_strided_slice %174 {offsets = [0, 384], sizes = [16, 128], strides = [1, 1]} : vector<16x768xf32> to vector<16x128xf32>
    %204 = arith.addf %202, %203 : vector<16x128xf32>
    %205 = arith.negf %204 : vector<16x128xf32>
    %206 = math.exp %205 : vector<16x128xf32>
    %cst_61 = arith.constant 1.000000e+00 : f32
    %207 = vector.broadcast %cst_61 : f32 to vector<16x128xf32>
    %208 = arith.addf %207, %206 : vector<16x128xf32>
    %209 = arith.divf %207, %208 : vector<16x128xf32>
    %210 = vector.extract_strided_slice %172 {offsets = [0, 128], sizes = [16, 128], strides = [1, 1]} : vector<16x384xf32> to vector<16x128xf32>
    %211 = vector.extract_strided_slice %174 {offsets = [0, 512], sizes = [16, 128], strides = [1, 1]} : vector<16x768xf32> to vector<16x128xf32>
    %212 = arith.addf %210, %211 : vector<16x128xf32>
    %213 = arith.negf %212 : vector<16x128xf32>
    %214 = math.exp %213 : vector<16x128xf32>
    %cst_62 = arith.constant 1.000000e+00 : f32
    %215 = vector.broadcast %cst_62 : f32 to vector<16x128xf32>
    %216 = arith.addf %215, %214 : vector<16x128xf32>
    %217 = arith.divf %215, %216 : vector<16x128xf32>
    %218 = vector.extract_strided_slice %172 {offsets = [0, 256], sizes = [16, 128], strides = [1, 1]} : vector<16x384xf32> to vector<16x128xf32>
    %219 = vector.extract_strided_slice %174 {offsets = [0, 640], sizes = [16, 128], strides = [1, 1]} : vector<16x768xf32> to vector<16x128xf32>
    %220 = vector.broadcast %27 : vector<1x128xf32> to vector<16x128xf32>
    %221 = arith.addf %219, %220 : vector<16x128xf32>
    %222 = arith.mulf %209, %221 : vector<16x128xf32>
    %223 = arith.addf %218, %222 : vector<16x128xf32>
    %224 = math.tanh %223 : vector<16x128xf32>
    %225 = vector.extract_strided_slice %162 {offsets = [0, 128], sizes = [16, 128], strides = [1, 1]} : vector<16x256xf32> to vector<16x128xf32>
    %226 = arith.subf %225, %224 : vector<16x128xf32>
    %227 = arith.mulf %217, %226 : vector<16x128xf32>
    %228 = arith.addf %224, %227 : vector<16x128xf32>
    %229 = tpu.concatenate %201, %228 in 1 : vector<16x128xf32>, vector<16x128xf32> -> vector<16x256xf32>
    %230 = arith.addf %163, %229 : vector<16x256xf32>
    %c3_i32_63 = arith.constant 3 : i32
    %c16_i32_64 = arith.constant 16 : i32
    %231 = arith.muli %c3_i32_63, %c16_i32_64 : i32
    %232 = tpu.assume_multiple %231, 16 : i32
    %c3_i32_65 = arith.constant 3 : i32
    %233 = arith.subi %c3_i32_65, %c3_i32_63 : i32
    %c16_i32_66 = arith.constant 16 : i32
    %234 = arith.muli %233, %c16_i32_66 : i32
    %235 = tpu.assume_multiple %234, 16 : i32
    %236 = arith.index_cast %232 : i32 to index
    %c0_67 = arith.constant 0 : index
    %237 = vector.load %arg11[%236, %c0_67] : memref<64x384xf32, #tpu.memory_space<vmem>>, vector<16x384xf32>
    %238 = arith.index_cast %235 : i32 to index
    %c0_68 = arith.constant 0 : index
    %239 = vector.load %arg12[%238, %c0_68] : memref<64x384xf32, #tpu.memory_space<vmem>>, vector<16x384xf32>
    %240 = arith.truncf %229 : vector<16x256xf32> to vector<16x256xbf16>
    %cst_69 = arith.constant dense<0.000000e+00> : vector<16x768xf32>
    %241 = tpu.matmul %240, %25, %cst_69 {dimension_numbers = #tpu.dot_dimension_numbers<[1], [0], [0], [1], [0, 0, 1, 1], [], []>} : vector<16x256xbf16>, vector<256x768xbf16>, vector<16x768xf32> -> vector<16x768xf32>
    %242 = vector.extract_strided_slice %237 {offsets = [0, 0], sizes = [16, 128], strides = [1, 1]} : vector<16x384xf32> to vector<16x128xf32>
    %243 = vector.extract_strided_slice %241 {offsets = [0, 0], sizes = [16, 128], strides = [1, 1]} : vector<16x768xf32> to vector<16x128xf32>
    %244 = arith.addf %242, %243 : vector<16x128xf32>
    %245 = arith.negf %244 : vector<16x128xf32>
    %246 = math.exp %245 : vector<16x128xf32>
    %cst_70 = arith.constant 1.000000e+00 : f32
    %247 = vector.broadcast %cst_70 : f32 to vector<16x128xf32>
    %248 = arith.addf %247, %246 : vector<16x128xf32>
    %249 = arith.divf %247, %248 : vector<16x128xf32>
    %250 = vector.extract_strided_slice %237 {offsets = [0, 128], sizes = [16, 128], strides = [1, 1]} : vector<16x384xf32> to vector<16x128xf32>
    %251 = vector.extract_strided_slice %241 {offsets = [0, 128], sizes = [16, 128], strides = [1, 1]} : vector<16x768xf32> to vector<16x128xf32>
    %252 = arith.addf %250, %251 : vector<16x128xf32>
    %253 = arith.negf %252 : vector<16x128xf32>
    %254 = math.exp %253 : vector<16x128xf32>
    %cst_71 = arith.constant 1.000000e+00 : f32
    %255 = vector.broadcast %cst_71 : f32 to vector<16x128xf32>
    %256 = arith.addf %255, %254 : vector<16x128xf32>
    %257 = arith.divf %255, %256 : vector<16x128xf32>
    %258 = vector.extract_strided_slice %237 {offsets = [0, 256], sizes = [16, 128], strides = [1, 1]} : vector<16x384xf32> to vector<16x128xf32>
    %259 = vector.extract_strided_slice %241 {offsets = [0, 256], sizes = [16, 128], strides = [1, 1]} : vector<16x768xf32> to vector<16x128xf32>
    %260 = vector.broadcast %26 : vector<1x128xf32> to vector<16x128xf32>
    %261 = arith.addf %259, %260 : vector<16x128xf32>
    %262 = arith.mulf %249, %261 : vector<16x128xf32>
    %263 = arith.addf %258, %262 : vector<16x128xf32>
    %264 = math.tanh %263 : vector<16x128xf32>
    %265 = vector.extract_strided_slice %229 {offsets = [0, 0], sizes = [16, 128], strides = [1, 1]} : vector<16x256xf32> to vector<16x128xf32>
    %266 = arith.subf %265, %264 : vector<16x128xf32>
    %267 = arith.mulf %257, %266 : vector<16x128xf32>
    %268 = arith.addf %264, %267 : vector<16x128xf32>
    %269 = vector.extract_strided_slice %239 {offsets = [0, 0], sizes = [16, 128], strides = [1, 1]} : vector<16x384xf32> to vector<16x128xf32>
    %270 = vector.extract_strided_slice %241 {offsets = [0, 384], sizes = [16, 128], strides = [1, 1]} : vector<16x768xf32> to vector<16x128xf32>
    %271 = arith.addf %269, %270 : vector<16x128xf32>
    %272 = arith.negf %271 : vector<16x128xf32>
    %273 = math.exp %272 : vector<16x128xf32>
    %cst_72 = arith.constant 1.000000e+00 : f32
    %274 = vector.broadcast %cst_72 : f32 to vector<16x128xf32>
    %275 = arith.addf %274, %273 : vector<16x128xf32>
    %276 = arith.divf %274, %275 : vector<16x128xf32>
    %277 = vector.extract_strided_slice %239 {offsets = [0, 128], sizes = [16, 128], strides = [1, 1]} : vector<16x384xf32> to vector<16x128xf32>
    %278 = vector.extract_strided_slice %241 {offsets = [0, 512], sizes = [16, 128], strides = [1, 1]} : vector<16x768xf32> to vector<16x128xf32>
    %279 = arith.addf %277, %278 : vector<16x128xf32>
    %280 = arith.negf %279 : vector<16x128xf32>
    %281 = math.exp %280 : vector<16x128xf32>
    %cst_73 = arith.constant 1.000000e+00 : f32
    %282 = vector.broadcast %cst_73 : f32 to vector<16x128xf32>
    %283 = arith.addf %282, %281 : vector<16x128xf32>
    %284 = arith.divf %282, %283 : vector<16x128xf32>
    %285 = vector.extract_strided_slice %239 {offsets = [0, 256], sizes = [16, 128], strides = [1, 1]} : vector<16x384xf32> to vector<16x128xf32>
    %286 = vector.extract_strided_slice %241 {offsets = [0, 640], sizes = [16, 128], strides = [1, 1]} : vector<16x768xf32> to vector<16x128xf32>
    %287 = vector.broadcast %27 : vector<1x128xf32> to vector<16x128xf32>
    %288 = arith.addf %286, %287 : vector<16x128xf32>
    %289 = arith.mulf %276, %288 : vector<16x128xf32>
    %290 = arith.addf %285, %289 : vector<16x128xf32>
    %291 = math.tanh %290 : vector<16x128xf32>
    %292 = vector.extract_strided_slice %229 {offsets = [0, 128], sizes = [16, 128], strides = [1, 1]} : vector<16x256xf32> to vector<16x128xf32>
    %293 = arith.subf %292, %291 : vector<16x128xf32>
    %294 = arith.mulf %284, %293 : vector<16x128xf32>
    %295 = arith.addf %291, %294 : vector<16x128xf32>
    %296 = tpu.concatenate %268, %295 in 1 : vector<16x128xf32>, vector<16x128xf32> -> vector<16x256xf32>
    %297 = arith.addf %230, %296 : vector<16x256xf32>
    %c4_i32 = arith.constant 4 : i32
    %c0_74 = arith.constant 0 : index
    %c0_75 = arith.constant 0 : index
    %298 = vector.load %arg9[%c0_74, %c0_75] : memref<16x256xf32, #tpu.memory_space<vmem>>, vector<16x256xf32>
    %299 = arith.addf %298, %297 : vector<16x256xf32>
    %c0_76 = arith.constant 0 : index
    %c0_77 = arith.constant 0 : index
    %300 = vector.load %arg9[%c0_76, %c0_77] : memref<16x256xf32, #tpu.memory_space<vmem>>, vector<16x256xf32>
    tpu.vector_store %arg9[%c0_76, %c0_77], %299 {strides = array<i32>} : memref<16x256xf32, #tpu.memory_space<vmem>>, vector<16x256xf32>,
    %c0_78 = arith.constant 0 : index
    %c0_79 = arith.constant 0 : index
    %301 = vector.load %arg10[%c0_78, %c0_79] : memref<16x256xf32, #tpu.memory_space<vmem>>, vector<16x256xf32>
    tpu.vector_store %arg10[%c0_78, %c0_79], %296 {strides = array<i32>} : memref<16x256xf32, #tpu.memory_space<vmem>>, vector<16x256xf32>,
    return
  }
  func.func @transform_0(%arg0: i32) -> (i32, i32) {
    %c0_i32 = arith.constant 0 : i32
    %c0_i32_0 = arith.constant 0 : i32
    return %arg0, %c0_i32 : i32, i32
  }
  func.func @transform_1(%arg0: i32) -> (i32, i32) {
    %c0_i32 = arith.constant 0 : i32
    %c0_i32_0 = arith.constant 0 : i32
    return %arg0, %c0_i32 : i32, i32
  }
  func.func @transform_2(%arg0: i32) -> (i32, i32) {
    %c1_i32 = arith.constant 1 : i32
    %0 = arith.subi %c1_i32, %arg0 : i32
    %c0_i32 = arith.constant 0 : i32
    %c0_i32_0 = arith.constant 0 : i32
    return %0, %c0_i32 : i32, i32
  }
  func.func @transform_3(%arg0: i32) -> (i32, i32) {
    %c1_i32 = arith.constant 1 : i32
    %0 = arith.subi %c1_i32, %arg0 : i32
    %c0_i32 = arith.constant 0 : i32
    %c0_i32_0 = arith.constant 0 : i32
    return %0, %c0_i32 : i32, i32
  }
  func.func @transform_4(%arg0: i32) -> (i32, i32) {
    %c0_i32 = arith.constant 0 : i32
    %c0_i32_0 = arith.constant 0 : i32
    %c0_i32_1 = arith.constant 0 : i32
    return %c0_i32, %c0_i32_0 : i32, i32
  }
  func.func @transform_5(%arg0: i32) -> (i32, i32) {
    %c0_i32 = arith.constant 0 : i32
    %c0_i32_0 = arith.constant 0 : i32
    %c0_i32_1 = arith.constant 0 : i32
    return %c0_i32, %c0_i32_0 : i32, i32
  }
  func.func @transform_6(%arg0: i32) -> (i32, i32) {
    %c0_i32 = arith.constant 0 : i32
    %c0_i32_0 = arith.constant 0 : i32
    %c0_i32_1 = arith.constant 0 : i32
    return %c0_i32, %c0_i32_0 : i32, i32
  }
  func.func @transform_7(%arg0: i32) -> (i32, i32) {
    %c0_i32 = arith.constant 0 : i32
    %c0_i32_0 = arith.constant 0 : i32
    %c0_i32_1 = arith.constant 0 : i32
    return %c0_i32, %c0_i32_0 : i32, i32
  }
  func.func @transform_8(%arg0: i32) -> (i32, i32) {
    %c0_i32 = arith.constant 0 : i32
    %c0_i32_0 = arith.constant 0 : i32
    %c0_i32_1 = arith.constant 0 : i32
    return %c0_i32, %c0_i32_0 : i32, i32
  }
}

</mosaic_0001>

<llo_original>
// kernel: bigru_forward.2
$region0: #{bigru_forward.2}
  #allocation0 [shape = 'u32[]', space=smem, size = 0x4, offset = 0x4, fixed_abs, tag = 'smem constant byte address 0x4 - core index']
  #allocation1 [shape = 'u32[144,128]{1,0:T(1,128)}', space=vmem, size = 0x12000, scoped, tag = 'internal scratch']
  #allocation2 [shape = 'f32[16,256]{1,0:T(8,128)}', space=vmem, size = 0x4000, scoped, tag = 'scratch operand']
  #allocation3 [shape = 'f32[64,384]{1,0:T(8,128)}', space=vmem, size = 0x18000, scoped, tag = 'scratch operand']
  #allocation4 [shape = 'f32[64,384]{1,0:T(8,128)}', space=vmem, size = 0x18000, scoped, tag = 'scratch operand']
  %s0 = inlined_call_operand.vmem [shape: f32[128,16], index: 0, kind: input, shape index: {}, may-alias: {0,1}]
  %s1 = inlined_call_operand.vmem [shape: f32[128,16], index: 1, kind: input, shape index: {}, may-alias: {0,1}]
  %s2 = inlined_call_operand.hbm [shape: bf16[16,768], index: 2, kind: input, shape index: {}]
  %s3 = inlined_call_operand.hbm [shape: f32[1,768], index: 3, kind: input, shape index: {}]
  %s4 = inlined_call_operand.hbm [shape: bf16[256,768], index: 4, kind: input, shape index: {}]
  %s5 = inlined_call_operand.hbm [shape: f32[1,256], index: 5, kind: input, shape index: {}]
  %s6 = inlined_call_operand.vmem [shape: bf16[128,128], index: 6, kind: output, shape index: {0}]
  %s7 = inlined_call_operand.vmem [shape: bf16[128,128], index: 7, kind: output, shape index: {1}]
  %8 = xla_tuple %s6, %s7
  %s9 = sld [smem:[#allocation0]]
  $region85: #{bigru_forward.2} parent=0
    _
  %s11 = ssub.s32 1, %s9
  %s12 = scalar_select 0, %s11, %s9
  $region1: #{bigru_forward.2} parent=0
    #allocation5 [shape = 'u8[24576]{0}', space=vmem, size = 0x6000, scoped, tag = 'input window, operand 2, single buffered']
    #allocation6 [shape = 's32[2]{0}', space=sflag, size = 0x8, scoped, tag = 'scoped memory for bigru_forward.2']
    #allocation7 [shape = 'u8[3072]{0}', space=vmem, size = 0xc00, scoped, tag = 'input window, operand 3, single buffered']
    #allocation8 [shape = 's32[1]{0}', space=sflag, size = 0x4, scoped, tag = 'scoped memory for bigru_forward.2']
    #allocation9 [shape = 'u8[393216]{0}', space=vmem, size = 0x60000, scoped, tag = 'input window, operand 4, single buffered']
    #allocation10 [shape = 'u8[1024]{0}', space=vmem, size = 0x400, scoped, tag = 'input window, operand 5, single buffered']
    #allocation11 [shape = 's32[1]{0}', space=sflag, size = 0x4, scoped, tag = 'scoped memory for bigru_forward.2']
    %13 = vsyncpa [#allocation6], 0
    %14 = vsyncpa [#allocation8], 0
    %15 = vsyncpa [#allocation11], 0
    loop: start=0, step=1, limit=4
    $region2: #{bigru_forward.2} parent=1 // loop_pre_header
      _
    $region3: #{bigru_forward.2} parent=1 // loop_header
      %s17 = sphi 0, %s21
      %p18 = scmp.ge.s32.totalorder %s17, 4
      %s27 = sphi 0, %s29
      %s30 = sphi 0, %s27
      %s31 = sphi 0, %s30
      %s47 = sphi 0, %s31
      %s55 = sphi 0, %s57
      %s58 = sphi 0, %s55
      %s59 = sphi 0, %s58
      %s75 = sphi 0, %s59
      %s79 = sphi 0, %s79
      %s81 = sphi 0, %s79
      %s82 = sphi 0, %s81
      %s96 = sphi 0, %s82
      %s100 = sphi 0, %s100
      %s102 = sphi 0, %s100
      %s103 = sphi 0, %s102
      %s117 = sphi 0, %s103
      %s121 = sphi 0, %s121
      %s123 = sphi 0, %s121
      %s124 = sphi 0, %s123
      %s138 = sphi 0, %s124
      %s142 = sphi 0, %s142
      %s144 = sphi 0, %s142
      %s145 = sphi 0, %s144
      %s159 = sphi 0, %s145
      %s165 = sphi 0, %s167
      %s168 = sphi 0, %s165
      %s169 = sphi 0, %s168
      %s185 = sphi 0, %s169
      %s193 = sphi 0, %s195
      %s196 = sphi 0, %s193
      %s197 = sphi 0, %s196
      %s213 = sphi 0, %s197
    $region4: #{bigru_forward.2} parent=1 // loop_header_branch
      %20 = sbr.rel (%p18) target = $region8
    $region5: #{bigru_forward.2} parent=1 // loop_body
      %s22 = ssub.s32 %s17, 1
      %s23 = ssub.s32 %s17, 2
      %s24 = sadd.s32 %s17, 1
      %s25 = ssub.s32 %s17, %s24
      %p26 = scmp.eq.s32.totalorder %s25, 0
      %s28 = sadd.s32 %s27, 1
      %s29 = scalar_select %p26, %s27, %s28
      %p32 = pneg %p26
      %p33 = scmp.eq.s32.totalorder %s17, 1
      %p34 = por %p32, %p33
      %p35 = scmp.ne.s32.totalorder %s27, %s30
      %p36 = scmp.eq.s32.totalorder %s17, 0
      %p37 = por %p35, %p36
      %p38 = scmp.ne.s32.totalorder %s27, %s30
      %p39 = scmp.eq.s32.totalorder %s22, 1
      %p40 = por %p38, %p39
      %p41 = scmp.ne.s32.totalorder %s30, %s31
      %p42 = scmp.eq.s32.totalorder %s22, 0
      %p43 = por %p41, %p42
      %p44 = scmp.ne.s32.totalorder %s30, %s31
      %p45 = scmp.eq.s32.totalorder %s23, 1
      %p46 = por %p44, %p45
      %p48 = scmp.ne.s32.totalorder %s31, %s47
      %p49 = scmp.eq.s32.totalorder %s23, 0
      %p50 = por %p48, %p49
      %s51 = ssub.s32 1, %s17
      %s52 = ssub.s32 1, %s24
      %s53 = ssub.s32 %s51, %s52
      %p54 = scmp.eq.s32.totalorder %s53, 0
      %s56 = sadd.s32 %s55, 1
      %s57 = scalar_select %p54, %s55, %s56
      %p60 = pneg %p54
      %p61 = scmp.eq.s32.totalorder %s17, 1
      %p62 = por %p60, %p61
      %p63 = scmp.ne.s32.totalorder %s55, %s58
      %p64 = scmp.eq.s32.totalorder %s17, 0
      %p65 = por %p63, %p64
      %p66 = scmp.ne.s32.totalorder %s55, %s58
      %p67 = scmp.eq.s32.totalorder %s22, 1
      %p68 = por %p66, %p67
      %p69 = scmp.ne.s32.totalorder %s58, %s59
      %p70 = scmp.eq.s32.totalorder %s22, 0
      %p71 = por %p69, %p70
      %p72 = scmp.ne.s32.totalorder %s58, %s59
      %p73 = scmp.eq.s32.totalorder %s23, 1
      %p74 = por %p72, %p73
      %p76 = scmp.ne.s32.totalorder %s59, %s75
      %p77 = scmp.eq.s32.totalorder %s23, 0
      %p78 = por %p76, %p77
      %s80 = sadd.s32 %s79, 1
      %p83 = scmp.eq.s32.totalorder %s17, 1
      %p84 = scmp.ne.s32.totalorder %s79, %s81
      %p85 = scmp.eq.s32.totalorder %s17, 0
      %p86 = por %p84, %p85
      %p87 = scmp.ne.s32.totalorder %s79, %s81
      %p88 = scmp.eq.s32.totalorder %s22, 1
      %p89 = por %p87, %p88
      %p90 = scmp.ne.s32.totalorder %s81, %s82
      %p91 = scmp.eq.s32.totalorder %s22, 0
      %p92 = por %p90, %p91
      %p93 = scmp.ne.s32.totalorder %s81, %s82
      %p94 = scmp.eq.s32.totalorder %s23, 1
      %p95 = por %p93, %p94
      %p97 = scmp.ne.s32.totalorder %s82, %s96
      %p98 = scmp.eq.s32.totalorder %s23, 0
      %p99 = por %p97, %p98
      %s101 = sadd.s32 %s100, 1
      %p104 = scmp.eq.s32.totalorder %s17, 1
      %p105 = scmp.ne.s32.totalorder %s100, %s102
      %p106 = scmp.eq.s32.totalorder %s17, 0
      %p107 = por %p105, %p106
      %p108 = scmp.ne.s32.totalorder %s100, %s102
      %p109 = scmp.eq.s32.totalorder %s22, 1
      %p110 = por %p108, %p109
      %p111 = scmp.ne.s32.totalorder %s102, %s103
      %p112 = scmp.eq.s32.totalorder %s22, 0
      %p113 = por %p111, %p112
      %p114 = scmp.ne.s32.totalorder %s102, %s103
      %p115 = scmp.eq.s32.totalorder %s23, 1
      %p116 = por %p114, %p115
      %p118 = scmp.ne.s32.totalorder %s103, %s117
      %p119 = scmp.eq.s32.totalorder %s23, 0
      %p120 = por %p118, %p119
      %s122 = sadd.s32 %s121, 1
      %p125 = scmp.eq.s32.totalorder %s17, 1
      %p126 = scmp.ne.s32.totalorder %s121, %s123
      %p127 = scmp.eq.s32.totalorder %s17, 0
      %p128 = por %p126, %p127
      %p129 = scmp.ne.s32.totalorder %s121, %s123
      %p130 = scmp.eq.s32.totalorder %s22, 1
      %p131 = por %p129, %p130
      %p132 = scmp.ne.s32.totalorder %s123, %s124
      %p133 = scmp.eq.s32.totalorder %s22, 0
      %p134 = por %p132, %p133
      %p135 = scmp.ne.s32.totalorder %s123, %s124
      %p136 = scmp.eq.s32.totalorder %s23, 1
      %p137 = por %p135, %p136
      %p139 = scmp.ne.s32.totalorder %s124, %s138
      %p140 = scmp.eq.s32.totalorder %s23, 0
      %p141 = por %p139, %p140
      %s143 = sadd.s32 %s142, 1
      %p146 = scmp.eq.s32.totalorder %s17, 1
      %p147 = scmp.ne.s32.totalorder %s142, %s144
      %p148 = scmp.eq.s32.totalorder %s17, 0
      %p149 = por %p147, %p148
      %p150 = scmp.ne.s32.totalorder %s142, %s144
      %p151 = scmp.eq.s32.totalorder %s22, 1
      %p152 = por %p150, %p151
      %p153 = scmp.ne.s32.totalorder %s144, %s145
      %p154 = scmp.eq.s32.totalorder %s22, 0
      %p155 = por %p153, %p154
      %p156 = scmp.ne.s32.totalorder %s144, %s145
      %p157 = scmp.eq.s32.totalorder %s23, 1
      %p158 = por %p156, %p157
      %p160 = scmp.ne.s32.totalorder %s145, %s159
      %p161 = scmp.eq.s32.totalorder %s23, 0
      %p162 = por %p160, %p161
      %s163 = ssub.s32 %s17, %s24
      %p164 = scmp.eq.s32.totalorder %s163, 0
      %s166 = sadd.s32 %s165, 1
      %s167 = scalar_select %p164, %s165, %s166
      %p170 = pneg %p164
      %p171 = scmp.eq.s32.totalorder %s17, 1
      %p172 = por %p170, %p171
      %p173 = scmp.ne.s32.totalorder %s165, %s168
      %p174 = scmp.eq.s32.totalorder %s17, 0
      %p175 = por %p173, %p174
      %p176 = scmp.ne.s32.totalorder %s165, %s168
      %p177 = scmp.eq.s32.totalorder %s22, 1
      %p178 = por %p176, %p177
      %p179 = scmp.ne.s32.totalorder %s168, %s169
      %p180 = scmp.eq.s32.totalorder %s22, 0
      %p181 = por %p179, %p180
      %p182 = scmp.ne.s32.totalorder %s168, %s169
      %p183 = scmp.eq.s32.totalorder %s23, 1
      %p184 = por %p182, %p183
      %p186 = scmp.ne.s32.totalorder %s169, %s185
      %p187 = scmp.eq.s32.totalorder %s23, 0
      %p188 = por %p186, %p187
      %s189 = ssub.s32 1, %s17
      %s190 = ssub.s32 1, %s24
      %s191 = ssub.s32 %s189, %s190
      %p192 = scmp.eq.s32.totalorder %s191, 0
      %s194 = sadd.s32 %s193, 1
      %s195 = scalar_select %p192, %s193, %s194
      %p198 = pneg %p192
      %p199 = scmp.eq.s32.totalorder %s17, 1
      %p200 = por %p198, %p199
      %p201 = scmp.ne.s32.totalorder %s193, %s196
      %p202 = scmp.eq.s32.totalorder %s17, 0
      %p203 = por %p201, %p202
      %p204 = scmp.ne.s32.totalorder %s193, %s196
      %p205 = scmp.eq.s32.totalorder %s22, 1
      %p206 = por %p204, %p205
      %p207 = scmp.ne.s32.totalorder %s196, %s197
      %p208 = scmp.eq.s32.totalorder %s22, 0
      %p209 = por %p207, %p208
      %p210 = scmp.ne.s32.totalorder %s196, %s197
      %p211 = scmp.eq.s32.totalorder %s23, 1
      %p212 = por %p210, %p211
      %p214 = scmp.ne.s32.totalorder %s197, %s213
      %p215 = scmp.eq.s32.totalorder %s23, 0
      %p216 = por %p214, %p215
      %p217 = scmp.le.s32.totalorder 1, %s17
      %p218 = scmp.lt.s32.totalorder %s17, 3
      %p219 = pnand %p217, %p218
      %p220 = pneg %p219
      // Predicated region
      $region9: #{bigru_forward.2} parent=5 // pred_check
        _
      $region10: #{bigru_forward.2} parent=5 // pred_check_branch
        %222 = sbr.rel (%p219) target = $region12
      $region11: #{bigru_forward.2} parent=5 // pred_region
        %s223 = ssub.s32 %s17, 1
        // Predicated region
        $region13: #{bigru_forward.2} parent=11 // pred_check
          %p224 = pneg %p92
        $region14: #{bigru_forward.2} parent=11 // pred_check_branch
          %226 = sbr.rel (%p224) target = $region16
        $region15: #{bigru_forward.2} parent=11 // pred_region
          %s228 = ssub.s32 768, 768
          %229 = vsyncadd [#allocation6], %s228
          %s230 = sshll.u32 [#allocation5], 4
          %s231 = int_to_ptr.vmem [resolvable:$true] %s230
          %236 = dma.hbm_to_vmem [thread:$0]  %s2, 768, %s231, [#allocation6], 384, 384, 24
        $region16: #{bigru_forward.2} parent=11 // pred_fallthru
          _
        // Predicated region
        $region17: #{bigru_forward.2} parent=11 // pred_check
          %p237 = pneg %p113
        $region18: #{bigru_forward.2} parent=11 // pred_check_branch
          %239 = sbr.rel (%p237) target = $region20
        $region19: #{bigru_forward.2} parent=11 // pred_region
          %s241 = ssub.s32 96, 96
          %242 = vsyncadd [#allocation8], %s241
          %s244 = sshll.u32 [#allocation7], 4
          %s245 = int_to_ptr.vmem [resolvable:$true] %s244
          %247 = dma.hbm_to_vmem [thread:$0]  %s3, 96, %s245, [#allocation8]
        $region20: #{bigru_forward.2} parent=11 // pred_fallthru
          _
        // Predicated region
        $region21: #{bigru_forward.2} parent=11 // pred_check
          %p248 = pneg %p134
        $region22: #{bigru_forward.2} parent=11 // pred_check_branch
          %250 = sbr.rel (%p248) target = $region24
        $region23: #{bigru_forward.2} parent=11 // pred_region
          %s252 = ssub.s32 12288, 12288
          %253 = vsyncadd [#allocation8], %s252
          %s254 = sshll.u32 [#allocation9], 4
          %s255 = int_to_ptr.vmem [resolvable:$true] %s254
          %260 = dma.hbm_to_vmem [thread:$0]  %s4, 12288, %s255, [#allocation8], 384, 384, 24
        $region24: #{bigru_forward.2} parent=11 // pred_fallthru
          _
        // Predicated region
        $region25: #{bigru_forward.2} parent=11 // pred_check
          %p261 = pneg %p155
        $region26: #{bigru_forward.2} parent=11 // pred_check_branch
          %263 = sbr.rel (%p261) target = $region28
        $region27: #{bigru_forward.2} parent=11 // pred_region
          %s265 = ssub.s32 32, 32
          %266 = vsyncadd [#allocation11], %s265
          %s268 = sshll.u32 [#allocation10], 4
          %s269 = int_to_ptr.vmem [resolvable:$true] %s268
          %271 = dma.hbm_to_vmem [thread:$0]  %s5, 32, %s269, [#allocation11]
        $region28: #{bigru_forward.2} parent=11 // pred_fallthru
          _
      $region12: #{bigru_forward.2} parent=5 // pred_fallthru
        _
      %p272 = scmp.lt.s32.totalorder %s17, 2
      // Predicated region
      $region29: #{bigru_forward.2} parent=5 // pred_check
        %p273 = pneg %p272
      $region30: #{bigru_forward.2} parent=5 // pred_check_branch
        %275 = sbr.rel (%p273) target = $region32
      $region31: #{bigru_forward.2} parent=5 // pred_region
        // Predicated region
        $region33: #{bigru_forward.2} parent=31 // pred_check
          %p276 = pneg %p37
        $region34: #{bigru_forward.2} parent=31 // pred_check_branch
          %278 = sbr.rel (%p276) target = $region36
        $region35: #{bigru_forward.2} parent=31 // pred_region
          %s279 = smul.u32 8, %s17
          %p280 = scmp.lt.s32.totalorder %s279, 15
          %s281 = scalar_select %p280, %s279, 15
          %s282 = smul.addr %s281, 8
          %s283 = scalar_lea.vmem %s0, %s282
          %s284 = smul.u32 8, %s17
        $region36: #{bigru_forward.2} parent=31 // pred_fallthru
          _
        // Predicated region
        $region37: #{bigru_forward.2} parent=31 // pred_check
          %p285 = pneg %p65
        $region38: #{bigru_forward.2} parent=31 // pred_check_branch
          %287 = sbr.rel (%p285) target = $region40
        $region39: #{bigru_forward.2} parent=31 // pred_region
          %s288 = ssub.s32 1, %s17
          %s289 = smul.u32 8, %s288
          %p290 = scmp.lt.s32.totalorder %s289, 15
          %s291 = scalar_select %p290, %s289, 15
          %s292 = smul.addr %s291, 8
          %s293 = scalar_lea.vmem %s1, %s292
          %s294 = ssub.s32 1, %s17
          %s295 = smul.u32 8, %s294
        $region40: #{bigru_forward.2} parent=31 // pred_fallthru
          _
      $region32: #{bigru_forward.2} parent=5 // pred_fallthru
        _
      %p296 = scmp.le.s32.totalorder 1, %s17
      %p297 = scmp.lt.s32.totalorder %s17, 3
      %p298 = pnand %p296, %p297
      %p299 = pneg %p298
      // Predicated region
      $region41: #{bigru_forward.2} parent=5 // pred_check
        _
      $region42: #{bigru_forward.2} parent=5 // pred_check_branch
        %301 = sbr.rel (%p298) target = $region44
      $region43: #{bigru_forward.2} parent=5 // pred_region
        %s302 = ssub.s32 %s17, 1
        // Predicated region
        $region45: #{bigru_forward.2} parent=43 // pred_check
          %p303 = pneg %p92
        $region46: #{bigru_forward.2} parent=43 // pred_check_branch
          %305 = sbr.rel (%p303) target = $region48
        $region47: #{bigru_forward.2} parent=43 // pred_region
          %306 = dma.done [#allocation6], 768
        $region48: #{bigru_forward.2} parent=43 // pred_fallthru
          _
        // Predicated region
        $region49: #{bigru_forward.2} parent=43 // pred_check
          %p307 = pneg %p113
        $region50: #{bigru_forward.2} parent=43 // pred_check_branch
          %309 = sbr.rel (%p307) target = $region52
        $region51: #{bigru_forward.2} parent=43 // pred_region
          %310 = dma.done [#allocation8], 96
        $region52: #{bigru_forward.2} parent=43 // pred_fallthru
          _
        // Predicated region
        $region53: #{bigru_forward.2} parent=43 // pred_check
          %p311 = pneg %p134
        $region54: #{bigru_forward.2} parent=43 // pred_check_branch
          %313 = sbr.rel (%p311) target = $region56
        $region55: #{bigru_forward.2} parent=43 // pred_region
          %314 = dma.done [#allocation8], 12288
        $region56: #{bigru_forward.2} parent=43 // pred_fallthru
          _
        // Predicated region
        $region57: #{bigru_forward.2} parent=43 // pred_check
          %p315 = pneg %p155
        $region58: #{bigru_forward.2} parent=43 // pred_check_branch
          %317 = sbr.rel (%p315) target = $region60
        $region59: #{bigru_forward.2} parent=43 // pred_region
          %318 = dma.done [#allocation11], 32
        $region60: #{bigru_forward.2} parent=43 // pred_fallthru
          _
        %s319 = smul.u32 8, %s22
        %p320 = scmp.lt.s32.totalorder %s319, 15
        %s321 = scalar_select %p320, %s319, 15
        %s322 = smul.addr %s321, 8
        %s323 = scalar_lea.vmem %s0, %s322
        %p324 = pneg %p43
        %p325 = pneg %p40
        %s326 = ssub.s32 1, %s22
        %s327 = smul.u32 8, %s326
        %p328 = scmp.lt.s32.totalorder %s327, 15
        %s329 = scalar_select %p328, %s327, 15
        %s330 = smul.addr %s329, 8
        %s331 = scalar_lea.vmem %s1, %s330
        %p332 = pneg %p71
        %p333 = pneg %p68
        %p334 = pneg %p92
        %p335 = pneg %p89
        %p336 = pneg %p113
        %p337 = pneg %p110
        %p338 = pneg %p134
        %p339 = pneg %p131
        %p340 = pneg %p155
        %p341 = pneg %p152
        %p342 = pneg %p181
        %p343 = pneg %p178
        %s344 = smul.u32 8, %s22
        %p345 = scmp.lt.s32.totalorder %s344, 15
        %s346 = scalar_select %p345, %s344, 15
        %s347 = smul.addr %s346, 4
        %s348 = scalar_lea.vmem %s6, %s347
        %p349 = pneg %p209
        %p350 = pneg %p206
        %s351 = ssub.s32 1, %s22
        %s352 = smul.u32 8, %s351
        %p353 = scmp.lt.s32.totalorder %s352, 15
        %s354 = scalar_select %p353, %s352, 15
        %s355 = smul.addr %s354, 4
        %s356 = scalar_lea.vmem %s7, %s355
        %s357 = smul.u32 8, %s22
        %p358 = scmp.lt.s32.totalorder %s357, 15
        %s359 = scalar_select %p358, %s357, 15
        %s360 = smul.addr %s359, 8
        %s361 = scalar_lea.vmem %s0, %s360
        %s362 = smul.u32 8, %s22
        %s363 = ssub.s32 1, %s22
        %s364 = smul.u32 8, %s363
        %p365 = scmp.lt.s32.totalorder %s364, 15
        %s366 = scalar_select %p365, %s364, 15
        %s367 = smul.addr %s366, 8
        %s368 = scalar_lea.vmem %s1, %s367
        %s369 = ssub.s32 1, %s22
        %s370 = smul.u32 8, %s369
        %s371 = smul.u32 8, %s22
        %p372 = scmp.lt.s32.totalorder %s371, 15
        %s373 = scalar_select %p372, %s371, 15
        %s374 = smul.addr %s373, 4
        %s375 = scalar_lea.vmem %s6, %s374
        %s376 = smul.u32 8, %s22
        %s377 = ssub.s32 1, %s22
        %s378 = smul.u32 8, %s377
        %p379 = scmp.lt.s32.totalorder %s378, 15
        %s380 = scalar_select %p379, %s378, 15
        %s381 = smul.addr %s380, 4
        %s382 = scalar_lea.vmem %s7, %s381
        %s383 = ssub.s32 1, %s22
        %s384 = smul.u32 8, %s383
        %p386 = scmp.eq.s32.totalorder %s22, 0
        // Predicated region
        $region61: #{bigru_forward.2} parent=43 // pred_check
          %p387 = pneg %p386
        $region62: #{bigru_forward.2} parent=43 // pred_check_branch
          %389 = sbr.rel (%p387) target = $region64
        $region63: #{bigru_forward.2} parent=43 // pred_region
          %390 = vst [vmem:[#allocation2] sm:$0xff] 0.0
          %391 = vst [vmem:[#allocation2 + $0x8] sm:$0xff] 0.0
          %392 = vst [vmem:[#allocation2 + $0x10] sm:$0xff] 0.0
          %393 = vst [vmem:[#allocation2 + $0x18] sm:$0xff] 0.0
        $region64: #{bigru_forward.2} parent=43 // pred_fallthru
          _
        %v394 = vld [vmem:[%s361] sm:$0xff]
        %v395 = vld [vmem:[%s361 + $0x8] sm:$0xff]
        %v396 = vld [vmem:[%s361 + $0x10] sm:$0xff]
        %v397 = vld [vmem:[%s361 + $0x18] sm:$0xff]
        %v398 = vld [vmem:[%s361 + $0x20] sm:$0xff]
        %v399 = vld [vmem:[%s361 + $0x28] sm:$0xff]
        %v400 = vld [vmem:[%s361 + $0x30] sm:$0xff]
        %v401 = vld [vmem:[%s361 + $0x38] sm:$0xff]
        %v402 = vpack.c.bf16 %v395, %v394
        %v403 = vpack.c.bf16 %v397, %v396
        %v404 = vpack.c.bf16 %v399, %v398
        %v405 = vpack.c.bf16 %v401, %v400
        %v406 = vld [vmem:[#allocation5] sm:$0xff]
        %v407 = vld [vmem:[#allocation5 + $0x8] sm:$0xf]
        %v408 = vld [vmem:[#allocation5 + $0x18] sm:$0xff]
        %v409 = vld [vmem:[#allocation5 + $0x20] sm:$0xf]
        %v410 = vld [vmem:[#allocation7] sm:$0x7]
        %v412 = vlaneseq
        %v413 = vshrl.u32 %v412, 7
        %v414 = vsub.s32 0, %v413
        %v415 = vrot.slane %v410, %v414
        %v416 = vlaneseq
        %v417 = vshrl.u32 %v416, 7
        %v418 = vsub.s32 1, %v417
        %v419 = vrot.slane %v410, %v418
        %v420 = vlaneseq
        %v421 = vshrl.u32 %v420, 7
        %v422 = vsub.s32 2, %v421
        %v423 = vrot.slane %v410, %v422
        %v431 = vunpack.c.l.b16 %v406
        %v432 = vunpack.c.h.b16 %v406
        %v433 = vunpack.c.l.b16 %v407
        %v434 = vunpack.c.l.b16 %v408
        %v435 = vunpack.c.h.b16 %v408
        %v436 = vunpack.c.l.b16 %v409
        %v437 = vpack.c.b16 %v434, %v431
        %v438 = vpack.c.b16 %v435, %v432
        %v439 = vpack.c.b16 %v436, %v433
        %vm443 = vcmask 130048
        %v445 = vsel %vm443, %v402, 0
        %v448 = vsel %vm443, %v403, 0
        %v451 = vsel %vm443, %v404, 0
        %v454 = vsel %vm443, %v405, 0
        %456 = vmatprep.subr.bf16.mxu0 %v438
        %457 = vmatpush1.bf16.msra.mxu0 %v437
        %458 = vmatprep.subr.bf16.mxu0 0
        %459 = vmatpush1.bf16.msra.mxu0 0
        %460 = vmatprep.subr.bf16.mxu0 0
        %461 = vmatpush1.bf16.msra.mxu0 0
        %462 = vmatprep.subr.bf16.mxu0 0
        %463 = vmatpush1.bf16.msra.mxu0 0
        %464 = vmatprep.subr.bf16.mxu0 0
        %465 = vmatpush1.bf16.msra.mxu0 0
        %466 = vmatprep.subr.bf16.mxu0 0
        %467 = vmatpush1.bf16.msra.mxu0 0
        %468 = vmatprep.subr.bf16.mxu0 0
        %469 = vmatpush1.bf16.msra.mxu0 0
        %470 = vmatprep.subr.bf16.mxu0 0
        %471 = vmatpush1.bf16.msra.mxu0 0
        %472 = vmatprep.subr.bf16.mxu0 0
        %473 = vmatpush1.bf16.msra.mxu0 0
        %474 = vmatprep.subr.bf16.mxu0 0
        %475 = vmatpush1.bf16.msra.mxu0 0
        %476 = vmatprep.subr.bf16.mxu0 0
        %477 = vmatpush1.bf16.msra.mxu0 0
        %478 = vmatprep.subr.bf16.mxu0 0
        %479 = vmatpush1.bf16.msra.mxu0 0
        %480 = vmatprep.subr.bf16.mxu0 0
        %481 = vmatpush1.bf16.msra.mxu0 0
        %482 = vmatprep.subr.bf16.mxu0 0
        %483 = vmatpush1.bf16.msra.mxu0 0
        %484 = vmatprep.subr.bf16.mxu0 0
        %485 = vmatpush1.bf16.msra.mxu0 0
        %486 = vmatprep.subr.bf16.mxu0 0
        %487 = vmatpush1.bf16.msra.mxu0 0
        %488 = vmatprep.mubr.bf16.mxu0 0
        %489 = vmatmul.mubr.bf16.gmra.mrb[0].mxu0 %v445
        %v490 = vpop.f32.mrb[0].mxu0
        %v491 = vadd.f32 %v415, %v490
        %v492 = vpop.f32.mrb[0].mxu0
        %v493 = vadd.f32 %v419, %v492
        %v494 = vpop.f32.mrb[0].mxu0
        %v495 = vadd.f32 %v415, %v494
        %v496 = vpop.f32.mrb[0].mxu0
        %v497 = vadd.f32 %v419, %v496
        %498 = vmatprep.mubr.bf16.mxu0 0
        %499 = vmatmul.mubr.bf16.gmra.mrb[0].mxu0 %v448
        %v500 = vpop.f32.mrb[0].mxu0
        %v501 = vadd.f32 %v415, %v500
        %v502 = vpop.f32.mrb[0].mxu0
        %v503 = vadd.f32 %v419, %v502
        %v504 = vpop.f32.mrb[0].mxu0
        %v505 = vadd.f32 %v415, %v504
        %v506 = vpop.f32.mrb[0].mxu0
        %v507 = vadd.f32 %v419, %v506
        %508 = vmatprep.mubr.bf16.mxu0 0
        %509 = vmatmul.mubr.bf16.gmra.mrb[0].mxu0 %v451
        %v510 = vpop.f32.mrb[0].mxu0
        %v511 = vadd.f32 %v415, %v510
        %v512 = vpop.f32.mrb[0].mxu0
        %v513 = vadd.f32 %v419, %v512
        %v514 = vpop.f32.mrb[0].mxu0
        %v515 = vadd.f32 %v415, %v514
        %v516 = vpop.f32.mrb[0].mxu0
        %v517 = vadd.f32 %v419, %v516
        %518 = vmatprep.mubr.bf16.mxu0 0
        %519 = vmatmul.mubr.bf16.gmra.mrb[0].mxu0 %v454
        %v520 = vpop.f32.mrb[0].mxu0
        %v521 = vadd.f32 %v415, %v520
        %v522 = vpop.f32.mrb[0].mxu0
        %v523 = vadd.f32 %v419, %v522
        %v524 = vpop.f32.mrb[0].mxu0
        %v525 = vadd.f32 %v415, %v524
        %v526 = vpop.f32.mrb[0].mxu0
        %v527 = vadd.f32 %v419, %v526
        %528 = vdwg.mxu0
        %529 = vmatprep.subr.bf16.mxu0 0
        %530 = vmatpush1.bf16.msra.mxu0 %v439
        %531 = vmatprep.subr.bf16.mxu0 0
        %532 = vmatpush1.bf16.msra.mxu0 0
        %533 = vmatprep.subr.bf16.mxu0 0
        %534 = vmatpush1.bf16.msra.mxu0 0
        %535 = vmatprep.subr.bf16.mxu0 0
        %536 = vmatpush1.bf16.msra.mxu0 0
        %537 = vmatprep.subr.bf16.mxu0 0
        %538 = vmatpush1.bf16.msra.mxu0 0
        %539 = vmatprep.subr.bf16.mxu0 0
        %540 = vmatpush1.bf16.msra.mxu0 0
        %541 = vmatprep.subr.bf16.mxu0 0
        %542 = vmatpush1.bf16.msra.mxu0 0
        %543 = vmatprep.subr.bf16.mxu0 0
        %544 = vmatpush1.bf16.msra.mxu0 0
        %545 = vmatprep.subr.bf16.mxu0 0
        %546 = vmatpush1.bf16.msra.mxu0 0
        %547 = vmatprep.subr.bf16.mxu0 0
        %548 = vmatpush1.bf16.msra.mxu0 0
        %549 = vmatprep.subr.bf16.mxu0 0
        %550 = vmatpush1.bf16.msra.mxu0 0
        %551 = vmatprep.subr.bf16.mxu0 0
        %552 = vmatpush1.bf16.msra.mxu0 0
        %553 = vmatprep.subr.bf16.mxu0 0
        %554 = vmatpush1.bf16.msra.mxu0 0
        %555 = vmatprep.subr.bf16.mxu0 0
        %556 = vmatpush1.bf16.msra.mxu0 0
        %557 = vmatprep.subr.bf16.mxu0 0
        %558 = vmatpush1.bf16.msra.mxu0 0
        %559 = vmatprep.subr.bf16.mxu0 0
        %560 = vmatpush1.bf16.msra.mxu0 0
        %561 = vmatprep.mubr.bf16.mxu0 0
        %562 = vmatmul.mubr.bf16.gmra.mrb[0].mxu0 %v445
        %v563 = vpop.f32.mrb[0].mxu0
        %v564 = vadd.f32 %v423, %v563
        %v565 = vpop.f32.mrb[0].mxu0
        %v566 = vpop.f32.mrb[0].mxu0
        %v567 = vadd.f32 %v423, %v566
        %v568 = vpop.f32.mrb[0].mxu0
        %569 = vmatprep.mubr.bf16.mxu0 0
        %570 = vmatmul.mubr.bf16.gmra.mrb[0].mxu0 %v448
        %v571 = vpop.f32.mrb[0].mxu0
        %v572 = vadd.f32 %v423, %v571
        %v573 = vpop.f32.mrb[0].mxu0
        %v574 = vpop.f32.mrb[0].mxu0
        %v575 = vadd.f32 %v423, %v574
        %v576 = vpop.f32.mrb[0].mxu0
        %577 = vmatprep.mubr.bf16.mxu0 0
        %578 = vmatmul.mubr.bf16.gmra.mrb[0].mxu0 %v451
        %v579 = vpop.f32.mrb[0].mxu0
        %v580 = vadd.f32 %v423, %v579
        %v581 = vpop.f32.mrb[0].mxu0
        %v582 = vpop.f32.mrb[0].mxu0
        %v583 = vadd.f32 %v423, %v582
        %v584 = vpop.f32.mrb[0].mxu0
        %585 = vmatprep.mubr.bf16.mxu0 0
        %586 = vmatmul.mubr.bf16.gmra.mrb[0].mxu0 %v454
        %v587 = vpop.f32.mrb[0].mxu0
        %v588 = vadd.f32 %v423, %v587
        %v589 = vpop.f32.mrb[0].mxu0
        %v590 = vpop.f32.mrb[0].mxu0
        %v591 = vadd.f32 %v423, %v590
        %v592 = vpop.f32.mrb[0].mxu0
        %593 = vdwg.mxu0
        %594 = vst [vmem:[#allocation3] sm:$0xff] %v491
        %595 = vst [vmem:[#allocation3 + $0x8] sm:$0xff] %v493
        %596 = vst [vmem:[#allocation3 + $0x10] sm:$0xff] %v564
        %597 = vst [vmem:[#allocation3 + $0x18] sm:$0xff] %v495
        %598 = vst [vmem:[#allocation3 + $0x20] sm:$0xff] %v497
        %599 = vst [vmem:[#allocation3 + $0x28] sm:$0xff] %v567
        %600 = vst [vmem:[#allocation3 + $0x30] sm:$0xff] %v501
        %601 = vst [vmem:[#allocation3 + $0x38] sm:$0xff] %v503
        %602 = vst [vmem:[#allocation3 + $0x40] sm:$0xff] %v572
        %603 = vst [vmem:[#allocation3 + $0x48] sm:$0xff] %v505
        %604 = vst [vmem:[#allocation3 + $0x50] sm:$0xff] %v507
        %605 = vst [vmem:[#allocation3 + $0x58] sm:$0xff] %v575
        %606 = vst [vmem:[#allocation3 + $0x60] sm:$0xff] %v511
        %607 = vst [vmem:[#allocation3 + $0x68] sm:$0xff] %v513
        %608 = vst [vmem:[#allocation3 + $0x70] sm:$0xff] %v580
        %609 = vst [vmem:[#allocation3 + $0x78] sm:$0xff] %v515
        %610 = vst [vmem:[#allocation3 + $0x80] sm:$0xff] %v517
        %611 = vst [vmem:[#allocation3 + $0x88] sm:$0xff] %v583
        %612 = vst [vmem:[#allocation3 + $0x90] sm:$0xff] %v521
        %613 = vst [vmem:[#allocation3 + $0x98] sm:$0xff] %v523
        %614 = vst [vmem:[#allocation3 + $0xa0] sm:$0xff] %v588
        %615 = vst [vmem:[#allocation3 + $0xa8] sm:$0xff] %v525
        %616 = vst [vmem:[#allocation3 + $0xb0] sm:$0xff] %v527
        %617 = vst [vmem:[#allocation3 + $0xb8] sm:$0xff] %v591
        %v618 = vld [vmem:[%s368] sm:$0xff]
        %v619 = vld [vmem:[%s368 + $0x8] sm:$0xff]
        %v620 = vld [vmem:[%s368 + $0x10] sm:$0xff]
        %v621 = vld [vmem:[%s368 + $0x18] sm:$0xff]
        %v622 = vld [vmem:[%s368 + $0x20] sm:$0xff]
        %v623 = vld [vmem:[%s368 + $0x28] sm:$0xff]
        %v624 = vld [vmem:[%s368 + $0x30] sm:$0xff]
        %v625 = vld [vmem:[%s368 + $0x38] sm:$0xff]
        %v626 = vpack.c.bf16 %v619, %v618
        %v627 = vpack.c.bf16 %v621, %v620
        %v628 = vpack.c.bf16 %v623, %v622
        %v629 = vpack.c.bf16 %v625, %v624
        %v630 = vld [vmem:[#allocation5 + $0xc] sm:$0xff]
        %v631 = vld [vmem:[#allocation5 + $0x14] sm:$0xf]
        %v632 = vld [vmem:[#allocation5 + $0x24] sm:$0xff]
        %v633 = vld [vmem:[#allocation5 + $0x2c] sm:$0xf]
        %v634 = vld [vmem:[#allocation7 + $0x3] sm:$0x7]
        %v636 = vlaneseq
        %v637 = vshrl.u32 %v636, 7
        %v638 = vsub.s32 0, %v637
        %v639 = vrot.slane %v634, %v638
        %v640 = vlaneseq
        %v641 = vshrl.u32 %v640, 7
        %v642 = vsub.s32 1, %v641
        %v643 = vrot.slane %v634, %v642
        %v644 = vlaneseq
        %v645 = vshrl.u32 %v644, 7
        %v646 = vsub.s32 2, %v645
        %v647 = vrot.slane %v634, %v646
        %v655 = vunpack.c.l.b16 %v630
        %v656 = vunpack.c.h.b16 %v630
        %v657 = vunpack.c.l.b16 %v631
        %v658 = vunpack.c.l.b16 %v632
        %v659 = vunpack.c.h.b16 %v632
        %v660 = vunpack.c.l.b16 %v633
        %v661 = vpack.c.b16 %v658, %v655
        %v662 = vpack.c.b16 %v659, %v656
        %v663 = vpack.c.b16 %v660, %v657
        %v668 = vsel %vm443, %v626, 0
        %v671 = vsel %vm443, %v627, 0
        %v674 = vsel %vm443, %v628, 0
        %v677 = vsel %vm443, %v629, 0
        %679 = vmatprep.subr.bf16.mxu0 %v662
        %680 = vmatpush1.bf16.msra.mxu0 %v661
        %681 = vmatprep.subr.bf16.mxu0 0
        %682 = vmatpush1.bf16.msra.mxu0 0
        %683 = vmatprep.subr.bf16.mxu0 0
        %684 = vmatpush1.bf16.msra.mxu0 0
        %685 = vmatprep.subr.bf16.mxu0 0
        %686 = vmatpush1.bf16.msra.mxu0 0
        %687 = vmatprep.subr.bf16.mxu0 0
        %688 = vmatpush1.bf16.msra.mxu0 0
        %689 = vmatprep.subr.bf16.mxu0 0
        %690 = vmatpush1.bf16.msra.mxu0 0
        %691 = vmatprep.subr.bf16.mxu0 0
        %692 = vmatpush1.bf16.msra.mxu0 0
        %693 = vmatprep.subr.bf16.mxu0 0
        %694 = vmatpush1.bf16.msra.mxu0 0
        %695 = vmatprep.subr.bf16.mxu0 0
        %696 = vmatpush1.bf16.msra.mxu0 0
        %697 = vmatprep.subr.bf16.mxu0 0
        %698 = vmatpush1.bf16.msra.mxu0 0
        %699 = vmatprep.subr.bf16.mxu0 0
        %700 = vmatpush1.bf16.msra.mxu0 0
        %701 = vmatprep.subr.bf16.mxu0 0
        %702 = vmatpush1.bf16.msra.mxu0 0
        %703 = vmatprep.subr.bf16.mxu0 0
        %704 = vmatpush1.bf16.msra.mxu0 0
        %705 = vmatprep.subr.bf16.mxu0 0
        %706 = vmatpush1.bf16.msra.mxu0 0
        %707 = vmatprep.subr.bf16.mxu0 0
        %708 = vmatpush1.bf16.msra.mxu0 0
        %709 = vmatprep.subr.bf16.mxu0 0
        %710 = vmatpush1.bf16.msra.mxu0 0
        %711 = vmatprep.mubr.bf16.mxu0 0
        %712 = vmatmul.mubr.bf16.gmra.mrb[0].mxu0 %v668
        %v713 = vpop.f32.mrb[0].mxu0
        %v714 = vadd.f32 %v639, %v713
        %v715 = vpop.f32.mrb[0].mxu0
        %v716 = vadd.f32 %v643, %v715
        %v717 = vpop.f32.mrb[0].mxu0
        %v718 = vadd.f32 %v639, %v717
        %v719 = vpop.f32.mrb[0].mxu0
        %v720 = vadd.f32 %v643, %v719
        %721 = vmatprep.mubr.bf16.mxu0 0
        %722 = vmatmul.mubr.bf16.gmra.mrb[0].mxu0 %v671
        %v723 = vpop.f32.mrb[0].mxu0
        %v724 = vadd.f32 %v639, %v723
        %v725 = vpop.f32.mrb[0].mxu0
        %v726 = vadd.f32 %v643, %v725
        %v727 = vpop.f32.mrb[0].mxu0
        %v728 = vadd.f32 %v639, %v727
        %v729 = vpop.f32.mrb[0].mxu0
        %v730 = vadd.f32 %v643, %v729
        %731 = vmatprep.mubr.bf16.mxu0 0
        %732 = vmatmul.mubr.bf16.gmra.mrb[0].mxu0 %v674
        %v733 = vpop.f32.mrb[0].mxu0
        %v734 = vadd.f32 %v639, %v733
        %v735 = vpop.f32.mrb[0].mxu0
        %v736 = vadd.f32 %v643, %v735
        %v737 = vpop.f32.mrb[0].mxu0
        %v738 = vadd.f32 %v639, %v737
        %v739 = vpop.f32.mrb[0].mxu0
        %v740 = vadd.f32 %v643, %v739
        %741 = vmatprep.mubr.bf16.mxu0 0
        %742 = vmatmul.mubr.bf16.gmra.mrb[0].mxu0 %v677
        %v743 = vpop.f32.mrb[0].mxu0
        %v744 = vadd.f32 %v639, %v743
        %v745 = vpop.f32.mrb[0].mxu0
        %v746 = vadd.f32 %v643, %v745
        %v747 = vpop.f32.mrb[0].mxu0
        %v748 = vadd.f32 %v639, %v747
        %v749 = vpop.f32.mrb[0].mxu0
        %v750 = vadd.f32 %v643, %v749
        %751 = vdwg.mxu0
        %752 = vmatprep.subr.bf16.mxu0 0
        %753 = vmatpush1.bf16.msra.mxu0 %v663
        %754 = vmatprep.subr.bf16.mxu0 0
        %755 = vmatpush1.bf16.msra.mxu0 0
        %756 = vmatprep.subr.bf16.mxu0 0
        %757 = vmatpush1.bf16.msra.mxu0 0
        %758 = vmatprep.subr.bf16.mxu0 0
        %759 = vmatpush1.bf16.msra.mxu0 0
        %760 = vmatprep.subr.bf16.mxu0 0
        %761 = vmatpush1.bf16.msra.mxu0 0
        %762 = vmatprep.subr.bf16.mxu0 0
        %763 = vmatpush1.bf16.msra.mxu0 0
        %764 = vmatprep.subr.bf16.mxu0 0
        %765 = vmatpush1.bf16.msra.mxu0 0
        %766 = vmatprep.subr.bf16.mxu0 0
        %767 = vmatpush1.bf16.msra.mxu0 0
        %768 = vmatprep.subr.bf16.mxu0 0
        %769 = vmatpush1.bf16.msra.mxu0 0
        %770 = vmatprep.subr.bf16.mxu0 0
        %771 = vmatpush1.bf16.msra.mxu0 0
        %772 = vmatprep.subr.bf16.mxu0 0
        %773 = vmatpush1.bf16.msra.mxu0 0
        %774 = vmatprep.subr.bf16.mxu0 0
        %775 = vmatpush1.bf16.msra.mxu0 0
        %776 = vmatprep.subr.bf16.mxu0 0
        %777 = vmatpush1.bf16.msra.mxu0 0
        %778 = vmatprep.subr.bf16.mxu0 0
        %779 = vmatpush1.bf16.msra.mxu0 0
        %780 = vmatprep.subr.bf16.mxu0 0
        %781 = vmatpush1.bf16.msra.mxu0 0
        %782 = vmatprep.subr.bf16.mxu0 0
        %783 = vmatpush1.bf16.msra.mxu0 0
        %784 = vmatprep.mubr.bf16.mxu0 0
        %785 = vmatmul.mubr.bf16.gmra.mrb[0].mxu0 %v668
        %v786 = vpop.f32.mrb[0].mxu0
        %v787 = vadd.f32 %v647, %v786
        %v788 = vpop.f32.mrb[0].mxu0
        %v789 = vpop.f32.mrb[0].mxu0
        %v790 = vadd.f32 %v647, %v789
        %v791 = vpop.f32.mrb[0].mxu0
        %792 = vmatprep.mubr.bf16.mxu0 0
        %793 = vmatmul.mubr.bf16.gmra.mrb[0].mxu0 %v671
        %v794 = vpop.f32.mrb[0].mxu0
        %v795 = vadd.f32 %v647, %v794
        %v796 = vpop.f32.mrb[0].mxu0
        %v797 = vpop.f32.mrb[0].mxu0
        %v798 = vadd.f32 %v647, %v797
        %v799 = vpop.f32.mrb[0].mxu0
        %800 = vmatprep.mubr.bf16.mxu0 0
        %801 = vmatmul.mubr.bf16.gmra.mrb[0].mxu0 %v674
        %v802 = vpop.f32.mrb[0].mxu0
        %v803 = vadd.f32 %v647, %v802
        %v804 = vpop.f32.mrb[0].mxu0
        %v805 = vpop.f32.mrb[0].mxu0
        %v806 = vadd.f32 %v647, %v805
        %v807 = vpop.f32.mrb[0].mxu0
        %808 = vmatprep.mubr.bf16.mxu0 0
        %809 = vmatmul.mubr.bf16.gmra.mrb[0].mxu0 %v677
        %v810 = vpop.f32.mrb[0].mxu0
        %v811 = vadd.f32 %v647, %v810
        %v812 = vpop.f32.mrb[0].mxu0
        %v813 = vpop.f32.mrb[0].mxu0
        %v814 = vadd.f32 %v647, %v813
        %v815 = vpop.f32.mrb[0].mxu0
        %816 = vdwg.mxu0
        %817 = vst [vmem:[#allocation4] sm:$0xff] %v714
        %818 = vst [vmem:[#allocation4 + $0x8] sm:$0xff] %v716
        %819 = vst [vmem:[#allocation4 + $0x10] sm:$0xff] %v787
        %820 = vst [vmem:[#allocation4 + $0x18] sm:$0xff] %v718
        %821 = vst [vmem:[#allocation4 + $0x20] sm:$0xff] %v720
        %822 = vst [vmem:[#allocation4 + $0x28] sm:$0xff] %v790
        %823 = vst [vmem:[#allocation4 + $0x30] sm:$0xff] %v724
        %824 = vst [vmem:[#allocation4 + $0x38] sm:$0xff] %v726
        %825 = vst [vmem:[#allocation4 + $0x40] sm:$0xff] %v795
        %826 = vst [vmem:[#allocation4 + $0x48] sm:$0xff] %v728
        %827 = vst [vmem:[#allocation4 + $0x50] sm:$0xff] %v730
        %828 = vst [vmem:[#allocation4 + $0x58] sm:$0xff] %v798
        %829 = vst [vmem:[#allocation4 + $0x60] sm:$0xff] %v734
        %830 = vst [vmem:[#allocation4 + $0x68] sm:$0xff] %v736
        %831 = vst [vmem:[#allocation4 + $0x70] sm:$0xff] %v803
        %832 = vst [vmem:[#allocation4 + $0x78] sm:$0xff] %v738
        %833 = vst [vmem:[#allocation4 + $0x80] sm:$0xff] %v740
        %834 = vst [vmem:[#allocation4 + $0x88] sm:$0xff] %v806
        %835 = vst [vmem:[#allocation4 + $0x90] sm:$0xff] %v744
        %836 = vst [vmem:[#allocation4 + $0x98] sm:$0xff] %v746
        %837 = vst [vmem:[#allocation4 + $0xa0] sm:$0xff] %v811
        %838 = vst [vmem:[#allocation4 + $0xa8] sm:$0xff] %v748
        %839 = vst [vmem:[#allocation4 + $0xb0] sm:$0xff] %v750
        %840 = vst [vmem:[#allocation4 + $0xb8] sm:$0xff] %v814
        %v841 = vld [vmem:[#allocation9] sm:$0xff]
        %v842 = vld [vmem:[#allocation9 + $0x8] sm:$0xff]
        %v843 = vld [vmem:[#allocation9 + $0x10] sm:$0xff]
        %v844 = vld [vmem:[#allocation9 + $0x18] sm:$0xff]
        %v845 = vld [vmem:[#allocation9 + $0x20] sm:$0xff]
        %v846 = vld [vmem:[#allocation9 + $0x28] sm:$0xff]
        %v847 = vld [vmem:[#allocation9 + $0x30] sm:$0xff]
        %v848 = vld [vmem:[#allocation9 + $0x38] sm:$0xff]
        %v849 = vld [vmem:[#allocation9 + $0x40] sm:$0xff]
        %v850 = vld [vmem:[#allocation9 + $0x48] sm:$0xff]
        %v851 = vld [vmem:[#allocation9 + $0x50] sm:$0xff]
        %v852 = vld [vmem:[#allocation9 + $0x58] sm:$0xff]
        %v853 = vld [vmem:[#allocation9 + $0x60] sm:$0xff]
        %v854 = vld [vmem:[#allocation9 + $0x68] sm:$0xff]
        %v855 = vld [vmem:[#allocation9 + $0x70] sm:$0xff]
        %v856 = vld [vmem:[#allocation9 + $0x78] sm:$0xff]
        %v857 = vld [vmem:[#allocation9 + $0x80] sm:$0xff]
        %v858 = vld [vmem:[#allocation9 + $0x88] sm:$0xff]
        %v859 = vld [vmem:[#allocation9 + $0x90] sm:$0xff]
        %v860 = vld [vmem:[#allocation9 + $0x98] sm:$0xff]
        %v861 = vld [vmem:[#allocation9 + $0xa0] sm:$0xff]
        %v862 = vld [vmem:[#allocation9 + $0xa8] sm:$0xff]
        %v863 = vld [vmem:[#allocation9 + $0xb0] sm:$0xff]
        %v864 = vld [vmem:[#allocation9 + $0xb8] sm:$0xff]
        %v865 = vld [vmem:[#allocation9 + $0xc0] sm:$0xff]
        %v866 = vld [vmem:[#allocation9 + $0xc8] sm:$0xff]
        %v867 = vld [vmem:[#allocation9 + $0xd0] sm:$0xff]
        %v868 = vld [vmem:[#allocation9 + $0xd8] sm:$0xff]
        %v869 = vld [vmem:[#allocation9 + $0xe0] sm:$0xff]
        %v870 = vld [vmem:[#allocation9 + $0xe8] sm:$0xff]
        %v871 = vld [vmem:[#allocation9 + $0xf0] sm:$0xff]
        %v872 = vld [vmem:[#allocation9 + $0xf8] sm:$0xff]
        %v873 = vld [vmem:[#allocation9 + $0x100] sm:$0xff]
        %v874 = vld [vmem:[#allocation9 + $0x108] sm:$0xff]
        %v875 = vld [vmem:[#allocation9 + $0x110] sm:$0xff]
        %v876 = vld [vmem:[#allocation9 + $0x118] sm:$0xff]
        %v877 = vld [vmem:[#allocation9 + $0x120] sm:$0xff]
        %v878 = vld [vmem:[#allocation9 + $0x128] sm:$0xff]
        %v879 = vld [vmem:[#allocation9 + $0x130] sm:$0xff]
        %v880 = vld [vmem:[#allocation9 + $0x138] sm:$0xff]
        %v881 = vld [vmem:[#allocation9 + $0x140] sm:$0xff]
        %v882 = vld [vmem:[#allocation9 + $0x148] sm:$0xff]
        %v883 = vld [vmem:[#allocation9 + $0x150] sm:$0xff]
        %v884 = vld [vmem:[#allocation9 + $0x158] sm:$0xff]
        %v885 = vld [vmem:[#allocation9 + $0x160] sm:$0xff]
        %v886 = vld [vmem:[#allocation9 + $0x168] sm:$0xff]
        %v887 = vld [vmem:[#allocation9 + $0x170] sm:$0xff]
        %v888 = vld [vmem:[#allocation9 + $0x178] sm:$0xff]
        %v889 = vld [vmem:[#allocation9 + $0x180] sm:$0xff]
        %v890 = vld [vmem:[#allocation9 + $0x188] sm:$0xff]
        %v891 = vld [vmem:[#allocation9 + $0x190] sm:$0xff]
        %v892 = vld [vmem:[#allocation9 + $0x198] sm:$0xff]
        %v893 = vld [vmem:[#allocation9 + $0x1a0] sm:$0xff]
        %v894 = vld [vmem:[#allocation9 + $0x1a8] sm:$0xff]
        %v895 = vld [vmem:[#allocation9 + $0x1b0] sm:$0xff]
        %v896 = vld [vmem:[#allocation9 + $0x1b8] sm:$0xff]
        %v897 = vld [vmem:[#allocation9 + $0x1c0] sm:$0xff]
        %v898 = vld [vmem:[#allocation9 + $0x1c8] sm:$0xff]
        %v899 = vld [vmem:[#allocation9 + $0x1d0] sm:$0xff]
        %v900 = vld [vmem:[#allocation9 + $0x1d8] sm:$0xff]
        %v901 = vld [vmem:[#allocation9 + $0x1e0] sm:$0xff]
        %v902 = vld [vmem:[#allocation9 + $0x1e8] sm:$0xff]
        %v903 = vld [vmem:[#allocation9 + $0x1f0] sm:$0xff]
        %v904 = vld [vmem:[#allocation9 + $0x1f8] sm:$0xff]
        %v905 = vld [vmem:[#allocation9 + $0x200] sm:$0xff]
        %v906 = vld [vmem:[#allocation9 + $0x208] sm:$0xff]
        %v907 = vld [vmem:[#allocation9 + $0x210] sm:$0xff]
        %v908 = vld [vmem:[#allocation9 + $0x218] sm:$0xff]
        %v909 = vld [vmem:[#allocation9 + $0x220] sm:$0xff]
        %v910 = vld [vmem:[#allocation9 + $0x228] sm:$0xff]
        %v911 = vld [vmem:[#allocation9 + $0x230] sm:$0xff]
        %v912 = vld [vmem:[#allocation9 + $0x238] sm:$0xff]
        %v913 = vld [vmem:[#allocation9 + $0x240] sm:$0xff]
        %v914 = vld [vmem:[#allocation9 + $0x248] sm:$0xff]
        %v915 = vld [vmem:[#allocation9 + $0x250] sm:$0xff]
        %v916 = vld [vmem:[#allocation9 + $0x258] sm:$0xff]
        %v917 = vld [vmem:[#allocation9 + $0x260] sm:$0xff]
        %v918 = vld [vmem:[#allocation9 + $0x268] sm:$0xff]
        %v919 = vld [vmem:[#allocation9 + $0x270] sm:$0xff]
        %v920 = vld [vmem:[#allocation9 + $0x278] sm:$0xff]
        %v921 = vld [vmem:[#allocation9 + $0x280] sm:$0xff]
        %v922 = vld [vmem:[#allocation9 + $0x288] sm:$0xff]
        %v923 = vld [vmem:[#allocation9 + $0x290] sm:$0xff]
        %v924 = vld [vmem:[#allocation9 + $0x298] sm:$0xff]
        %v925 = vld [vmem:[#allocation9 + $0x2a0] sm:$0xff]
        %v926 = vld [vmem:[#allocation9 + $0x2a8] sm:$0xff]
        %v927 = vld [vmem:[#allocation9 + $0x2b0] sm:$0xff]
        %v928 = vld [vmem:[#allocation9 + $0x2b8] sm:$0xff]
        %v929 = vld [vmem:[#allocation9 + $0x2c0] sm:$0xff]
        %v930 = vld [vmem:[#allocation9 + $0x2c8] sm:$0xff]
        %v931 = vld [vmem:[#allocation9 + $0x2d0] sm:$0xff]
        %v932 = vld [vmem:[#allocation9 + $0x2d8] sm:$0xff]
        %v933 = vld [vmem:[#allocation9 + $0x2e0] sm:$0xff]
        %v934 = vld [vmem:[#allocation9 + $0x2e8] sm:$0xff]
        %v935 = vld [vmem:[#allocation9 + $0x2f0] sm:$0xff]
        %v936 = vld [vmem:[#allocation9 + $0x2f8] sm:$0xff]
        %v937 = vld [vmem:[#allocation10] sm:$0x1]
        %v938 = vld [vmem:[#allocation10 + $0x1] sm:$0x1]
        %v939 = vld [vmem:[#allocation2] sm:$0xff]
        %v940 = vld [vmem:[#allocation2 + $0x8] sm:$0xff]
        %v941 = vld [vmem:[#allocation2 + $0x10] sm:$0xff]
        %v942 = vld [vmem:[#allocation2 + $0x18] sm:$0xff]
        %s943 = smul.u32 0, 3
        %s944 = smul.addr %s943, 8
        %s945 = scalar_lea.vmem [#allocation3], %s944
        %v946 = vld [vmem:[%s945] sm:$0xff]
        %v947 = vld [vmem:[%s945 + $0x8] sm:$0xff]
        %v948 = vld [vmem:[%s945 + $0x10] sm:$0xff]
        %v949 = vld [vmem:[%s945 + $0x18] sm:$0xff]
        %v950 = vld [vmem:[%s945 + $0x20] sm:$0xff]
        %v951 = vld [vmem:[%s945 + $0x28] sm:$0xff]
        %s952 = smul.u32 6, 3
        %s953 = smul.addr %s952, 8
        %s954 = scalar_lea.vmem [#allocation4], %s953
        %v955 = vld [vmem:[%s954] sm:$0xff]
        %v956 = vld [vmem:[%s954 + $0x8] sm:$0xff]
        %v957 = vld [vmem:[%s954 + $0x10] sm:$0xff]
        %v958 = vld [vmem:[%s954 + $0x18] sm:$0xff]
        %v959 = vld [vmem:[%s954 + $0x20] sm:$0xff]
        %v960 = vld [vmem:[%s954 + $0x28] sm:$0xff]
        %v961 = vpack.c.bf16 %v941, %v939
        %v962 = vpack.c.bf16 %v942, %v940
        %v1059 = vunpack.c.l.b16 %v841
        %v1060 = vunpack.c.h.b16 %v841
        %v1061 = vunpack.c.l.b16 %v842
        %v1062 = vunpack.c.h.b16 %v842
        %v1063 = vunpack.c.l.b16 %v843
        %v1064 = vunpack.c.h.b16 %v843
        %v1065 = vunpack.c.l.b16 %v844
        %v1066 = vunpack.c.h.b16 %v844
        %v1067 = vunpack.c.l.b16 %v845
        %v1068 = vunpack.c.h.b16 %v845
        %v1069 = vunpack.c.l.b16 %v846
        %v1070 = vunpack.c.h.b16 %v846
        %v1071 = vunpack.c.l.b16 %v847
        %v1072 = vunpack.c.h.b16 %v847
        %v1073 = vunpack.c.l.b16 %v848
        %v1074 = vunpack.c.h.b16 %v848
        %v1075 = vunpack.c.l.b16 %v849
        %v1076 = vunpack.c.h.b16 %v849
        %v1077 = vunpack.c.l.b16 %v850
        %v1078 = vunpack.c.h.b16 %v850
        %v1079 = vunpack.c.l.b16 %v851
        %v1080 = vunpack.c.h.b16 %v851
        %v1081 = vunpack.c.l.b16 %v852
        %v1082 = vunpack.c.h.b16 %v852
        %v1083 = vunpack.c.l.b16 %v853
        %v1084 = vunpack.c.h.b16 %v853
        %v1085 = vunpack.c.l.b16 %v854
        %v1086 = vunpack.c.h.b16 %v854
        %v1087 = vunpack.c.l.b16 %v855
        %v1088 = vunpack.c.h.b16 %v855
        %v1089 = vunpack.c.l.b16 %v856
        %v1090 = vunpack.c.h.b16 %v856
        %v1091 = vunpack.c.l.b16 %v857
        %v1092 = vunpack.c.h.b16 %v857
        %v1093 = vunpack.c.l.b16 %v858
        %v1094 = vunpack.c.h.b16 %v858
        %v1095 = vunpack.c.l.b16 %v859
        %v1096 = vunpack.c.h.b16 %v859
        %v1097 = vunpack.c.l.b16 %v860
        %v1098 = vunpack.c.h.b16 %v860
        %v1099 = vunpack.c.l.b16 %v861
        %v1100 = vunpack.c.h.b16 %v861
        %v1101 = vunpack.c.l.b16 %v862
        %v1102 = vunpack.c.h.b16 %v862
        %v1103 = vunpack.c.l.b16 %v863
        %v1104 = vunpack.c.h.b16 %v863
        %v1105 = vunpack.c.l.b16 %v864
        %v1106 = vunpack.c.h.b16 %v864
        %v1107 = vunpack.c.l.b16 %v865
        %v1108 = vunpack.c.h.b16 %v865
        %v1109 = vunpack.c.l.b16 %v866
        %v1110 = vunpack.c.h.b16 %v866
        %v1111 = vunpack.c.l.b16 %v867
        %v1112 = vunpack.c.h.b16 %v867
        %v1113 = vunpack.c.l.b16 %v868
        %v1114 = vunpack.c.h.b16 %v868
        %v1115 = vunpack.c.l.b16 %v869
        %v1116 = vunpack.c.h.b16 %v869
        %v1117 = vunpack.c.l.b16 %v870
        %v1118 = vunpack.c.h.b16 %v870
        %v1119 = vunpack.c.l.b16 %v871
        %v1120 = vunpack.c.h.b16 %v871
        %v1121 = vunpack.c.l.b16 %v872
        %v1122 = vunpack.c.h.b16 %v872
        %v1123 = vunpack.c.l.b16 %v873
        %v1124 = vunpack.c.h.b16 %v873
        %v1125 = vunpack.c.l.b16 %v874
        %v1126 = vunpack.c.h.b16 %v874
        %v1127 = vunpack.c.l.b16 %v875
        %v1128 = vunpack.c.h.b16 %v875
        %v1129 = vunpack.c.l.b16 %v876
        %v1130 = vunpack.c.h.b16 %v876
        %v1131 = vunpack.c.l.b16 %v877
        %v1132 = vunpack.c.h.b16 %v877
        %v1133 = vunpack.c.l.b16 %v878
        %v1134 = vunpack.c.h.b16 %v878
        %v1135 = vunpack.c.l.b16 %v879
        %v1136 = vunpack.c.h.b16 %v879
        %v1137 = vunpack.c.l.b16 %v880
        %v1138 = vunpack.c.h.b16 %v880
        %v1139 = vunpack.c.l.b16 %v881
        %v1140 = vunpack.c.h.b16 %v881
        %v1141 = vunpack.c.l.b16 %v882
        %v1142 = vunpack.c.h.b16 %v882
        %v1143 = vunpack.c.l.b16 %v883
        %v1144 = vunpack.c.h.b16 %v883
        %v1145 = vunpack.c.l.b16 %v884
        %v1146 = vunpack.c.h.b16 %v884
        %v1147 = vunpack.c.l.b16 %v885
        %v1148 = vunpack.c.h.b16 %v885
        %v1149 = vunpack.c.l.b16 %v886
        %v1150 = vunpack.c.h.b16 %v886
        %v1151 = vunpack.c.l.b16 %v887
        %v1152 = vunpack.c.h.b16 %v887
        %v1153 = vunpack.c.l.b16 %v888
        %v1154 = vunpack.c.h.b16 %v888
        %v1155 = vunpack.c.l.b16 %v889
        %v1156 = vunpack.c.h.b16 %v889
        %v1157 = vunpack.c.l.b16 %v890
        %v1158 = vunpack.c.h.b16 %v890
        %v1159 = vunpack.c.l.b16 %v891
        %v1160 = vunpack.c.h.b16 %v891
        %v1161 = vunpack.c.l.b16 %v892
        %v1162 = vunpack.c.h.b16 %v892
        %v1163 = vunpack.c.l.b16 %v893
        %v1164 = vunpack.c.h.b16 %v893
        %v1165 = vunpack.c.l.b16 %v894
        %v1166 = vunpack.c.h.b16 %v894
        %v1167 = vunpack.c.l.b16 %v895
        %v1168 = vunpack.c.h.b16 %v895
        %v1169 = vunpack.c.l.b16 %v896
        %v1170 = vunpack.c.h.b16 %v896
        %v1171 = vunpack.c.l.b16 %v897
        %v1172 = vunpack.c.h.b16 %v897
        %v1173 = vunpack.c.l.b16 %v898
        %v1174 = vunpack.c.h.b16 %v898
        %v1175 = vunpack.c.l.b16 %v899
        %v1176 = vunpack.c.h.b16 %v899
        %v1177 = vunpack.c.l.b16 %v900
        %v1178 = vunpack.c.h.b16 %v900
        %v1179 = vunpack.c.l.b16 %v901
        %v1180 = vunpack.c.h.b16 %v901
        %v1181 = vunpack.c.l.b16 %v902
        %v1182 = vunpack.c.h.b16 %v902
        %v1183 = vunpack.c.l.b16 %v903
        %v1184 = vunpack.c.h.b16 %v903
        %v1185 = vunpack.c.l.b16 %v904
        %v1186 = vunpack.c.h.b16 %v904
        %v1187 = vunpack.c.l.b16 %v905
        %v1188 = vunpack.c.h.b16 %v905
        %v1189 = vunpack.c.l.b16 %v906
        %v1190 = vunpack.c.h.b16 %v906
        %v1191 = vunpack.c.l.b16 %v907
        %v1192 = vunpack.c.h.b16 %v907
        %v1193 = vunpack.c.l.b16 %v908
        %v1194 = vunpack.c.h.b16 %v908
        %v1195 = vunpack.c.l.b16 %v909
        %v1196 = vunpack.c.h.b16 %v909
        %v1197 = vunpack.c.l.b16 %v910
        %v1198 = vunpack.c.h.b16 %v910
        %v1199 = vunpack.c.l.b16 %v911
        %v1200 = vunpack.c.h.b16 %v911
        %v1201 = vunpack.c.l.b16 %v912
        %v1202 = vunpack.c.h.b16 %v912
        %v1203 = vunpack.c.l.b16 %v913
        %v1204 = vunpack.c.h.b16 %v913
        %v1205 = vunpack.c.l.b16 %v914
        %v1206 = vunpack.c.h.b16 %v914
        %v1207 = vunpack.c.l.b16 %v915
        %v1208 = vunpack.c.h.b16 %v915
        %v1209 = vunpack.c.l.b16 %v916
        %v1210 = vunpack.c.h.b16 %v916
        %v1211 = vunpack.c.l.b16 %v917
        %v1212 = vunpack.c.h.b16 %v917
        %v1213 = vunpack.c.l.b16 %v918
        %v1214 = vunpack.c.h.b16 %v918
        %v1215 = vunpack.c.l.b16 %v919
        %v1216 = vunpack.c.h.b16 %v919
        %v1217 = vunpack.c.l.b16 %v920
        %v1218 = vunpack.c.h.b16 %v920
        %v1219 = vunpack.c.l.b16 %v921
        %v1220 = vunpack.c.h.b16 %v921
        %v1221 = vunpack.c.l.b16 %v922
        %v1222 = vunpack.c.h.b16 %v922
        %v1223 = vunpack.c.l.b16 %v923
        %v1224 = vunpack.c.h.b16 %v923
        %v1225 = vunpack.c.l.b16 %v924
        %v1226 = vunpack.c.h.b16 %v924
        %v1227 = vunpack.c.l.b16 %v925
        %v1228 = vunpack.c.h.b16 %v925
        %v1229 = vunpack.c.l.b16 %v926
        %v1230 = vunpack.c.h.b16 %v926
        %v1231 = vunpack.c.l.b16 %v927
        %v1232 = vunpack.c.h.b16 %v927
        %v1233 = vunpack.c.l.b16 %v928
        %v1234 = vunpack.c.h.b16 %v928
        %v1235 = vunpack.c.l.b16 %v929
        %v1236 = vunpack.c.h.b16 %v929
        %v1237 = vunpack.c.l.b16 %v930
        %v1238 = vunpack.c.h.b16 %v930
        %v1239 = vunpack.c.l.b16 %v931
        %v1240 = vunpack.c.h.b16 %v931
        %v1241 = vunpack.c.l.b16 %v932
        %v1242 = vunpack.c.h.b16 %v932
        %v1243 = vunpack.c.l.b16 %v933
        %v1244 = vunpack.c.h.b16 %v933
        %v1245 = vunpack.c.l.b16 %v934
        %v1246 = vunpack.c.h.b16 %v934
        %v1247 = vunpack.c.l.b16 %v935
        %v1248 = vunpack.c.h.b16 %v935
        %v1249 = vunpack.c.l.b16 %v936
        %v1250 = vunpack.c.h.b16 %v936
        %v1251 = vpack.c.b16 %v1065, %v1059
        %v1252 = vpack.c.b16 %v1066, %v1060
        %v1253 = vpack.c.b16 %v1067, %v1061
        %v1254 = vpack.c.b16 %v1068, %v1062
        %v1255 = vpack.c.b16 %v1069, %v1063
        %v1256 = vpack.c.b16 %v1070, %v1064
        %v1257 = vpack.c.b16 %v1077, %v1071
        %v1258 = vpack.c.b16 %v1078, %v1072
        %v1259 = vpack.c.b16 %v1079, %v1073
        %v1260 = vpack.c.b16 %v1080, %v1074
        %v1261 = vpack.c.b16 %v1081, %v1075
        %v1262 = vpack.c.b16 %v1082, %v1076
        %v1263 = vpack.c.b16 %v1089, %v1083
        %v1264 = vpack.c.b16 %v1090, %v1084
        %v1265 = vpack.c.b16 %v1091, %v1085
        %v1266 = vpack.c.b16 %v1092, %v1086
        %v1267 = vpack.c.b16 %v1093, %v1087
        %v1268 = vpack.c.b16 %v1094, %v1088
        %v1269 = vpack.c.b16 %v1101, %v1095
        %v1270 = vpack.c.b16 %v1102, %v1096
        %v1271 = vpack.c.b16 %v1103, %v1097
        %v1272 = vpack.c.b16 %v1104, %v1098
        %v1273 = vpack.c.b16 %v1105, %v1099
        %v1274 = vpack.c.b16 %v1106, %v1100
        %v1275 = vpack.c.b16 %v1113, %v1107
        %v1276 = vpack.c.b16 %v1114, %v1108
        %v1277 = vpack.c.b16 %v1115, %v1109
        %v1278 = vpack.c.b16 %v1116, %v1110
        %v1279 = vpack.c.b16 %v1117, %v1111
        %v1280 = vpack.c.b16 %v1118, %v1112
        %v1281 = vpack.c.b16 %v1125, %v1119
        %v1282 = vpack.c.b16 %v1126, %v1120
        %v1283 = vpack.c.b16 %v1127, %v1121
        %v1284 = vpack.c.b16 %v1128, %v1122
        %v1285 = vpack.c.b16 %v1129, %v1123
        %v1286 = vpack.c.b16 %v1130, %v1124
        %v1287 = vpack.c.b16 %v1137, %v1131
        %v1288 = vpack.c.b16 %v1138, %v1132
        %v1289 = vpack.c.b16 %v1139, %v1133
        %v1290 = vpack.c.b16 %v1140, %v1134
        %v1291 = vpack.c.b16 %v1141, %v1135
        %v1292 = vpack.c.b16 %v1142, %v1136
        %v1293 = vpack.c.b16 %v1149, %v1143
        %v1294 = vpack.c.b16 %v1150, %v1144
        %v1295 = vpack.c.b16 %v1151, %v1145
        %v1296 = vpack.c.b16 %v1152, %v1146
        %v1297 = vpack.c.b16 %v1153, %v1147
        %v1298 = vpack.c.b16 %v1154, %v1148
        %v1299 = vpack.c.b16 %v1161, %v1155
        %v1300 = vpack.c.b16 %v1162, %v1156
        %v1301 = vpack.c.b16 %v1163, %v1157
        %v1302 = vpack.c.b16 %v1164, %v1158
        %v1303 = vpack.c.b16 %v1165, %v1159
        %v1304 = vpack.c.b16 %v1166, %v1160
        %v1305 = vpack.c.b16 %v1173, %v1167
        %v1306 = vpack.c.b16 %v1174, %v1168
        %v1307 = vpack.c.b16 %v1175, %v1169
        %v1308 = vpack.c.b16 %v1176, %v1170
        %v1309 = vpack.c.b16 %v1177, %v1171
        %v1310 = vpack.c.b16 %v1178, %v1172
        %v1311 = vpack.c.b16 %v1185, %v1179
        %v1312 = vpack.c.b16 %v1186, %v1180
        %v1313 = vpack.c.b16 %v1187, %v1181
        %v1314 = vpack.c.b16 %v1188, %v1182
        %v1315 = vpack.c.b16 %v1189, %v1183
        %v1316 = vpack.c.b16 %v1190, %v1184
        %v1317 = vpack.c.b16 %v1197, %v1191
        %v1318 = vpack.c.b16 %v1198, %v1192
        %v1319 = vpack.c.b16 %v1199, %v1193
        %v1320 = vpack.c.b16 %v1200, %v1194
        %v1321 = vpack.c.b16 %v1201, %v1195
        %v1322 = vpack.c.b16 %v1202, %v1196
        %v1323 = vpack.c.b16 %v1209, %v1203
        %v1324 = vpack.c.b16 %v1210, %v1204
        %v1325 = vpack.c.b16 %v1211, %v1205
        %v1326 = vpack.c.b16 %v1212, %v1206
        %v1327 = vpack.c.b16 %v1213, %v1207
        %v1328 = vpack.c.b16 %v1214, %v1208
        %v1329 = vpack.c.b16 %v1221, %v1215
        %v1330 = vpack.c.b16 %v1222, %v1216
        %v1331 = vpack.c.b16 %v1223, %v1217
        %v1332 = vpack.c.b16 %v1224, %v1218
        %v1333 = vpack.c.b16 %v1225, %v1219
        %v1334 = vpack.c.b16 %v1226, %v1220
        %v1335 = vpack.c.b16 %v1233, %v1227
        %v1336 = vpack.c.b16 %v1234, %v1228
        %v1337 = vpack.c.b16 %v1235, %v1229
        %v1338 = vpack.c.b16 %v1236, %v1230
        %v1339 = vpack.c.b16 %v1237, %v1231
        %v1340 = vpack.c.b16 %v1238, %v1232
        %v1341 = vpack.c.b16 %v1245, %v1239
        %v1342 = vpack.c.b16 %v1246, %v1240
        %v1343 = vpack.c.b16 %v1247, %v1241
        %v1344 = vpack.c.b16 %v1248, %v1242
        %v1345 = vpack.c.b16 %v1249, %v1243
        %v1346 = vpack.c.b16 %v1250, %v1244
        %1443 = vmatprep.subr.bf16.mxu0 %v1252
        %1444 = vmatpush1.bf16.msra.mxu0 %v1251
        %1445 = vmatprep.subr.bf16.mxu0 %v1258
        %1446 = vmatpush1.bf16.msra.mxu0 %v1257
        %1447 = vmatprep.subr.bf16.mxu0 %v1264
        %1448 = vmatpush1.bf16.msra.mxu0 %v1263
        %1449 = vmatprep.subr.bf16.mxu0 %v1270
        %1450 = vmatpush1.bf16.msra.mxu0 %v1269
        %1451 = vmatprep.subr.bf16.mxu0 %v1276
        %1452 = vmatpush1.bf16.msra.mxu0 %v1275
        %1453 = vmatprep.subr.bf16.mxu0 %v1282
        %1454 = vmatpush1.bf16.msra.mxu0 %v1281
        %1455 = vmatprep.subr.bf16.mxu0 %v1288
        %1456 = vmatpush1.bf16.msra.mxu0 %v1287
        %1457 = vmatprep.subr.bf16.mxu0 %v1294
        %1458 = vmatpush1.bf16.msra.mxu0 %v1293
        %1459 = vmatprep.subr.bf16.mxu0 %v1300
        %1460 = vmatpush1.bf16.msra.mxu0 %v1299
        %1461 = vmatprep.subr.bf16.mxu0 %v1306
        %1462 = vmatpush1.bf16.msra.mxu0 %v1305
        %1463 = vmatprep.subr.bf16.mxu0 %v1312
        %1464 = vmatpush1.bf16.msra.mxu0 %v1311
        %1465 = vmatprep.subr.bf16.mxu0 %v1318
        %1466 = vmatpush1.bf16.msra.mxu0 %v1317
        %1467 = vmatprep.subr.bf16.mxu0 %v1324
        %1468 = vmatpush1.bf16.msra.mxu0 %v1323
        %1469 = vmatprep.subr.bf16.mxu0 %v1330
        %1470 = vmatpush1.bf16.msra.mxu0 %v1329
        %1471 = vmatprep.subr.bf16.mxu0 %v1336
        %1472 = vmatpush1.bf16.msra.mxu0 %v1335
        %1473 = vmatprep.subr.bf16.mxu0 %v1342
        %1474 = vmatpush1.bf16.msra.mxu0 %v1341
        %1475 = vmatprep.mubr.bf16.mxu0 %v962
        %1476 = vmatmul.mubr.bf16.gmra.mrb[0].mxu0 %v961
        %v1477 = vpop.f32.mrb[0].mxu0
        %v1478 = vadd.f32 0.0, %v1477
        %v1479 = vpop.f32.mrb[0].mxu0
        %v1480 = vadd.f32 0.0, %v1479
        %v1481 = vpop.f32.mrb[0].mxu0
        %v1482 = vadd.f32 0.0, %v1481
        %v1483 = vpop.f32.mrb[0].mxu0
        %v1484 = vadd.f32 0.0, %v1483
        %1485 = vdwg.mxu0
        %1486 = vmatprep.subr.bf16.mxu0 %v1254
        %1487 = vmatpush1.bf16.msra.mxu0 %v1253
        %1488 = vmatprep.subr.bf16.mxu0 %v1260
        %1489 = vmatpush1.bf16.msra.mxu0 %v1259
        %1490 = vmatprep.subr.bf16.mxu0 %v1266
        %1491 = vmatpush1.bf16.msra.mxu0 %v1265
        %1492 = vmatprep.subr.bf16.mxu0 %v1272
        %1493 = vmatpush1.bf16.msra.mxu0 %v1271
        %1494 = vmatprep.subr.bf16.mxu0 %v1278
        %1495 = vmatpush1.bf16.msra.mxu0 %v1277
        %1496 = vmatprep.subr.bf16.mxu0 %v1284
        %1497 = vmatpush1.bf16.msra.mxu0 %v1283
        %1498 = vmatprep.subr.bf16.mxu0 %v1290
        %1499 = vmatpush1.bf16.msra.mxu0 %v1289
        %1500 = vmatprep.subr.bf16.mxu0 %v1296
        %1501 = vmatpush1.bf16.msra.mxu0 %v1295
        %1502 = vmatprep.subr.bf16.mxu0 %v1302
        %1503 = vmatpush1.bf16.msra.mxu0 %v1301
        %1504 = vmatprep.subr.bf16.mxu0 %v1308
        %1505 = vmatpush1.bf16.msra.mxu0 %v1307
        %1506 = vmatprep.subr.bf16.mxu0 %v1314
        %1507 = vmatpush1.bf16.msra.mxu0 %v1313
        %1508 = vmatprep.subr.bf16.mxu0 %v1320
        %1509 = vmatpush1.bf16.msra.mxu0 %v1319
        %1510 = vmatprep.subr.bf16.mxu0 %v1326
        %1511 = vmatpush1.bf16.msra.mxu0 %v1325
        %1512 = vmatprep.subr.bf16.mxu0 %v1332
        %1513 = vmatpush1.bf16.msra.mxu0 %v1331
        %1514 = vmatprep.subr.bf16.mxu0 %v1338
        %1515 = vmatpush1.bf16.msra.mxu0 %v1337
        %1516 = vmatprep.subr.bf16.mxu0 %v1344
        %1517 = vmatpush1.bf16.msra.mxu0 %v1343
        %1518 = vmatprep.mubr.bf16.mxu0 %v962
        %1519 = vmatmul.mubr.bf16.gmra.mrb[0].mxu0 %v961
        %v1520 = vpop.f32.mrb[0].mxu0
        %v1521 = vadd.f32 0.0, %v1520
        %v1522 = vpop.f32.mrb[0].mxu0
        %v1523 = vadd.f32 0.0, %v1522
        %v1524 = vpop.f32.mrb[0].mxu0
        %v1525 = vadd.f32 0.0, %v1524
        %v1526 = vpop.f32.mrb[0].mxu0
        %v1527 = vadd.f32 0.0, %v1526
        %1528 = vdwg.mxu0
        %1529 = vmatprep.subr.bf16.mxu0 %v1256
        %1530 = vmatpush1.bf16.msra.mxu0 %v1255
        %1531 = vmatprep.subr.bf16.mxu0 %v1262
        %1532 = vmatpush1.bf16.msra.mxu0 %v1261
        %1533 = vmatprep.subr.bf16.mxu0 %v1268
        %1534 = vmatpush1.bf16.msra.mxu0 %v1267
        %1535 = vmatprep.subr.bf16.mxu0 %v1274
        %1536 = vmatpush1.bf16.msra.mxu0 %v1273
        %1537 = vmatprep.subr.bf16.mxu0 %v1280
        %1538 = vmatpush1.bf16.msra.mxu0 %v1279
        %1539 = vmatprep.subr.bf16.mxu0 %v1286
        %1540 = vmatpush1.bf16.msra.mxu0 %v1285
        %1541 = vmatprep.subr.bf16.mxu0 %v1292
        %1542 = vmatpush1.bf16.msra.mxu0 %v1291
        %1543 = vmatprep.subr.bf16.mxu0 %v1298
        %1544 = vmatpush1.bf16.msra.mxu0 %v1297
        %1545 = vmatprep.subr.bf16.mxu0 %v1304
        %1546 = vmatpush1.bf16.msra.mxu0 %v1303
        %1547 = vmatprep.subr.bf16.mxu0 %v1310
        %1548 = vmatpush1.bf16.msra.mxu0 %v1309
        %1549 = vmatprep.subr.bf16.mxu0 %v1316
        %1550 = vmatpush1.bf16.msra.mxu0 %v1315
        %1551 = vmatprep.subr.bf16.mxu0 %v1322
        %1552 = vmatpush1.bf16.msra.mxu0 %v1321
        %1553 = vmatprep.subr.bf16.mxu0 %v1328
        %1554 = vmatpush1.bf16.msra.mxu0 %v1327
        %1555 = vmatprep.subr.bf16.mxu0 %v1334
        %1556 = vmatpush1.bf16.msra.mxu0 %v1333
        %1557 = vmatprep.subr.bf16.mxu0 %v1340
        %1558 = vmatpush1.bf16.msra.mxu0 %v1339
        %1559 = vmatprep.subr.bf16.mxu0 %v1346
        %1560 = vmatpush1.bf16.msra.mxu0 %v1345
        %1561 = vmatprep.mubr.bf16.mxu0 %v962
        %1562 = vmatmul.mubr.bf16.gmra.mrb[0].mxu0 %v961
        %v1563 = vpop.f32.mrb[0].mxu0
        %v1564 = vadd.f32 0.0, %v1563
        %v1565 = vpop.f32.mrb[0].mxu0
        %v1566 = vadd.f32 0.0, %v1565
        %v1567 = vpop.f32.mrb[0].mxu0
        %v1568 = vadd.f32 0.0, %v1567
        %v1569 = vpop.f32.mrb[0].mxu0
        %v1570 = vadd.f32 0.0, %v1569
        %1571 = vdwg.mxu0
        %v1572 = vadd.f32 %v946, %v1478
        %v1573 = vadd.f32 %v949, %v1482
        %v1574 = vxor.u32 %v1572, 2147483648
        %v1575 = vxor.u32 %v1573, 2147483648
        %v1576 = vmul.f32 %v1574, 1.442695
        %v1577 = vpow.pop %v1576
        %v1578 = vmul.f32 %v1575, 1.442695
        %v1579 = vpow.pop %v1578
        %v1580 = vadd.f32 %v1577, 1.0
        %v1581 = vadd.f32 %v1579, 1.0
        %v1582 = vrcp.pop %v1580
        %v1583 = vmul.f32 1.0, %v1582
        %v1584 = vrcp.pop %v1581
        %v1585 = vmul.f32 1.0, %v1584
        %v1586 = vadd.f32 %v947, %v1480
        %v1587 = vadd.f32 %v950, %v1484
        %v1588 = vxor.u32 %v1586, 2147483648
        %v1589 = vxor.u32 %v1587, 2147483648
        %v1590 = vmul.f32 %v1588, 1.442695
        %v1591 = vpow.pop %v1590
        %v1592 = vmul.f32 %v1589, 1.442695
        %v1593 = vpow.pop %v1592
        %v1594 = vadd.f32 %v1591, 1.0
        %v1595 = vadd.f32 %v1593, 1.0
        %v1596 = vrcp.pop %v1594
        %v1597 = vmul.f32 1.0, %v1596
        %v1598 = vrcp.pop %v1595
        %v1599 = vmul.f32 1.0, %v1598
        %v1601 = vlaneseq
        %v1602 = vshrl.u32 %v1601, 7
        %v1603 = vsub.s32 0, %v1602
        %v1604 = vrot.slane %v937, %v1603
        %v1606 = vadd.f32 %v1521, %v1604
        %v1607 = vadd.f32 %v1525, %v1604
        %v1608 = vmul.f32 %v1583, %v1606
        %v1609 = vmul.f32 %v1585, %v1607
        %v1610 = vadd.f32 %v948, %v1608
        %v1611 = vadd.f32 %v951, %v1609
        %v1612 = vtanh.pop %v1610
        %v1613 = vtanh.pop %v1611
        %v1614 = vsub.f32 %v939, %v1612
        %v1615 = vsub.f32 %v941, %v1613
        %v1616 = vmul.f32 %v1597, %v1614
        %v1617 = vmul.f32 %v1599, %v1615
        %v1618 = vadd.f32 %v1612, %v1616
        %v1619 = vadd.f32 %v1613, %v1617
        %v1620 = vadd.f32 %v955, %v1523
        %v1621 = vadd.f32 %v958, %v1527
        %v1622 = vxor.u32 %v1620, 2147483648
        %v1623 = vxor.u32 %v1621, 2147483648
        %v1624 = vmul.f32 %v1622, 1.442695
        %v1625 = vpow.pop %v1624
        %v1626 = vmul.f32 %v1623, 1.442695
        %v1627 = vpow.pop %v1626
        %v1628 = vadd.f32 %v1625, 1.0
        %v1629 = vadd.f32 %v1627, 1.0
        %v1630 = vrcp.pop %v1628
        %v1631 = vmul.f32 1.0, %v1630
        %v1632 = vrcp.pop %v1629
        %v1633 = vmul.f32 1.0, %v1632
        %v1634 = vadd.f32 %v956, %v1564
        %v1635 = vadd.f32 %v959, %v1568
        %v1636 = vxor.u32 %v1634, 2147483648
        %v1637 = vxor.u32 %v1635, 2147483648
        %v1638 = vmul.f32 %v1636, 1.442695
        %v1639 = vpow.pop %v1638
        %v1640 = vmul.f32 %v1637, 1.442695
        %v1641 = vpow.pop %v1640
        %v1642 = vadd.f32 %v1639, 1.0
        %v1643 = vadd.f32 %v1641, 1.0
        %v1644 = vrcp.pop %v1642
        %v1645 = vmul.f32 1.0, %v1644
        %v1646 = vrcp.pop %v1643
        %v1647 = vmul.f32 1.0, %v1646
        %v1649 = vlaneseq
        %v1650 = vshrl.u32 %v1649, 7
        %v1651 = vsub.s32 0, %v1650
        %v1652 = vrot.slane %v938, %v1651
        %v1654 = vadd.f32 %v1566, %v1652
        %v1655 = vadd.f32 %v1570, %v1652
        %v1656 = vmul.f32 %v1631, %v1654
        %v1657 = vmul.f32 %v1633, %v1655
        %v1658 = vadd.f32 %v957, %v1656
        %v1659 = vadd.f32 %v960, %v1657
        %v1660 = vtanh.pop %v1658
        %v1661 = vtanh.pop %v1659
        %v1662 = vsub.f32 %v940, %v1660
        %v1663 = vsub.f32 %v942, %v1661
        %v1664 = vmul.f32 %v1645, %v1662
        %v1665 = vmul.f32 %v1647, %v1663
        %v1666 = vadd.f32 %v1660, %v1664
        %v1667 = vadd.f32 %v1661, %v1665
        %v1668 = vpack.c.bf16 %v1619, %v1618
        %v1670 = vunpack.c.l.b16 %v1668
        %v1671 = vunpack.c.h.b16 %v1668
        %v1672 = vpack.c.b16 %v1670, %v1670
        %v1673 = vpack.c.b16 %v1671, %v1671
        %1676 = vst [vmem:[%s375] sm:$0xf] %v1672
        %1677 = vst [vmem:[%s375 + $0x4] sm:$0xf] %v1673
        %v1678 = vpack.c.bf16 %v1667, %v1666
        %v1680 = vunpack.c.l.b16 %v1678
        %v1681 = vunpack.c.h.b16 %v1678
        %v1682 = vpack.c.b16 %v1680, %v1680
        %v1683 = vpack.c.b16 %v1681, %v1681
        %s1686 = scalar_lea.vmem %s382, 24
        %1687 = vst [vmem:[%s1686] sm:$0xf] %v1682
        %1688 = vst [vmem:[%s1686 + $0x4] sm:$0xf] %v1683
        %s1689 = smul.u32 2, 3
        %s1690 = smul.addr %s1689, 8
        %s1691 = scalar_lea.vmem [#allocation3], %s1690
        %v1692 = vld [vmem:[%s1691] sm:$0xff]
        %v1693 = vld [vmem:[%s1691 + $0x8] sm:$0xff]
        %v1694 = vld [vmem:[%s1691 + $0x10] sm:$0xff]
        %v1695 = vld [vmem:[%s1691 + $0x18] sm:$0xff]
        %v1696 = vld [vmem:[%s1691 + $0x20] sm:$0xff]
        %v1697 = vld [vmem:[%s1691 + $0x28] sm:$0xff]
        %s1698 = smul.u32 4, 3
        %s1699 = smul.addr %s1698, 8
        %s1700 = scalar_lea.vmem [#allocation4], %s1699
        %v1701 = vld [vmem:[%s1700] sm:$0xff]
        %v1702 = vld [vmem:[%s1700 + $0x8] sm:$0xff]
        %v1703 = vld [vmem:[%s1700 + $0x10] sm:$0xff]
        %v1704 = vld [vmem:[%s1700 + $0x18] sm:$0xff]
        %v1705 = vld [vmem:[%s1700 + $0x20] sm:$0xff]
        %v1706 = vld [vmem:[%s1700 + $0x28] sm:$0xff]
        %1707 = vmatprep.subr.bf16.mxu0 %v1252
        %1708 = vmatpush1.bf16.msra.mxu0 %v1251
        %1709 = vmatprep.subr.bf16.mxu0 %v1258
        %1710 = vmatpush1.bf16.msra.mxu0 %v1257
        %1711 = vmatprep.subr.bf16.mxu0 %v1264
        %1712 = vmatpush1.bf16.msra.mxu0 %v1263
        %1713 = vmatprep.subr.bf16.mxu0 %v1270
        %1714 = vmatpush1.bf16.msra.mxu0 %v1269
        %1715 = vmatprep.subr.bf16.mxu0 %v1276
        %1716 = vmatpush1.bf16.msra.mxu0 %v1275
        %1717 = vmatprep.subr.bf16.mxu0 %v1282
        %1718 = vmatpush1.bf16.msra.mxu0 %v1281
        %1719 = vmatprep.subr.bf16.mxu0 %v1288
        %1720 = vmatpush1.bf16.msra.mxu0 %v1287
        %1721 = vmatprep.subr.bf16.mxu0 %v1294
        %1722 = vmatpush1.bf16.msra.mxu0 %v1293
        %1723 = vmatprep.subr.bf16.mxu0 %v1300
        %1724 = vmatpush1.bf16.msra.mxu0 %v1299
        %1725 = vmatprep.subr.bf16.mxu0 %v1306
        %1726 = vmatpush1.bf16.msra.mxu0 %v1305
        %1727 = vmatprep.subr.bf16.mxu0 %v1312
        %1728 = vmatpush1.bf16.msra.mxu0 %v1311
        %1729 = vmatprep.subr.bf16.mxu0 %v1318
        %1730 = vmatpush1.bf16.msra.mxu0 %v1317
        %1731 = vmatprep.subr.bf16.mxu0 %v1324
        %1732 = vmatpush1.bf16.msra.mxu0 %v1323
        %1733 = vmatprep.subr.bf16.mxu0 %v1330
        %1734 = vmatpush1.bf16.msra.mxu0 %v1329
        %1735 = vmatprep.subr.bf16.mxu0 %v1336
        %1736 = vmatpush1.bf16.msra.mxu0 %v1335
        %1737 = vmatprep.subr.bf16.mxu0 %v1342
        %1738 = vmatpush1.bf16.msra.mxu0 %v1341
        %1739 = vmatprep.mubr.bf16.mxu0 %v1678
        %1740 = vmatmul.mubr.bf16.gmra.mrb[0].mxu0 %v1668
        %v1741 = vpop.f32.mrb[0].mxu0
        %v1742 = vadd.f32 0.0, %v1741
        %v1743 = vpop.f32.mrb[0].mxu0
        %v1744 = vadd.f32 0.0, %v1743
        %v1745 = vpop.f32.mrb[0].mxu0
        %v1746 = vadd.f32 0.0, %v1745
        %v1747 = vpop.f32.mrb[0].mxu0
        %v1748 = vadd.f32 0.0, %v1747
        %1749 = vdwg.mxu0
        %1750 = vmatprep.subr.bf16.mxu0 %v1254
        %1751 = vmatpush1.bf16.msra.mxu0 %v1253
        %1752 = vmatprep.subr.bf16.mxu0 %v1260
        %1753 = vmatpush1.bf16.msra.mxu0 %v1259
        %1754 = vmatprep.subr.bf16.mxu0 %v1266
        %1755 = vmatpush1.bf16.msra.mxu0 %v1265
        %1756 = vmatprep.subr.bf16.mxu0 %v1272
        %1757 = vmatpush1.bf16.msra.mxu0 %v1271
        %1758 = vmatprep.subr.bf16.mxu0 %v1278
        %1759 = vmatpush1.bf16.msra.mxu0 %v1277
        %1760 = vmatprep.subr.bf16.mxu0 %v1284
        %1761 = vmatpush1.bf16.msra.mxu0 %v1283
        %1762 = vmatprep.subr.bf16.mxu0 %v1290
        %1763 = vmatpush1.bf16.msra.mxu0 %v1289
        %1764 = vmatprep.subr.bf16.mxu0 %v1296
        %1765 = vmatpush1.bf16.msra.mxu0 %v1295
        %1766 = vmatprep.subr.bf16.mxu0 %v1302
        %1767 = vmatpush1.bf16.msra.mxu0 %v1301
        %1768 = vmatprep.subr.bf16.mxu0 %v1308
        %1769 = vmatpush1.bf16.msra.mxu0 %v1307
        %1770 = vmatprep.subr.bf16.mxu0 %v1314
        %1771 = vmatpush1.bf16.msra.mxu0 %v1313
        %1772 = vmatprep.subr.bf16.mxu0 %v1320
        %1773 = vmatpush1.bf16.msra.mxu0 %v1319
        %1774 = vmatprep.subr.bf16.mxu0 %v1326
        %1775 = vmatpush1.bf16.msra.mxu0 %v1325
        %1776 = vmatprep.subr.bf16.mxu0 %v1332
        %1777 = vmatpush1.bf16.msra.mxu0 %v1331
        %1778 = vmatprep.subr.bf16.mxu0 %v1338
        %1779 = vmatpush1.bf16.msra.mxu0 %v1337
        %1780 = vmatprep.subr.bf16.mxu0 %v1344
        %1781 = vmatpush1.bf16.msra.mxu0 %v1343
        %1782 = vmatprep.mubr.bf16.mxu0 %v1678
        %1783 = vmatmul.mubr.bf16.gmra.mrb[0].mxu0 %v1668
        %v1784 = vpop.f32.mrb[0].mxu0
        %v1785 = vadd.f32 0.0, %v1784
        %v1786 = vpop.f32.mrb[0].mxu0
        %v1787 = vadd.f32 0.0, %v1786
        %v1788 = vpop.f32.mrb[0].mxu0
        %v1789 = vadd.f32 0.0, %v1788
        %v1790 = vpop.f32.mrb[0].mxu0
        %v1791 = vadd.f32 0.0, %v1790
        %1792 = vdwg.mxu0
        %1793 = vmatprep.subr.bf16.mxu0 %v1256
        %1794 = vmatpush1.bf16.msra.mxu0 %v1255
        %1795 = vmatprep.subr.bf16.mxu0 %v1262
        %1796 = vmatpush1.bf16.msra.mxu0 %v1261
        %1797 = vmatprep.subr.bf16.mxu0 %v1268
        %1798 = vmatpush1.bf16.msra.mxu0 %v1267
        %1799 = vmatprep.subr.bf16.mxu0 %v1274
        %1800 = vmatpush1.bf16.msra.mxu0 %v1273
        %1801 = vmatprep.subr.bf16.mxu0 %v1280
        %1802 = vmatpush1.bf16.msra.mxu0 %v1279
        %1803 = vmatprep.subr.bf16.mxu0 %v1286
        %1804 = vmatpush1.bf16.msra.mxu0 %v1285
        %1805 = vmatprep.subr.bf16.mxu0 %v1292
        %1806 = vmatpush1.bf16.msra.mxu0 %v1291
        %1807 = vmatprep.subr.bf16.mxu0 %v1298
        %1808 = vmatpush1.bf16.msra.mxu0 %v1297
        %1809 = vmatprep.subr.bf16.mxu0 %v1304
        %1810 = vmatpush1.bf16.msra.mxu0 %v1303
        %1811 = vmatprep.subr.bf16.mxu0 %v1310
        %1812 = vmatpush1.bf16.msra.mxu0 %v1309
        %1813 = vmatprep.subr.bf16.mxu0 %v1316
        %1814 = vmatpush1.bf16.msra.mxu0 %v1315
        %1815 = vmatprep.subr.bf16.mxu0 %v1322
        %1816 = vmatpush1.bf16.msra.mxu0 %v1321
        %1817 = vmatprep.subr.bf16.mxu0 %v1328
        %1818 = vmatpush1.bf16.msra.mxu0 %v1327
        %1819 = vmatprep.subr.bf16.mxu0 %v1334
        %1820 = vmatpush1.bf16.msra.mxu0 %v1333
        %1821 = vmatprep.subr.bf16.mxu0 %v1340
        %1822 = vmatpush1.bf16.msra.mxu0 %v1339
        %1823 = vmatprep.subr.bf16.mxu0 %v1346
        %1824 = vmatpush1.bf16.msra.mxu0 %v1345
        %1825 = vmatprep.mubr.bf16.mxu0 %v1678
        %1826 = vmatmul.mubr.bf16.gmra.mrb[0].mxu0 %v1668
        %v1827 = vpop.f32.mrb[0].mxu0
        %v1828 = vadd.f32 0.0, %v1827
        %v1829 = vpop.f32.mrb[0].mxu0
        %v1830 = vadd.f32 0.0, %v1829
        %v1831 = vpop.f32.mrb[0].mxu0
        %v1832 = vadd.f32 0.0, %v1831
        %v1833 = vpop.f32.mrb[0].mxu0
        %v1834 = vadd.f32 0.0, %v1833
        %1835 = vdwg.mxu0
        %v1836 = vadd.f32 %v1692, %v1742
        %v1837 = vadd.f32 %v1695, %v1746
        %v1838 = vxor.u32 %v1836, 2147483648
        %v1839 = vxor.u32 %v1837, 2147483648
        %v1840 = vmul.f32 %v1838, 1.442695
        %v1841 = vpow.pop %v1840
        %v1842 = vmul.f32 %v1839, 1.442695
        %v1843 = vpow.pop %v1842
        %v1844 = vadd.f32 %v1841, 1.0
        %v1845 = vadd.f32 %v1843, 1.0
        %v1846 = vrcp.pop %v1844
        %v1847 = vmul.f32 1.0, %v1846
        %v1848 = vrcp.pop %v1845
        %v1849 = vmul.f32 1.0, %v1848
        %v1850 = vadd.f32 %v1693, %v1744
        %v1851 = vadd.f32 %v1696, %v1748
        %v1852 = vxor.u32 %v1850, 2147483648
        %v1853 = vxor.u32 %v1851, 2147483648
        %v1854 = vmul.f32 %v1852, 1.442695
        %v1855 = vpow.pop %v1854
        %v1856 = vmul.f32 %v1853, 1.442695
        %v1857 = vpow.pop %v1856
        %v1858 = vadd.f32 %v1855, 1.0
        %v1859 = vadd.f32 %v1857, 1.0
        %v1860 = vrcp.pop %v1858
        %v1861 = vmul.f32 1.0, %v1860
        %v1862 = vrcp.pop %v1859
        %v1863 = vmul.f32 1.0, %v1862
        %v1864 = vadd.f32 %v1785, %v1604
        %v1865 = vadd.f32 %v1789, %v1604
        %v1866 = vmul.f32 %v1847, %v1864
        %v1867 = vmul.f32 %v1849, %v1865
        %v1868 = vadd.f32 %v1694, %v1866
        %v1869 = vadd.f32 %v1697, %v1867
        %v1870 = vtanh.pop %v1868
        %v1871 = vtanh.pop %v1869
        %v1872 = vsub.f32 %v1618, %v1870
        %v1873 = vsub.f32 %v1619, %v1871
        %v1874 = vmul.f32 %v1861, %v1872
        %v1875 = vmul.f32 %v1863, %v1873
        %v1876 = vadd.f32 %v1870, %v1874
        %v1877 = vadd.f32 %v1871, %v1875
        %v1878 = vadd.f32 %v1701, %v1787
        %v1879 = vadd.f32 %v1704, %v1791
        %v1880 = vxor.u32 %v1878, 2147483648
        %v1881 = vxor.u32 %v1879, 2147483648
        %v1882 = vmul.f32 %v1880, 1.442695
        %v1883 = vpow.pop %v1882
        %v1884 = vmul.f32 %v1881, 1.442695
        %v1885 = vpow.pop %v1884
        %v1886 = vadd.f32 %v1883, 1.0
        %v1887 = vadd.f32 %v1885, 1.0
        %v1888 = vrcp.pop %v1886
        %v1889 = vmul.f32 1.0, %v1888
        %v1890 = vrcp.pop %v1887
        %v1891 = vmul.f32 1.0, %v1890
        %v1892 = vadd.f32 %v1702, %v1828
        %v1893 = vadd.f32 %v1705, %v1832
        %v1894 = vxor.u32 %v1892, 2147483648
        %v1895 = vxor.u32 %v1893, 2147483648
        %v1896 = vmul.f32 %v1894, 1.442695
        %v1897 = vpow.pop %v1896
        %v1898 = vmul.f32 %v1895, 1.442695
        %v1899 = vpow.pop %v1898
        %v1900 = vadd.f32 %v1897, 1.0
        %v1901 = vadd.f32 %v1899, 1.0
        %v1902 = vrcp.pop %v1900
        %v1903 = vmul.f32 1.0, %v1902
        %v1904 = vrcp.pop %v1901
        %v1905 = vmul.f32 1.0, %v1904
        %v1906 = vadd.f32 %v1830, %v1652
        %v1907 = vadd.f32 %v1834, %v1652
        %v1908 = vmul.f32 %v1889, %v1906
        %v1909 = vmul.f32 %v1891, %v1907
        %v1910 = vadd.f32 %v1703, %v1908
        %v1911 = vadd.f32 %v1706, %v1909
        %v1912 = vtanh.pop %v1910
        %v1913 = vtanh.pop %v1911
        %v1914 = vsub.f32 %v1666, %v1912
        %v1915 = vsub.f32 %v1667, %v1913
        %v1916 = vmul.f32 %v1903, %v1914
        %v1917 = vmul.f32 %v1905, %v1915
        %v1918 = vadd.f32 %v1912, %v1916
        %v1919 = vadd.f32 %v1913, %v1917
        %v1920 = vpack.c.bf16 %v1877, %v1876
        %v1922 = vunpack.c.l.b16 %v1920
        %v1923 = vunpack.c.h.b16 %v1920
        %v1924 = vpack.c.b16 %v1922, %v1922
        %v1925 = vpack.c.b16 %v1923, %v1923
        %s1928 = scalar_lea.vmem %s375, 8
        %1929 = vst [vmem:[%s1928] sm:$0xf] %v1924
        %1930 = vst [vmem:[%s1928 + $0x4] sm:$0xf] %v1925
        %v1931 = vpack.c.bf16 %v1919, %v1918
        %v1933 = vunpack.c.l.b16 %v1931
        %v1934 = vunpack.c.h.b16 %v1931
        %v1935 = vpack.c.b16 %v1933, %v1933
        %v1936 = vpack.c.b16 %v1934, %v1934
        %s1939 = scalar_lea.vmem %s382, 16
        %1940 = vst [vmem:[%s1939] sm:$0xf] %v1935
        %1941 = vst [vmem:[%s1939 + $0x4] sm:$0xf] %v1936
        %s1942 = smul.addr %s1698, 8
        %s1943 = scalar_lea.vmem [#allocation3], %s1942
        %v1944 = vld [vmem:[%s1943] sm:$0xff]
        %v1945 = vld [vmem:[%s1943 + $0x8] sm:$0xff]
        %v1946 = vld [vmem:[%s1943 + $0x10] sm:$0xff]
        %v1947 = vld [vmem:[%s1943 + $0x18] sm:$0xff]
        %v1948 = vld [vmem:[%s1943 + $0x20] sm:$0xff]
        %v1949 = vld [vmem:[%s1943 + $0x28] sm:$0xff]
        %s1950 = smul.addr %s1689, 8
        %s1951 = scalar_lea.vmem [#allocation4], %s1950
        %v1952 = vld [vmem:[%s1951] sm:$0xff]
        %v1953 = vld [vmem:[%s1951 + $0x8] sm:$0xff]
        %v1954 = vld [vmem:[%s1951 + $0x10] sm:$0xff]
        %v1955 = vld [vmem:[%s1951 + $0x18] sm:$0xff]
        %v1956 = vld [vmem:[%s1951 + $0x20] sm:$0xff]
        %v1957 = vld [vmem:[%s1951 + $0x28] sm:$0xff]
        %1958 = vmatprep.subr.bf16.mxu0 %v1252
        %1959 = vmatpush1.bf16.msra.mxu0 %v1251
        %1960 = vmatprep.subr.bf16.mxu0 %v1258
        %1961 = vmatpush1.bf16.msra.mxu0 %v1257
        %1962 = vmatprep.subr.bf16.mxu0 %v1264
        %1963 = vmatpush1.bf16.msra.mxu0 %v1263
        %1964 = vmatprep.subr.bf16.mxu0 %v1270
        %1965 = vmatpush1.bf16.msra.mxu0 %v1269
        %1966 = vmatprep.subr.bf16.mxu0 %v1276
        %1967 = vmatpush1.bf16.msra.mxu0 %v1275
        %1968 = vmatprep.subr.bf16.mxu0 %v1282
        %1969 = vmatpush1.bf16.msra.mxu0 %v1281
        %1970 = vmatprep.subr.bf16.mxu0 %v1288
        %1971 = vmatpush1.bf16.msra.mxu0 %v1287
        %1972 = vmatprep.subr.bf16.mxu0 %v1294
        %1973 = vmatpush1.bf16.msra.mxu0 %v1293
        %1974 = vmatprep.subr.bf16.mxu0 %v1300
        %1975 = vmatpush1.bf16.msra.mxu0 %v1299
        %1976 = vmatprep.subr.bf16.mxu0 %v1306
        %1977 = vmatpush1.bf16.msra.mxu0 %v1305
        %1978 = vmatprep.subr.bf16.mxu0 %v1312
        %1979 = vmatpush1.bf16.msra.mxu0 %v1311
        %1980 = vmatprep.subr.bf16.mxu0 %v1318
        %1981 = vmatpush1.bf16.msra.mxu0 %v1317
        %1982 = vmatprep.subr.bf16.mxu0 %v1324
        %1983 = vmatpush1.bf16.msra.mxu0 %v1323
        %1984 = vmatprep.subr.bf16.mxu0 %v1330
        %1985 = vmatpush1.bf16.msra.mxu0 %v1329
        %1986 = vmatprep.subr.bf16.mxu0 %v1336
        %1987 = vmatpush1.bf16.msra.mxu0 %v1335
        %1988 = vmatprep.subr.bf16.mxu0 %v1342
        %1989 = vmatpush1.bf16.msra.mxu0 %v1341
        %1990 = vmatprep.mubr.bf16.mxu0 %v1931
        %1991 = vmatmul.mubr.bf16.gmra.mrb[0].mxu0 %v1920
        %v1992 = vpop.f32.mrb[0].mxu0
        %v1993 = vadd.f32 0.0, %v1992
        %v1994 = vpop.f32.mrb[0].mxu0
        %v1995 = vadd.f32 0.0, %v1994
        %v1996 = vpop.f32.mrb[0].mxu0
        %v1997 = vadd.f32 0.0, %v1996
        %v1998 = vpop.f32.mrb[0].mxu0
        %v1999 = vadd.f32 0.0, %v1998
        %2000 = vdwg.mxu0
        %2001 = vmatprep.subr.bf16.mxu0 %v1254
        %2002 = vmatpush1.bf16.msra.mxu0 %v1253
        %2003 = vmatprep.subr.bf16.mxu0 %v1260
        %2004 = vmatpush1.bf16.msra.mxu0 %v1259
        %2005 = vmatprep.subr.bf16.mxu0 %v1266
        %2006 = vmatpush1.bf16.msra.mxu0 %v1265
        %2007 = vmatprep.subr.bf16.mxu0 %v1272
        %2008 = vmatpush1.bf16.msra.mxu0 %v1271
        %2009 = vmatprep.subr.bf16.mxu0 %v1278
        %2010 = vmatpush1.bf16.msra.mxu0 %v1277
        %2011 = vmatprep.subr.bf16.mxu0 %v1284
        %2012 = vmatpush1.bf16.msra.mxu0 %v1283
        %2013 = vmatprep.subr.bf16.mxu0 %v1290
        %2014 = vmatpush1.bf16.msra.mxu0 %v1289
        %2015 = vmatprep.subr.bf16.mxu0 %v1296
        %2016 = vmatpush1.bf16.msra.mxu0 %v1295
        %2017 = vmatprep.subr.bf16.mxu0 %v1302
        %2018 = vmatpush1.bf16.msra.mxu0 %v1301
        %2019 = vmatprep.subr.bf16.mxu0 %v1308
        %2020 = vmatpush1.bf16.msra.mxu0 %v1307
        %2021 = vmatprep.subr.bf16.mxu0 %v1314
        %2022 = vmatpush1.bf16.msra.mxu0 %v1313
        %2023 = vmatprep.subr.bf16.mxu0 %v1320
        %2024 = vmatpush1.bf16.msra.mxu0 %v1319
        %2025 = vmatprep.subr.bf16.mxu0 %v1326
        %2026 = vmatpush1.bf16.msra.mxu0 %v1325
        %2027 = vmatprep.subr.bf16.mxu0 %v1332
        %2028 = vmatpush1.bf16.msra.mxu0 %v1331
        %2029 = vmatprep.subr.bf16.mxu0 %v1338
        %2030 = vmatpush1.bf16.msra.mxu0 %v1337
        %2031 = vmatprep.subr.bf16.mxu0 %v1344
        %2032 = vmatpush1.bf16.msra.mxu0 %v1343
        %2033 = vmatprep.mubr.bf16.mxu0 %v1931
        %2034 = vmatmul.mubr.bf16.gmra.mrb[0].mxu0 %v1920
        %v2035 = vpop.f32.mrb[0].mxu0
        %v2036 = vadd.f32 0.0, %v2035
        %v2037 = vpop.f32.mrb[0].mxu0
        %v2038 = vadd.f32 0.0, %v2037
        %v2039 = vpop.f32.mrb[0].mxu0
        %v2040 = vadd.f32 0.0, %v2039
        %v2041 = vpop.f32.mrb[0].mxu0
        %v2042 = vadd.f32 0.0, %v2041
        %2043 = vdwg.mxu0
        %2044 = vmatprep.subr.bf16.mxu0 %v1256
        %2045 = vmatpush1.bf16.msra.mxu0 %v1255
        %2046 = vmatprep.subr.bf16.mxu0 %v1262
        %2047 = vmatpush1.bf16.msra.mxu0 %v1261
        %2048 = vmatprep.subr.bf16.mxu0 %v1268
        %2049 = vmatpush1.bf16.msra.mxu0 %v1267
        %2050 = vmatprep.subr.bf16.mxu0 %v1274
        %2051 = vmatpush1.bf16.msra.mxu0 %v1273
        %2052 = vmatprep.subr.bf16.mxu0 %v1280
        %2053 = vmatpush1.bf16.msra.mxu0 %v1279
        %2054 = vmatprep.subr.bf16.mxu0 %v1286
        %2055 = vmatpush1.bf16.msra.mxu0 %v1285
        %2056 = vmatprep.subr.bf16.mxu0 %v1292
        %2057 = vmatpush1.bf16.msra.mxu0 %v1291
        %2058 = vmatprep.subr.bf16.mxu0 %v1298
        %2059 = vmatpush1.bf16.msra.mxu0 %v1297
        %2060 = vmatprep.subr.bf16.mxu0 %v1304
        %2061 = vmatpush1.bf16.msra.mxu0 %v1303
        %2062 = vmatprep.subr.bf16.mxu0 %v1310
        %2063 = vmatpush1.bf16.msra.mxu0 %v1309
        %2064 = vmatprep.subr.bf16.mxu0 %v1316
        %2065 = vmatpush1.bf16.msra.mxu0 %v1315
        %2066 = vmatprep.subr.bf16.mxu0 %v1322
        %2067 = vmatpush1.bf16.msra.mxu0 %v1321
        %2068 = vmatprep.subr.bf16.mxu0 %v1328
        %2069 = vmatpush1.bf16.msra.mxu0 %v1327
        %2070 = vmatprep.subr.bf16.mxu0 %v1334
        %2071 = vmatpush1.bf16.msra.mxu0 %v1333
        %2072 = vmatprep.subr.bf16.mxu0 %v1340
        %2073 = vmatpush1.bf16.msra.mxu0 %v1339
        %2074 = vmatprep.subr.bf16.mxu0 %v1346
        %2075 = vmatpush1.bf16.msra.mxu0 %v1345
        %2076 = vmatprep.mubr.bf16.mxu0 %v1931
        %2077 = vmatmul.mubr.bf16.gmra.mrb[0].mxu0 %v1920
        %v2078 = vpop.f32.mrb[0].mxu0
        %v2079 = vadd.f32 0.0, %v2078
        %v2080 = vpop.f32.mrb[0].mxu0
        %v2081 = vadd.f32 0.0, %v2080
        %v2082 = vpop.f32.mrb[0].mxu0
        %v2083 = vadd.f32 0.0, %v2082
        %v2084 = vpop.f32.mrb[0].mxu0
        %v2085 = vadd.f32 0.0, %v2084
        %2086 = vdwg.mxu0
        %v2087 = vadd.f32 %v1944, %v1993
        %v2088 = vadd.f32 %v1947, %v1997
        %v2089 = vxor.u32 %v2087, 2147483648
        %v2090 = vxor.u32 %v2088, 2147483648
        %v2091 = vmul.f32 %v2089, 1.442695
        %v2092 = vpow.pop %v2091
        %v2093 = vmul.f32 %v2090, 1.442695
        %v2094 = vpow.pop %v2093
        %v2095 = vadd.f32 %v2092, 1.0
        %v2096 = vadd.f32 %v2094, 1.0
        %v2097 = vrcp.pop %v2095
        %v2098 = vmul.f32 1.0, %v2097
        %v2099 = vrcp.pop %v2096
        %v2100 = vmul.f32 1.0, %v2099
        %v2101 = vadd.f32 %v1945, %v1995
        %v2102 = vadd.f32 %v1948, %v1999
        %v2103 = vxor.u32 %v2101, 2147483648
        %v2104 = vxor.u32 %v2102, 2147483648
        %v2105 = vmul.f32 %v2103, 1.442695
        %v2106 = vpow.pop %v2105
        %v2107 = vmul.f32 %v2104, 1.442695
        %v2108 = vpow.pop %v2107
        %v2109 = vadd.f32 %v2106, 1.0
        %v2110 = vadd.f32 %v2108, 1.0
        %v2111 = vrcp.pop %v2109
        %v2112 = vmul.f32 1.0, %v2111
        %v2113 = vrcp.pop %v2110
        %v2114 = vmul.f32 1.0, %v2113
        %v2115 = vadd.f32 %v2036, %v1604
        %v2116 = vadd.f32 %v2040, %v1604
        %v2117 = vmul.f32 %v2098, %v2115
        %v2118 = vmul.f32 %v2100, %v2116
        %v2119 = vadd.f32 %v1946, %v2117
        %v2120 = vadd.f32 %v1949, %v2118
        %v2121 = vtanh.pop %v2119
        %v2122 = vtanh.pop %v2120
        %v2123 = vsub.f32 %v1876, %v2121
        %v2124 = vsub.f32 %v1877, %v2122
        %v2125 = vmul.f32 %v2112, %v2123
        %v2126 = vmul.f32 %v2114, %v2124
        %v2127 = vadd.f32 %v2121, %v2125
        %v2128 = vadd.f32 %v2122, %v2126
        %v2129 = vadd.f32 %v1952, %v2038
        %v2130 = vadd.f32 %v1955, %v2042
        %v2131 = vxor.u32 %v2129, 2147483648
        %v2132 = vxor.u32 %v2130, 2147483648
        %v2133 = vmul.f32 %v2131, 1.442695
        %v2134 = vpow.pop %v2133
        %v2135 = vmul.f32 %v2132, 1.442695
        %v2136 = vpow.pop %v2135
        %v2137 = vadd.f32 %v2134, 1.0
        %v2138 = vadd.f32 %v2136, 1.0
        %v2139 = vrcp.pop %v2137
        %v2140 = vmul.f32 1.0, %v2139
        %v2141 = vrcp.pop %v2138
        %v2142 = vmul.f32 1.0, %v2141
        %v2143 = vadd.f32 %v1953, %v2079
        %v2144 = vadd.f32 %v1956, %v2083
        %v2145 = vxor.u32 %v2143, 2147483648
        %v2146 = vxor.u32 %v2144, 2147483648
        %v2147 = vmul.f32 %v2145, 1.442695
        %v2148 = vpow.pop %v2147
        %v2149 = vmul.f32 %v2146, 1.442695
        %v2150 = vpow.pop %v2149
        %v2151 = vadd.f32 %v2148, 1.0
        %v2152 = vadd.f32 %v2150, 1.0
        %v2153 = vrcp.pop %v2151
        %v2154 = vmul.f32 1.0, %v2153
        %v2155 = vrcp.pop %v2152
        %v2156 = vmul.f32 1.0, %v2155
        %v2157 = vadd.f32 %v2081, %v1652
        %v2158 = vadd.f32 %v2085, %v1652
        %v2159 = vmul.f32 %v2140, %v2157
        %v2160 = vmul.f32 %v2142, %v2158
        %v2161 = vadd.f32 %v1954, %v2159
        %v2162 = vadd.f32 %v1957, %v2160
        %v2163 = vtanh.pop %v2161
        %v2164 = vtanh.pop %v2162
        %v2165 = vsub.f32 %v1918, %v2163
        %v2166 = vsub.f32 %v1919, %v2164
        %v2167 = vmul.f32 %v2154, %v2165
        %v2168 = vmul.f32 %v2156, %v2166
        %v2169 = vadd.f32 %v2163, %v2167
        %v2170 = vadd.f32 %v2164, %v2168
        %v2171 = vpack.c.bf16 %v2128, %v2127
        %v2173 = vunpack.c.l.b16 %v2171
        %v2174 = vunpack.c.h.b16 %v2171
        %v2175 = vpack.c.b16 %v2173, %v2173
        %v2176 = vpack.c.b16 %v2174, %v2174
        %s2179 = scalar_lea.vmem %s375, 16
        %2180 = vst [vmem:[%s2179] sm:$0xf] %v2175
        %2181 = vst [vmem:[%s2179 + $0x4] sm:$0xf] %v2176
        %v2182 = vpack.c.bf16 %v2170, %v2169
        %v2184 = vunpack.c.l.b16 %v2182
        %v2185 = vunpack.c.h.b16 %v2182
        %v2186 = vpack.c.b16 %v2184, %v2184
        %v2187 = vpack.c.b16 %v2185, %v2185
        %s2190 = scalar_lea.vmem %s382, 8
        %2191 = vst [vmem:[%s2190] sm:$0xf] %v2186
        %2192 = vst [vmem:[%s2190 + $0x4] sm:$0xf] %v2187
        %s2193 = smul.addr %s952, 8
        %s2194 = scalar_lea.vmem [#allocation3], %s2193
        %v2195 = vld [vmem:[%s2194] sm:$0xff]
        %v2196 = vld [vmem:[%s2194 + $0x8] sm:$0xff]
        %v2197 = vld [vmem:[%s2194 + $0x10] sm:$0xff]
        %v2198 = vld [vmem:[%s2194 + $0x18] sm:$0xff]
        %v2199 = vld [vmem:[%s2194 + $0x20] sm:$0xff]
        %v2200 = vld [vmem:[%s2194 + $0x28] sm:$0xff]
        %s2201 = smul.addr %s943, 8
        %s2202 = scalar_lea.vmem [#allocation4], %s2201
        %v2203 = vld [vmem:[%s2202] sm:$0xff]
        %v2204 = vld [vmem:[%s2202 + $0x8] sm:$0xff]
        %v2205 = vld [vmem:[%s2202 + $0x10] sm:$0xff]
        %v2206 = vld [vmem:[%s2202 + $0x18] sm:$0xff]
        %v2207 = vld [vmem:[%s2202 + $0x20] sm:$0xff]
        %v2208 = vld [vmem:[%s2202 + $0x28] sm:$0xff]
        %2209 = vmatprep.subr.bf16.mxu0 %v1252
        %2210 = vmatpush1.bf16.msra.mxu0 %v1251
        %2211 = vmatprep.subr.bf16.mxu0 %v1258
        %2212 = vmatpush1.bf16.msra.mxu0 %v1257
        %2213 = vmatprep.subr.bf16.mxu0 %v1264
        %2214 = vmatpush1.bf16.msra.mxu0 %v1263
        %2215 = vmatprep.subr.bf16.mxu0 %v1270
        %2216 = vmatpush1.bf16.msra.mxu0 %v1269
        %2217 = vmatprep.subr.bf16.mxu0 %v1276
        %2218 = vmatpush1.bf16.msra.mxu0 %v1275
        %2219 = vmatprep.subr.bf16.mxu0 %v1282
        %2220 = vmatpush1.bf16.msra.mxu0 %v1281
        %2221 = vmatprep.subr.bf16.mxu0 %v1288
        %2222 = vmatpush1.bf16.msra.mxu0 %v1287
        %2223 = vmatprep.subr.bf16.mxu0 %v1294
        %2224 = vmatpush1.bf16.msra.mxu0 %v1293
        %2225 = vmatprep.subr.bf16.mxu0 %v1300
        %2226 = vmatpush1.bf16.msra.mxu0 %v1299
        %2227 = vmatprep.subr.bf16.mxu0 %v1306
        %2228 = vmatpush1.bf16.msra.mxu0 %v1305
        %2229 = vmatprep.subr.bf16.mxu0 %v1312
        %2230 = vmatpush1.bf16.msra.mxu0 %v1311
        %2231 = vmatprep.subr.bf16.mxu0 %v1318
        %2232 = vmatpush1.bf16.msra.mxu0 %v1317
        %2233 = vmatprep.subr.bf16.mxu0 %v1324
        %2234 = vmatpush1.bf16.msra.mxu0 %v1323
        %2235 = vmatprep.subr.bf16.mxu0 %v1330
        %2236 = vmatpush1.bf16.msra.mxu0 %v1329
        %2237 = vmatprep.subr.bf16.mxu0 %v1336
        %2238 = vmatpush1.bf16.msra.mxu0 %v1335
        %2239 = vmatprep.subr.bf16.mxu0 %v1342
        %2240 = vmatpush1.bf16.msra.mxu0 %v1341
        %2241 = vmatprep.mubr.bf16.mxu0 %v2182
        %2242 = vmatmul.mubr.bf16.gmra.mrb[0].mxu0 %v2171
        %v2243 = vpop.f32.mrb[0].mxu0
        %v2244 = vadd.f32 0.0, %v2243
        %v2245 = vpop.f32.mrb[0].mxu0
        %v2246 = vadd.f32 0.0, %v2245
        %v2247 = vpop.f32.mrb[0].mxu0
        %v2248 = vadd.f32 0.0, %v2247
        %v2249 = vpop.f32.mrb[0].mxu0
        %v2250 = vadd.f32 0.0, %v2249
        %2251 = vdwg.mxu0
        %2252 = vmatprep.subr.bf16.mxu0 %v1254
        %2253 = vmatpush1.bf16.msra.mxu0 %v1253
        %2254 = vmatprep.subr.bf16.mxu0 %v1260
        %2255 = vmatpush1.bf16.msra.mxu0 %v1259
        %2256 = vmatprep.subr.bf16.mxu0 %v1266
        %2257 = vmatpush1.bf16.msra.mxu0 %v1265
        %2258 = vmatprep.subr.bf16.mxu0 %v1272
        %2259 = vmatpush1.bf16.msra.mxu0 %v1271
        %2260 = vmatprep.subr.bf16.mxu0 %v1278
        %2261 = vmatpush1.bf16.msra.mxu0 %v1277
        %2262 = vmatprep.subr.bf16.mxu0 %v1284
        %2263 = vmatpush1.bf16.msra.mxu0 %v1283
        %2264 = vmatprep.subr.bf16.mxu0 %v1290
        %2265 = vmatpush1.bf16.msra.mxu0 %v1289
        %2266 = vmatprep.subr.bf16.mxu0 %v1296
        %2267 = vmatpush1.bf16.msra.mxu0 %v1295
        %2268 = vmatprep.subr.bf16.mxu0 %v1302
        %2269 = vmatpush1.bf16.msra.mxu0 %v1301
        %2270 = vmatprep.subr.bf16.mxu0 %v1308
        %2271 = vmatpush1.bf16.msra.mxu0 %v1307
        %2272 = vmatprep.subr.bf16.mxu0 %v1314
        %2273 = vmatpush1.bf16.msra.mxu0 %v1313
        %2274 = vmatprep.subr.bf16.mxu0 %v1320
        %2275 = vmatpush1.bf16.msra.mxu0 %v1319
        %2276 = vmatprep.subr.bf16.mxu0 %v1326
        %2277 = vmatpush1.bf16.msra.mxu0 %v1325
        %2278 = vmatprep.subr.bf16.mxu0 %v1332
        %2279 = vmatpush1.bf16.msra.mxu0 %v1331
        %2280 = vmatprep.subr.bf16.mxu0 %v1338
        %2281 = vmatpush1.bf16.msra.mxu0 %v1337
        %2282 = vmatprep.subr.bf16.mxu0 %v1344
        %2283 = vmatpush1.bf16.msra.mxu0 %v1343
        %2284 = vmatprep.mubr.bf16.mxu0 %v2182
        %2285 = vmatmul.mubr.bf16.gmra.mrb[0].mxu0 %v2171
        %v2286 = vpop.f32.mrb[0].mxu0
        %v2287 = vadd.f32 0.0, %v2286
        %v2288 = vpop.f32.mrb[0].mxu0
        %v2289 = vadd.f32 0.0, %v2288
        %v2290 = vpop.f32.mrb[0].mxu0
        %v2291 = vadd.f32 0.0, %v2290
        %v2292 = vpop.f32.mrb[0].mxu0
        %v2293 = vadd.f32 0.0, %v2292
        %2294 = vdwg.mxu0
        %2295 = vmatprep.subr.bf16.mxu0 %v1256
        %2296 = vmatpush1.bf16.msra.mxu0 %v1255
        %2297 = vmatprep.subr.bf16.mxu0 %v1262
        %2298 = vmatpush1.bf16.msra.mxu0 %v1261
        %2299 = vmatprep.subr.bf16.mxu0 %v1268
        %2300 = vmatpush1.bf16.msra.mxu0 %v1267
        %2301 = vmatprep.subr.bf16.mxu0 %v1274
        %2302 = vmatpush1.bf16.msra.mxu0 %v1273
        %2303 = vmatprep.subr.bf16.mxu0 %v1280
        %2304 = vmatpush1.bf16.msra.mxu0 %v1279
        %2305 = vmatprep.subr.bf16.mxu0 %v1286
        %2306 = vmatpush1.bf16.msra.mxu0 %v1285
        %2307 = vmatprep.subr.bf16.mxu0 %v1292
        %2308 = vmatpush1.bf16.msra.mxu0 %v1291
        %2309 = vmatprep.subr.bf16.mxu0 %v1298
        %2310 = vmatpush1.bf16.msra.mxu0 %v1297
        %2311 = vmatprep.subr.bf16.mxu0 %v1304
        %2312 = vmatpush1.bf16.msra.mxu0 %v1303
        %2313 = vmatprep.subr.bf16.mxu0 %v1310
        %2314 = vmatpush1.bf16.msra.mxu0 %v1309
        %2315 = vmatprep.subr.bf16.mxu0 %v1316
        %2316 = vmatpush1.bf16.msra.mxu0 %v1315
        %2317 = vmatprep.subr.bf16.mxu0 %v1322
        %2318 = vmatpush1.bf16.msra.mxu0 %v1321
        %2319 = vmatprep.subr.bf16.mxu0 %v1328
        %2320 = vmatpush1.bf16.msra.mxu0 %v1327
        %2321 = vmatprep.subr.bf16.mxu0 %v1334
        %2322 = vmatpush1.bf16.msra.mxu0 %v1333
        %2323 = vmatprep.subr.bf16.mxu0 %v1340
        %2324 = vmatpush1.bf16.msra.mxu0 %v1339
        %2325 = vmatprep.subr.bf16.mxu0 %v1346
        %2326 = vmatpush1.bf16.msra.mxu0 %v1345
        %2327 = vmatprep.mubr.bf16.mxu0 %v2182
        %2328 = vmatmul.mubr.bf16.gmra.mrb[0].mxu0 %v2171
        %v2329 = vpop.f32.mrb[0].mxu0
        %v2330 = vadd.f32 0.0, %v2329
        %v2331 = vpop.f32.mrb[0].mxu0
        %v2332 = vadd.f32 0.0, %v2331
        %v2333 = vpop.f32.mrb[0].mxu0
        %v2334 = vadd.f32 0.0, %v2333
        %v2335 = vpop.f32.mrb[0].mxu0
        %v2336 = vadd.f32 0.0, %v2335
        %2337 = vdwg.mxu0
        %v2338 = vadd.f32 %v2195, %v2244
        %v2339 = vadd.f32 %v2198, %v2248
        %v2340 = vxor.u32 %v2338, 2147483648
        %v2341 = vxor.u32 %v2339, 2147483648
        %v2342 = vmul.f32 %v2340, 1.442695
        %v2343 = vpow.pop %v2342
        %v2344 = vmul.f32 %v2341, 1.442695
        %v2345 = vpow.pop %v2344
        %v2346 = vadd.f32 %v2343, 1.0
        %v2347 = vadd.f32 %v2345, 1.0
        %v2348 = vrcp.pop %v2346
        %v2349 = vmul.f32 1.0, %v2348
        %v2350 = vrcp.pop %v2347
        %v2351 = vmul.f32 1.0, %v2350
        %v2352 = vadd.f32 %v2196, %v2246
        %v2353 = vadd.f32 %v2199, %v2250
        %v2354 = vxor.u32 %v2352, 2147483648
        %v2355 = vxor.u32 %v2353, 2147483648
        %v2356 = vmul.f32 %v2354, 1.442695
        %v2357 = vpow.pop %v2356
        %v2358 = vmul.f32 %v2355, 1.442695
        %v2359 = vpow.pop %v2358
        %v2360 = vadd.f32 %v2357, 1.0
        %v2361 = vadd.f32 %v2359, 1.0
        %v2362 = vrcp.pop %v2360
        %v2363 = vmul.f32 1.0, %v2362
        %v2364 = vrcp.pop %v2361
        %v2365 = vmul.f32 1.0, %v2364
        %v2366 = vadd.f32 %v2287, %v1604
        %v2367 = vadd.f32 %v2291, %v1604
        %v2368 = vmul.f32 %v2349, %v2366
        %v2369 = vmul.f32 %v2351, %v2367
        %v2370 = vadd.f32 %v2197, %v2368
        %v2371 = vadd.f32 %v2200, %v2369
        %v2372 = vtanh.pop %v2370
        %v2373 = vtanh.pop %v2371
        %v2374 = vsub.f32 %v2127, %v2372
        %v2375 = vsub.f32 %v2128, %v2373
        %v2376 = vmul.f32 %v2363, %v2374
        %v2377 = vmul.f32 %v2365, %v2375
        %v2378 = vadd.f32 %v2372, %v2376
        %v2379 = vadd.f32 %v2373, %v2377
        %v2380 = vadd.f32 %v2203, %v2289
        %v2381 = vadd.f32 %v2206, %v2293
        %v2382 = vxor.u32 %v2380, 2147483648
        %v2383 = vxor.u32 %v2381, 2147483648
        %v2384 = vmul.f32 %v2382, 1.442695
        %v2385 = vpow.pop %v2384
        %v2386 = vmul.f32 %v2383, 1.442695
        %v2387 = vpow.pop %v2386
        %v2388 = vadd.f32 %v2385, 1.0
        %v2389 = vadd.f32 %v2387, 1.0
        %v2390 = vrcp.pop %v2388
        %v2391 = vmul.f32 1.0, %v2390
        %v2392 = vrcp.pop %v2389
        %v2393 = vmul.f32 1.0, %v2392
        %v2394 = vadd.f32 %v2204, %v2330
        %v2395 = vadd.f32 %v2207, %v2334
        %v2396 = vxor.u32 %v2394, 2147483648
        %v2397 = vxor.u32 %v2395, 2147483648
        %v2398 = vmul.f32 %v2396, 1.442695
        %v2399 = vpow.pop %v2398
        %v2400 = vmul.f32 %v2397, 1.442695
        %v2401 = vpow.pop %v2400
        %v2402 = vadd.f32 %v2399, 1.0
        %v2403 = vadd.f32 %v2401, 1.0
        %v2404 = vrcp.pop %v2402
        %v2405 = vmul.f32 1.0, %v2404
        %v2406 = vrcp.pop %v2403
        %v2407 = vmul.f32 1.0, %v2406
        %v2408 = vadd.f32 %v2332, %v1652
        %v2409 = vadd.f32 %v2336, %v1652
        %v2410 = vmul.f32 %v2391, %v2408
        %v2411 = vmul.f32 %v2393, %v2409
        %v2412 = vadd.f32 %v2205, %v2410
        %v2413 = vadd.f32 %v2208, %v2411
        %v2414 = vtanh.pop %v2412
        %v2415 = vtanh.pop %v2413
        %v2416 = vsub.f32 %v2169, %v2414
        %v2417 = vsub.f32 %v2170, %v2415
        %v2418 = vmul.f32 %v2405, %v2416
        %v2419 = vmul.f32 %v2407, %v2417
        %v2420 = vadd.f32 %v2414, %v2418
        %v2421 = vadd.f32 %v2415, %v2419
        %v2422 = vpack.c.bf16 %v2379, %v2378
        %v2424 = vunpack.c.l.b16 %v2422
        %v2425 = vunpack.c.h.b16 %v2422
        %v2426 = vpack.c.b16 %v2424, %v2424
        %v2427 = vpack.c.b16 %v2425, %v2425
        %s2430 = scalar_lea.vmem %s375, 24
        %2431 = vst [vmem:[%s2430] sm:$0xf] %v2426
        %2432 = vst [vmem:[%s2430 + $0x4] sm:$0xf] %v2427
        %v2433 = vpack.c.bf16 %v2421, %v2420
        %v2435 = vunpack.c.l.b16 %v2433
        %v2436 = vunpack.c.h.b16 %v2433
        %v2437 = vpack.c.b16 %v2435, %v2435
        %v2438 = vpack.c.b16 %v2436, %v2436
        %2441 = vst [vmem:[%s382] sm:$0xf] %v2437
        %2442 = vst [vmem:[%s382 + $0x4] sm:$0xf] %v2438
        %2443 = vst [vmem:[#allocation2] sm:$0xff] %v2378
        %2444 = vst [vmem:[#allocation2 + $0x8] sm:$0xff] %v2420
        %2445 = vst [vmem:[#allocation2 + $0x10] sm:$0xff] %v2379
        %2446 = vst [vmem:[#allocation2 + $0x18] sm:$0xff] %v2421
        %s2447 = smul.u32 8, %s22
        %p2448 = scmp.lt.s32.totalorder %s2447, 15
        %s2449 = scalar_select %p2448, %s2447, 15
        %s2450 = smul.addr %s2449, 4
        %s2451 = scalar_lea.vmem %s6, %s2450
        %s2452 = ssub.s32 1, %s22
        %s2453 = smul.u32 8, %s2452
        %p2454 = scmp.lt.s32.totalorder %s2453, 15
        %s2455 = scalar_select %p2454, %s2453, 15
        %s2456 = smul.addr %s2455, 4
        %s2457 = scalar_lea.vmem %s7, %s2456
        // Predicated region
        $region65: #{bigru_forward.2} parent=43 // pred_check
          %p2458 = pneg %p178
        $region66: #{bigru_forward.2} parent=43 // pred_check_branch
          %2460 = sbr.rel (%p2458) target = $region68
        $region67: #{bigru_forward.2} parent=43 // pred_region
          %s2461 = smul.u32 8, %s22
        $region68: #{bigru_forward.2} parent=43 // pred_fallthru
          _
        // Predicated region
        $region69: #{bigru_forward.2} parent=43 // pred_check
          %p2462 = pneg %p206
        $region70: #{bigru_forward.2} parent=43 // pred_check_branch
          %2464 = sbr.rel (%p2462) target = $region72
        $region71: #{bigru_forward.2} parent=43 // pred_region
          %s2465 = ssub.s32 1, %s22
          %s2466 = smul.u32 8, %s2465
        $region72: #{bigru_forward.2} parent=43 // pred_fallthru
          _
      $region44: #{bigru_forward.2} parent=5 // pred_fallthru
        _
      %p2467 = scmp.le.s32.totalorder 2, %s17
      // Predicated region
      $region73: #{bigru_forward.2} parent=5 // pred_check
        %p2468 = pneg %p2467
      $region74: #{bigru_forward.2} parent=5 // pred_check_branch
        %2470 = sbr.rel (%p2468) target = $region76
      $region75: #{bigru_forward.2} parent=5 // pred_region
        %s2471 = ssub.s32 %s17, 2
        // Predicated region
        $region77: #{bigru_forward.2} parent=75 // pred_check
          %p2472 = pneg %p184
        $region78: #{bigru_forward.2} parent=75 // pred_check_branch
          %2474 = sbr.rel (%p2472) target = $region80
        $region79: #{bigru_forward.2} parent=75 // pred_region
          %s2475 = smul.u32 8, %s23
          %p2476 = scmp.lt.s32.totalorder %s2475, 15
          %s2477 = scalar_select %p2476, %s2475, 15
          %s2478 = smul.addr %s2477, 4
          %s2479 = scalar_lea.vmem %s6, %s2478
        $region80: #{bigru_forward.2} parent=75 // pred_fallthru
          _
        // Predicated region
        $region81: #{bigru_forward.2} parent=75 // pred_check
          %p2480 = pneg %p212
        $region82: #{bigru_forward.2} parent=75 // pred_check_branch
          %2482 = sbr.rel (%p2480) target = $region84
        $region83: #{bigru_forward.2} parent=75 // pred_region
          %s2483 = ssub.s32 1, %s23
          %s2484 = smul.u32 8, %s2483
          %p2485 = scmp.lt.s32.totalorder %s2484, 15
          %s2486 = scalar_select %p2485, %s2484, 15
          %s2487 = smul.addr %s2486, 4
          %s2488 = scalar_lea.vmem %s7, %s2487
        $region84: #{bigru_forward.2} parent=75 // pred_fallthru
          _
      $region76: #{bigru_forward.2} parent=5 // pred_fallthru
        _
    $region6: #{bigru_forward.2} parent=1 // loop_footer
      %s21 = sadd.s32 1, %s17
    $region7: #{bigru_forward.2} parent=1 // loop_footer_branch
      %16 = sbr.rel target = $region3
    $region8: #{bigru_forward.2} parent=1 // loop_exit
      _
    %2489 = vsyncpa [#allocation6], 1
    %s2490 = scalar_lea.sflag [#allocation6], 1
    %2491 = vsyncpa %s2490, 1
    %2492 = vsyncpa [#allocation8], 1
    %2493 = vsyncpa [#allocation11], 1

// kernel: bigru_forward.3
$region0: #{bigru_forward.3}
  #allocation0 [shape = 'u32[]', space=smem, size = 0x4, offset = 0x4, fixed_abs, tag = 'smem constant byte address 0x4 - core index']
  #allocation1 [shape = 'u32[144,128]{1,0:T(1,128)}', space=vmem, size = 0x12000, scoped, tag = 'internal scratch']
  #allocation2 [shape = 'f32[16,256]{1,0:T(8,128)}', space=vmem, size = 0x4000, scoped, tag = 'scratch operand']
  #allocation3 [shape = 'f32[64,384]{1,0:T(8,128)}', space=vmem, size = 0x18000, scoped, tag = 'scratch operand']
  #allocation4 [shape = 'f32[64,384]{1,0:T(8,128)}', space=vmem, size = 0x18000, scoped, tag = 'scratch operand']
  %s0 = inlined_call_operand.vmem [shape: bf16[128,128], index: 0, kind: input, shape index: {}, may-alias: {0,2}]
  %s1 = inlined_call_operand.vmem [shape: bf16[128,128], index: 1, kind: input, shape index: {}, may-alias: {1,3}]
  %s2 = inlined_call_operand.vmem [shape: bf16[128,128], index: 2, kind: input, shape index: {}, may-alias: {0,2}]
  %s3 = inlined_call_operand.vmem [shape: bf16[128,128], index: 3, kind: input, shape index: {}, may-alias: {1,3}]
  %s4 = inlined_call_operand.vmem [shape: bf16[256,768], index: 4, kind: input, shape index: {}]
  %s5 = inlined_call_operand.vmem [shape: f32[1,768], index: 5, kind: input, shape index: {}]
  %s6 = inlined_call_operand.hbm [shape: bf16[256,768], index: 6, kind: input, shape index: {}]
  %s7 = inlined_call_operand.vmem [shape: f32[1,256], index: 7, kind: input, shape index: {}]
  %s8 = inlined_call_operand.vmem [shape: f32[16,256], index: 8, kind: output, shape index: {}]
  %s9 = sld [smem:[#allocation0]]
  $region73: #{bigru_forward.3} parent=0
    _
  %s11 = ssub.s32 1, %s9
  %s12 = scalar_select 0, %s11, %s9
  $region1: #{bigru_forward.3} parent=0
    #allocation5 [shape = 'u8[393216]{0}', space=vmem, size = 0x60000, scoped, tag = 'input window, operand 6, single buffered']
    #allocation6 [shape = 's32[2]{0}', space=sflag, size = 0x8, scoped, tag = 'scoped memory for bigru_forward.3']
    %13 = vsyncpa [#allocation6], 0
    loop: start=0, step=1, limit=4
    $region2: #{bigru_forward.3} parent=1 // loop_pre_header
      _
    $region3: #{bigru_forward.3} parent=1 // loop_header
      %s15 = sphi 0, %s19
      %p16 = scmp.ge.s32.totalorder %s15, 4
      %s25 = sphi 0, %s27
      %s28 = sphi 0, %s25
      %s29 = sphi 0, %s28
      %s45 = sphi 0, %s29
      %s51 = sphi 0, %s53
      %s54 = sphi 0, %s51
      %s55 = sphi 0, %s54
      %s71 = sphi 0, %s55
      %s79 = sphi 0, %s81
      %s82 = sphi 0, %s79
      %s83 = sphi 0, %s82
      %s99 = sphi 0, %s83
      %s107 = sphi 0, %s109
      %s110 = sphi 0, %s107
      %s111 = sphi 0, %s110
      %s127 = sphi 0, %s111
      %s131 = sphi 0, %s131
      %s133 = sphi 0, %s131
      %s134 = sphi 0, %s133
      %s148 = sphi 0, %s134
      %s152 = sphi 0, %s152
      %s154 = sphi 0, %s152
      %s155 = sphi 0, %s154
      %s169 = sphi 0, %s155
      %s173 = sphi 0, %s173
      %s175 = sphi 0, %s173
      %s176 = sphi 0, %s175
      %s190 = sphi 0, %s176
      %s194 = sphi 0, %s194
      %s196 = sphi 0, %s194
      %s197 = sphi 0, %s196
      %s211 = sphi 0, %s197
      %s215 = sphi 0, %s215
      %s217 = sphi 0, %s215
      %s218 = sphi 0, %s217
      %s232 = sphi 0, %s218
    $region4: #{bigru_forward.3} parent=1 // loop_header_branch
      %18 = sbr.rel (%p16) target = $region8
    $region5: #{bigru_forward.3} parent=1 // loop_body
      %s20 = ssub.s32 %s15, 1
      %s21 = ssub.s32 %s15, 2
      %s22 = sadd.s32 %s15, 1
      %s23 = ssub.s32 %s15, %s22
      %p24 = scmp.eq.s32.totalorder %s23, 0
      %s26 = sadd.s32 %s25, 1
      %s27 = scalar_select %p24, %s25, %s26
      %p30 = pneg %p24
      %p31 = scmp.eq.s32.totalorder %s15, 1
      %p32 = por %p30, %p31
      %p33 = scmp.ne.s32.totalorder %s25, %s28
      %p34 = scmp.eq.s32.totalorder %s15, 0
      %p35 = por %p33, %p34
      %p36 = scmp.ne.s32.totalorder %s25, %s28
      %p37 = scmp.eq.s32.totalorder %s20, 1
      %p38 = por %p36, %p37
      %p39 = scmp.ne.s32.totalorder %s28, %s29
      %p40 = scmp.eq.s32.totalorder %s20, 0
      %p41 = por %p39, %p40
      %p42 = scmp.ne.s32.totalorder %s28, %s29
      %p43 = scmp.eq.s32.totalorder %s21, 1
      %p44 = por %p42, %p43
      %p46 = scmp.ne.s32.totalorder %s29, %s45
      %p47 = scmp.eq.s32.totalorder %s21, 0
      %p48 = por %p46, %p47
      %s49 = ssub.s32 %s15, %s22
      %p50 = scmp.eq.s32.totalorder %s49, 0
      %s52 = sadd.s32 %s51, 1
      %s53 = scalar_select %p50, %s51, %s52
      %p56 = pneg %p50
      %p57 = scmp.eq.s32.totalorder %s15, 1
      %p58 = por %p56, %p57
      %p59 = scmp.ne.s32.totalorder %s51, %s54
      %p60 = scmp.eq.s32.totalorder %s15, 0
      %p61 = por %p59, %p60
      %p62 = scmp.ne.s32.totalorder %s51, %s54
      %p63 = scmp.eq.s32.totalorder %s20, 1
      %p64 = por %p62, %p63
      %p65 = scmp.ne.s32.totalorder %s54, %s55
      %p66 = scmp.eq.s32.totalorder %s20, 0
      %p67 = por %p65, %p66
      %p68 = scmp.ne.s32.totalorder %s54, %s55
      %p69 = scmp.eq.s32.totalorder %s21, 1
      %p70 = por %p68, %p69
      %p72 = scmp.ne.s32.totalorder %s55, %s71
      %p73 = scmp.eq.s32.totalorder %s21, 0
      %p74 = por %p72, %p73
      %s75 = ssub.s32 1, %s15
      %s76 = ssub.s32 1, %s22
      %s77 = ssub.s32 %s75, %s76
      %p78 = scmp.eq.s32.totalorder %s77, 0
      %s80 = sadd.s32 %s79, 1
      %s81 = scalar_select %p78, %s79, %s80
      %p84 = pneg %p78
      %p85 = scmp.eq.s32.totalorder %s15, 1
      %p86 = por %p84, %p85
      %p87 = scmp.ne.s32.totalorder %s79, %s82
      %p88 = scmp.eq.s32.totalorder %s15, 0
      %p89 = por %p87, %p88
      %p90 = scmp.ne.s32.totalorder %s79, %s82
      %p91 = scmp.eq.s32.totalorder %s20, 1
      %p92 = por %p90, %p91
      %p93 = scmp.ne.s32.totalorder %s82, %s83
      %p94 = scmp.eq.s32.totalorder %s20, 0
      %p95 = por %p93, %p94
      %p96 = scmp.ne.s32.totalorder %s82, %s83
      %p97 = scmp.eq.s32.totalorder %s21, 1
      %p98 = por %p96, %p97
      %p100 = scmp.ne.s32.totalorder %s83, %s99
      %p101 = scmp.eq.s32.totalorder %s21, 0
      %p102 = por %p100, %p101
      %s103 = ssub.s32 1, %s15
      %s104 = ssub.s32 1, %s22
      %s105 = ssub.s32 %s103, %s104
      %p106 = scmp.eq.s32.totalorder %s105, 0
      %s108 = sadd.s32 %s107, 1
      %s109 = scalar_select %p106, %s107, %s108
      %p112 = pneg %p106
      %p113 = scmp.eq.s32.totalorder %s15, 1
      %p114 = por %p112, %p113
      %p115 = scmp.ne.s32.totalorder %s107, %s110
      %p116 = scmp.eq.s32.totalorder %s15, 0
      %p117 = por %p115, %p116
      %p118 = scmp.ne.s32.totalorder %s107, %s110
      %p119 = scmp.eq.s32.totalorder %s20, 1
      %p120 = por %p118, %p119
      %p121 = scmp.ne.s32.totalorder %s110, %s111
      %p122 = scmp.eq.s32.totalorder %s20, 0
      %p123 = por %p121, %p122
      %p124 = scmp.ne.s32.totalorder %s110, %s111
      %p125 = scmp.eq.s32.totalorder %s21, 1
      %p126 = por %p124, %p125
      %p128 = scmp.ne.s32.totalorder %s111, %s127
      %p129 = scmp.eq.s32.totalorder %s21, 0
      %p130 = por %p128, %p129
      %s132 = sadd.s32 %s131, 1
      %p135 = scmp.eq.s32.totalorder %s15, 1
      %p136 = scmp.ne.s32.totalorder %s131, %s133
      %p137 = scmp.eq.s32.totalorder %s15, 0
      %p138 = por %p136, %p137
      %p139 = scmp.ne.s32.totalorder %s131, %s133
      %p140 = scmp.eq.s32.totalorder %s20, 1
      %p141 = por %p139, %p140
      %p142 = scmp.ne.s32.totalorder %s133, %s134
      %p143 = scmp.eq.s32.totalorder %s20, 0
      %p144 = por %p142, %p143
      %p145 = scmp.ne.s32.totalorder %s133, %s134
      %p146 = scmp.eq.s32.totalorder %s21, 1
      %p147 = por %p145, %p146
      %p149 = scmp.ne.s32.totalorder %s134, %s148
      %p150 = scmp.eq.s32.totalorder %s21, 0
      %p151 = por %p149, %p150
      %s153 = sadd.s32 %s152, 1
      %p156 = scmp.eq.s32.totalorder %s15, 1
      %p157 = scmp.ne.s32.totalorder %s152, %s154
      %p158 = scmp.eq.s32.totalorder %s15, 0
      %p159 = por %p157, %p158
      %p160 = scmp.ne.s32.totalorder %s152, %s154
      %p161 = scmp.eq.s32.totalorder %s20, 1
      %p162 = por %p160, %p161
      %p163 = scmp.ne.s32.totalorder %s154, %s155
      %p164 = scmp.eq.s32.totalorder %s20, 0
      %p165 = por %p163, %p164
      %p166 = scmp.ne.s32.totalorder %s154, %s155
      %p167 = scmp.eq.s32.totalorder %s21, 1
      %p168 = por %p166, %p167
      %p170 = scmp.ne.s32.totalorder %s155, %s169
      %p171 = scmp.eq.s32.totalorder %s21, 0
      %p172 = por %p170, %p171
      %s174 = sadd.s32 %s173, 1
      %p177 = scmp.eq.s32.totalorder %s15, 1
      %p178 = scmp.ne.s32.totalorder %s173, %s175
      %p179 = scmp.eq.s32.totalorder %s15, 0
      %p180 = por %p178, %p179
      %p181 = scmp.ne.s32.totalorder %s173, %s175
      %p182 = scmp.eq.s32.totalorder %s20, 1
      %p183 = por %p181, %p182
      %p184 = scmp.ne.s32.totalorder %s175, %s176
      %p185 = scmp.eq.s32.totalorder %s20, 0
      %p186 = por %p184, %p185
      %p187 = scmp.ne.s32.totalorder %s175, %s176
      %p188 = scmp.eq.s32.totalorder %s21, 1
      %p189 = por %p187, %p188
      %p191 = scmp.ne.s32.totalorder %s176, %s190
      %p192 = scmp.eq.s32.totalorder %s21, 0
      %p193 = por %p191, %p192
      %s195 = sadd.s32 %s194, 1
      %p198 = scmp.eq.s32.totalorder %s15, 1
      %p199 = scmp.ne.s32.totalorder %s194, %s196
      %p200 = scmp.eq.s32.totalorder %s15, 0
      %p201 = por %p199, %p200
      %p202 = scmp.ne.s32.totalorder %s194, %s196
      %p203 = scmp.eq.s32.totalorder %s20, 1
      %p204 = por %p202, %p203
      %p205 = scmp.ne.s32.totalorder %s196, %s197
      %p206 = scmp.eq.s32.totalorder %s20, 0
      %p207 = por %p205, %p206
      %p208 = scmp.ne.s32.totalorder %s196, %s197
      %p209 = scmp.eq.s32.totalorder %s21, 1
      %p210 = por %p208, %p209
      %p212 = scmp.ne.s32.totalorder %s197, %s211
      %p213 = scmp.eq.s32.totalorder %s21, 0
      %p214 = por %p212, %p213
      %s216 = sadd.s32 %s215, 1
      %p219 = scmp.eq.s32.totalorder %s15, 1
      %p220 = scmp.ne.s32.totalorder %s215, %s217
      %p221 = scmp.eq.s32.totalorder %s15, 0
      %p222 = por %p220, %p221
      %p223 = scmp.ne.s32.totalorder %s215, %s217
      %p224 = scmp.eq.s32.totalorder %s20, 1
      %p225 = por %p223, %p224
      %p226 = scmp.ne.s32.totalorder %s217, %s218
      %p227 = scmp.eq.s32.totalorder %s20, 0
      %p228 = por %p226, %p227
      %p229 = scmp.ne.s32.totalorder %s217, %s218
      %p230 = scmp.eq.s32.totalorder %s21, 1
      %p231 = por %p229, %p230
      %p233 = scmp.ne.s32.totalorder %s218, %s232
      %p234 = scmp.eq.s32.totalorder %s21, 0
      %p235 = por %p233, %p234
      %p236 = scmp.le.s32.totalorder 1, %s15
      %p237 = scmp.lt.s32.totalorder %s15, 3
      %p238 = pnand %p236, %p237
      %p239 = pneg %p238
      // Predicated region
      $region9: #{bigru_forward.3} parent=5 // pred_check
        _
      $region10: #{bigru_forward.3} parent=5 // pred_check_branch
        %241 = sbr.rel (%p238) target = $region12
      $region11: #{bigru_forward.3} parent=5 // pred_region
        %s242 = ssub.s32 %s15, 1
        // Predicated region
        $region13: #{bigru_forward.3} parent=11 // pred_check
          %p243 = pneg %p144
        $region14: #{bigru_forward.3} parent=11 // pred_check_branch
          %245 = sbr.rel (%p243) target = $region16
        $region15: #{bigru_forward.3} parent=11 // pred_region
          _
        $region16: #{bigru_forward.3} parent=11 // pred_fallthru
          _
        // Predicated region
        $region17: #{bigru_forward.3} parent=11 // pred_check
          %p246 = pneg %p165
        $region18: #{bigru_forward.3} parent=11 // pred_check_branch
          %248 = sbr.rel (%p246) target = $region20
        $region19: #{bigru_forward.3} parent=11 // pred_region
          _
        $region20: #{bigru_forward.3} parent=11 // pred_fallthru
          _
        // Predicated region
        $region21: #{bigru_forward.3} parent=11 // pred_check
          %p249 = pneg %p186
        $region22: #{bigru_forward.3} parent=11 // pred_check_branch
          %251 = sbr.rel (%p249) target = $region24
        $region23: #{bigru_forward.3} parent=11 // pred_region
          %s253 = ssub.s32 12288, 12288
          %254 = vsyncadd [#allocation6], %s253
          %s255 = sshll.u32 [#allocation5], 4
          %s256 = int_to_ptr.vmem [resolvable:$true] %s255
          %261 = dma.hbm_to_vmem [thread:$0]  %s6, 12288, %s256, [#allocation6], 384, 384, 24
        $region24: #{bigru_forward.3} parent=11 // pred_fallthru
          _
        // Predicated region
        $region25: #{bigru_forward.3} parent=11 // pred_check
          %p262 = pneg %p207
        $region26: #{bigru_forward.3} parent=11 // pred_check_branch
          %264 = sbr.rel (%p262) target = $region28
        $region27: #{bigru_forward.3} parent=11 // pred_region
          _
        $region28: #{bigru_forward.3} parent=11 // pred_fallthru
          _
      $region12: #{bigru_forward.3} parent=5 // pred_fallthru
        _
      %p265 = scmp.lt.s32.totalorder %s15, 2
      // Predicated region
      $region29: #{bigru_forward.3} parent=5 // pred_check
        %p266 = pneg %p265
      $region30: #{bigru_forward.3} parent=5 // pred_check_branch
        %268 = sbr.rel (%p266) target = $region32
      $region31: #{bigru_forward.3} parent=5 // pred_region
        // Predicated region
        $region33: #{bigru_forward.3} parent=31 // pred_check
          %p269 = pneg %p35
        $region34: #{bigru_forward.3} parent=31 // pred_check_branch
          %271 = sbr.rel (%p269) target = $region36
        $region35: #{bigru_forward.3} parent=31 // pred_region
          %s272 = smul.u32 8, %s15
          %p273 = scmp.lt.s32.totalorder %s272, 15
          %s274 = scalar_select %p273, %s272, 15
          %s275 = smul.addr %s274, 4
          %s276 = scalar_lea.vmem %s0, %s275
          %s277 = smul.u32 8, %s15
        $region36: #{bigru_forward.3} parent=31 // pred_fallthru
          _
        // Predicated region
        $region37: #{bigru_forward.3} parent=31 // pred_check
          %p278 = pneg %p61
        $region38: #{bigru_forward.3} parent=31 // pred_check_branch
          %280 = sbr.rel (%p278) target = $region40
        $region39: #{bigru_forward.3} parent=31 // pred_region
          %s281 = smul.u32 8, %s15
          %p282 = scmp.lt.s32.totalorder %s281, 15
          %s283 = scalar_select %p282, %s281, 15
          %s284 = smul.addr %s283, 4
          %s285 = scalar_lea.vmem %s1, %s284
          %s286 = smul.u32 8, %s15
        $region40: #{bigru_forward.3} parent=31 // pred_fallthru
          _
        // Predicated region
        $region41: #{bigru_forward.3} parent=31 // pred_check
          %p287 = pneg %p89
        $region42: #{bigru_forward.3} parent=31 // pred_check_branch
          %289 = sbr.rel (%p287) target = $region44
        $region43: #{bigru_forward.3} parent=31 // pred_region
          %s290 = ssub.s32 1, %s15
          %s291 = smul.u32 8, %s290
          %p292 = scmp.lt.s32.totalorder %s291, 15
          %s293 = scalar_select %p292, %s291, 15
          %s294 = smul.addr %s293, 4
          %s295 = scalar_lea.vmem %s2, %s294
          %s296 = ssub.s32 1, %s15
          %s297 = smul.u32 8, %s296
        $region44: #{bigru_forward.3} parent=31 // pred_fallthru
          _
        // Predicated region
        $region45: #{bigru_forward.3} parent=31 // pred_check
          %p298 = pneg %p117
        $region46: #{bigru_forward.3} parent=31 // pred_check_branch
          %300 = sbr.rel (%p298) target = $region48
        $region47: #{bigru_forward.3} parent=31 // pred_region
          %s301 = ssub.s32 1, %s15
          %s302 = smul.u32 8, %s301
          %p303 = scmp.lt.s32.totalorder %s302, 15
          %s304 = scalar_select %p303, %s302, 15
          %s305 = smul.addr %s304, 4
          %s306 = scalar_lea.vmem %s3, %s305
          %s307 = ssub.s32 1, %s15
          %s308 = smul.u32 8, %s307
        $region48: #{bigru_forward.3} parent=31 // pred_fallthru
          _
      $region32: #{bigru_forward.3} parent=5 // pred_fallthru
        _
      %p309 = scmp.le.s32.totalorder 1, %s15
      %p310 = scmp.lt.s32.totalorder %s15, 3
      %p311 = pnand %p309, %p310
      %p312 = pneg %p311
      // Predicated region
      $region49: #{bigru_forward.3} parent=5 // pred_check
        _
      $region50: #{bigru_forward.3} parent=5 // pred_check_branch
        %314 = sbr.rel (%p311) target = $region52
      $region51: #{bigru_forward.3} parent=5 // pred_region
        %s315 = ssub.s32 %s15, 1
        // Predicated region
        $region53: #{bigru_forward.3} parent=51 // pred_check
          %p316 = pneg %p186
        $region54: #{bigru_forward.3} parent=51 // pred_check_branch
          %318 = sbr.rel (%p316) target = $region56
        $region55: #{bigru_forward.3} parent=51 // pred_region
          %319 = dma.done [#allocation6], 12288
        $region56: #{bigru_forward.3} parent=51 // pred_fallthru
          _
        %s320 = smul.u32 8, %s20
        %p321 = scmp.lt.s32.totalorder %s320, 15
        %s322 = scalar_select %p321, %s320, 15
        %s323 = smul.addr %s322, 4
        %s324 = scalar_lea.vmem %s0, %s323
        %p325 = pneg %p41
        %p326 = pneg %p38
        %s327 = smul.u32 8, %s20
        %p328 = scmp.lt.s32.totalorder %s327, 15
        %s329 = scalar_select %p328, %s327, 15
        %s330 = smul.addr %s329, 4
        %s331 = scalar_lea.vmem %s1, %s330
        %p332 = pneg %p67
        %p333 = pneg %p64
        %s334 = ssub.s32 1, %s20
        %s335 = smul.u32 8, %s334
        %p336 = scmp.lt.s32.totalorder %s335, 15
        %s337 = scalar_select %p336, %s335, 15
        %s338 = smul.addr %s337, 4
        %s339 = scalar_lea.vmem %s2, %s338
        %p340 = pneg %p95
        %p341 = pneg %p92
        %s342 = ssub.s32 1, %s20
        %s343 = smul.u32 8, %s342
        %p344 = scmp.lt.s32.totalorder %s343, 15
        %s345 = scalar_select %p344, %s343, 15
        %s346 = smul.addr %s345, 4
        %s347 = scalar_lea.vmem %s3, %s346
        %p348 = pneg %p123
        %p349 = pneg %p120
        %p350 = pneg %p144
        %p351 = pneg %p141
        %p352 = pneg %p165
        %p353 = pneg %p162
        %p354 = pneg %p186
        %p355 = pneg %p183
        %p356 = pneg %p207
        %p357 = pneg %p204
        %p358 = pneg %p228
        %p359 = pneg %p225
        %s360 = smul.u32 8, %s20
        %p361 = scmp.lt.s32.totalorder %s360, 15
        %s362 = scalar_select %p361, %s360, 15
        %s363 = smul.addr %s362, 4
        %s364 = scalar_lea.vmem %s0, %s363
        %s365 = smul.u32 8, %s20
        %s366 = smul.u32 8, %s20
        %p367 = scmp.lt.s32.totalorder %s366, 15
        %s368 = scalar_select %p367, %s366, 15
        %s369 = smul.addr %s368, 4
        %s370 = scalar_lea.vmem %s1, %s369
        %s371 = smul.u32 8, %s20
        %s372 = ssub.s32 1, %s20
        %s373 = smul.u32 8, %s372
        %p374 = scmp.lt.s32.totalorder %s373, 15
        %s375 = scalar_select %p374, %s373, 15
        %s376 = smul.addr %s375, 4
        %s377 = scalar_lea.vmem %s2, %s376
        %s378 = ssub.s32 1, %s20
        %s379 = smul.u32 8, %s378
        %s380 = ssub.s32 1, %s20
        %s381 = smul.u32 8, %s380
        %p382 = scmp.lt.s32.totalorder %s381, 15
        %s383 = scalar_select %p382, %s381, 15
        %s384 = smul.addr %s383, 4
        %s385 = scalar_lea.vmem %s3, %s384
        %s386 = ssub.s32 1, %s20
        %s387 = smul.u32 8, %s386
        %p389 = scmp.eq.s32.totalorder %s20, 0
        // Predicated region
        $region57: #{bigru_forward.3} parent=51 // pred_check
          %p390 = pneg %p389
        $region58: #{bigru_forward.3} parent=51 // pred_check_branch
          %392 = sbr.rel (%p390) target = $region60
        $region59: #{bigru_forward.3} parent=51 // pred_region
          %393 = vst [vmem:[#allocation2] sm:$0xff] 0.0
          %394 = vst [vmem:[#allocation2 + $0x8] sm:$0xff] 0.0
          %395 = vst [vmem:[#allocation2 + $0x10] sm:$0xff] 0.0
          %396 = vst [vmem:[#allocation2 + $0x18] sm:$0xff] 0.0
          %397 = vst [vmem:[%s8] sm:$0xff] 0.0
          %398 = vst [vmem:[%s8 + $0x8] sm:$0xff] 0.0
          %399 = vst [vmem:[%s8 + $0x10] sm:$0xff] 0.0
          %400 = vst [vmem:[%s8 + $0x18] sm:$0xff] 0.0
        $region60: #{bigru_forward.3} parent=51 // pred_fallthru
          _
        %v401 = vld [vmem:[%s364] sm:$0xf]
        %v402 = vld [vmem:[%s364 + $0x4] sm:$0xf]
        %v403 = vld [vmem:[%s364 + $0x8] sm:$0xf]
        %v404 = vld [vmem:[%s364 + $0xc] sm:$0xf]
        %v405 = vld [vmem:[%s364 + $0x10] sm:$0xf]
        %v406 = vld [vmem:[%s364 + $0x14] sm:$0xf]
        %v407 = vld [vmem:[%s364 + $0x18] sm:$0xf]
        %v408 = vld [vmem:[%s364 + $0x1c] sm:$0xf]
        %v409 = vld [vmem:[%s4] sm:$0xff]
        %v410 = vld [vmem:[%s4 + $0x8] sm:$0xf]
        %v411 = vld [vmem:[%s4 + $0x18] sm:$0xff]
        %v412 = vld [vmem:[%s4 + $0x20] sm:$0xf]
        %v413 = vld [vmem:[%s4 + $0x30] sm:$0xff]
        %v414 = vld [vmem:[%s4 + $0x38] sm:$0xf]
        %v415 = vld [vmem:[%s4 + $0x48] sm:$0xff]
        %v416 = vld [vmem:[%s4 + $0x50] sm:$0xf]
        %v417 = vld [vmem:[%s4 + $0x60] sm:$0xff]
        %v418 = vld [vmem:[%s4 + $0x68] sm:$0xf]
        %v419 = vld [vmem:[%s4 + $0x78] sm:$0xff]
        %v420 = vld [vmem:[%s4 + $0x80] sm:$0xf]
        %v421 = vld [vmem:[%s4 + $0x90] sm:$0xff]
        %v422 = vld [vmem:[%s4 + $0x98] sm:$0xf]
        %v423 = vld [vmem:[%s4 + $0xa8] sm:$0xff]
        %v424 = vld [vmem:[%s4 + $0xb0] sm:$0xf]
        %v425 = vld [vmem:[%s4 + $0xc0] sm:$0xff]
        %v426 = vld [vmem:[%s4 + $0xc8] sm:$0xf]
        %v427 = vld [vmem:[%s4 + $0xd8] sm:$0xff]
        %v428 = vld [vmem:[%s4 + $0xe0] sm:$0xf]
        %v429 = vld [vmem:[%s4 + $0xf0] sm:$0xff]
        %v430 = vld [vmem:[%s4 + $0xf8] sm:$0xf]
        %v431 = vld [vmem:[%s4 + $0x108] sm:$0xff]
        %v432 = vld [vmem:[%s4 + $0x110] sm:$0xf]
        %v433 = vld [vmem:[%s4 + $0x120] sm:$0xff]
        %v434 = vld [vmem:[%s4 + $0x128] sm:$0xf]
        %v435 = vld [vmem:[%s4 + $0x138] sm:$0xff]
        %v436 = vld [vmem:[%s4 + $0x140] sm:$0xf]
        %v437 = vld [vmem:[%s4 + $0x150] sm:$0xff]
        %v438 = vld [vmem:[%s4 + $0x158] sm:$0xf]
        %v439 = vld [vmem:[%s4 + $0x168] sm:$0xff]
        %v440 = vld [vmem:[%s4 + $0x170] sm:$0xf]
        %v441 = vld [vmem:[%s370] sm:$0xf]
        %v442 = vld [vmem:[%s370 + $0x4] sm:$0xf]
        %v443 = vld [vmem:[%s370 + $0x8] sm:$0xf]
        %v444 = vld [vmem:[%s370 + $0xc] sm:$0xf]
        %v445 = vld [vmem:[%s370 + $0x10] sm:$0xf]
        %v446 = vld [vmem:[%s370 + $0x14] sm:$0xf]
        %v447 = vld [vmem:[%s370 + $0x18] sm:$0xf]
        %v448 = vld [vmem:[%s370 + $0x1c] sm:$0xf]
        %v449 = vld [vmem:[%s4 + $0x180] sm:$0xff]
        %v450 = vld [vmem:[%s4 + $0x188] sm:$0xf]
        %v451 = vld [vmem:[%s4 + $0x198] sm:$0xff]
        %v452 = vld [vmem:[%s4 + $0x1a0] sm:$0xf]
        %v453 = vld [vmem:[%s4 + $0x1b0] sm:$0xff]
        %v454 = vld [vmem:[%s4 + $0x1b8] sm:$0xf]
        %v455 = vld [vmem:[%s4 + $0x1c8] sm:$0xff]
        %v456 = vld [vmem:[%s4 + $0x1d0] sm:$0xf]
        %v457 = vld [vmem:[%s4 + $0x1e0] sm:$0xff]
        %v458 = vld [vmem:[%s4 + $0x1e8] sm:$0xf]
        %v459 = vld [vmem:[%s4 + $0x1f8] sm:$0xff]
        %v460 = vld [vmem:[%s4 + $0x200] sm:$0xf]
        %v461 = vld [vmem:[%s4 + $0x210] sm:$0xff]
        %v462 = vld [vmem:[%s4 + $0x218] sm:$0xf]
        %v463 = vld [vmem:[%s4 + $0x228] sm:$0xff]
        %v464 = vld [vmem:[%s4 + $0x230] sm:$0xf]
        %v465 = vld [vmem:[%s4 + $0x240] sm:$0xff]
        %v466 = vld [vmem:[%s4 + $0x248] sm:$0xf]
        %v467 = vld [vmem:[%s4 + $0x258] sm:$0xff]
        %v468 = vld [vmem:[%s4 + $0x260] sm:$0xf]
        %v469 = vld [vmem:[%s4 + $0x270] sm:$0xff]
        %v470 = vld [vmem:[%s4 + $0x278] sm:$0xf]
        %v471 = vld [vmem:[%s4 + $0x288] sm:$0xff]
        %v472 = vld [vmem:[%s4 + $0x290] sm:$0xf]
        %v473 = vld [vmem:[%s4 + $0x2a0] sm:$0xff]
        %v474 = vld [vmem:[%s4 + $0x2a8] sm:$0xf]
        %v475 = vld [vmem:[%s4 + $0x2b8] sm:$0xff]
        %v476 = vld [vmem:[%s4 + $0x2c0] sm:$0xf]
        %v477 = vld [vmem:[%s4 + $0x2d0] sm:$0xff]
        %v478 = vld [vmem:[%s4 + $0x2d8] sm:$0xf]
        %v479 = vld [vmem:[%s4 + $0x2e8] sm:$0xff]
        %v480 = vld [vmem:[%s4 + $0x2f0] sm:$0xf]
        %v489 = vunpack.c.l.b16 %v441
        %v490 = vunpack.c.l.b16 %v442
        %v491 = vunpack.c.l.b16 %v443
        %v492 = vunpack.c.l.b16 %v444
        %v493 = vunpack.c.l.b16 %v445
        %v494 = vunpack.c.l.b16 %v446
        %v495 = vunpack.c.l.b16 %v447
        %v496 = vunpack.c.l.b16 %v448
        %v497 = vpack.c.b16 %v490, %v489
        %v498 = vpack.c.b16 %v492, %v491
        %v499 = vpack.c.b16 %v494, %v493
        %v500 = vpack.c.b16 %v496, %v495
        %v537 = vunpack.c.l.b16 %v449
        %v538 = vunpack.c.h.b16 %v449
        %v539 = vunpack.c.l.b16 %v450
        %v540 = vunpack.c.l.b16 %v451
        %v541 = vunpack.c.h.b16 %v451
        %v542 = vunpack.c.l.b16 %v452
        %v543 = vunpack.c.l.b16 %v453
        %v544 = vunpack.c.h.b16 %v453
        %v545 = vunpack.c.l.b16 %v454
        %v546 = vunpack.c.l.b16 %v455
        %v547 = vunpack.c.h.b16 %v455
        %v548 = vunpack.c.l.b16 %v456
        %v549 = vunpack.c.l.b16 %v457
        %v550 = vunpack.c.h.b16 %v457
        %v551 = vunpack.c.l.b16 %v458
        %v552 = vunpack.c.l.b16 %v459
        %v553 = vunpack.c.h.b16 %v459
        %v554 = vunpack.c.l.b16 %v460
        %v555 = vunpack.c.l.b16 %v461
        %v556 = vunpack.c.h.b16 %v461
        %v557 = vunpack.c.l.b16 %v462
        %v558 = vunpack.c.l.b16 %v463
        %v559 = vunpack.c.h.b16 %v463
        %v560 = vunpack.c.l.b16 %v464
        %v561 = vunpack.c.l.b16 %v465
        %v562 = vunpack.c.h.b16 %v465
        %v563 = vunpack.c.l.b16 %v466
        %v564 = vunpack.c.l.b16 %v467
        %v565 = vunpack.c.h.b16 %v467
        %v566 = vunpack.c.l.b16 %v468
        %v567 = vunpack.c.l.b16 %v469
        %v568 = vunpack.c.h.b16 %v469
        %v569 = vunpack.c.l.b16 %v470
        %v570 = vunpack.c.l.b16 %v471
        %v571 = vunpack.c.h.b16 %v471
        %v572 = vunpack.c.l.b16 %v472
        %v573 = vunpack.c.l.b16 %v473
        %v574 = vunpack.c.h.b16 %v473
        %v575 = vunpack.c.l.b16 %v474
        %v576 = vunpack.c.l.b16 %v475
        %v577 = vunpack.c.h.b16 %v475
        %v578 = vunpack.c.l.b16 %v476
        %v579 = vunpack.c.l.b16 %v477
        %v580 = vunpack.c.h.b16 %v477
        %v581 = vunpack.c.l.b16 %v478
        %v582 = vunpack.c.l.b16 %v479
        %v583 = vunpack.c.h.b16 %v479
        %v584 = vunpack.c.l.b16 %v480
        %v585 = vpack.c.b16 %v540, %v537
        %v586 = vpack.c.b16 %v541, %v538
        %v587 = vpack.c.b16 %v542, %v539
        %v588 = vpack.c.b16 %v546, %v543
        %v589 = vpack.c.b16 %v547, %v544
        %v590 = vpack.c.b16 %v548, %v545
        %v591 = vpack.c.b16 %v552, %v549
        %v592 = vpack.c.b16 %v553, %v550
        %v593 = vpack.c.b16 %v554, %v551
        %v594 = vpack.c.b16 %v558, %v555
        %v595 = vpack.c.b16 %v559, %v556
        %v596 = vpack.c.b16 %v560, %v557
        %v597 = vpack.c.b16 %v564, %v561
        %v598 = vpack.c.b16 %v565, %v562
        %v599 = vpack.c.b16 %v566, %v563
        %v600 = vpack.c.b16 %v570, %v567
        %v601 = vpack.c.b16 %v571, %v568
        %v602 = vpack.c.b16 %v572, %v569
        %v603 = vpack.c.b16 %v576, %v573
        %v604 = vpack.c.b16 %v577, %v574
        %v605 = vpack.c.b16 %v578, %v575
        %v606 = vpack.c.b16 %v582, %v579
        %v607 = vpack.c.b16 %v583, %v580
        %v608 = vpack.c.b16 %v584, %v581
        %633 = vmatprep.subr.bf16.mxu0 %v586
        %634 = vmatpush1.bf16.msra.mxu0 %v585
        %635 = vmatprep.subr.bf16.mxu0 %v589
        %636 = vmatpush1.bf16.msra.mxu0 %v588
        %637 = vmatprep.subr.bf16.mxu0 %v592
        %638 = vmatpush1.bf16.msra.mxu0 %v591
        %639 = vmatprep.subr.bf16.mxu0 %v595
        %640 = vmatpush1.bf16.msra.mxu0 %v594
        %641 = vmatprep.subr.bf16.mxu0 %v598
        %642 = vmatpush1.bf16.msra.mxu0 %v597
        %643 = vmatprep.subr.bf16.mxu0 %v601
        %644 = vmatpush1.bf16.msra.mxu0 %v600
        %645 = vmatprep.subr.bf16.mxu0 %v604
        %646 = vmatpush1.bf16.msra.mxu0 %v603
        %647 = vmatprep.subr.bf16.mxu0 %v607
        %648 = vmatpush1.bf16.msra.mxu0 %v606
        %649 = vmatprep.subr.bf16.mxu0 0
        %650 = vmatpush1.bf16.msra.mxu0 0
        %651 = vmatprep.subr.bf16.mxu0 0
        %652 = vmatpush1.bf16.msra.mxu0 0
        %653 = vmatprep.subr.bf16.mxu0 0
        %654 = vmatpush1.bf16.msra.mxu0 0
        %655 = vmatprep.subr.bf16.mxu0 0
        %656 = vmatpush1.bf16.msra.mxu0 0
        %657 = vmatprep.subr.bf16.mxu0 0
        %658 = vmatpush1.bf16.msra.mxu0 0
        %659 = vmatprep.subr.bf16.mxu0 0
        %660 = vmatpush1.bf16.msra.mxu0 0
        %661 = vmatprep.subr.bf16.mxu0 0
        %662 = vmatpush1.bf16.msra.mxu0 0
        %663 = vmatprep.subr.bf16.mxu0 0
        %664 = vmatpush1.bf16.msra.mxu0 0
        %665 = vmatprep.mubr.bf16.mxu0 0
        %666 = vmatmul.mubr.bf16.gmra.mrb[0].mxu0 %v497
        %v667 = vpop.f32.mrb[0].mxu0
        %v668 = vadd.f32 0.0, %v667
        %v669 = vpop.f32.mrb[0].mxu0
        %v670 = vadd.f32 0.0, %v669
        %v671 = vpop.f32.mrb[0].mxu0
        %v672 = vadd.f32 0.0, %v671
        %v673 = vpop.f32.mrb[0].mxu0
        %v674 = vadd.f32 0.0, %v673
        %675 = vmatprep.mubr.bf16.mxu0 0
        %676 = vmatmul.mubr.bf16.gmra.mrb[0].mxu0 %v498
        %v677 = vpop.f32.mrb[0].mxu0
        %v678 = vadd.f32 0.0, %v677
        %v679 = vpop.f32.mrb[0].mxu0
        %v680 = vadd.f32 0.0, %v679
        %v681 = vpop.f32.mrb[0].mxu0
        %v682 = vadd.f32 0.0, %v681
        %v683 = vpop.f32.mrb[0].mxu0
        %v684 = vadd.f32 0.0, %v683
        %685 = vmatprep.mubr.bf16.mxu0 0
        %686 = vmatmul.mubr.bf16.gmra.mrb[0].mxu0 %v499
        %v687 = vpop.f32.mrb[0].mxu0
        %v688 = vadd.f32 0.0, %v687
        %v689 = vpop.f32.mrb[0].mxu0
        %v690 = vadd.f32 0.0, %v689
        %v691 = vpop.f32.mrb[0].mxu0
        %v692 = vadd.f32 0.0, %v691
        %v693 = vpop.f32.mrb[0].mxu0
        %v694 = vadd.f32 0.0, %v693
        %695 = vmatprep.mubr.bf16.mxu0 0
        %696 = vmatmul.mubr.bf16.gmra.mrb[0].mxu0 %v500
        %v697 = vpop.f32.mrb[0].mxu0
        %v698 = vadd.f32 0.0, %v697
        %v699 = vpop.f32.mrb[0].mxu0
        %v700 = vadd.f32 0.0, %v699
        %v701 = vpop.f32.mrb[0].mxu0
        %v702 = vadd.f32 0.0, %v701
        %v703 = vpop.f32.mrb[0].mxu0
        %v704 = vadd.f32 0.0, %v703
        %705 = vdwg.mxu0
        %706 = vmatprep.subr.bf16.mxu0 0
        %707 = vmatpush1.bf16.msra.mxu0 %v587
        %708 = vmatprep.subr.bf16.mxu0 0
        %709 = vmatpush1.bf16.msra.mxu0 %v590
        %710 = vmatprep.subr.bf16.mxu0 0
        %711 = vmatpush1.bf16.msra.mxu0 %v593
        %712 = vmatprep.subr.bf16.mxu0 0
        %713 = vmatpush1.bf16.msra.mxu0 %v596
        %714 = vmatprep.subr.bf16.mxu0 0
        %715 = vmatpush1.bf16.msra.mxu0 %v599
        %716 = vmatprep.subr.bf16.mxu0 0
        %717 = vmatpush1.bf16.msra.mxu0 %v602
        %718 = vmatprep.subr.bf16.mxu0 0
        %719 = vmatpush1.bf16.msra.mxu0 %v605
        %720 = vmatprep.subr.bf16.mxu0 0
        %721 = vmatpush1.bf16.msra.mxu0 %v608
        %722 = vmatprep.subr.bf16.mxu0 0
        %723 = vmatpush1.bf16.msra.mxu0 0
        %724 = vmatprep.subr.bf16.mxu0 0
        %725 = vmatpush1.bf16.msra.mxu0 0
        %726 = vmatprep.subr.bf16.mxu0 0
        %727 = vmatpush1.bf16.msra.mxu0 0
        %728 = vmatprep.subr.bf16.mxu0 0
        %729 = vmatpush1.bf16.msra.mxu0 0
        %730 = vmatprep.subr.bf16.mxu0 0
        %731 = vmatpush1.bf16.msra.mxu0 0
        %732 = vmatprep.subr.bf16.mxu0 0
        %733 = vmatpush1.bf16.msra.mxu0 0
        %734 = vmatprep.subr.bf16.mxu0 0
        %735 = vmatpush1.bf16.msra.mxu0 0
        %736 = vmatprep.subr.bf16.mxu0 0
        %737 = vmatpush1.bf16.msra.mxu0 0
        %738 = vmatprep.mubr.bf16.mxu0 0
        %739 = vmatmul.mubr.bf16.gmra.mrb[0].mxu0 %v497
        %v740 = vpop.f32.mrb[0].mxu0
        %v741 = vadd.f32 0.0, %v740
        %v742 = vpop.f32.mrb[0].mxu0
        %v743 = vpop.f32.mrb[0].mxu0
        %v744 = vadd.f32 0.0, %v743
        %v745 = vpop.f32.mrb[0].mxu0
        %746 = vmatprep.mubr.bf16.mxu0 0
        %747 = vmatmul.mubr.bf16.gmra.mrb[0].mxu0 %v498
        %v748 = vpop.f32.mrb[0].mxu0
        %v749 = vadd.f32 0.0, %v748
        %v750 = vpop.f32.mrb[0].mxu0
        %v751 = vpop.f32.mrb[0].mxu0
        %v752 = vadd.f32 0.0, %v751
        %v753 = vpop.f32.mrb[0].mxu0
        %754 = vmatprep.mubr.bf16.mxu0 0
        %755 = vmatmul.mubr.bf16.gmra.mrb[0].mxu0 %v499
        %v756 = vpop.f32.mrb[0].mxu0
        %v757 = vadd.f32 0.0, %v756
        %v758 = vpop.f32.mrb[0].mxu0
        %v759 = vpop.f32.mrb[0].mxu0
        %v760 = vadd.f32 0.0, %v759
        %v761 = vpop.f32.mrb[0].mxu0
        %762 = vmatprep.mubr.bf16.mxu0 0
        %763 = vmatmul.mubr.bf16.gmra.mrb[0].mxu0 %v500
        %v764 = vpop.f32.mrb[0].mxu0
        %v765 = vadd.f32 0.0, %v764
        %v766 = vpop.f32.mrb[0].mxu0
        %v767 = vpop.f32.mrb[0].mxu0
        %v768 = vadd.f32 0.0, %v767
        %v769 = vpop.f32.mrb[0].mxu0
        %770 = vdwg.mxu0
        %v779 = vunpack.c.l.b16 %v401
        %v780 = vunpack.c.l.b16 %v402
        %v781 = vunpack.c.l.b16 %v403
        %v782 = vunpack.c.l.b16 %v404
        %v783 = vunpack.c.l.b16 %v405
        %v784 = vunpack.c.l.b16 %v406
        %v785 = vunpack.c.l.b16 %v407
        %v786 = vunpack.c.l.b16 %v408
        %v787 = vpack.c.b16 %v780, %v779
        %v788 = vpack.c.b16 %v782, %v781
        %v789 = vpack.c.b16 %v784, %v783
        %v790 = vpack.c.b16 %v786, %v785
        %v827 = vunpack.c.l.b16 %v409
        %v828 = vunpack.c.h.b16 %v409
        %v829 = vunpack.c.l.b16 %v410
        %v830 = vunpack.c.l.b16 %v411
        %v831 = vunpack.c.h.b16 %v411
        %v832 = vunpack.c.l.b16 %v412
        %v833 = vunpack.c.l.b16 %v413
        %v834 = vunpack.c.h.b16 %v413
        %v835 = vunpack.c.l.b16 %v414
        %v836 = vunpack.c.l.b16 %v415
        %v837 = vunpack.c.h.b16 %v415
        %v838 = vunpack.c.l.b16 %v416
        %v839 = vunpack.c.l.b16 %v417
        %v840 = vunpack.c.h.b16 %v417
        %v841 = vunpack.c.l.b16 %v418
        %v842 = vunpack.c.l.b16 %v419
        %v843 = vunpack.c.h.b16 %v419
        %v844 = vunpack.c.l.b16 %v420
        %v845 = vunpack.c.l.b16 %v421
        %v846 = vunpack.c.h.b16 %v421
        %v847 = vunpack.c.l.b16 %v422
        %v848 = vunpack.c.l.b16 %v423
        %v849 = vunpack.c.h.b16 %v423
        %v850 = vunpack.c.l.b16 %v424
        %v851 = vunpack.c.l.b16 %v425
        %v852 = vunpack.c.h.b16 %v425
        %v853 = vunpack.c.l.b16 %v426
        %v854 = vunpack.c.l.b16 %v427
        %v855 = vunpack.c.h.b16 %v427
        %v856 = vunpack.c.l.b16 %v428
        %v857 = vunpack.c.l.b16 %v429
        %v858 = vunpack.c.h.b16 %v429
        %v859 = vunpack.c.l.b16 %v430
        %v860 = vunpack.c.l.b16 %v431
        %v861 = vunpack.c.h.b16 %v431
        %v862 = vunpack.c.l.b16 %v432
        %v863 = vunpack.c.l.b16 %v433
        %v864 = vunpack.c.h.b16 %v433
        %v865 = vunpack.c.l.b16 %v434
        %v866 = vunpack.c.l.b16 %v435
        %v867 = vunpack.c.h.b16 %v435
        %v868 = vunpack.c.l.b16 %v436
        %v869 = vunpack.c.l.b16 %v437
        %v870 = vunpack.c.h.b16 %v437
        %v871 = vunpack.c.l.b16 %v438
        %v872 = vunpack.c.l.b16 %v439
        %v873 = vunpack.c.h.b16 %v439
        %v874 = vunpack.c.l.b16 %v440
        %v875 = vpack.c.b16 %v830, %v827
        %v876 = vpack.c.b16 %v831, %v828
        %v877 = vpack.c.b16 %v832, %v829
        %v878 = vpack.c.b16 %v836, %v833
        %v879 = vpack.c.b16 %v837, %v834
        %v880 = vpack.c.b16 %v838, %v835
        %v881 = vpack.c.b16 %v842, %v839
        %v882 = vpack.c.b16 %v843, %v840
        %v883 = vpack.c.b16 %v844, %v841
        %v884 = vpack.c.b16 %v848, %v845
        %v885 = vpack.c.b16 %v849, %v846
        %v886 = vpack.c.b16 %v850, %v847
        %v887 = vpack.c.b16 %v854, %v851
        %v888 = vpack.c.b16 %v855, %v852
        %v889 = vpack.c.b16 %v856, %v853
        %v890 = vpack.c.b16 %v860, %v857
        %v891 = vpack.c.b16 %v861, %v858
        %v892 = vpack.c.b16 %v862, %v859
        %v893 = vpack.c.b16 %v866, %v863
        %v894 = vpack.c.b16 %v867, %v864
        %v895 = vpack.c.b16 %v868, %v865
        %v896 = vpack.c.b16 %v872, %v869
        %v897 = vpack.c.b16 %v873, %v870
        %v898 = vpack.c.b16 %v874, %v871
        %923 = vmatprep.subr.bf16.mxu0 %v876
        %924 = vmatpush1.bf16.msra.mxu0 %v875
        %925 = vmatprep.subr.bf16.mxu0 %v879
        %926 = vmatpush1.bf16.msra.mxu0 %v878
        %927 = vmatprep.subr.bf16.mxu0 %v882
        %928 = vmatpush1.bf16.msra.mxu0 %v881
        %929 = vmatprep.subr.bf16.mxu0 %v885
        %930 = vmatpush1.bf16.msra.mxu0 %v884
        %931 = vmatprep.subr.bf16.mxu0 %v888
        %932 = vmatpush1.bf16.msra.mxu0 %v887
        %933 = vmatprep.subr.bf16.mxu0 %v891
        %934 = vmatpush1.bf16.msra.mxu0 %v890
        %935 = vmatprep.subr.bf16.mxu0 %v894
        %936 = vmatpush1.bf16.msra.mxu0 %v893
        %937 = vmatprep.subr.bf16.mxu0 %v897
        %938 = vmatpush1.bf16.msra.mxu0 %v896
        %939 = vmatprep.subr.bf16.mxu0 0
        %940 = vmatpush1.bf16.msra.mxu0 0
        %941 = vmatprep.subr.bf16.mxu0 0
        %942 = vmatpush1.bf16.msra.mxu0 0
        %943 = vmatprep.subr.bf16.mxu0 0
        %944 = vmatpush1.bf16.msra.mxu0 0
        %945 = vmatprep.subr.bf16.mxu0 0
        %946 = vmatpush1.bf16.msra.mxu0 0
        %947 = vmatprep.subr.bf16.mxu0 0
        %948 = vmatpush1.bf16.msra.mxu0 0
        %949 = vmatprep.subr.bf16.mxu0 0
        %950 = vmatpush1.bf16.msra.mxu0 0
        %951 = vmatprep.subr.bf16.mxu0 0
        %952 = vmatpush1.bf16.msra.mxu0 0
        %953 = vmatprep.subr.bf16.mxu0 0
        %954 = vmatpush1.bf16.msra.mxu0 0
        %955 = vmatprep.mubr.bf16.mxu0 0
        %956 = vmatmul.mubr.bf16.gmra.mrb[0].mxu0 %v787
        %v957 = vpop.f32.mrb[0].mxu0
        %v958 = vadd.f32 %v668, %v957
        %v959 = vpop.f32.mrb[0].mxu0
        %v960 = vadd.f32 %v670, %v959
        %v961 = vpop.f32.mrb[0].mxu0
        %v962 = vadd.f32 %v672, %v961
        %v963 = vpop.f32.mrb[0].mxu0
        %v964 = vadd.f32 %v674, %v963
        %965 = vmatprep.mubr.bf16.mxu0 0
        %966 = vmatmul.mubr.bf16.gmra.mrb[0].mxu0 %v788
        %v967 = vpop.f32.mrb[0].mxu0
        %v968 = vadd.f32 %v678, %v967
        %v969 = vpop.f32.mrb[0].mxu0
        %v970 = vadd.f32 %v680, %v969
        %v971 = vpop.f32.mrb[0].mxu0
        %v972 = vadd.f32 %v682, %v971
        %v973 = vpop.f32.mrb[0].mxu0
        %v974 = vadd.f32 %v684, %v973
        %975 = vmatprep.mubr.bf16.mxu0 0
        %976 = vmatmul.mubr.bf16.gmra.mrb[0].mxu0 %v789
        %v977 = vpop.f32.mrb[0].mxu0
        %v978 = vadd.f32 %v688, %v977
        %v979 = vpop.f32.mrb[0].mxu0
        %v980 = vadd.f32 %v690, %v979
        %v981 = vpop.f32.mrb[0].mxu0
        %v982 = vadd.f32 %v692, %v981
        %v983 = vpop.f32.mrb[0].mxu0
        %v984 = vadd.f32 %v694, %v983
        %985 = vmatprep.mubr.bf16.mxu0 0
        %986 = vmatmul.mubr.bf16.gmra.mrb[0].mxu0 %v790
        %v987 = vpop.f32.mrb[0].mxu0
        %v988 = vadd.f32 %v698, %v987
        %v989 = vpop.f32.mrb[0].mxu0
        %v990 = vadd.f32 %v700, %v989
        %v991 = vpop.f32.mrb[0].mxu0
        %v992 = vadd.f32 %v702, %v991
        %v993 = vpop.f32.mrb[0].mxu0
        %v994 = vadd.f32 %v704, %v993
        %995 = vdwg.mxu0
        %996 = vmatprep.subr.bf16.mxu0 0
        %997 = vmatpush1.bf16.msra.mxu0 %v877
        %998 = vmatprep.subr.bf16.mxu0 0
        %999 = vmatpush1.bf16.msra.mxu0 %v880
        %1000 = vmatprep.subr.bf16.mxu0 0
        %1001 = vmatpush1.bf16.msra.mxu0 %v883
        %1002 = vmatprep.subr.bf16.mxu0 0
        %1003 = vmatpush1.bf16.msra.mxu0 %v886
        %1004 = vmatprep.subr.bf16.mxu0 0
        %1005 = vmatpush1.bf16.msra.mxu0 %v889
        %1006 = vmatprep.subr.bf16.mxu0 0
        %1007 = vmatpush1.bf16.msra.mxu0 %v892
        %1008 = vmatprep.subr.bf16.mxu0 0
        %1009 = vmatpush1.bf16.msra.mxu0 %v895
        %1010 = vmatprep.subr.bf16.mxu0 0
        %1011 = vmatpush1.bf16.msra.mxu0 %v898
        %1012 = vmatprep.subr.bf16.mxu0 0
        %1013 = vmatpush1.bf16.msra.mxu0 0
        %1014 = vmatprep.subr.bf16.mxu0 0
        %1015 = vmatpush1.bf16.msra.mxu0 0
        %1016 = vmatprep.subr.bf16.mxu0 0
        %1017 = vmatpush1.bf16.msra.mxu0 0
        %1018 = vmatprep.subr.bf16.mxu0 0
        %1019 = vmatpush1.bf16.msra.mxu0 0
        %1020 = vmatprep.subr.bf16.mxu0 0
        %1021 = vmatpush1.bf16.msra.mxu0 0
        %1022 = vmatprep.subr.bf16.mxu0 0
        %1023 = vmatpush1.bf16.msra.mxu0 0
        %1024 = vmatprep.subr.bf16.mxu0 0
        %1025 = vmatpush1.bf16.msra.mxu0 0
        %1026 = vmatprep.subr.bf16.mxu0 0
        %1027 = vmatpush1.bf16.msra.mxu0 0
        %1028 = vmatprep.mubr.bf16.mxu0 0
        %1029 = vmatmul.mubr.bf16.gmra.mrb[0].mxu0 %v787
        %v1030 = vpop.f32.mrb[0].mxu0
        %v1031 = vadd.f32 %v741, %v1030
        %v1032 = vpop.f32.mrb[0].mxu0
        %v1033 = vpop.f32.mrb[0].mxu0
        %v1034 = vadd.f32 %v744, %v1033
        %v1035 = vpop.f32.mrb[0].mxu0
        %1036 = vmatprep.mubr.bf16.mxu0 0
        %1037 = vmatmul.mubr.bf16.gmra.mrb[0].mxu0 %v788
        %v1038 = vpop.f32.mrb[0].mxu0
        %v1039 = vadd.f32 %v749, %v1038
        %v1040 = vpop.f32.mrb[0].mxu0
        %v1041 = vpop.f32.mrb[0].mxu0
        %v1042 = vadd.f32 %v752, %v1041
        %v1043 = vpop.f32.mrb[0].mxu0
        %1044 = vmatprep.mubr.bf16.mxu0 0
        %1045 = vmatmul.mubr.bf16.gmra.mrb[0].mxu0 %v789
        %v1046 = vpop.f32.mrb[0].mxu0
        %v1047 = vadd.f32 %v757, %v1046
        %v1048 = vpop.f32.mrb[0].mxu0
        %v1049 = vpop.f32.mrb[0].mxu0
        %v1050 = vadd.f32 %v760, %v1049
        %v1051 = vpop.f32.mrb[0].mxu0
        %1052 = vmatprep.mubr.bf16.mxu0 0
        %1053 = vmatmul.mubr.bf16.gmra.mrb[0].mxu0 %v790
        %v1054 = vpop.f32.mrb[0].mxu0
        %v1055 = vadd.f32 %v765, %v1054
        %v1056 = vpop.f32.mrb[0].mxu0
        %v1057 = vpop.f32.mrb[0].mxu0
        %v1058 = vadd.f32 %v768, %v1057
        %v1059 = vpop.f32.mrb[0].mxu0
        %1060 = vdwg.mxu0
        %v1061 = vld [vmem:[%s5] sm:$0x7]
        %v1063 = vlaneseq
        %v1064 = vshrl.u32 %v1063, 7
        %v1065 = vsub.s32 0, %v1064
        %v1066 = vrot.slane %v1061, %v1065
        %v1067 = vlaneseq
        %v1068 = vshrl.u32 %v1067, 7
        %v1069 = vsub.s32 1, %v1068
        %v1070 = vrot.slane %v1061, %v1069
        %v1071 = vlaneseq
        %v1072 = vshrl.u32 %v1071, 7
        %v1073 = vsub.s32 2, %v1072
        %v1074 = vrot.slane %v1061, %v1073
        %v1078 = vadd.f32 %v958, %v1066
        %v1079 = vadd.f32 %v960, %v1070
        %v1080 = vadd.f32 %v1031, %v1074
        %v1081 = vadd.f32 %v962, %v1066
        %v1082 = vadd.f32 %v964, %v1070
        %v1083 = vadd.f32 %v1034, %v1074
        %v1084 = vadd.f32 %v968, %v1066
        %v1085 = vadd.f32 %v970, %v1070
        %v1086 = vadd.f32 %v1039, %v1074
        %v1087 = vadd.f32 %v972, %v1066
        %v1088 = vadd.f32 %v974, %v1070
        %v1089 = vadd.f32 %v1042, %v1074
        %v1090 = vadd.f32 %v978, %v1066
        %v1091 = vadd.f32 %v980, %v1070
        %v1092 = vadd.f32 %v1047, %v1074
        %v1093 = vadd.f32 %v982, %v1066
        %v1094 = vadd.f32 %v984, %v1070
        %v1095 = vadd.f32 %v1050, %v1074
        %v1096 = vadd.f32 %v988, %v1066
        %v1097 = vadd.f32 %v990, %v1070
        %v1098 = vadd.f32 %v1055, %v1074
        %v1099 = vadd.f32 %v992, %v1066
        %v1100 = vadd.f32 %v994, %v1070
        %v1101 = vadd.f32 %v1058, %v1074
        %1102 = vst [vmem:[#allocation3] sm:$0xff] %v1078
        %1103 = vst [vmem:[#allocation3 + $0x8] sm:$0xff] %v1079
        %1104 = vst [vmem:[#allocation3 + $0x10] sm:$0xff] %v1080
        %1105 = vst [vmem:[#allocation3 + $0x18] sm:$0xff] %v1081
        %1106 = vst [vmem:[#allocation3 + $0x20] sm:$0xff] %v1082
        %1107 = vst [vmem:[#allocation3 + $0x28] sm:$0xff] %v1083
        %1108 = vst [vmem:[#allocation3 + $0x30] sm:$0xff] %v1084
        %1109 = vst [vmem:[#allocation3 + $0x38] sm:$0xff] %v1085
        %1110 = vst [vmem:[#allocation3 + $0x40] sm:$0xff] %v1086
        %1111 = vst [vmem:[#allocation3 + $0x48] sm:$0xff] %v1087
        %1112 = vst [vmem:[#allocation3 + $0x50] sm:$0xff] %v1088
        %1113 = vst [vmem:[#allocation3 + $0x58] sm:$0xff] %v1089
        %1114 = vst [vmem:[#allocation3 + $0x60] sm:$0xff] %v1090
        %1115 = vst [vmem:[#allocation3 + $0x68] sm:$0xff] %v1091
        %1116 = vst [vmem:[#allocation3 + $0x70] sm:$0xff] %v1092
        %1117 = vst [vmem:[#allocation3 + $0x78] sm:$0xff] %v1093
        %1118 = vst [vmem:[#allocation3 + $0x80] sm:$0xff] %v1094
        %1119 = vst [vmem:[#allocation3 + $0x88] sm:$0xff] %v1095
        %1120 = vst [vmem:[#allocation3 + $0x90] sm:$0xff] %v1096
        %1121 = vst [vmem:[#allocation3 + $0x98] sm:$0xff] %v1097
        %1122 = vst [vmem:[#allocation3 + $0xa0] sm:$0xff] %v1098
        %1123 = vst [vmem:[#allocation3 + $0xa8] sm:$0xff] %v1099
        %1124 = vst [vmem:[#allocation3 + $0xb0] sm:$0xff] %v1100
        %1125 = vst [vmem:[#allocation3 + $0xb8] sm:$0xff] %v1101
        %v1126 = vld [vmem:[%s377] sm:$0xf]
        %v1127 = vld [vmem:[%s377 + $0x4] sm:$0xf]
        %v1128 = vld [vmem:[%s377 + $0x8] sm:$0xf]
        %v1129 = vld [vmem:[%s377 + $0xc] sm:$0xf]
        %v1130 = vld [vmem:[%s377 + $0x10] sm:$0xf]
        %v1131 = vld [vmem:[%s377 + $0x14] sm:$0xf]
        %v1132 = vld [vmem:[%s377 + $0x18] sm:$0xf]
        %v1133 = vld [vmem:[%s377 + $0x1c] sm:$0xf]
        %v1134 = vld [vmem:[%s4 + $0xc] sm:$0xff]
        %v1135 = vld [vmem:[%s4 + $0x14] sm:$0xf]
        %v1136 = vld [vmem:[%s4 + $0x24] sm:$0xff]
        %v1137 = vld [vmem:[%s4 + $0x2c] sm:$0xf]
        %v1138 = vld [vmem:[%s4 + $0x3c] sm:$0xff]
        %v1139 = vld [vmem:[%s4 + $0x44] sm:$0xf]
        %v1140 = vld [vmem:[%s4 + $0x54] sm:$0xff]
        %v1141 = vld [vmem:[%s4 + $0x5c] sm:$0xf]
        %v1142 = vld [vmem:[%s4 + $0x6c] sm:$0xff]
        %v1143 = vld [vmem:[%s4 + $0x74] sm:$0xf]
        %v1144 = vld [vmem:[%s4 + $0x84] sm:$0xff]
        %v1145 = vld [vmem:[%s4 + $0x8c] sm:$0xf]
        %v1146 = vld [vmem:[%s4 + $0x9c] sm:$0xff]
        %v1147 = vld [vmem:[%s4 + $0xa4] sm:$0xf]
        %v1148 = vld [vmem:[%s4 + $0xb4] sm:$0xff]
        %v1149 = vld [vmem:[%s4 + $0xbc] sm:$0xf]
        %v1150 = vld [vmem:[%s4 + $0xcc] sm:$0xff]
        %v1151 = vld [vmem:[%s4 + $0xd4] sm:$0xf]
        %v1152 = vld [vmem:[%s4 + $0xe4] sm:$0xff]
        %v1153 = vld [vmem:[%s4 + $0xec] sm:$0xf]
        %v1154 = vld [vmem:[%s4 + $0xfc] sm:$0xff]
        %v1155 = vld [vmem:[%s4 + $0x104] sm:$0xf]
        %v1156 = vld [vmem:[%s4 + $0x114] sm:$0xff]
        %v1157 = vld [vmem:[%s4 + $0x11c] sm:$0xf]
        %v1158 = vld [vmem:[%s4 + $0x12c] sm:$0xff]
        %v1159 = vld [vmem:[%s4 + $0x134] sm:$0xf]
        %v1160 = vld [vmem:[%s4 + $0x144] sm:$0xff]
        %v1161 = vld [vmem:[%s4 + $0x14c] sm:$0xf]
        %v1162 = vld [vmem:[%s4 + $0x15c] sm:$0xff]
        %v1163 = vld [vmem:[%s4 + $0x164] sm:$0xf]
        %v1164 = vld [vmem:[%s4 + $0x174] sm:$0xff]
        %v1165 = vld [vmem:[%s4 + $0x17c] sm:$0xf]
        %v1166 = vld [vmem:[%s385] sm:$0xf]
        %v1167 = vld [vmem:[%s385 + $0x4] sm:$0xf]
        %v1168 = vld [vmem:[%s385 + $0x8] sm:$0xf]
        %v1169 = vld [vmem:[%s385 + $0xc] sm:$0xf]
        %v1170 = vld [vmem:[%s385 + $0x10] sm:$0xf]
        %v1171 = vld [vmem:[%s385 + $0x14] sm:$0xf]
        %v1172 = vld [vmem:[%s385 + $0x18] sm:$0xf]
        %v1173 = vld [vmem:[%s385 + $0x1c] sm:$0xf]
        %v1174 = vld [vmem:[%s4 + $0x18c] sm:$0xff]
        %v1175 = vld [vmem:[%s4 + $0x194] sm:$0xf]
        %v1176 = vld [vmem:[%s4 + $0x1a4] sm:$0xff]
        %v1177 = vld [vmem:[%s4 + $0x1ac] sm:$0xf]
        %v1178 = vld [vmem:[%s4 + $0x1bc] sm:$0xff]
        %v1179 = vld [vmem:[%s4 + $0x1c4] sm:$0xf]
        %v1180 = vld [vmem:[%s4 + $0x1d4] sm:$0xff]
        %v1181 = vld [vmem:[%s4 + $0x1dc] sm:$0xf]
        %v1182 = vld [vmem:[%s4 + $0x1ec] sm:$0xff]
        %v1183 = vld [vmem:[%s4 + $0x1f4] sm:$0xf]
        %v1184 = vld [vmem:[%s4 + $0x204] sm:$0xff]
        %v1185 = vld [vmem:[%s4 + $0x20c] sm:$0xf]
        %v1186 = vld [vmem:[%s4 + $0x21c] sm:$0xff]
        %v1187 = vld [vmem:[%s4 + $0x224] sm:$0xf]
        %v1188 = vld [vmem:[%s4 + $0x234] sm:$0xff]
        %v1189 = vld [vmem:[%s4 + $0x23c] sm:$0xf]
        %v1190 = vld [vmem:[%s4 + $0x24c] sm:$0xff]
        %v1191 = vld [vmem:[%s4 + $0x254] sm:$0xf]
        %v1192 = vld [vmem:[%s4 + $0x264] sm:$0xff]
        %v1193 = vld [vmem:[%s4 + $0x26c] sm:$0xf]
        %v1194 = vld [vmem:[%s4 + $0x27c] sm:$0xff]
        %v1195 = vld [vmem:[%s4 + $0x284] sm:$0xf]
        %v1196 = vld [vmem:[%s4 + $0x294] sm:$0xff]
        %v1197 = vld [vmem:[%s4 + $0x29c] sm:$0xf]
        %v1198 = vld [vmem:[%s4 + $0x2ac] sm:$0xff]
        %v1199 = vld [vmem:[%s4 + $0x2b4] sm:$0xf]
        %v1200 = vld [vmem:[%s4 + $0x2c4] sm:$0xff]
        %v1201 = vld [vmem:[%s4 + $0x2cc] sm:$0xf]
        %v1202 = vld [vmem:[%s4 + $0x2dc] sm:$0xff]
        %v1203 = vld [vmem:[%s4 + $0x2e4] sm:$0xf]
        %v1204 = vld [vmem:[%s4 + $0x2f4] sm:$0xff]
        %v1205 = vld [vmem:[%s4 + $0x2fc] sm:$0xf]
        %v1214 = vunpack.c.l.b16 %v1166
        %v1215 = vunpack.c.l.b16 %v1167
        %v1216 = vunpack.c.l.b16 %v1168
        %v1217 = vunpack.c.l.b16 %v1169
        %v1218 = vunpack.c.l.b16 %v1170
        %v1219 = vunpack.c.l.b16 %v1171
        %v1220 = vunpack.c.l.b16 %v1172
        %v1221 = vunpack.c.l.b16 %v1173
        %v1222 = vpack.c.b16 %v1215, %v1214
        %v1223 = vpack.c.b16 %v1217, %v1216
        %v1224 = vpack.c.b16 %v1219, %v1218
        %v1225 = vpack.c.b16 %v1221, %v1220
        %v1262 = vunpack.c.l.b16 %v1174
        %v1263 = vunpack.c.h.b16 %v1174
        %v1264 = vunpack.c.l.b16 %v1175
        %v1265 = vunpack.c.l.b16 %v1176
        %v1266 = vunpack.c.h.b16 %v1176
        %v1267 = vunpack.c.l.b16 %v1177
        %v1268 = vunpack.c.l.b16 %v1178
        %v1269 = vunpack.c.h.b16 %v1178
        %v1270 = vunpack.c.l.b16 %v1179
        %v1271 = vunpack.c.l.b16 %v1180
        %v1272 = vunpack.c.h.b16 %v1180
        %v1273 = vunpack.c.l.b16 %v1181
        %v1274 = vunpack.c.l.b16 %v1182
        %v1275 = vunpack.c.h.b16 %v1182
        %v1276 = vunpack.c.l.b16 %v1183
        %v1277 = vunpack.c.l.b16 %v1184
        %v1278 = vunpack.c.h.b16 %v1184
        %v1279 = vunpack.c.l.b16 %v1185
        %v1280 = vunpack.c.l.b16 %v1186
        %v1281 = vunpack.c.h.b16 %v1186
        %v1282 = vunpack.c.l.b16 %v1187
        %v1283 = vunpack.c.l.b16 %v1188
        %v1284 = vunpack.c.h.b16 %v1188
        %v1285 = vunpack.c.l.b16 %v1189
        %v1286 = vunpack.c.l.b16 %v1190
        %v1287 = vunpack.c.h.b16 %v1190
        %v1288 = vunpack.c.l.b16 %v1191
        %v1289 = vunpack.c.l.b16 %v1192
        %v1290 = vunpack.c.h.b16 %v1192
        %v1291 = vunpack.c.l.b16 %v1193
        %v1292 = vunpack.c.l.b16 %v1194
        %v1293 = vunpack.c.h.b16 %v1194
        %v1294 = vunpack.c.l.b16 %v1195
        %v1295 = vunpack.c.l.b16 %v1196
        %v1296 = vunpack.c.h.b16 %v1196
        %v1297 = vunpack.c.l.b16 %v1197
        %v1298 = vunpack.c.l.b16 %v1198
        %v1299 = vunpack.c.h.b16 %v1198
        %v1300 = vunpack.c.l.b16 %v1199
        %v1301 = vunpack.c.l.b16 %v1200
        %v1302 = vunpack.c.h.b16 %v1200
        %v1303 = vunpack.c.l.b16 %v1201
        %v1304 = vunpack.c.l.b16 %v1202
        %v1305 = vunpack.c.h.b16 %v1202
        %v1306 = vunpack.c.l.b16 %v1203
        %v1307 = vunpack.c.l.b16 %v1204
        %v1308 = vunpack.c.h.b16 %v1204
        %v1309 = vunpack.c.l.b16 %v1205
        %v1310 = vpack.c.b16 %v1265, %v1262
        %v1311 = vpack.c.b16 %v1266, %v1263
        %v1312 = vpack.c.b16 %v1267, %v1264
        %v1313 = vpack.c.b16 %v1271, %v1268
        %v1314 = vpack.c.b16 %v1272, %v1269
        %v1315 = vpack.c.b16 %v1273, %v1270
        %v1316 = vpack.c.b16 %v1277, %v1274
        %v1317 = vpack.c.b16 %v1278, %v1275
        %v1318 = vpack.c.b16 %v1279, %v1276
        %v1319 = vpack.c.b16 %v1283, %v1280
        %v1320 = vpack.c.b16 %v1284, %v1281
        %v1321 = vpack.c.b16 %v1285, %v1282
        %v1322 = vpack.c.b16 %v1289, %v1286
        %v1323 = vpack.c.b16 %v1290, %v1287
        %v1324 = vpack.c.b16 %v1291, %v1288
        %v1325 = vpack.c.b16 %v1295, %v1292
        %v1326 = vpack.c.b16 %v1296, %v1293
        %v1327 = vpack.c.b16 %v1297, %v1294
        %v1328 = vpack.c.b16 %v1301, %v1298
        %v1329 = vpack.c.b16 %v1302, %v1299
        %v1330 = vpack.c.b16 %v1303, %v1300
        %v1331 = vpack.c.b16 %v1307, %v1304
        %v1332 = vpack.c.b16 %v1308, %v1305
        %v1333 = vpack.c.b16 %v1309, %v1306
        %1358 = vmatprep.subr.bf16.mxu0 %v1311
        %1359 = vmatpush1.bf16.msra.mxu0 %v1310
        %1360 = vmatprep.subr.bf16.mxu0 %v1314
        %1361 = vmatpush1.bf16.msra.mxu0 %v1313
        %1362 = vmatprep.subr.bf16.mxu0 %v1317
        %1363 = vmatpush1.bf16.msra.mxu0 %v1316
        %1364 = vmatprep.subr.bf16.mxu0 %v1320
        %1365 = vmatpush1.bf16.msra.mxu0 %v1319
        %1366 = vmatprep.subr.bf16.mxu0 %v1323
        %1367 = vmatpush1.bf16.msra.mxu0 %v1322
        %1368 = vmatprep.subr.bf16.mxu0 %v1326
        %1369 = vmatpush1.bf16.msra.mxu0 %v1325
        %1370 = vmatprep.subr.bf16.mxu0 %v1329
        %1371 = vmatpush1.bf16.msra.mxu0 %v1328
        %1372 = vmatprep.subr.bf16.mxu0 %v1332
        %1373 = vmatpush1.bf16.msra.mxu0 %v1331
        %1374 = vmatprep.subr.bf16.mxu0 0
        %1375 = vmatpush1.bf16.msra.mxu0 0
        %1376 = vmatprep.subr.bf16.mxu0 0
        %1377 = vmatpush1.bf16.msra.mxu0 0
        %1378 = vmatprep.subr.bf16.mxu0 0
        %1379 = vmatpush1.bf16.msra.mxu0 0
        %1380 = vmatprep.subr.bf16.mxu0 0
        %1381 = vmatpush1.bf16.msra.mxu0 0
        %1382 = vmatprep.subr.bf16.mxu0 0
        %1383 = vmatpush1.bf16.msra.mxu0 0
        %1384 = vmatprep.subr.bf16.mxu0 0
        %1385 = vmatpush1.bf16.msra.mxu0 0
        %1386 = vmatprep.subr.bf16.mxu0 0
        %1387 = vmatpush1.bf16.msra.mxu0 0
        %1388 = vmatprep.subr.bf16.mxu0 0
        %1389 = vmatpush1.bf16.msra.mxu0 0
        %1390 = vmatprep.mubr.bf16.mxu0 0
        %1391 = vmatmul.mubr.bf16.gmra.mrb[0].mxu0 %v1222
        %v1392 = vpop.f32.mrb[0].mxu0
        %v1393 = vadd.f32 0.0, %v1392
        %v1394 = vpop.f32.mrb[0].mxu0
        %v1395 = vadd.f32 0.0, %v1394
        %v1396 = vpop.f32.mrb[0].mxu0
        %v1397 = vadd.f32 0.0, %v1396
        %v1398 = vpop.f32.mrb[0].mxu0
        %v1399 = vadd.f32 0.0, %v1398
        %1400 = vmatprep.mubr.bf16.mxu0 0
        %1401 = vmatmul.mubr.bf16.gmra.mrb[0].mxu0 %v1223
        %v1402 = vpop.f32.mrb[0].mxu0
        %v1403 = vadd.f32 0.0, %v1402
        %v1404 = vpop.f32.mrb[0].mxu0
        %v1405 = vadd.f32 0.0, %v1404
        %v1406 = vpop.f32.mrb[0].mxu0
        %v1407 = vadd.f32 0.0, %v1406
        %v1408 = vpop.f32.mrb[0].mxu0
        %v1409 = vadd.f32 0.0, %v1408
        %1410 = vmatprep.mubr.bf16.mxu0 0
        %1411 = vmatmul.mubr.bf16.gmra.mrb[0].mxu0 %v1224
        %v1412 = vpop.f32.mrb[0].mxu0
        %v1413 = vadd.f32 0.0, %v1412
        %v1414 = vpop.f32.mrb[0].mxu0
        %v1415 = vadd.f32 0.0, %v1414
        %v1416 = vpop.f32.mrb[0].mxu0
        %v1417 = vadd.f32 0.0, %v1416
        %v1418 = vpop.f32.mrb[0].mxu0
        %v1419 = vadd.f32 0.0, %v1418
        %1420 = vmatprep.mubr.bf16.mxu0 0
        %1421 = vmatmul.mubr.bf16.gmra.mrb[0].mxu0 %v1225
        %v1422 = vpop.f32.mrb[0].mxu0
        %v1423 = vadd.f32 0.0, %v1422
        %v1424 = vpop.f32.mrb[0].mxu0
        %v1425 = vadd.f32 0.0, %v1424
        %v1426 = vpop.f32.mrb[0].mxu0
        %v1427 = vadd.f32 0.0, %v1426
        %v1428 = vpop.f32.mrb[0].mxu0
        %v1429 = vadd.f32 0.0, %v1428
        %1430 = vdwg.mxu0
        %1431 = vmatprep.subr.bf16.mxu0 0
        %1432 = vmatpush1.bf16.msra.mxu0 %v1312
        %1433 = vmatprep.subr.bf16.mxu0 0
        %1434 = vmatpush1.bf16.msra.mxu0 %v1315
        %1435 = vmatprep.subr.bf16.mxu0 0
        %1436 = vmatpush1.bf16.msra.mxu0 %v1318
        %1437 = vmatprep.subr.bf16.mxu0 0
        %1438 = vmatpush1.bf16.msra.mxu0 %v1321
        %1439 = vmatprep.subr.bf16.mxu0 0
        %1440 = vmatpush1.bf16.msra.mxu0 %v1324
        %1441 = vmatprep.subr.bf16.mxu0 0
        %1442 = vmatpush1.bf16.msra.mxu0 %v1327
        %1443 = vmatprep.subr.bf16.mxu0 0
        %1444 = vmatpush1.bf16.msra.mxu0 %v1330
        %1445 = vmatprep.subr.bf16.mxu0 0
        %1446 = vmatpush1.bf16.msra.mxu0 %v1333
        %1447 = vmatprep.subr.bf16.mxu0 0
        %1448 = vmatpush1.bf16.msra.mxu0 0
        %1449 = vmatprep.subr.bf16.mxu0 0
        %1450 = vmatpush1.bf16.msra.mxu0 0
        %1451 = vmatprep.subr.bf16.mxu0 0
        %1452 = vmatpush1.bf16.msra.mxu0 0
        %1453 = vmatprep.subr.bf16.mxu0 0
        %1454 = vmatpush1.bf16.msra.mxu0 0
        %1455 = vmatprep.subr.bf16.mxu0 0
        %1456 = vmatpush1.bf16.msra.mxu0 0
        %1457 = vmatprep.subr.bf16.mxu0 0
        %1458 = vmatpush1.bf16.msra.mxu0 0
        %1459 = vmatprep.subr.bf16.mxu0 0
        %1460 = vmatpush1.bf16.msra.mxu0 0
        %1461 = vmatprep.subr.bf16.mxu0 0
        %1462 = vmatpush1.bf16.msra.mxu0 0
        %1463 = vmatprep.mubr.bf16.mxu0 0
        %1464 = vmatmul.mubr.bf16.gmra.mrb[0].mxu0 %v1222
        %v1465 = vpop.f32.mrb[0].mxu0
        %v1466 = vadd.f32 0.0, %v1465
        %v1467 = vpop.f32.mrb[0].mxu0
        %v1468 = vpop.f32.mrb[0].mxu0
        %v1469 = vadd.f32 0.0, %v1468
        %v1470 = vpop.f32.mrb[0].mxu0
        %1471 = vmatprep.mubr.bf16.mxu0 0
        %1472 = vmatmul.mubr.bf16.gmra.mrb[0].mxu0 %v1223
        %v1473 = vpop.f32.mrb[0].mxu0
        %v1474 = vadd.f32 0.0, %v1473
        %v1475 = vpop.f32.mrb[0].mxu0
        %v1476 = vpop.f32.mrb[0].mxu0
        %v1477 = vadd.f32 0.0, %v1476
        %v1478 = vpop.f32.mrb[0].mxu0
        %1479 = vmatprep.mubr.bf16.mxu0 0
        %1480 = vmatmul.mubr.bf16.gmra.mrb[0].mxu0 %v1224
        %v1481 = vpop.f32.mrb[0].mxu0
        %v1482 = vadd.f32 0.0, %v1481
        %v1483 = vpop.f32.mrb[0].mxu0
        %v1484 = vpop.f32.mrb[0].mxu0
        %v1485 = vadd.f32 0.0, %v1484
        %v1486 = vpop.f32.mrb[0].mxu0
        %1487 = vmatprep.mubr.bf16.mxu0 0
        %1488 = vmatmul.mubr.bf16.gmra.mrb[0].mxu0 %v1225
        %v1489 = vpop.f32.mrb[0].mxu0
        %v1490 = vadd.f32 0.0, %v1489
        %v1491 = vpop.f32.mrb[0].mxu0
        %v1492 = vpop.f32.mrb[0].mxu0
        %v1493 = vadd.f32 0.0, %v1492
        %v1494 = vpop.f32.mrb[0].mxu0
        %1495 = vdwg.mxu0
        %v1504 = vunpack.c.l.b16 %v1126
        %v1505 = vunpack.c.l.b16 %v1127
        %v1506 = vunpack.c.l.b16 %v1128
        %v1507 = vunpack.c.l.b16 %v1129
        %v1508 = vunpack.c.l.b16 %v1130
        %v1509 = vunpack.c.l.b16 %v1131
        %v1510 = vunpack.c.l.b16 %v1132
        %v1511 = vunpack.c.l.b16 %v1133
        %v1512 = vpack.c.b16 %v1505, %v1504
        %v1513 = vpack.c.b16 %v1507, %v1506
        %v1514 = vpack.c.b16 %v1509, %v1508
        %v1515 = vpack.c.b16 %v1511, %v1510
        %v1552 = vunpack.c.l.b16 %v1134
        %v1553 = vunpack.c.h.b16 %v1134
        %v1554 = vunpack.c.l.b16 %v1135
        %v1555 = vunpack.c.l.b16 %v1136
        %v1556 = vunpack.c.h.b16 %v1136
        %v1557 = vunpack.c.l.b16 %v1137
        %v1558 = vunpack.c.l.b16 %v1138
        %v1559 = vunpack.c.h.b16 %v1138
        %v1560 = vunpack.c.l.b16 %v1139
        %v1561 = vunpack.c.l.b16 %v1140
        %v1562 = vunpack.c.h.b16 %v1140
        %v1563 = vunpack.c.l.b16 %v1141
        %v1564 = vunpack.c.l.b16 %v1142
        %v1565 = vunpack.c.h.b16 %v1142
        %v1566 = vunpack.c.l.b16 %v1143
        %v1567 = vunpack.c.l.b16 %v1144
        %v1568 = vunpack.c.h.b16 %v1144
        %v1569 = vunpack.c.l.b16 %v1145
        %v1570 = vunpack.c.l.b16 %v1146
        %v1571 = vunpack.c.h.b16 %v1146
        %v1572 = vunpack.c.l.b16 %v1147
        %v1573 = vunpack.c.l.b16 %v1148
        %v1574 = vunpack.c.h.b16 %v1148
        %v1575 = vunpack.c.l.b16 %v1149
        %v1576 = vunpack.c.l.b16 %v1150
        %v1577 = vunpack.c.h.b16 %v1150
        %v1578 = vunpack.c.l.b16 %v1151
        %v1579 = vunpack.c.l.b16 %v1152
        %v1580 = vunpack.c.h.b16 %v1152
        %v1581 = vunpack.c.l.b16 %v1153
        %v1582 = vunpack.c.l.b16 %v1154
        %v1583 = vunpack.c.h.b16 %v1154
        %v1584 = vunpack.c.l.b16 %v1155
        %v1585 = vunpack.c.l.b16 %v1156
        %v1586 = vunpack.c.h.b16 %v1156
        %v1587 = vunpack.c.l.b16 %v1157
        %v1588 = vunpack.c.l.b16 %v1158
        %v1589 = vunpack.c.h.b16 %v1158
        %v1590 = vunpack.c.l.b16 %v1159
        %v1591 = vunpack.c.l.b16 %v1160
        %v1592 = vunpack.c.h.b16 %v1160
        %v1593 = vunpack.c.l.b16 %v1161
        %v1594 = vunpack.c.l.b16 %v1162
        %v1595 = vunpack.c.h.b16 %v1162
        %v1596 = vunpack.c.l.b16 %v1163
        %v1597 = vunpack.c.l.b16 %v1164
        %v1598 = vunpack.c.h.b16 %v1164
        %v1599 = vunpack.c.l.b16 %v1165
        %v1600 = vpack.c.b16 %v1555, %v1552
        %v1601 = vpack.c.b16 %v1556, %v1553
        %v1602 = vpack.c.b16 %v1557, %v1554
        %v1603 = vpack.c.b16 %v1561, %v1558
        %v1604 = vpack.c.b16 %v1562, %v1559
        %v1605 = vpack.c.b16 %v1563, %v1560
        %v1606 = vpack.c.b16 %v1567, %v1564
        %v1607 = vpack.c.b16 %v1568, %v1565
        %v1608 = vpack.c.b16 %v1569, %v1566
        %v1609 = vpack.c.b16 %v1573, %v1570
        %v1610 = vpack.c.b16 %v1574, %v1571
        %v1611 = vpack.c.b16 %v1575, %v1572
        %v1612 = vpack.c.b16 %v1579, %v1576
        %v1613 = vpack.c.b16 %v1580, %v1577
        %v1614 = vpack.c.b16 %v1581, %v1578
        %v1615 = vpack.c.b16 %v1585, %v1582
        %v1616 = vpack.c.b16 %v1586, %v1583
        %v1617 = vpack.c.b16 %v1587, %v1584
        %v1618 = vpack.c.b16 %v1591, %v1588
        %v1619 = vpack.c.b16 %v1592, %v1589
        %v1620 = vpack.c.b16 %v1593, %v1590
        %v1621 = vpack.c.b16 %v1597, %v1594
        %v1622 = vpack.c.b16 %v1598, %v1595
        %v1623 = vpack.c.b16 %v1599, %v1596
        %1648 = vmatprep.subr.bf16.mxu0 %v1601
        %1649 = vmatpush1.bf16.msra.mxu0 %v1600
        %1650 = vmatprep.subr.bf16.mxu0 %v1604
        %1651 = vmatpush1.bf16.msra.mxu0 %v1603
        %1652 = vmatprep.subr.bf16.mxu0 %v1607
        %1653 = vmatpush1.bf16.msra.mxu0 %v1606
        %1654 = vmatprep.subr.bf16.mxu0 %v1610
        %1655 = vmatpush1.bf16.msra.mxu0 %v1609
        %1656 = vmatprep.subr.bf16.mxu0 %v1613
        %1657 = vmatpush1.bf16.msra.mxu0 %v1612
        %1658 = vmatprep.subr.bf16.mxu0 %v1616
        %1659 = vmatpush1.bf16.msra.mxu0 %v1615
        %1660 = vmatprep.subr.bf16.mxu0 %v1619
        %1661 = vmatpush1.bf16.msra.mxu0 %v1618
        %1662 = vmatprep.subr.bf16.mxu0 %v1622
        %1663 = vmatpush1.bf16.msra.mxu0 %v1621
        %1664 = vmatprep.subr.bf16.mxu0 0
        %1665 = vmatpush1.bf16.msra.mxu0 0
        %1666 = vmatprep.subr.bf16.mxu0 0
        %1667 = vmatpush1.bf16.msra.mxu0 0
        %1668 = vmatprep.subr.bf16.mxu0 0
        %1669 = vmatpush1.bf16.msra.mxu0 0
        %1670 = vmatprep.subr.bf16.mxu0 0
        %1671 = vmatpush1.bf16.msra.mxu0 0
        %1672 = vmatprep.subr.bf16.mxu0 0
        %1673 = vmatpush1.bf16.msra.mxu0 0
        %1674 = vmatprep.subr.bf16.mxu0 0
        %1675 = vmatpush1.bf16.msra.mxu0 0
        %1676 = vmatprep.subr.bf16.mxu0 0
        %1677 = vmatpush1.bf16.msra.mxu0 0
        %1678 = vmatprep.subr.bf16.mxu0 0
        %1679 = vmatpush1.bf16.msra.mxu0 0
        %1680 = vmatprep.mubr.bf16.mxu0 0
        %1681 = vmatmul.mubr.bf16.gmra.mrb[0].mxu0 %v1512
        %v1682 = vpop.f32.mrb[0].mxu0
        %v1683 = vadd.f32 %v1393, %v1682
        %v1684 = vpop.f32.mrb[0].mxu0
        %v1685 = vadd.f32 %v1395, %v1684
        %v1686 = vpop.f32.mrb[0].mxu0
        %v1687 = vadd.f32 %v1397, %v1686
        %v1688 = vpop.f32.mrb[0].mxu0
        %v1689 = vadd.f32 %v1399, %v1688
        %1690 = vmatprep.mubr.bf16.mxu0 0
        %1691 = vmatmul.mubr.bf16.gmra.mrb[0].mxu0 %v1513
        %v1692 = vpop.f32.mrb[0].mxu0
        %v1693 = vadd.f32 %v1403, %v1692
        %v1694 = vpop.f32.mrb[0].mxu0
        %v1695 = vadd.f32 %v1405, %v1694
        %v1696 = vpop.f32.mrb[0].mxu0
        %v1697 = vadd.f32 %v1407, %v1696
        %v1698 = vpop.f32.mrb[0].mxu0
        %v1699 = vadd.f32 %v1409, %v1698
        %1700 = vmatprep.mubr.bf16.mxu0 0
        %1701 = vmatmul.mubr.bf16.gmra.mrb[0].mxu0 %v1514
        %v1702 = vpop.f32.mrb[0].mxu0
        %v1703 = vadd.f32 %v1413, %v1702
        %v1704 = vpop.f32.mrb[0].mxu0
        %v1705 = vadd.f32 %v1415, %v1704
        %v1706 = vpop.f32.mrb[0].mxu0
        %v1707 = vadd.f32 %v1417, %v1706
        %v1708 = vpop.f32.mrb[0].mxu0
        %v1709 = vadd.f32 %v1419, %v1708
        %1710 = vmatprep.mubr.bf16.mxu0 0
        %1711 = vmatmul.mubr.bf16.gmra.mrb[0].mxu0 %v1515
        %v1712 = vpop.f32.mrb[0].mxu0
        %v1713 = vadd.f32 %v1423, %v1712
        %v1714 = vpop.f32.mrb[0].mxu0
        %v1715 = vadd.f32 %v1425, %v1714
        %v1716 = vpop.f32.mrb[0].mxu0
        %v1717 = vadd.f32 %v1427, %v1716
        %v1718 = vpop.f32.mrb[0].mxu0
        %v1719 = vadd.f32 %v1429, %v1718
        %1720 = vdwg.mxu0
        %1721 = vmatprep.subr.bf16.mxu0 0
        %1722 = vmatpush1.bf16.msra.mxu0 %v1602
        %1723 = vmatprep.subr.bf16.mxu0 0
        %1724 = vmatpush1.bf16.msra.mxu0 %v1605
        %1725 = vmatprep.subr.bf16.mxu0 0
        %1726 = vmatpush1.bf16.msra.mxu0 %v1608
        %1727 = vmatprep.subr.bf16.mxu0 0
        %1728 = vmatpush1.bf16.msra.mxu0 %v1611
        %1729 = vmatprep.subr.bf16.mxu0 0
        %1730 = vmatpush1.bf16.msra.mxu0 %v1614
        %1731 = vmatprep.subr.bf16.mxu0 0
        %1732 = vmatpush1.bf16.msra.mxu0 %v1617
        %1733 = vmatprep.subr.bf16.mxu0 0
        %1734 = vmatpush1.bf16.msra.mxu0 %v1620
        %1735 = vmatprep.subr.bf16.mxu0 0
        %1736 = vmatpush1.bf16.msra.mxu0 %v1623
        %1737 = vmatprep.subr.bf16.mxu0 0
        %1738 = vmatpush1.bf16.msra.mxu0 0
        %1739 = vmatprep.subr.bf16.mxu0 0
        %1740 = vmatpush1.bf16.msra.mxu0 0
        %1741 = vmatprep.subr.bf16.mxu0 0
        %1742 = vmatpush1.bf16.msra.mxu0 0
        %1743 = vmatprep.subr.bf16.mxu0 0
        %1744 = vmatpush1.bf16.msra.mxu0 0
        %1745 = vmatprep.subr.bf16.mxu0 0
        %1746 = vmatpush1.bf16.msra.mxu0 0
        %1747 = vmatprep.subr.bf16.mxu0 0
        %1748 = vmatpush1.bf16.msra.mxu0 0
        %1749 = vmatprep.subr.bf16.mxu0 0
        %1750 = vmatpush1.bf16.msra.mxu0 0
        %1751 = vmatprep.subr.bf16.mxu0 0
        %1752 = vmatpush1.bf16.msra.mxu0 0
        %1753 = vmatprep.mubr.bf16.mxu0 0
        %1754 = vmatmul.mubr.bf16.gmra.mrb[0].mxu0 %v1512
        %v1755 = vpop.f32.mrb[0].mxu0
        %v1756 = vadd.f32 %v1466, %v1755
        %v1757 = vpop.f32.mrb[0].mxu0
        %v1758 = vpop.f32.mrb[0].mxu0
        %v1759 = vadd.f32 %v1469, %v1758
        %v1760 = vpop.f32.mrb[0].mxu0
        %1761 = vmatprep.mubr.bf16.mxu0 0
        %1762 = vmatmul.mubr.bf16.gmra.mrb[0].mxu0 %v1513
        %v1763 = vpop.f32.mrb[0].mxu0
        %v1764 = vadd.f32 %v1474, %v1763
        %v1765 = vpop.f32.mrb[0].mxu0
        %v1766 = vpop.f32.mrb[0].mxu0
        %v1767 = vadd.f32 %v1477, %v1766
        %v1768 = vpop.f32.mrb[0].mxu0
        %1769 = vmatprep.mubr.bf16.mxu0 0
        %1770 = vmatmul.mubr.bf16.gmra.mrb[0].mxu0 %v1514
        %v1771 = vpop.f32.mrb[0].mxu0
        %v1772 = vadd.f32 %v1482, %v1771
        %v1773 = vpop.f32.mrb[0].mxu0
        %v1774 = vpop.f32.mrb[0].mxu0
        %v1775 = vadd.f32 %v1485, %v1774
        %v1776 = vpop.f32.mrb[0].mxu0
        %1777 = vmatprep.mubr.bf16.mxu0 0
        %1778 = vmatmul.mubr.bf16.gmra.mrb[0].mxu0 %v1515
        %v1779 = vpop.f32.mrb[0].mxu0
        %v1780 = vadd.f32 %v1490, %v1779
        %v1781 = vpop.f32.mrb[0].mxu0
        %v1782 = vpop.f32.mrb[0].mxu0
        %v1783 = vadd.f32 %v1493, %v1782
        %v1784 = vpop.f32.mrb[0].mxu0
        %1785 = vdwg.mxu0
        %v1786 = vld [vmem:[%s5 + $0x3] sm:$0x7]
        %v1788 = vlaneseq
        %v1789 = vshrl.u32 %v1788, 7
        %v1790 = vsub.s32 0, %v1789
        %v1791 = vrot.slane %v1786, %v1790
        %v1792 = vlaneseq
        %v1793 = vshrl.u32 %v1792, 7
        %v1794 = vsub.s32 1, %v1793
        %v1795 = vrot.slane %v1786, %v1794
        %v1796 = vlaneseq
        %v1797 = vshrl.u32 %v1796, 7
        %v1798 = vsub.s32 2, %v1797
        %v1799 = vrot.slane %v1786, %v1798
        %v1803 = vadd.f32 %v1683, %v1791
        %v1804 = vadd.f32 %v1685, %v1795
        %v1805 = vadd.f32 %v1756, %v1799
        %v1806 = vadd.f32 %v1687, %v1791
        %v1807 = vadd.f32 %v1689, %v1795
        %v1808 = vadd.f32 %v1759, %v1799
        %v1809 = vadd.f32 %v1693, %v1791
        %v1810 = vadd.f32 %v1695, %v1795
        %v1811 = vadd.f32 %v1764, %v1799
        %v1812 = vadd.f32 %v1697, %v1791
        %v1813 = vadd.f32 %v1699, %v1795
        %v1814 = vadd.f32 %v1767, %v1799
        %v1815 = vadd.f32 %v1703, %v1791
        %v1816 = vadd.f32 %v1705, %v1795
        %v1817 = vadd.f32 %v1772, %v1799
        %v1818 = vadd.f32 %v1707, %v1791
        %v1819 = vadd.f32 %v1709, %v1795
        %v1820 = vadd.f32 %v1775, %v1799
        %v1821 = vadd.f32 %v1713, %v1791
        %v1822 = vadd.f32 %v1715, %v1795
        %v1823 = vadd.f32 %v1780, %v1799
        %v1824 = vadd.f32 %v1717, %v1791
        %v1825 = vadd.f32 %v1719, %v1795
        %v1826 = vadd.f32 %v1783, %v1799
        %1827 = vst [vmem:[#allocation4] sm:$0xff] %v1803
        %1828 = vst [vmem:[#allocation4 + $0x8] sm:$0xff] %v1804
        %1829 = vst [vmem:[#allocation4 + $0x10] sm:$0xff] %v1805
        %1830 = vst [vmem:[#allocation4 + $0x18] sm:$0xff] %v1806
        %1831 = vst [vmem:[#allocation4 + $0x20] sm:$0xff] %v1807
        %1832 = vst [vmem:[#allocation4 + $0x28] sm:$0xff] %v1808
        %1833 = vst [vmem:[#allocation4 + $0x30] sm:$0xff] %v1809
        %1834 = vst [vmem:[#allocation4 + $0x38] sm:$0xff] %v1810
        %1835 = vst [vmem:[#allocation4 + $0x40] sm:$0xff] %v1811
        %1836 = vst [vmem:[#allocation4 + $0x48] sm:$0xff] %v1812
        %1837 = vst [vmem:[#allocation4 + $0x50] sm:$0xff] %v1813
        %1838 = vst [vmem:[#allocation4 + $0x58] sm:$0xff] %v1814
        %1839 = vst [vmem:[#allocation4 + $0x60] sm:$0xff] %v1815
        %1840 = vst [vmem:[#allocation4 + $0x68] sm:$0xff] %v1816
        %1841 = vst [vmem:[#allocation4 + $0x70] sm:$0xff] %v1817
        %1842 = vst [vmem:[#allocation4 + $0x78] sm:$0xff] %v1818
        %1843 = vst [vmem:[#allocation4 + $0x80] sm:$0xff] %v1819
        %1844 = vst [vmem:[#allocation4 + $0x88] sm:$0xff] %v1820
        %1845 = vst [vmem:[#allocation4 + $0x90] sm:$0xff] %v1821
        %1846 = vst [vmem:[#allocation4 + $0x98] sm:$0xff] %v1822
        %1847 = vst [vmem:[#allocation4 + $0xa0] sm:$0xff] %v1823
        %1848 = vst [vmem:[#allocation4 + $0xa8] sm:$0xff] %v1824
        %1849 = vst [vmem:[#allocation4 + $0xb0] sm:$0xff] %v1825
        %1850 = vst [vmem:[#allocation4 + $0xb8] sm:$0xff] %v1826
        %v1851 = vld [vmem:[#allocation5] sm:$0xff]
        %v1852 = vld [vmem:[#allocation5 + $0x8] sm:$0xff]
        %v1853 = vld [vmem:[#allocation5 + $0x10] sm:$0xff]
        %v1854 = vld [vmem:[#allocation5 + $0x18] sm:$0xff]
        %v1855 = vld [vmem:[#allocation5 + $0x20] sm:$0xff]
        %v1856 = vld [vmem:[#allocation5 + $0x28] sm:$0xff]
        %v1857 = vld [vmem:[#allocation5 + $0x30] sm:$0xff]
        %v1858 = vld [vmem:[#allocation5 + $0x38] sm:$0xff]
        %v1859 = vld [vmem:[#allocation5 + $0x40] sm:$0xff]
        %v1860 = vld [vmem:[#allocation5 + $0x48] sm:$0xff]
        %v1861 = vld [vmem:[#allocation5 + $0x50] sm:$0xff]
        %v1862 = vld [vmem:[#allocation5 + $0x58] sm:$0xff]
        %v1863 = vld [vmem:[#allocation5 + $0x60] sm:$0xff]
        %v1864 = vld [vmem:[#allocation5 + $0x68] sm:$0xff]
        %v1865 = vld [vmem:[#allocation5 + $0x70] sm:$0xff]
        %v1866 = vld [vmem:[#allocation5 + $0x78] sm:$0xff]
        %v1867 = vld [vmem:[#allocation5 + $0x80] sm:$0xff]
        %v1868 = vld [vmem:[#allocation5 + $0x88] sm:$0xff]
        %v1869 = vld [vmem:[#allocation5 + $0x90] sm:$0xff]
        %v1870 = vld [vmem:[#allocation5 + $0x98] sm:$0xff]
        %v1871 = vld [vmem:[#allocation5 + $0xa0] sm:$0xff]
        %v1872 = vld [vmem:[#allocation5 + $0xa8] sm:$0xff]
        %v1873 = vld [vmem:[#allocation5 + $0xb0] sm:$0xff]
        %v1874 = vld [vmem:[#allocation5 + $0xb8] sm:$0xff]
        %v1875 = vld [vmem:[#allocation5 + $0xc0] sm:$0xff]
        %v1876 = vld [vmem:[#allocation5 + $0xc8] sm:$0xff]
        %v1877 = vld [vmem:[#allocation5 + $0xd0] sm:$0xff]
        %v1878 = vld [vmem:[#allocation5 + $0xd8] sm:$0xff]
        %v1879 = vld [vmem:[#allocation5 + $0xe0] sm:$0xff]
        %v1880 = vld [vmem:[#allocation5 + $0xe8] sm:$0xff]
        %v1881 = vld [vmem:[#allocation5 + $0xf0] sm:$0xff]
        %v1882 = vld [vmem:[#allocation5 + $0xf8] sm:$0xff]
        %v1883 = vld [vmem:[#allocation5 + $0x100] sm:$0xff]
        %v1884 = vld [vmem:[#allocation5 + $0x108] sm:$0xff]
        %v1885 = vld [vmem:[#allocation5 + $0x110] sm:$0xff]
        %v1886 = vld [vmem:[#allocation5 + $0x118] sm:$0xff]
        %v1887 = vld [vmem:[#allocation5 + $0x120] sm:$0xff]
        %v1888 = vld [vmem:[#allocation5 + $0x128] sm:$0xff]
        %v1889 = vld [vmem:[#allocation5 + $0x130] sm:$0xff]
        %v1890 = vld [vmem:[#allocation5 + $0x138] sm:$0xff]
        %v1891 = vld [vmem:[#allocation5 + $0x140] sm:$0xff]
        %v1892 = vld [vmem:[#allocation5 + $0x148] sm:$0xff]
        %v1893 = vld [vmem:[#allocation5 + $0x150] sm:$0xff]
        %v1894 = vld [vmem:[#allocation5 + $0x158] sm:$0xff]
        %v1895 = vld [vmem:[#allocation5 + $0x160] sm:$0xff]
        %v1896 = vld [vmem:[#allocation5 + $0x168] sm:$0xff]
        %v1897 = vld [vmem:[#allocation5 + $0x170] sm:$0xff]
        %v1898 = vld [vmem:[#allocation5 + $0x178] sm:$0xff]
        %v1899 = vld [vmem:[#allocation5 + $0x180] sm:$0xff]
        %v1900 = vld [vmem:[#allocation5 + $0x188] sm:$0xff]
        %v1901 = vld [vmem:[#allocation5 + $0x190] sm:$0xff]
        %v1902 = vld [vmem:[#allocation5 + $0x198] sm:$0xff]
        %v1903 = vld [vmem:[#allocation5 + $0x1a0] sm:$0xff]
        %v1904 = vld [vmem:[#allocation5 + $0x1a8] sm:$0xff]
        %v1905 = vld [vmem:[#allocation5 + $0x1b0] sm:$0xff]
        %v1906 = vld [vmem:[#allocation5 + $0x1b8] sm:$0xff]
        %v1907 = vld [vmem:[#allocation5 + $0x1c0] sm:$0xff]
        %v1908 = vld [vmem:[#allocation5 + $0x1c8] sm:$0xff]
        %v1909 = vld [vmem:[#allocation5 + $0x1d0] sm:$0xff]
        %v1910 = vld [vmem:[#allocation5 + $0x1d8] sm:$0xff]
        %v1911 = vld [vmem:[#allocation5 + $0x1e0] sm:$0xff]
        %v1912 = vld [vmem:[#allocation5 + $0x1e8] sm:$0xff]
        %v1913 = vld [vmem:[#allocation5 + $0x1f0] sm:$0xff]
        %v1914 = vld [vmem:[#allocation5 + $0x1f8] sm:$0xff]
        %v1915 = vld [vmem:[#allocation5 + $0x200] sm:$0xff]
        %v1916 = vld [vmem:[#allocation5 + $0x208] sm:$0xff]
        %v1917 = vld [vmem:[#allocation5 + $0x210] sm:$0xff]
        %v1918 = vld [vmem:[#allocation5 + $0x218] sm:$0xff]
        %v1919 = vld [vmem:[#allocation5 + $0x220] sm:$0xff]
        %v1920 = vld [vmem:[#allocation5 + $0x228] sm:$0xff]
        %v1921 = vld [vmem:[#allocation5 + $0x230] sm:$0xff]
        %v1922 = vld [vmem:[#allocation5 + $0x238] sm:$0xff]
        %v1923 = vld [vmem:[#allocation5 + $0x240] sm:$0xff]
        %v1924 = vld [vmem:[#allocation5 + $0x248] sm:$0xff]
        %v1925 = vld [vmem:[#allocation5 + $0x250] sm:$0xff]
        %v1926 = vld [vmem:[#allocation5 + $0x258] sm:$0xff]
        %v1927 = vld [vmem:[#allocation5 + $0x260] sm:$0xff]
        %v1928 = vld [vmem:[#allocation5 + $0x268] sm:$0xff]
        %v1929 = vld [vmem:[#allocation5 + $0x270] sm:$0xff]
        %v1930 = vld [vmem:[#allocation5 + $0x278] sm:$0xff]
        %v1931 = vld [vmem:[#allocation5 + $0x280] sm:$0xff]
        %v1932 = vld [vmem:[#allocation5 + $0x288] sm:$0xff]
        %v1933 = vld [vmem:[#allocation5 + $0x290] sm:$0xff]
        %v1934 = vld [vmem:[#allocation5 + $0x298] sm:$0xff]
        %v1935 = vld [vmem:[#allocation5 + $0x2a0] sm:$0xff]
        %v1936 = vld [vmem:[#allocation5 + $0x2a8] sm:$0xff]
        %v1937 = vld [vmem:[#allocation5 + $0x2b0] sm:$0xff]
        %v1938 = vld [vmem:[#allocation5 + $0x2b8] sm:$0xff]
        %v1939 = vld [vmem:[#allocation5 + $0x2c0] sm:$0xff]
        %v1940 = vld [vmem:[#allocation5 + $0x2c8] sm:$0xff]
        %v1941 = vld [vmem:[#allocation5 + $0x2d0] sm:$0xff]
        %v1942 = vld [vmem:[#allocation5 + $0x2d8] sm:$0xff]
        %v1943 = vld [vmem:[#allocation5 + $0x2e0] sm:$0xff]
        %v1944 = vld [vmem:[#allocation5 + $0x2e8] sm:$0xff]
        %v1945 = vld [vmem:[#allocation5 + $0x2f0] sm:$0xff]
        %v1946 = vld [vmem:[#allocation5 + $0x2f8] sm:$0xff]
        %v1947 = vld [vmem:[%s7] sm:$0x1]
        %v1948 = vld [vmem:[%s7 + $0x1] sm:$0x1]
        %v1949 = vld [vmem:[#allocation2] sm:$0xff]
        %v1950 = vld [vmem:[#allocation2 + $0x8] sm:$0xff]
        %v1951 = vld [vmem:[#allocation2 + $0x10] sm:$0xff]
        %v1952 = vld [vmem:[#allocation2 + $0x18] sm:$0xff]
        %s1953 = smul.u32 0, 3
        %s1954 = smul.addr %s1953, 8
        %s1955 = scalar_lea.vmem [#allocation3], %s1954
        %v1956 = vld [vmem:[%s1955] sm:$0xff]
        %v1957 = vld [vmem:[%s1955 + $0x8] sm:$0xff]
        %v1958 = vld [vmem:[%s1955 + $0x10] sm:$0xff]
        %v1959 = vld [vmem:[%s1955 + $0x18] sm:$0xff]
        %v1960 = vld [vmem:[%s1955 + $0x20] sm:$0xff]
        %v1961 = vld [vmem:[%s1955 + $0x28] sm:$0xff]
        %s1962 = smul.u32 6, 3
        %s1963 = smul.addr %s1962, 8
        %s1964 = scalar_lea.vmem [#allocation4], %s1963
        %v1965 = vld [vmem:[%s1964] sm:$0xff]
        %v1966 = vld [vmem:[%s1964 + $0x8] sm:$0xff]
        %v1967 = vld [vmem:[%s1964 + $0x10] sm:$0xff]
        %v1968 = vld [vmem:[%s1964 + $0x18] sm:$0xff]
        %v1969 = vld [vmem:[%s1964 + $0x20] sm:$0xff]
        %v1970 = vld [vmem:[%s1964 + $0x28] sm:$0xff]
        %v1971 = vpack.c.bf16 %v1951, %v1949
        %v1972 = vpack.c.bf16 %v1952, %v1950
        %v2069 = vunpack.c.l.b16 %v1851
        %v2070 = vunpack.c.h.b16 %v1851
        %v2071 = vunpack.c.l.b16 %v1852
        %v2072 = vunpack.c.h.b16 %v1852
        %v2073 = vunpack.c.l.b16 %v1853
        %v2074 = vunpack.c.h.b16 %v1853
        %v2075 = vunpack.c.l.b16 %v1854
        %v2076 = vunpack.c.h.b16 %v1854
        %v2077 = vunpack.c.l.b16 %v1855
        %v2078 = vunpack.c.h.b16 %v1855
        %v2079 = vunpack.c.l.b16 %v1856
        %v2080 = vunpack.c.h.b16 %v1856
        %v2081 = vunpack.c.l.b16 %v1857
        %v2082 = vunpack.c.h.b16 %v1857
        %v2083 = vunpack.c.l.b16 %v1858
        %v2084 = vunpack.c.h.b16 %v1858
        %v2085 = vunpack.c.l.b16 %v1859
        %v2086 = vunpack.c.h.b16 %v1859
        %v2087 = vunpack.c.l.b16 %v1860
        %v2088 = vunpack.c.h.b16 %v1860
        %v2089 = vunpack.c.l.b16 %v1861
        %v2090 = vunpack.c.h.b16 %v1861
        %v2091 = vunpack.c.l.b16 %v1862
        %v2092 = vunpack.c.h.b16 %v1862
        %v2093 = vunpack.c.l.b16 %v1863
        %v2094 = vunpack.c.h.b16 %v1863
        %v2095 = vunpack.c.l.b16 %v1864
        %v2096 = vunpack.c.h.b16 %v1864
        %v2097 = vunpack.c.l.b16 %v1865
        %v2098 = vunpack.c.h.b16 %v1865
        %v2099 = vunpack.c.l.b16 %v1866
        %v2100 = vunpack.c.h.b16 %v1866
        %v2101 = vunpack.c.l.b16 %v1867
        %v2102 = vunpack.c.h.b16 %v1867
        %v2103 = vunpack.c.l.b16 %v1868
        %v2104 = vunpack.c.h.b16 %v1868
        %v2105 = vunpack.c.l.b16 %v1869
        %v2106 = vunpack.c.h.b16 %v1869
        %v2107 = vunpack.c.l.b16 %v1870
        %v2108 = vunpack.c.h.b16 %v1870
        %v2109 = vunpack.c.l.b16 %v1871
        %v2110 = vunpack.c.h.b16 %v1871
        %v2111 = vunpack.c.l.b16 %v1872
        %v2112 = vunpack.c.h.b16 %v1872
        %v2113 = vunpack.c.l.b16 %v1873
        %v2114 = vunpack.c.h.b16 %v1873
        %v2115 = vunpack.c.l.b16 %v1874
        %v2116 = vunpack.c.h.b16 %v1874
        %v2117 = vunpack.c.l.b16 %v1875
        %v2118 = vunpack.c.h.b16 %v1875
        %v2119 = vunpack.c.l.b16 %v1876
        %v2120 = vunpack.c.h.b16 %v1876
        %v2121 = vunpack.c.l.b16 %v1877
        %v2122 = vunpack.c.h.b16 %v1877
        %v2123 = vunpack.c.l.b16 %v1878
        %v2124 = vunpack.c.h.b16 %v1878
        %v2125 = vunpack.c.l.b16 %v1879
        %v2126 = vunpack.c.h.b16 %v1879
        %v2127 = vunpack.c.l.b16 %v1880
        %v2128 = vunpack.c.h.b16 %v1880
        %v2129 = vunpack.c.l.b16 %v1881
        %v2130 = vunpack.c.h.b16 %v1881
        %v2131 = vunpack.c.l.b16 %v1882
        %v2132 = vunpack.c.h.b16 %v1882
        %v2133 = vunpack.c.l.b16 %v1883
        %v2134 = vunpack.c.h.b16 %v1883
        %v2135 = vunpack.c.l.b16 %v1884
        %v2136 = vunpack.c.h.b16 %v1884
        %v2137 = vunpack.c.l.b16 %v1885
        %v2138 = vunpack.c.h.b16 %v1885
        %v2139 = vunpack.c.l.b16 %v1886
        %v2140 = vunpack.c.h.b16 %v1886
        %v2141 = vunpack.c.l.b16 %v1887
        %v2142 = vunpack.c.h.b16 %v1887
        %v2143 = vunpack.c.l.b16 %v1888
        %v2144 = vunpack.c.h.b16 %v1888
        %v2145 = vunpack.c.l.b16 %v1889
        %v2146 = vunpack.c.h.b16 %v1889
        %v2147 = vunpack.c.l.b16 %v1890
        %v2148 = vunpack.c.h.b16 %v1890
        %v2149 = vunpack.c.l.b16 %v1891
        %v2150 = vunpack.c.h.b16 %v1891
        %v2151 = vunpack.c.l.b16 %v1892
        %v2152 = vunpack.c.h.b16 %v1892
        %v2153 = vunpack.c.l.b16 %v1893
        %v2154 = vunpack.c.h.b16 %v1893
        %v2155 = vunpack.c.l.b16 %v1894
        %v2156 = vunpack.c.h.b16 %v1894
        %v2157 = vunpack.c.l.b16 %v1895
        %v2158 = vunpack.c.h.b16 %v1895
        %v2159 = vunpack.c.l.b16 %v1896
        %v2160 = vunpack.c.h.b16 %v1896
        %v2161 = vunpack.c.l.b16 %v1897
        %v2162 = vunpack.c.h.b16 %v1897
        %v2163 = vunpack.c.l.b16 %v1898
        %v2164 = vunpack.c.h.b16 %v1898
        %v2165 = vunpack.c.l.b16 %v1899
        %v2166 = vunpack.c.h.b16 %v1899
        %v2167 = vunpack.c.l.b16 %v1900
        %v2168 = vunpack.c.h.b16 %v1900
        %v2169 = vunpack.c.l.b16 %v1901
        %v2170 = vunpack.c.h.b16 %v1901
        %v2171 = vunpack.c.l.b16 %v1902
        %v2172 = vunpack.c.h.b16 %v1902
        %v2173 = vunpack.c.l.b16 %v1903
        %v2174 = vunpack.c.h.b16 %v1903
        %v2175 = vunpack.c.l.b16 %v1904
        %v2176 = vunpack.c.h.b16 %v1904
        %v2177 = vunpack.c.l.b16 %v1905
        %v2178 = vunpack.c.h.b16 %v1905
        %v2179 = vunpack.c.l.b16 %v1906
        %v2180 = vunpack.c.h.b16 %v1906
        %v2181 = vunpack.c.l.b16 %v1907
        %v2182 = vunpack.c.h.b16 %v1907
        %v2183 = vunpack.c.l.b16 %v1908
        %v2184 = vunpack.c.h.b16 %v1908
        %v2185 = vunpack.c.l.b16 %v1909
        %v2186 = vunpack.c.h.b16 %v1909
        %v2187 = vunpack.c.l.b16 %v1910
        %v2188 = vunpack.c.h.b16 %v1910
        %v2189 = vunpack.c.l.b16 %v1911
        %v2190 = vunpack.c.h.b16 %v1911
        %v2191 = vunpack.c.l.b16 %v1912
        %v2192 = vunpack.c.h.b16 %v1912
        %v2193 = vunpack.c.l.b16 %v1913
        %v2194 = vunpack.c.h.b16 %v1913
        %v2195 = vunpack.c.l.b16 %v1914
        %v2196 = vunpack.c.h.b16 %v1914
        %v2197 = vunpack.c.l.b16 %v1915
        %v2198 = vunpack.c.h.b16 %v1915
        %v2199 = vunpack.c.l.b16 %v1916
        %v2200 = vunpack.c.h.b16 %v1916
        %v2201 = vunpack.c.l.b16 %v1917
        %v2202 = vunpack.c.h.b16 %v1917
        %v2203 = vunpack.c.l.b16 %v1918
        %v2204 = vunpack.c.h.b16 %v1918
        %v2205 = vunpack.c.l.b16 %v1919
        %v2206 = vunpack.c.h.b16 %v1919
        %v2207 = vunpack.c.l.b16 %v1920
        %v2208 = vunpack.c.h.b16 %v1920
        %v2209 = vunpack.c.l.b16 %v1921
        %v2210 = vunpack.c.h.b16 %v1921
        %v2211 = vunpack.c.l.b16 %v1922
        %v2212 = vunpack.c.h.b16 %v1922
        %v2213 = vunpack.c.l.b16 %v1923
        %v2214 = vunpack.c.h.b16 %v1923
        %v2215 = vunpack.c.l.b16 %v1924
        %v2216 = vunpack.c.h.b16 %v1924
        %v2217 = vunpack.c.l.b16 %v1925
        %v2218 = vunpack.c.h.b16 %v1925
        %v2219 = vunpack.c.l.b16 %v1926
        %v2220 = vunpack.c.h.b16 %v1926
        %v2221 = vunpack.c.l.b16 %v1927
        %v2222 = vunpack.c.h.b16 %v1927
        %v2223 = vunpack.c.l.b16 %v1928
        %v2224 = vunpack.c.h.b16 %v1928
        %v2225 = vunpack.c.l.b16 %v1929
        %v2226 = vunpack.c.h.b16 %v1929
        %v2227 = vunpack.c.l.b16 %v1930
        %v2228 = vunpack.c.h.b16 %v1930
        %v2229 = vunpack.c.l.b16 %v1931
        %v2230 = vunpack.c.h.b16 %v1931
        %v2231 = vunpack.c.l.b16 %v1932
        %v2232 = vunpack.c.h.b16 %v1932
        %v2233 = vunpack.c.l.b16 %v1933
        %v2234 = vunpack.c.h.b16 %v1933
        %v2235 = vunpack.c.l.b16 %v1934
        %v2236 = vunpack.c.h.b16 %v1934
        %v2237 = vunpack.c.l.b16 %v1935
        %v2238 = vunpack.c.h.b16 %v1935
        %v2239 = vunpack.c.l.b16 %v1936
        %v2240 = vunpack.c.h.b16 %v1936
        %v2241 = vunpack.c.l.b16 %v1937
        %v2242 = vunpack.c.h.b16 %v1937
        %v2243 = vunpack.c.l.b16 %v1938
        %v2244 = vunpack.c.h.b16 %v1938
        %v2245 = vunpack.c.l.b16 %v1939
        %v2246 = vunpack.c.h.b16 %v1939
        %v2247 = vunpack.c.l.b16 %v1940
        %v2248 = vunpack.c.h.b16 %v1940
        %v2249 = vunpack.c.l.b16 %v1941
        %v2250 = vunpack.c.h.b16 %v1941
        %v2251 = vunpack.c.l.b16 %v1942
        %v2252 = vunpack.c.h.b16 %v1942
        %v2253 = vunpack.c.l.b16 %v1943
        %v2254 = vunpack.c.h.b16 %v1943
        %v2255 = vunpack.c.l.b16 %v1944
        %v2256 = vunpack.c.h.b16 %v1944
        %v2257 = vunpack.c.l.b16 %v1945
        %v2258 = vunpack.c.h.b16 %v1945
        %v2259 = vunpack.c.l.b16 %v1946
        %v2260 = vunpack.c.h.b16 %v1946
        %v2261 = vpack.c.b16 %v2075, %v2069
        %v2262 = vpack.c.b16 %v2076, %v2070
        %v2263 = vpack.c.b16 %v2077, %v2071
        %v2264 = vpack.c.b16 %v2078, %v2072
        %v2265 = vpack.c.b16 %v2079, %v2073
        %v2266 = vpack.c.b16 %v2080, %v2074
        %v2267 = vpack.c.b16 %v2087, %v2081
        %v2268 = vpack.c.b16 %v2088, %v2082
        %v2269 = vpack.c.b16 %v2089, %v2083
        %v2270 = vpack.c.b16 %v2090, %v2084
        %v2271 = vpack.c.b16 %v2091, %v2085
        %v2272 = vpack.c.b16 %v2092, %v2086
        %v2273 = vpack.c.b16 %v2099, %v2093
        %v2274 = vpack.c.b16 %v2100, %v2094
        %v2275 = vpack.c.b16 %v2101, %v2095
        %v2276 = vpack.c.b16 %v2102, %v2096
        %v2277 = vpack.c.b16 %v2103, %v2097
        %v2278 = vpack.c.b16 %v2104, %v2098
        %v2279 = vpack.c.b16 %v2111, %v2105
        %v2280 = vpack.c.b16 %v2112, %v2106
        %v2281 = vpack.c.b16 %v2113, %v2107
        %v2282 = vpack.c.b16 %v2114, %v2108
        %v2283 = vpack.c.b16 %v2115, %v2109
        %v2284 = vpack.c.b16 %v2116, %v2110
        %v2285 = vpack.c.b16 %v2123, %v2117
        %v2286 = vpack.c.b16 %v2124, %v2118
        %v2287 = vpack.c.b16 %v2125, %v2119
        %v2288 = vpack.c.b16 %v2126, %v2120
        %v2289 = vpack.c.b16 %v2127, %v2121
        %v2290 = vpack.c.b16 %v2128, %v2122
        %v2291 = vpack.c.b16 %v2135, %v2129
        %v2292 = vpack.c.b16 %v2136, %v2130
        %v2293 = vpack.c.b16 %v2137, %v2131
        %v2294 = vpack.c.b16 %v2138, %v2132
        %v2295 = vpack.c.b16 %v2139, %v2133
        %v2296 = vpack.c.b16 %v2140, %v2134
        %v2297 = vpack.c.b16 %v2147, %v2141
        %v2298 = vpack.c.b16 %v2148, %v2142
        %v2299 = vpack.c.b16 %v2149, %v2143
        %v2300 = vpack.c.b16 %v2150, %v2144
        %v2301 = vpack.c.b16 %v2151, %v2145
        %v2302 = vpack.c.b16 %v2152, %v2146
        %v2303 = vpack.c.b16 %v2159, %v2153
        %v2304 = vpack.c.b16 %v2160, %v2154
        %v2305 = vpack.c.b16 %v2161, %v2155
        %v2306 = vpack.c.b16 %v2162, %v2156
        %v2307 = vpack.c.b16 %v2163, %v2157
        %v2308 = vpack.c.b16 %v2164, %v2158
        %v2309 = vpack.c.b16 %v2171, %v2165
        %v2310 = vpack.c.b16 %v2172, %v2166
        %v2311 = vpack.c.b16 %v2173, %v2167
        %v2312 = vpack.c.b16 %v2174, %v2168
        %v2313 = vpack.c.b16 %v2175, %v2169
        %v2314 = vpack.c.b16 %v2176, %v2170
        %v2315 = vpack.c.b16 %v2183, %v2177
        %v2316 = vpack.c.b16 %v2184, %v2178
        %v2317 = vpack.c.b16 %v2185, %v2179
        %v2318 = vpack.c.b16 %v2186, %v2180
        %v2319 = vpack.c.b16 %v2187, %v2181
        %v2320 = vpack.c.b16 %v2188, %v2182
        %v2321 = vpack.c.b16 %v2195, %v2189
        %v2322 = vpack.c.b16 %v2196, %v2190
        %v2323 = vpack.c.b16 %v2197, %v2191
        %v2324 = vpack.c.b16 %v2198, %v2192
        %v2325 = vpack.c.b16 %v2199, %v2193
        %v2326 = vpack.c.b16 %v2200, %v2194
        %v2327 = vpack.c.b16 %v2207, %v2201
        %v2328 = vpack.c.b16 %v2208, %v2202
        %v2329 = vpack.c.b16 %v2209, %v2203
        %v2330 = vpack.c.b16 %v2210, %v2204
        %v2331 = vpack.c.b16 %v2211, %v2205
        %v2332 = vpack.c.b16 %v2212, %v2206
        %v2333 = vpack.c.b16 %v2219, %v2213
        %v2334 = vpack.c.b16 %v2220, %v2214
        %v2335 = vpack.c.b16 %v2221, %v2215
        %v2336 = vpack.c.b16 %v2222, %v2216
        %v2337 = vpack.c.b16 %v2223, %v2217
        %v2338 = vpack.c.b16 %v2224, %v2218
        %v2339 = vpack.c.b16 %v2231, %v2225
        %v2340 = vpack.c.b16 %v2232, %v2226
        %v2341 = vpack.c.b16 %v2233, %v2227
        %v2342 = vpack.c.b16 %v2234, %v2228
        %v2343 = vpack.c.b16 %v2235, %v2229
        %v2344 = vpack.c.b16 %v2236, %v2230
        %v2345 = vpack.c.b16 %v2243, %v2237
        %v2346 = vpack.c.b16 %v2244, %v2238
        %v2347 = vpack.c.b16 %v2245, %v2239
        %v2348 = vpack.c.b16 %v2246, %v2240
        %v2349 = vpack.c.b16 %v2247, %v2241
        %v2350 = vpack.c.b16 %v2248, %v2242
        %v2351 = vpack.c.b16 %v2255, %v2249
        %v2352 = vpack.c.b16 %v2256, %v2250
        %v2353 = vpack.c.b16 %v2257, %v2251
        %v2354 = vpack.c.b16 %v2258, %v2252
        %v2355 = vpack.c.b16 %v2259, %v2253
        %v2356 = vpack.c.b16 %v2260, %v2254
        %2453 = vmatprep.subr.bf16.mxu0 %v2262
        %2454 = vmatpush1.bf16.msra.mxu0 %v2261
        %2455 = vmatprep.subr.bf16.mxu0 %v2268
        %2456 = vmatpush1.bf16.msra.mxu0 %v2267
        %2457 = vmatprep.subr.bf16.mxu0 %v2274
        %2458 = vmatpush1.bf16.msra.mxu0 %v2273
        %2459 = vmatprep.subr.bf16.mxu0 %v2280
        %2460 = vmatpush1.bf16.msra.mxu0 %v2279
        %2461 = vmatprep.subr.bf16.mxu0 %v2286
        %2462 = vmatpush1.bf16.msra.mxu0 %v2285
        %2463 = vmatprep.subr.bf16.mxu0 %v2292
        %2464 = vmatpush1.bf16.msra.mxu0 %v2291
        %2465 = vmatprep.subr.bf16.mxu0 %v2298
        %2466 = vmatpush1.bf16.msra.mxu0 %v2297
        %2467 = vmatprep.subr.bf16.mxu0 %v2304
        %2468 = vmatpush1.bf16.msra.mxu0 %v2303
        %2469 = vmatprep.subr.bf16.mxu0 %v2310
        %2470 = vmatpush1.bf16.msra.mxu0 %v2309
        %2471 = vmatprep.subr.bf16.mxu0 %v2316
        %2472 = vmatpush1.bf16.msra.mxu0 %v2315
        %2473 = vmatprep.subr.bf16.mxu0 %v2322
        %2474 = vmatpush1.bf16.msra.mxu0 %v2321
        %2475 = vmatprep.subr.bf16.mxu0 %v2328
        %2476 = vmatpush1.bf16.msra.mxu0 %v2327
        %2477 = vmatprep.subr.bf16.mxu0 %v2334
        %2478 = vmatpush1.bf16.msra.mxu0 %v2333
        %2479 = vmatprep.subr.bf16.mxu0 %v2340
        %2480 = vmatpush1.bf16.msra.mxu0 %v2339
        %2481 = vmatprep.subr.bf16.mxu0 %v2346
        %2482 = vmatpush1.bf16.msra.mxu0 %v2345
        %2483 = vmatprep.subr.bf16.mxu0 %v2352
        %2484 = vmatpush1.bf16.msra.mxu0 %v2351
        %2485 = vmatprep.mubr.bf16.mxu0 %v1972
        %2486 = vmatmul.mubr.bf16.gmra.mrb[0].mxu0 %v1971
        %v2487 = vpop.f32.mrb[0].mxu0
        %v2488 = vadd.f32 0.0, %v2487
        %v2489 = vpop.f32.mrb[0].mxu0
        %v2490 = vadd.f32 0.0, %v2489
        %v2491 = vpop.f32.mrb[0].mxu0
        %v2492 = vadd.f32 0.0, %v2491
        %v2493 = vpop.f32.mrb[0].mxu0
        %v2494 = vadd.f32 0.0, %v2493
        %2495 = vdwg.mxu0
        %2496 = vmatprep.subr.bf16.mxu0 %v2264
        %2497 = vmatpush1.bf16.msra.mxu0 %v2263
        %2498 = vmatprep.subr.bf16.mxu0 %v2270
        %2499 = vmatpush1.bf16.msra.mxu0 %v2269
        %2500 = vmatprep.subr.bf16.mxu0 %v2276
        %2501 = vmatpush1.bf16.msra.mxu0 %v2275
        %2502 = vmatprep.subr.bf16.mxu0 %v2282
        %2503 = vmatpush1.bf16.msra.mxu0 %v2281
        %2504 = vmatprep.subr.bf16.mxu0 %v2288
        %2505 = vmatpush1.bf16.msra.mxu0 %v2287
        %2506 = vmatprep.subr.bf16.mxu0 %v2294
        %2507 = vmatpush1.bf16.msra.mxu0 %v2293
        %2508 = vmatprep.subr.bf16.mxu0 %v2300
        %2509 = vmatpush1.bf16.msra.mxu0 %v2299
        %2510 = vmatprep.subr.bf16.mxu0 %v2306
        %2511 = vmatpush1.bf16.msra.mxu0 %v2305
        %2512 = vmatprep.subr.bf16.mxu0 %v2312
        %2513 = vmatpush1.bf16.msra.mxu0 %v2311
        %2514 = vmatprep.subr.bf16.mxu0 %v2318
        %2515 = vmatpush1.bf16.msra.mxu0 %v2317
        %2516 = vmatprep.subr.bf16.mxu0 %v2324
        %2517 = vmatpush1.bf16.msra.mxu0 %v2323
        %2518 = vmatprep.subr.bf16.mxu0 %v2330
        %2519 = vmatpush1.bf16.msra.mxu0 %v2329
        %2520 = vmatprep.subr.bf16.mxu0 %v2336
        %2521 = vmatpush1.bf16.msra.mxu0 %v2335
        %2522 = vmatprep.subr.bf16.mxu0 %v2342
        %2523 = vmatpush1.bf16.msra.mxu0 %v2341
        %2524 = vmatprep.subr.bf16.mxu0 %v2348
        %2525 = vmatpush1.bf16.msra.mxu0 %v2347
        %2526 = vmatprep.subr.bf16.mxu0 %v2354
        %2527 = vmatpush1.bf16.msra.mxu0 %v2353
        %2528 = vmatprep.mubr.bf16.mxu0 %v1972
        %2529 = vmatmul.mubr.bf16.gmra.mrb[0].mxu0 %v1971
        %v2530 = vpop.f32.mrb[0].mxu0
        %v2531 = vadd.f32 0.0, %v2530
        %v2532 = vpop.f32.mrb[0].mxu0
        %v2533 = vadd.f32 0.0, %v2532
        %v2534 = vpop.f32.mrb[0].mxu0
        %v2535 = vadd.f32 0.0, %v2534
        %v2536 = vpop.f32.mrb[0].mxu0
        %v2537 = vadd.f32 0.0, %v2536
        %2538 = vdwg.mxu0
        %2539 = vmatprep.subr.bf16.mxu0 %v2266
        %2540 = vmatpush1.bf16.msra.mxu0 %v2265
        %2541 = vmatprep.subr.bf16.mxu0 %v2272
        %2542 = vmatpush1.bf16.msra.mxu0 %v2271
        %2543 = vmatprep.subr.bf16.mxu0 %v2278
        %2544 = vmatpush1.bf16.msra.mxu0 %v2277
        %2545 = vmatprep.subr.bf16.mxu0 %v2284
        %2546 = vmatpush1.bf16.msra.mxu0 %v2283
        %2547 = vmatprep.subr.bf16.mxu0 %v2290
        %2548 = vmatpush1.bf16.msra.mxu0 %v2289
        %2549 = vmatprep.subr.bf16.mxu0 %v2296
        %2550 = vmatpush1.bf16.msra.mxu0 %v2295
        %2551 = vmatprep.subr.bf16.mxu0 %v2302
        %2552 = vmatpush1.bf16.msra.mxu0 %v2301
        %2553 = vmatprep.subr.bf16.mxu0 %v2308
        %2554 = vmatpush1.bf16.msra.mxu0 %v2307
        %2555 = vmatprep.subr.bf16.mxu0 %v2314
        %2556 = vmatpush1.bf16.msra.mxu0 %v2313
        %2557 = vmatprep.subr.bf16.mxu0 %v2320
        %2558 = vmatpush1.bf16.msra.mxu0 %v2319
        %2559 = vmatprep.subr.bf16.mxu0 %v2326
        %2560 = vmatpush1.bf16.msra.mxu0 %v2325
        %2561 = vmatprep.subr.bf16.mxu0 %v2332
        %2562 = vmatpush1.bf16.msra.mxu0 %v2331
        %2563 = vmatprep.subr.bf16.mxu0 %v2338
        %2564 = vmatpush1.bf16.msra.mxu0 %v2337
        %2565 = vmatprep.subr.bf16.mxu0 %v2344
        %2566 = vmatpush1.bf16.msra.mxu0 %v2343
        %2567 = vmatprep.subr.bf16.mxu0 %v2350
        %2568 = vmatpush1.bf16.msra.mxu0 %v2349
        %2569 = vmatprep.subr.bf16.mxu0 %v2356
        %2570 = vmatpush1.bf16.msra.mxu0 %v2355
        %2571 = vmatprep.mubr.bf16.mxu0 %v1972
        %2572 = vmatmul.mubr.bf16.gmra.mrb[0].mxu0 %v1971
        %v2573 = vpop.f32.mrb[0].mxu0
        %v2574 = vadd.f32 0.0, %v2573
        %v2575 = vpop.f32.mrb[0].mxu0
        %v2576 = vadd.f32 0.0, %v2575
        %v2577 = vpop.f32.mrb[0].mxu0
        %v2578 = vadd.f32 0.0, %v2577
        %v2579 = vpop.f32.mrb[0].mxu0
        %v2580 = vadd.f32 0.0, %v2579
        %2581 = vdwg.mxu0
        %v2582 = vadd.f32 %v1956, %v2488
        %v2583 = vadd.f32 %v1959, %v2492
        %v2584 = vxor.u32 %v2582, 2147483648
        %v2585 = vxor.u32 %v2583, 2147483648
        %v2586 = vmul.f32 %v2584, 1.442695
        %v2587 = vpow.pop %v2586
        %v2588 = vmul.f32 %v2585, 1.442695
        %v2589 = vpow.pop %v2588
        %v2590 = vadd.f32 %v2587, 1.0
        %v2591 = vadd.f32 %v2589, 1.0
        %v2592 = vrcp.pop %v2590
        %v2593 = vmul.f32 1.0, %v2592
        %v2594 = vrcp.pop %v2591
        %v2595 = vmul.f32 1.0, %v2594
        %v2596 = vadd.f32 %v1957, %v2490
        %v2597 = vadd.f32 %v1960, %v2494
        %v2598 = vxor.u32 %v2596, 2147483648
        %v2599 = vxor.u32 %v2597, 2147483648
        %v2600 = vmul.f32 %v2598, 1.442695
        %v2601 = vpow.pop %v2600
        %v2602 = vmul.f32 %v2599, 1.442695
        %v2603 = vpow.pop %v2602
        %v2604 = vadd.f32 %v2601, 1.0
        %v2605 = vadd.f32 %v2603, 1.0
        %v2606 = vrcp.pop %v2604
        %v2607 = vmul.f32 1.0, %v2606
        %v2608 = vrcp.pop %v2605
        %v2609 = vmul.f32 1.0, %v2608
        %v2611 = vlaneseq
        %v2612 = vshrl.u32 %v2611, 7
        %v2613 = vsub.s32 0, %v2612
        %v2614 = vrot.slane %v1947, %v2613
        %v2616 = vadd.f32 %v2531, %v2614
        %v2617 = vadd.f32 %v2535, %v2614
        %v2618 = vmul.f32 %v2593, %v2616
        %v2619 = vmul.f32 %v2595, %v2617
        %v2620 = vadd.f32 %v1958, %v2618
        %v2621 = vadd.f32 %v1961, %v2619
        %v2622 = vtanh.pop %v2620
        %v2623 = vtanh.pop %v2621
        %v2624 = vsub.f32 %v1949, %v2622
        %v2625 = vsub.f32 %v1951, %v2623
        %v2626 = vmul.f32 %v2607, %v2624
        %v2627 = vmul.f32 %v2609, %v2625
        %v2628 = vadd.f32 %v2622, %v2626
        %v2629 = vadd.f32 %v2623, %v2627
        %v2630 = vadd.f32 %v1965, %v2533
        %v2631 = vadd.f32 %v1968, %v2537
        %v2632 = vxor.u32 %v2630, 2147483648
        %v2633 = vxor.u32 %v2631, 2147483648
        %v2634 = vmul.f32 %v2632, 1.442695
        %v2635 = vpow.pop %v2634
        %v2636 = vmul.f32 %v2633, 1.442695
        %v2637 = vpow.pop %v2636
        %v2638 = vadd.f32 %v2635, 1.0
        %v2639 = vadd.f32 %v2637, 1.0
        %v2640 = vrcp.pop %v2638
        %v2641 = vmul.f32 1.0, %v2640
        %v2642 = vrcp.pop %v2639
        %v2643 = vmul.f32 1.0, %v2642
        %v2644 = vadd.f32 %v1966, %v2574
        %v2645 = vadd.f32 %v1969, %v2578
        %v2646 = vxor.u32 %v2644, 2147483648
        %v2647 = vxor.u32 %v2645, 2147483648
        %v2648 = vmul.f32 %v2646, 1.442695
        %v2649 = vpow.pop %v2648
        %v2650 = vmul.f32 %v2647, 1.442695
        %v2651 = vpow.pop %v2650
        %v2652 = vadd.f32 %v2649, 1.0
        %v2653 = vadd.f32 %v2651, 1.0
        %v2654 = vrcp.pop %v2652
        %v2655 = vmul.f32 1.0, %v2654
        %v2656 = vrcp.pop %v2653
        %v2657 = vmul.f32 1.0, %v2656
        %v2659 = vlaneseq
        %v2660 = vshrl.u32 %v2659, 7
        %v2661 = vsub.s32 0, %v2660
        %v2662 = vrot.slane %v1948, %v2661
        %v2664 = vadd.f32 %v2576, %v2662
        %v2665 = vadd.f32 %v2580, %v2662
        %v2666 = vmul.f32 %v2641, %v2664
        %v2667 = vmul.f32 %v2643, %v2665
        %v2668 = vadd.f32 %v1967, %v2666
        %v2669 = vadd.f32 %v1970, %v2667
        %v2670 = vtanh.pop %v2668
        %v2671 = vtanh.pop %v2669
        %v2672 = vsub.f32 %v1950, %v2670
        %v2673 = vsub.f32 %v1952, %v2671
        %v2674 = vmul.f32 %v2655, %v2672
        %v2675 = vmul.f32 %v2657, %v2673
        %v2676 = vadd.f32 %v2670, %v2674
        %v2677 = vadd.f32 %v2671, %v2675
        %v2678 = vadd.f32 %v2628, 0.0
        %v2679 = vadd.f32 %v2676, 0.0
        %v2680 = vadd.f32 %v2629, 0.0
        %v2681 = vadd.f32 %v2677, 0.0
        %s2682 = smul.u32 2, 3
        %s2683 = smul.addr %s2682, 8
        %s2684 = scalar_lea.vmem [#allocation3], %s2683
        %v2685 = vld [vmem:[%s2684] sm:$0xff]
        %v2686 = vld [vmem:[%s2684 + $0x8] sm:$0xff]
        %v2687 = vld [vmem:[%s2684 + $0x10] sm:$0xff]
        %v2688 = vld [vmem:[%s2684 + $0x18] sm:$0xff]
        %v2689 = vld [vmem:[%s2684 + $0x20] sm:$0xff]
        %v2690 = vld [vmem:[%s2684 + $0x28] sm:$0xff]
        %s2691 = smul.u32 4, 3
        %s2692 = smul.addr %s2691, 8
        %s2693 = scalar_lea.vmem [#allocation4], %s2692
        %v2694 = vld [vmem:[%s2693] sm:$0xff]
        %v2695 = vld [vmem:[%s2693 + $0x8] sm:$0xff]
        %v2696 = vld [vmem:[%s2693 + $0x10] sm:$0xff]
        %v2697 = vld [vmem:[%s2693 + $0x18] sm:$0xff]
        %v2698 = vld [vmem:[%s2693 + $0x20] sm:$0xff]
        %v2699 = vld [vmem:[%s2693 + $0x28] sm:$0xff]
        %v2700 = vpack.c.bf16 %v2629, %v2628
        %v2701 = vpack.c.bf16 %v2677, %v2676
        %2702 = vmatprep.subr.bf16.mxu0 %v2262
        %2703 = vmatpush1.bf16.msra.mxu0 %v2261
        %2704 = vmatprep.subr.bf16.mxu0 %v2268
        %2705 = vmatpush1.bf16.msra.mxu0 %v2267
        %2706 = vmatprep.subr.bf16.mxu0 %v2274
        %2707 = vmatpush1.bf16.msra.mxu0 %v2273
        %2708 = vmatprep.subr.bf16.mxu0 %v2280
        %2709 = vmatpush1.bf16.msra.mxu0 %v2279
        %2710 = vmatprep.subr.bf16.mxu0 %v2286
        %2711 = vmatpush1.bf16.msra.mxu0 %v2285
        %2712 = vmatprep.subr.bf16.mxu0 %v2292
        %2713 = vmatpush1.bf16.msra.mxu0 %v2291
        %2714 = vmatprep.subr.bf16.mxu0 %v2298
        %2715 = vmatpush1.bf16.msra.mxu0 %v2297
        %2716 = vmatprep.subr.bf16.mxu0 %v2304
        %2717 = vmatpush1.bf16.msra.mxu0 %v2303
        %2718 = vmatprep.subr.bf16.mxu0 %v2310
        %2719 = vmatpush1.bf16.msra.mxu0 %v2309
        %2720 = vmatprep.subr.bf16.mxu0 %v2316
        %2721 = vmatpush1.bf16.msra.mxu0 %v2315
        %2722 = vmatprep.subr.bf16.mxu0 %v2322
        %2723 = vmatpush1.bf16.msra.mxu0 %v2321
        %2724 = vmatprep.subr.bf16.mxu0 %v2328
        %2725 = vmatpush1.bf16.msra.mxu0 %v2327
        %2726 = vmatprep.subr.bf16.mxu0 %v2334
        %2727 = vmatpush1.bf16.msra.mxu0 %v2333
        %2728 = vmatprep.subr.bf16.mxu0 %v2340
        %2729 = vmatpush1.bf16.msra.mxu0 %v2339
        %2730 = vmatprep.subr.bf16.mxu0 %v2346
        %2731 = vmatpush1.bf16.msra.mxu0 %v2345
        %2732 = vmatprep.subr.bf16.mxu0 %v2352
        %2733 = vmatpush1.bf16.msra.mxu0 %v2351
        %2734 = vmatprep.mubr.bf16.mxu0 %v2701
        %2735 = vmatmul.mubr.bf16.gmra.mrb[0].mxu0 %v2700
        %v2736 = vpop.f32.mrb[0].mxu0
        %v2737 = vadd.f32 0.0, %v2736
        %v2738 = vpop.f32.mrb[0].mxu0
        %v2739 = vadd.f32 0.0, %v2738
        %v2740 = vpop.f32.mrb[0].mxu0
        %v2741 = vadd.f32 0.0, %v2740
        %v2742 = vpop.f32.mrb[0].mxu0
        %v2743 = vadd.f32 0.0, %v2742
        %2744 = vdwg.mxu0
        %2745 = vmatprep.subr.bf16.mxu0 %v2264
        %2746 = vmatpush1.bf16.msra.mxu0 %v2263
        %2747 = vmatprep.subr.bf16.mxu0 %v2270
        %2748 = vmatpush1.bf16.msra.mxu0 %v2269
        %2749 = vmatprep.subr.bf16.mxu0 %v2276
        %2750 = vmatpush1.bf16.msra.mxu0 %v2275
        %2751 = vmatprep.subr.bf16.mxu0 %v2282
        %2752 = vmatpush1.bf16.msra.mxu0 %v2281
        %2753 = vmatprep.subr.bf16.mxu0 %v2288
        %2754 = vmatpush1.bf16.msra.mxu0 %v2287
        %2755 = vmatprep.subr.bf16.mxu0 %v2294
        %2756 = vmatpush1.bf16.msra.mxu0 %v2293
        %2757 = vmatprep.subr.bf16.mxu0 %v2300
        %2758 = vmatpush1.bf16.msra.mxu0 %v2299
        %2759 = vmatprep.subr.bf16.mxu0 %v2306
        %2760 = vmatpush1.bf16.msra.mxu0 %v2305
        %2761 = vmatprep.subr.bf16.mxu0 %v2312
        %2762 = vmatpush1.bf16.msra.mxu0 %v2311
        %2763 = vmatprep.subr.bf16.mxu0 %v2318
        %2764 = vmatpush1.bf16.msra.mxu0 %v2317
        %2765 = vmatprep.subr.bf16.mxu0 %v2324
        %2766 = vmatpush1.bf16.msra.mxu0 %v2323
        %2767 = vmatprep.subr.bf16.mxu0 %v2330
        %2768 = vmatpush1.bf16.msra.mxu0 %v2329
        %2769 = vmatprep.subr.bf16.mxu0 %v2336
        %2770 = vmatpush1.bf16.msra.mxu0 %v2335
        %2771 = vmatprep.subr.bf16.mxu0 %v2342
        %2772 = vmatpush1.bf16.msra.mxu0 %v2341
        %2773 = vmatprep.subr.bf16.mxu0 %v2348
        %2774 = vmatpush1.bf16.msra.mxu0 %v2347
        %2775 = vmatprep.subr.bf16.mxu0 %v2354
        %2776 = vmatpush1.bf16.msra.mxu0 %v2353
        %2777 = vmatprep.mubr.bf16.mxu0 %v2701
        %2778 = vmatmul.mubr.bf16.gmra.mrb[0].mxu0 %v2700
        %v2779 = vpop.f32.mrb[0].mxu0
        %v2780 = vadd.f32 0.0, %v2779
        %v2781 = vpop.f32.mrb[0].mxu0
        %v2782 = vadd.f32 0.0, %v2781
        %v2783 = vpop.f32.mrb[0].mxu0
        %v2784 = vadd.f32 0.0, %v2783
        %v2785 = vpop.f32.mrb[0].mxu0
        %v2786 = vadd.f32 0.0, %v2785
        %2787 = vdwg.mxu0
        %2788 = vmatprep.subr.bf16.mxu0 %v2266
        %2789 = vmatpush1.bf16.msra.mxu0 %v2265
        %2790 = vmatprep.subr.bf16.mxu0 %v2272
        %2791 = vmatpush1.bf16.msra.mxu0 %v2271
        %2792 = vmatprep.subr.bf16.mxu0 %v2278
        %2793 = vmatpush1.bf16.msra.mxu0 %v2277
        %2794 = vmatprep.subr.bf16.mxu0 %v2284
        %2795 = vmatpush1.bf16.msra.mxu0 %v2283
        %2796 = vmatprep.subr.bf16.mxu0 %v2290
        %2797 = vmatpush1.bf16.msra.mxu0 %v2289
        %2798 = vmatprep.subr.bf16.mxu0 %v2296
        %2799 = vmatpush1.bf16.msra.mxu0 %v2295
        %2800 = vmatprep.subr.bf16.mxu0 %v2302
        %2801 = vmatpush1.bf16.msra.mxu0 %v2301
        %2802 = vmatprep.subr.bf16.mxu0 %v2308
        %2803 = vmatpush1.bf16.msra.mxu0 %v2307
        %2804 = vmatprep.subr.bf16.mxu0 %v2314
        %2805 = vmatpush1.bf16.msra.mxu0 %v2313
        %2806 = vmatprep.subr.bf16.mxu0 %v2320
        %2807 = vmatpush1.bf16.msra.mxu0 %v2319
        %2808 = vmatprep.subr.bf16.mxu0 %v2326
        %2809 = vmatpush1.bf16.msra.mxu0 %v2325
        %2810 = vmatprep.subr.bf16.mxu0 %v2332
        %2811 = vmatpush1.bf16.msra.mxu0 %v2331
        %2812 = vmatprep.subr.bf16.mxu0 %v2338
        %2813 = vmatpush1.bf16.msra.mxu0 %v2337
        %2814 = vmatprep.subr.bf16.mxu0 %v2344
        %2815 = vmatpush1.bf16.msra.mxu0 %v2343
        %2816 = vmatprep.subr.bf16.mxu0 %v2350
        %2817 = vmatpush1.bf16.msra.mxu0 %v2349
        %2818 = vmatprep.subr.bf16.mxu0 %v2356
        %2819 = vmatpush1.bf16.msra.mxu0 %v2355
        %2820 = vmatprep.mubr.bf16.mxu0 %v2701
        %2821 = vmatmul.mubr.bf16.gmra.mrb[0].mxu0 %v2700
        %v2822 = vpop.f32.mrb[0].mxu0
        %v2823 = vadd.f32 0.0, %v2822
        %v2824 = vpop.f32.mrb[0].mxu0
        %v2825 = vadd.f32 0.0, %v2824
        %v2826 = vpop.f32.mrb[0].mxu0
        %v2827 = vadd.f32 0.0, %v2826
        %v2828 = vpop.f32.mrb[0].mxu0
        %v2829 = vadd.f32 0.0, %v2828
        %2830 = vdwg.mxu0
        %v2831 = vadd.f32 %v2685, %v2737
        %v2832 = vadd.f32 %v2688, %v2741
        %v2833 = vxor.u32 %v2831, 2147483648
        %v2834 = vxor.u32 %v2832, 2147483648
        %v2835 = vmul.f32 %v2833, 1.442695
        %v2836 = vpow.pop %v2835
        %v2837 = vmul.f32 %v2834, 1.442695
        %v2838 = vpow.pop %v2837
        %v2839 = vadd.f32 %v2836, 1.0
        %v2840 = vadd.f32 %v2838, 1.0
        %v2841 = vrcp.pop %v2839
        %v2842 = vmul.f32 1.0, %v2841
        %v2843 = vrcp.pop %v2840
        %v2844 = vmul.f32 1.0, %v2843
        %v2845 = vadd.f32 %v2686, %v2739
        %v2846 = vadd.f32 %v2689, %v2743
        %v2847 = vxor.u32 %v2845, 2147483648
        %v2848 = vxor.u32 %v2846, 2147483648
        %v2849 = vmul.f32 %v2847, 1.442695
        %v2850 = vpow.pop %v2849
        %v2851 = vmul.f32 %v2848, 1.442695
        %v2852 = vpow.pop %v2851
        %v2853 = vadd.f32 %v2850, 1.0
        %v2854 = vadd.f32 %v2852, 1.0
        %v2855 = vrcp.pop %v2853
        %v2856 = vmul.f32 1.0, %v2855
        %v2857 = vrcp.pop %v2854
        %v2858 = vmul.f32 1.0, %v2857
        %v2859 = vadd.f32 %v2780, %v2614
        %v2860 = vadd.f32 %v2784, %v2614
        %v2861 = vmul.f32 %v2842, %v2859
        %v2862 = vmul.f32 %v2844, %v2860
        %v2863 = vadd.f32 %v2687, %v2861
        %v2864 = vadd.f32 %v2690, %v2862
        %v2865 = vtanh.pop %v2863
        %v2866 = vtanh.pop %v2864
        %v2867 = vsub.f32 %v2628, %v2865
        %v2868 = vsub.f32 %v2629, %v2866
        %v2869 = vmul.f32 %v2856, %v2867
        %v2870 = vmul.f32 %v2858, %v2868
        %v2871 = vadd.f32 %v2865, %v2869
        %v2872 = vadd.f32 %v2866, %v2870
        %v2873 = vadd.f32 %v2694, %v2782
        %v2874 = vadd.f32 %v2697, %v2786
        %v2875 = vxor.u32 %v2873, 2147483648
        %v2876 = vxor.u32 %v2874, 2147483648
        %v2877 = vmul.f32 %v2875, 1.442695
        %v2878 = vpow.pop %v2877
        %v2879 = vmul.f32 %v2876, 1.442695
        %v2880 = vpow.pop %v2879
        %v2881 = vadd.f32 %v2878, 1.0
        %v2882 = vadd.f32 %v2880, 1.0
        %v2883 = vrcp.pop %v2881
        %v2884 = vmul.f32 1.0, %v2883
        %v2885 = vrcp.pop %v2882
        %v2886 = vmul.f32 1.0, %v2885
        %v2887 = vadd.f32 %v2695, %v2823
        %v2888 = vadd.f32 %v2698, %v2827
        %v2889 = vxor.u32 %v2887, 2147483648
        %v2890 = vxor.u32 %v2888, 2147483648
        %v2891 = vmul.f32 %v2889, 1.442695
        %v2892 = vpow.pop %v2891
        %v2893 = vmul.f32 %v2890, 1.442695
        %v2894 = vpow.pop %v2893
        %v2895 = vadd.f32 %v2892, 1.0
        %v2896 = vadd.f32 %v2894, 1.0
        %v2897 = vrcp.pop %v2895
        %v2898 = vmul.f32 1.0, %v2897
        %v2899 = vrcp.pop %v2896
        %v2900 = vmul.f32 1.0, %v2899
        %v2901 = vadd.f32 %v2825, %v2662
        %v2902 = vadd.f32 %v2829, %v2662
        %v2903 = vmul.f32 %v2884, %v2901
        %v2904 = vmul.f32 %v2886, %v2902
        %v2905 = vadd.f32 %v2696, %v2903
        %v2906 = vadd.f32 %v2699, %v2904
        %v2907 = vtanh.pop %v2905
        %v2908 = vtanh.pop %v2906
        %v2909 = vsub.f32 %v2676, %v2907
        %v2910 = vsub.f32 %v2677, %v2908
        %v2911 = vmul.f32 %v2898, %v2909
        %v2912 = vmul.f32 %v2900, %v2910
        %v2913 = vadd.f32 %v2907, %v2911
        %v2914 = vadd.f32 %v2908, %v2912
        %v2915 = vadd.f32 %v2678, %v2871
        %v2916 = vadd.f32 %v2679, %v2913
        %v2917 = vadd.f32 %v2680, %v2872
        %v2918 = vadd.f32 %v2681, %v2914
        %s2919 = smul.addr %s2691, 8
        %s2920 = scalar_lea.vmem [#allocation3], %s2919
        %v2921 = vld [vmem:[%s2920] sm:$0xff]
        %v2922 = vld [vmem:[%s2920 + $0x8] sm:$0xff]
        %v2923 = vld [vmem:[%s2920 + $0x10] sm:$0xff]
        %v2924 = vld [vmem:[%s2920 + $0x18] sm:$0xff]
        %v2925 = vld [vmem:[%s2920 + $0x20] sm:$0xff]
        %v2926 = vld [vmem:[%s2920 + $0x28] sm:$0xff]
        %s2927 = smul.addr %s2682, 8
        %s2928 = scalar_lea.vmem [#allocation4], %s2927
        %v2929 = vld [vmem:[%s2928] sm:$0xff]
        %v2930 = vld [vmem:[%s2928 + $0x8] sm:$0xff]
        %v2931 = vld [vmem:[%s2928 + $0x10] sm:$0xff]
        %v2932 = vld [vmem:[%s2928 + $0x18] sm:$0xff]
        %v2933 = vld [vmem:[%s2928 + $0x20] sm:$0xff]
        %v2934 = vld [vmem:[%s2928 + $0x28] sm:$0xff]
        %v2935 = vpack.c.bf16 %v2872, %v2871
        %v2936 = vpack.c.bf16 %v2914, %v2913
        %2937 = vmatprep.subr.bf16.mxu0 %v2262
        %2938 = vmatpush1.bf16.msra.mxu0 %v2261
        %2939 = vmatprep.subr.bf16.mxu0 %v2268
        %2940 = vmatpush1.bf16.msra.mxu0 %v2267
        %2941 = vmatprep.subr.bf16.mxu0 %v2274
        %2942 = vmatpush1.bf16.msra.mxu0 %v2273
        %2943 = vmatprep.subr.bf16.mxu0 %v2280
        %2944 = vmatpush1.bf16.msra.mxu0 %v2279
        %2945 = vmatprep.subr.bf16.mxu0 %v2286
        %2946 = vmatpush1.bf16.msra.mxu0 %v2285
        %2947 = vmatprep.subr.bf16.mxu0 %v2292
        %2948 = vmatpush1.bf16.msra.mxu0 %v2291
        %2949 = vmatprep.subr.bf16.mxu0 %v2298
        %2950 = vmatpush1.bf16.msra.mxu0 %v2297
        %2951 = vmatprep.subr.bf16.mxu0 %v2304
        %2952 = vmatpush1.bf16.msra.mxu0 %v2303
        %2953 = vmatprep.subr.bf16.mxu0 %v2310
        %2954 = vmatpush1.bf16.msra.mxu0 %v2309
        %2955 = vmatprep.subr.bf16.mxu0 %v2316
        %2956 = vmatpush1.bf16.msra.mxu0 %v2315
        %2957 = vmatprep.subr.bf16.mxu0 %v2322
        %2958 = vmatpush1.bf16.msra.mxu0 %v2321
        %2959 = vmatprep.subr.bf16.mxu0 %v2328
        %2960 = vmatpush1.bf16.msra.mxu0 %v2327
        %2961 = vmatprep.subr.bf16.mxu0 %v2334
        %2962 = vmatpush1.bf16.msra.mxu0 %v2333
        %2963 = vmatprep.subr.bf16.mxu0 %v2340
        %2964 = vmatpush1.bf16.msra.mxu0 %v2339
        %2965 = vmatprep.subr.bf16.mxu0 %v2346
        %2966 = vmatpush1.bf16.msra.mxu0 %v2345
        %2967 = vmatprep.subr.bf16.mxu0 %v2352
        %2968 = vmatpush1.bf16.msra.mxu0 %v2351
        %2969 = vmatprep.mubr.bf16.mxu0 %v2936
        %2970 = vmatmul.mubr.bf16.gmra.mrb[0].mxu0 %v2935
        %v2971 = vpop.f32.mrb[0].mxu0
        %v2972 = vadd.f32 0.0, %v2971
        %v2973 = vpop.f32.mrb[0].mxu0
        %v2974 = vadd.f32 0.0, %v2973
        %v2975 = vpop.f32.mrb[0].mxu0
        %v2976 = vadd.f32 0.0, %v2975
        %v2977 = vpop.f32.mrb[0].mxu0
        %v2978 = vadd.f32 0.0, %v2977
        %2979 = vdwg.mxu0
        %2980 = vmatprep.subr.bf16.mxu0 %v2264
        %2981 = vmatpush1.bf16.msra.mxu0 %v2263
        %2982 = vmatprep.subr.bf16.mxu0 %v2270
        %2983 = vmatpush1.bf16.msra.mxu0 %v2269
        %2984 = vmatprep.subr.bf16.mxu0 %v2276
        %2985 = vmatpush1.bf16.msra.mxu0 %v2275
        %2986 = vmatprep.subr.bf16.mxu0 %v2282
        %2987 = vmatpush1.bf16.msra.mxu0 %v2281
        %2988 = vmatprep.subr.bf16.mxu0 %v2288
        %2989 = vmatpush1.bf16.msra.mxu0 %v2287
        %2990 = vmatprep.subr.bf16.mxu0 %v2294
        %2991 = vmatpush1.bf16.msra.mxu0 %v2293
        %2992 = vmatprep.subr.bf16.mxu0 %v2300
        %2993 = vmatpush1.bf16.msra.mxu0 %v2299
        %2994 = vmatprep.subr.bf16.mxu0 %v2306
        %2995 = vmatpush1.bf16.msra.mxu0 %v2305
        %2996 = vmatprep.subr.bf16.mxu0 %v2312
        %2997 = vmatpush1.bf16.msra.mxu0 %v2311
        %2998 = vmatprep.subr.bf16.mxu0 %v2318
        %2999 = vmatpush1.bf16.msra.mxu0 %v2317
        %3000 = vmatprep.subr.bf16.mxu0 %v2324
        %3001 = vmatpush1.bf16.msra.mxu0 %v2323
        %3002 = vmatprep.subr.bf16.mxu0 %v2330
        %3003 = vmatpush1.bf16.msra.mxu0 %v2329
        %3004 = vmatprep.subr.bf16.mxu0 %v2336
        %3005 = vmatpush1.bf16.msra.mxu0 %v2335
        %3006 = vmatprep.subr.bf16.mxu0 %v2342
        %3007 = vmatpush1.bf16.msra.mxu0 %v2341
        %3008 = vmatprep.subr.bf16.mxu0 %v2348
        %3009 = vmatpush1.bf16.msra.mxu0 %v2347
        %3010 = vmatprep.subr.bf16.mxu0 %v2354
        %3011 = vmatpush1.bf16.msra.mxu0 %v2353
        %3012 = vmatprep.mubr.bf16.mxu0 %v2936
        %3013 = vmatmul.mubr.bf16.gmra.mrb[0].mxu0 %v2935
        %v3014 = vpop.f32.mrb[0].mxu0
        %v3015 = vadd.f32 0.0, %v3014
        %v3016 = vpop.f32.mrb[0].mxu0
        %v3017 = vadd.f32 0.0, %v3016
        %v3018 = vpop.f32.mrb[0].mxu0
        %v3019 = vadd.f32 0.0, %v3018
        %v3020 = vpop.f32.mrb[0].mxu0
        %v3021 = vadd.f32 0.0, %v3020
        %3022 = vdwg.mxu0
        %3023 = vmatprep.subr.bf16.mxu0 %v2266
        %3024 = vmatpush1.bf16.msra.mxu0 %v2265
        %3025 = vmatprep.subr.bf16.mxu0 %v2272
        %3026 = vmatpush1.bf16.msra.mxu0 %v2271
        %3027 = vmatprep.subr.bf16.mxu0 %v2278
        %3028 = vmatpush1.bf16.msra.mxu0 %v2277
        %3029 = vmatprep.subr.bf16.mxu0 %v2284
        %3030 = vmatpush1.bf16.msra.mxu0 %v2283
        %3031 = vmatprep.subr.bf16.mxu0 %v2290
        %3032 = vmatpush1.bf16.msra.mxu0 %v2289
        %3033 = vmatprep.subr.bf16.mxu0 %v2296
        %3034 = vmatpush1.bf16.msra.mxu0 %v2295
        %3035 = vmatprep.subr.bf16.mxu0 %v2302
        %3036 = vmatpush1.bf16.msra.mxu0 %v2301
        %3037 = vmatprep.subr.bf16.mxu0 %v2308
        %3038 = vmatpush1.bf16.msra.mxu0 %v2307
        %3039 = vmatprep.subr.bf16.mxu0 %v2314
        %3040 = vmatpush1.bf16.msra.mxu0 %v2313
        %3041 = vmatprep.subr.bf16.mxu0 %v2320
        %3042 = vmatpush1.bf16.msra.mxu0 %v2319
        %3043 = vmatprep.subr.bf16.mxu0 %v2326
        %3044 = vmatpush1.bf16.msra.mxu0 %v2325
        %3045 = vmatprep.subr.bf16.mxu0 %v2332
        %3046 = vmatpush1.bf16.msra.mxu0 %v2331
        %3047 = vmatprep.subr.bf16.mxu0 %v2338
        %3048 = vmatpush1.bf16.msra.mxu0 %v2337
        %3049 = vmatprep.subr.bf16.mxu0 %v2344
        %3050 = vmatpush1.bf16.msra.mxu0 %v2343
        %3051 = vmatprep.subr.bf16.mxu0 %v2350
        %3052 = vmatpush1.bf16.msra.mxu0 %v2349
        %3053 = vmatprep.subr.bf16.mxu0 %v2356
        %3054 = vmatpush1.bf16.msra.mxu0 %v2355
        %3055 = vmatprep.mubr.bf16.mxu0 %v2936
        %3056 = vmatmul.mubr.bf16.gmra.mrb[0].mxu0 %v2935
        %v3057 = vpop.f32.mrb[0].mxu0
        %v3058 = vadd.f32 0.0, %v3057
        %v3059 = vpop.f32.mrb[0].mxu0
        %v3060 = vadd.f32 0.0, %v3059
        %v3061 = vpop.f32.mrb[0].mxu0
        %v3062 = vadd.f32 0.0, %v3061
        %v3063 = vpop.f32.mrb[0].mxu0
        %v3064 = vadd.f32 0.0, %v3063
        %3065 = vdwg.mxu0
        %v3066 = vadd.f32 %v2921, %v2972
        %v3067 = vadd.f32 %v2924, %v2976
        %v3068 = vxor.u32 %v3066, 2147483648
        %v3069 = vxor.u32 %v3067, 2147483648
        %v3070 = vmul.f32 %v3068, 1.442695
        %v3071 = vpow.pop %v3070
        %v3072 = vmul.f32 %v3069, 1.442695
        %v3073 = vpow.pop %v3072
        %v3074 = vadd.f32 %v3071, 1.0
        %v3075 = vadd.f32 %v3073, 1.0
        %v3076 = vrcp.pop %v3074
        %v3077 = vmul.f32 1.0, %v3076
        %v3078 = vrcp.pop %v3075
        %v3079 = vmul.f32 1.0, %v3078
        %v3080 = vadd.f32 %v2922, %v2974
        %v3081 = vadd.f32 %v2925, %v2978
        %v3082 = vxor.u32 %v3080, 2147483648
        %v3083 = vxor.u32 %v3081, 2147483648
        %v3084 = vmul.f32 %v3082, 1.442695
        %v3085 = vpow.pop %v3084
        %v3086 = vmul.f32 %v3083, 1.442695
        %v3087 = vpow.pop %v3086
        %v3088 = vadd.f32 %v3085, 1.0
        %v3089 = vadd.f32 %v3087, 1.0
        %v3090 = vrcp.pop %v3088
        %v3091 = vmul.f32 1.0, %v3090
        %v3092 = vrcp.pop %v3089
        %v3093 = vmul.f32 1.0, %v3092
        %v3094 = vadd.f32 %v3015, %v2614
        %v3095 = vadd.f32 %v3019, %v2614
        %v3096 = vmul.f32 %v3077, %v3094
        %v3097 = vmul.f32 %v3079, %v3095
        %v3098 = vadd.f32 %v2923, %v3096
        %v3099 = vadd.f32 %v2926, %v3097
        %v3100 = vtanh.pop %v3098
        %v3101 = vtanh.pop %v3099
        %v3102 = vsub.f32 %v2871, %v3100
        %v3103 = vsub.f32 %v2872, %v3101
        %v3104 = vmul.f32 %v3091, %v3102
        %v3105 = vmul.f32 %v3093, %v3103
        %v3106 = vadd.f32 %v3100, %v3104
        %v3107 = vadd.f32 %v3101, %v3105
        %v3108 = vadd.f32 %v2929, %v3017
        %v3109 = vadd.f32 %v2932, %v3021
        %v3110 = vxor.u32 %v3108, 2147483648
        %v3111 = vxor.u32 %v3109, 2147483648
        %v3112 = vmul.f32 %v3110, 1.442695
        %v3113 = vpow.pop %v3112
        %v3114 = vmul.f32 %v3111, 1.442695
        %v3115 = vpow.pop %v3114
        %v3116 = vadd.f32 %v3113, 1.0
        %v3117 = vadd.f32 %v3115, 1.0
        %v3118 = vrcp.pop %v3116
        %v3119 = vmul.f32 1.0, %v3118
        %v3120 = vrcp.pop %v3117
        %v3121 = vmul.f32 1.0, %v3120
        %v3122 = vadd.f32 %v2930, %v3058
        %v3123 = vadd.f32 %v2933, %v3062
        %v3124 = vxor.u32 %v3122, 2147483648
        %v3125 = vxor.u32 %v3123, 2147483648
        %v3126 = vmul.f32 %v3124, 1.442695
        %v3127 = vpow.pop %v3126
        %v3128 = vmul.f32 %v3125, 1.442695
        %v3129 = vpow.pop %v3128
        %v3130 = vadd.f32 %v3127, 1.0
        %v3131 = vadd.f32 %v3129, 1.0
        %v3132 = vrcp.pop %v3130
        %v3133 = vmul.f32 1.0, %v3132
        %v3134 = vrcp.pop %v3131
        %v3135 = vmul.f32 1.0, %v3134
        %v3136 = vadd.f32 %v3060, %v2662
        %v3137 = vadd.f32 %v3064, %v2662
        %v3138 = vmul.f32 %v3119, %v3136
        %v3139 = vmul.f32 %v3121, %v3137
        %v3140 = vadd.f32 %v2931, %v3138
        %v3141 = vadd.f32 %v2934, %v3139
        %v3142 = vtanh.pop %v3140
        %v3143 = vtanh.pop %v3141
        %v3144 = vsub.f32 %v2913, %v3142
        %v3145 = vsub.f32 %v2914, %v3143
        %v3146 = vmul.f32 %v3133, %v3144
        %v3147 = vmul.f32 %v3135, %v3145
        %v3148 = vadd.f32 %v3142, %v3146
        %v3149 = vadd.f32 %v3143, %v3147
        %v3150 = vadd.f32 %v2915, %v3106
        %v3151 = vadd.f32 %v2916, %v3148
        %v3152 = vadd.f32 %v2917, %v3107
        %v3153 = vadd.f32 %v2918, %v3149
        %s3154 = smul.addr %s1962, 8
        %s3155 = scalar_lea.vmem [#allocation3], %s3154
        %v3156 = vld [vmem:[%s3155] sm:$0xff]
        %v3157 = vld [vmem:[%s3155 + $0x8] sm:$0xff]
        %v3158 = vld [vmem:[%s3155 + $0x10] sm:$0xff]
        %v3159 = vld [vmem:[%s3155 + $0x18] sm:$0xff]
        %v3160 = vld [vmem:[%s3155 + $0x20] sm:$0xff]
        %v3161 = vld [vmem:[%s3155 + $0x28] sm:$0xff]
        %s3162 = smul.addr %s1953, 8
        %s3163 = scalar_lea.vmem [#allocation4], %s3162
        %v3164 = vld [vmem:[%s3163] sm:$0xff]
        %v3165 = vld [vmem:[%s3163 + $0x8] sm:$0xff]
        %v3166 = vld [vmem:[%s3163 + $0x10] sm:$0xff]
        %v3167 = vld [vmem:[%s3163 + $0x18] sm:$0xff]
        %v3168 = vld [vmem:[%s3163 + $0x20] sm:$0xff]
        %v3169 = vld [vmem:[%s3163 + $0x28] sm:$0xff]
        %v3170 = vpack.c.bf16 %v3107, %v3106
        %v3171 = vpack.c.bf16 %v3149, %v3148
        %3172 = vmatprep.subr.bf16.mxu0 %v2262
        %3173 = vmatpush1.bf16.msra.mxu0 %v2261
        %3174 = vmatprep.subr.bf16.mxu0 %v2268
        %3175 = vmatpush1.bf16.msra.mxu0 %v2267
        %3176 = vmatprep.subr.bf16.mxu0 %v2274
        %3177 = vmatpush1.bf16.msra.mxu0 %v2273
        %3178 = vmatprep.subr.bf16.mxu0 %v2280
        %3179 = vmatpush1.bf16.msra.mxu0 %v2279
        %3180 = vmatprep.subr.bf16.mxu0 %v2286
        %3181 = vmatpush1.bf16.msra.mxu0 %v2285
        %3182 = vmatprep.subr.bf16.mxu0 %v2292
        %3183 = vmatpush1.bf16.msra.mxu0 %v2291
        %3184 = vmatprep.subr.bf16.mxu0 %v2298
        %3185 = vmatpush1.bf16.msra.mxu0 %v2297
        %3186 = vmatprep.subr.bf16.mxu0 %v2304
        %3187 = vmatpush1.bf16.msra.mxu0 %v2303
        %3188 = vmatprep.subr.bf16.mxu0 %v2310
        %3189 = vmatpush1.bf16.msra.mxu0 %v2309
        %3190 = vmatprep.subr.bf16.mxu0 %v2316
        %3191 = vmatpush1.bf16.msra.mxu0 %v2315
        %3192 = vmatprep.subr.bf16.mxu0 %v2322
        %3193 = vmatpush1.bf16.msra.mxu0 %v2321
        %3194 = vmatprep.subr.bf16.mxu0 %v2328
        %3195 = vmatpush1.bf16.msra.mxu0 %v2327
        %3196 = vmatprep.subr.bf16.mxu0 %v2334
        %3197 = vmatpush1.bf16.msra.mxu0 %v2333
        %3198 = vmatprep.subr.bf16.mxu0 %v2340
        %3199 = vmatpush1.bf16.msra.mxu0 %v2339
        %3200 = vmatprep.subr.bf16.mxu0 %v2346
        %3201 = vmatpush1.bf16.msra.mxu0 %v2345
        %3202 = vmatprep.subr.bf16.mxu0 %v2352
        %3203 = vmatpush1.bf16.msra.mxu0 %v2351
        %3204 = vmatprep.mubr.bf16.mxu0 %v3171
        %3205 = vmatmul.mubr.bf16.gmra.mrb[0].mxu0 %v3170
        %v3206 = vpop.f32.mrb[0].mxu0
        %v3207 = vadd.f32 0.0, %v3206
        %v3208 = vpop.f32.mrb[0].mxu0
        %v3209 = vadd.f32 0.0, %v3208
        %v3210 = vpop.f32.mrb[0].mxu0
        %v3211 = vadd.f32 0.0, %v3210
        %v3212 = vpop.f32.mrb[0].mxu0
        %v3213 = vadd.f32 0.0, %v3212
        %3214 = vdwg.mxu0
        %3215 = vmatprep.subr.bf16.mxu0 %v2264
        %3216 = vmatpush1.bf16.msra.mxu0 %v2263
        %3217 = vmatprep.subr.bf16.mxu0 %v2270
        %3218 = vmatpush1.bf16.msra.mxu0 %v2269
        %3219 = vmatprep.subr.bf16.mxu0 %v2276
        %3220 = vmatpush1.bf16.msra.mxu0 %v2275
        %3221 = vmatprep.subr.bf16.mxu0 %v2282
        %3222 = vmatpush1.bf16.msra.mxu0 %v2281
        %3223 = vmatprep.subr.bf16.mxu0 %v2288
        %3224 = vmatpush1.bf16.msra.mxu0 %v2287
        %3225 = vmatprep.subr.bf16.mxu0 %v2294
        %3226 = vmatpush1.bf16.msra.mxu0 %v2293
        %3227 = vmatprep.subr.bf16.mxu0 %v2300
        %3228 = vmatpush1.bf16.msra.mxu0 %v2299
        %3229 = vmatprep.subr.bf16.mxu0 %v2306
        %3230 = vmatpush1.bf16.msra.mxu0 %v2305
        %3231 = vmatprep.subr.bf16.mxu0 %v2312
        %3232 = vmatpush1.bf16.msra.mxu0 %v2311
        %3233 = vmatprep.subr.bf16.mxu0 %v2318
        %3234 = vmatpush1.bf16.msra.mxu0 %v2317
        %3235 = vmatprep.subr.bf16.mxu0 %v2324
        %3236 = vmatpush1.bf16.msra.mxu0 %v2323
        %3237 = vmatprep.subr.bf16.mxu0 %v2330
        %3238 = vmatpush1.bf16.msra.mxu0 %v2329
        %3239 = vmatprep.subr.bf16.mxu0 %v2336
        %3240 = vmatpush1.bf16.msra.mxu0 %v2335
        %3241 = vmatprep.subr.bf16.mxu0 %v2342
        %3242 = vmatpush1.bf16.msra.mxu0 %v2341
        %3243 = vmatprep.subr.bf16.mxu0 %v2348
        %3244 = vmatpush1.bf16.msra.mxu0 %v2347
        %3245 = vmatprep.subr.bf16.mxu0 %v2354
        %3246 = vmatpush1.bf16.msra.mxu0 %v2353
        %3247 = vmatprep.mubr.bf16.mxu0 %v3171
        %3248 = vmatmul.mubr.bf16.gmra.mrb[0].mxu0 %v3170
        %v3249 = vpop.f32.mrb[0].mxu0
        %v3250 = vadd.f32 0.0, %v3249
        %v3251 = vpop.f32.mrb[0].mxu0
        %v3252 = vadd.f32 0.0, %v3251
        %v3253 = vpop.f32.mrb[0].mxu0
        %v3254 = vadd.f32 0.0, %v3253
        %v3255 = vpop.f32.mrb[0].mxu0
        %v3256 = vadd.f32 0.0, %v3255
        %3257 = vdwg.mxu0
        %3258 = vmatprep.subr.bf16.mxu0 %v2266
        %3259 = vmatpush1.bf16.msra.mxu0 %v2265
        %3260 = vmatprep.subr.bf16.mxu0 %v2272
        %3261 = vmatpush1.bf16.msra.mxu0 %v2271
        %3262 = vmatprep.subr.bf16.mxu0 %v2278
        %3263 = vmatpush1.bf16.msra.mxu0 %v2277
        %3264 = vmatprep.subr.bf16.mxu0 %v2284
        %3265 = vmatpush1.bf16.msra.mxu0 %v2283
        %3266 = vmatprep.subr.bf16.mxu0 %v2290
        %3267 = vmatpush1.bf16.msra.mxu0 %v2289
        %3268 = vmatprep.subr.bf16.mxu0 %v2296
        %3269 = vmatpush1.bf16.msra.mxu0 %v2295
        %3270 = vmatprep.subr.bf16.mxu0 %v2302
        %3271 = vmatpush1.bf16.msra.mxu0 %v2301
        %3272 = vmatprep.subr.bf16.mxu0 %v2308
        %3273 = vmatpush1.bf16.msra.mxu0 %v2307
        %3274 = vmatprep.subr.bf16.mxu0 %v2314
        %3275 = vmatpush1.bf16.msra.mxu0 %v2313
        %3276 = vmatprep.subr.bf16.mxu0 %v2320
        %3277 = vmatpush1.bf16.msra.mxu0 %v2319
        %3278 = vmatprep.subr.bf16.mxu0 %v2326
        %3279 = vmatpush1.bf16.msra.mxu0 %v2325
        %3280 = vmatprep.subr.bf16.mxu0 %v2332
        %3281 = vmatpush1.bf16.msra.mxu0 %v2331
        %3282 = vmatprep.subr.bf16.mxu0 %v2338
        %3283 = vmatpush1.bf16.msra.mxu0 %v2337
        %3284 = vmatprep.subr.bf16.mxu0 %v2344
        %3285 = vmatpush1.bf16.msra.mxu0 %v2343
        %3286 = vmatprep.subr.bf16.mxu0 %v2350
        %3287 = vmatpush1.bf16.msra.mxu0 %v2349
        %3288 = vmatprep.subr.bf16.mxu0 %v2356
        %3289 = vmatpush1.bf16.msra.mxu0 %v2355
        %3290 = vmatprep.mubr.bf16.mxu0 %v3171
        %3291 = vmatmul.mubr.bf16.gmra.mrb[0].mxu0 %v3170
        %v3292 = vpop.f32.mrb[0].mxu0
        %v3293 = vadd.f32 0.0, %v3292
        %v3294 = vpop.f32.mrb[0].mxu0
        %v3295 = vadd.f32 0.0, %v3294
        %v3296 = vpop.f32.mrb[0].mxu0
        %v3297 = vadd.f32 0.0, %v3296
        %v3298 = vpop.f32.mrb[0].mxu0
        %v3299 = vadd.f32 0.0, %v3298
        %3300 = vdwg.mxu0
        %v3301 = vadd.f32 %v3156, %v3207
        %v3302 = vadd.f32 %v3159, %v3211
        %v3303 = vxor.u32 %v3301, 2147483648
        %v3304 = vxor.u32 %v3302, 2147483648
        %v3305 = vmul.f32 %v3303, 1.442695
        %v3306 = vpow.pop %v3305
        %v3307 = vmul.f32 %v3304, 1.442695
        %v3308 = vpow.pop %v3307
        %v3309 = vadd.f32 %v3306, 1.0
        %v3310 = vadd.f32 %v3308, 1.0
        %v3311 = vrcp.pop %v3309
        %v3312 = vmul.f32 1.0, %v3311
        %v3313 = vrcp.pop %v3310
        %v3314 = vmul.f32 1.0, %v3313
        %v3315 = vadd.f32 %v3157, %v3209
        %v3316 = vadd.f32 %v3160, %v3213
        %v3317 = vxor.u32 %v3315, 2147483648
        %v3318 = vxor.u32 %v3316, 2147483648
        %v3319 = vmul.f32 %v3317, 1.442695
        %v3320 = vpow.pop %v3319
        %v3321 = vmul.f32 %v3318, 1.442695
        %v3322 = vpow.pop %v3321
        %v3323 = vadd.f32 %v3320, 1.0
        %v3324 = vadd.f32 %v3322, 1.0
        %v3325 = vrcp.pop %v3323
        %v3326 = vmul.f32 1.0, %v3325
        %v3327 = vrcp.pop %v3324
        %v3328 = vmul.f32 1.0, %v3327
        %v3329 = vadd.f32 %v3250, %v2614
        %v3330 = vadd.f32 %v3254, %v2614
        %v3331 = vmul.f32 %v3312, %v3329
        %v3332 = vmul.f32 %v3314, %v3330
        %v3333 = vadd.f32 %v3158, %v3331
        %v3334 = vadd.f32 %v3161, %v3332
        %v3335 = vtanh.pop %v3333
        %v3336 = vtanh.pop %v3334
        %v3337 = vsub.f32 %v3106, %v3335
        %v3338 = vsub.f32 %v3107, %v3336
        %v3339 = vmul.f32 %v3326, %v3337
        %v3340 = vmul.f32 %v3328, %v3338
        %v3341 = vadd.f32 %v3335, %v3339
        %v3342 = vadd.f32 %v3336, %v3340
        %v3343 = vadd.f32 %v3164, %v3252
        %v3344 = vadd.f32 %v3167, %v3256
        %v3345 = vxor.u32 %v3343, 2147483648
        %v3346 = vxor.u32 %v3344, 2147483648
        %v3347 = vmul.f32 %v3345, 1.442695
        %v3348 = vpow.pop %v3347
        %v3349 = vmul.f32 %v3346, 1.442695
        %v3350 = vpow.pop %v3349
        %v3351 = vadd.f32 %v3348, 1.0
        %v3352 = vadd.f32 %v3350, 1.0
        %v3353 = vrcp.pop %v3351
        %v3354 = vmul.f32 1.0, %v3353
        %v3355 = vrcp.pop %v3352
        %v3356 = vmul.f32 1.0, %v3355
        %v3357 = vadd.f32 %v3165, %v3293
        %v3358 = vadd.f32 %v3168, %v3297
        %v3359 = vxor.u32 %v3357, 2147483648
        %v3360 = vxor.u32 %v3358, 2147483648
        %v3361 = vmul.f32 %v3359, 1.442695
        %v3362 = vpow.pop %v3361
        %v3363 = vmul.f32 %v3360, 1.442695
        %v3364 = vpow.pop %v3363
        %v3365 = vadd.f32 %v3362, 1.0
        %v3366 = vadd.f32 %v3364, 1.0
        %v3367 = vrcp.pop %v3365
        %v3368 = vmul.f32 1.0, %v3367
        %v3369 = vrcp.pop %v3366
        %v3370 = vmul.f32 1.0, %v3369
        %v3371 = vadd.f32 %v3295, %v2662
        %v3372 = vadd.f32 %v3299, %v2662
        %v3373 = vmul.f32 %v3354, %v3371
        %v3374 = vmul.f32 %v3356, %v3372
        %v3375 = vadd.f32 %v3166, %v3373
        %v3376 = vadd.f32 %v3169, %v3374
        %v3377 = vtanh.pop %v3375
        %v3378 = vtanh.pop %v3376
        %v3379 = vsub.f32 %v3148, %v3377
        %v3380 = vsub.f32 %v3149, %v3378
        %v3381 = vmul.f32 %v3368, %v3379
        %v3382 = vmul.f32 %v3370, %v3380
        %v3383 = vadd.f32 %v3377, %v3381
        %v3384 = vadd.f32 %v3378, %v3382
        %v3385 = vadd.f32 %v3150, %v3341
        %v3386 = vadd.f32 %v3151, %v3383
        %v3387 = vadd.f32 %v3152, %v3342
        %v3388 = vadd.f32 %v3153, %v3384
        %v3389 = vld [vmem:[%s8] sm:$0xff]
        %v3390 = vld [vmem:[%s8 + $0x8] sm:$0xff]
        %v3391 = vld [vmem:[%s8 + $0x10] sm:$0xff]
        %v3392 = vld [vmem:[%s8 + $0x18] sm:$0xff]
        %v3393 = vadd.f32 %v3389, %v3385
        %v3394 = vadd.f32 %v3390, %v3386
        %v3395 = vadd.f32 %v3391, %v3387
        %v3396 = vadd.f32 %v3392, %v3388
        %3397 = vst [vmem:[%s8] sm:$0xff] %v3393
        %3398 = vst [vmem:[%s8 + $0x8] sm:$0xff] %v3394
        %3399 = vst [vmem:[%s8 + $0x10] sm:$0xff] %v3395
        %3400 = vst [vmem:[%s8 + $0x18] sm:$0xff] %v3396
        %3401 = vst [vmem:[#allocation2] sm:$0xff] %v3341
        %3402 = vst [vmem:[#allocation2 + $0x8] sm:$0xff] %v3383
        %3403 = vst [vmem:[#allocation2 + $0x10] sm:$0xff] %v3342
        %3404 = vst [vmem:[#allocation2 + $0x18] sm:$0xff] %v3384
        // Predicated region
        $region61: #{bigru_forward.3} parent=51 // pred_check
          %p3405 = pneg %p225
        $region62: #{bigru_forward.3} parent=51 // pred_check_branch
          %3407 = sbr.rel (%p3405) target = $region64
        $region63: #{bigru_forward.3} parent=51 // pred_region
          _
        $region64: #{bigru_forward.3} parent=51 // pred_fallthru
          _
        // Predicated region
        $region65: #{bigru_forward.3} parent=51 // pred_check
          %p3408 = pneg %p225
        $region66: #{bigru_forward.3} parent=51 // pred_check_branch
          %3410 = sbr.rel (%p3408) target = $region68
        $region67: #{bigru_forward.3} parent=51 // pred_region
          _
        $region68: #{bigru_forward.3} parent=51 // pred_fallthru
          _
      $region52: #{bigru_forward.3} parent=5 // pred_fallthru
        _
      %p3411 = scmp.le.s32.totalorder 2, %s15
      // Predicated region
      $region69: #{bigru_forward.3} parent=5 // pred_check
        %p3412 = pneg %p3411
      $region70: #{bigru_forward.3} parent=5 // pred_check_branch
        %3414 = sbr.rel (%p3412) target = $region72
      $region71: #{bigru_forward.3} parent=5 // pred_region
        %s3415 = ssub.s32 %s15, 2
      $region72: #{bigru_forward.3} parent=5 // pred_fallthru
        _
    $region6: #{bigru_forward.3} parent=1 // loop_footer
      %s19 = sadd.s32 1, %s15
    $region7: #{bigru_forward.3} parent=1 // loop_footer_branch
      %14 = sbr.rel target = $region3
    $region8: #{bigru_forward.3} parent=1 // loop_exit
      _
    %3416 = vsyncpa [#allocation6], 1
    %s3417 = scalar_lea.sflag [#allocation6], 1
    %3418 = vsyncpa %s3417, 1

</llo_original>
